<compile_context>
chip_gen: v7x
topology: tpu7x:2x2x1
jax: 0.10.0
libtpu: 0.0.40
codegen_flags: <defaults>
</compile_context>

<pallas_src>
import jax
import jax.numpy as jnp
from jax.experimental import pallas as pl
from jax.experimental.pallas import tpu as pltpu

# ----- small, CLIP-shaped config (synthetic weights, no checkpoint) ---------
B = 2            # batch
S = 128          # max_length analogue: real CLIP pads 77 -> lane-dense 128
D = 128          # hidden_size, lane-dense (real CLIP-L: 768)
H = 2            # attention heads
HD = D // H      # head dim (64, as in real CLIP-L)
FF = 4 * D       # MLP intermediate size
LAYERS = 2       # encoder layers (real CLIP-L: 12)
VOCAB = 64
EOS_ID = VOCAB - 1
LN_EPS = 1e-5
NEG_BIAS = -1e9  # large finite negative (bf16/fp16-safe, underflows to 0 in softmax)


# ---------------------------------------------------------------------------
# Fused Pallas kernel: one (example, layer) grid step of the encoder;
# final LayerNorm fused into the last layer iteration.
# ---------------------------------------------------------------------------
def clip_encoder_kernel(bias_ref, x_in_ref,
                        ln1_g_ref, ln1_b_ref, wqkv_ref, bqkv_ref,
                        wo_ref, bo_ref, ln2_g_ref, ln2_b_ref,
                        w1_ref, b1_ref, w2_ref, b2_ref,
                        fln_g_ref, fln_b_ref,
                        out_ref):
    layer = pl.program_id(1)
    n_layers = pl.num_programs(1)

    # out_ref's block index is constant across the layer axis, so its VMEM
    # block doubles as the layer-resident activation (no extra scratch).
    @pl.when(layer == 0)
    def _():
        out_ref[0] = x_in_ref[0]

    def layer_norm(v, g, b):
        mu = jnp.mean(v, axis=-1, keepdims=True)
        var = jnp.mean(jnp.square(v - mu), axis=-1, keepdims=True)
        return (v - mu) * jax.lax.rsqrt(var + LN_EPS) * g + b

    def split_heads(t):                      # (S, D) -> (H, S, HD): one relayout
        return jnp.swapaxes(t.reshape(S, H, HD), 0, 1)

    x = out_ref[0]                           # (S, D) f32, resident across layers
    bias = bias_ref[0]                       # (1, S, S) causal + key-padding bias

    # ---- self-attention block (pre-LN) ----
    h = layer_norm(x, ln1_g_ref[0], ln1_b_ref[0])
    qkv = jnp.dot(h.astype(jnp.bfloat16), wqkv_ref[0],
                  preferred_element_type=jnp.float32) + bqkv_ref[0]       # (S, 3D)

    scale = HD ** -0.5
    qh = split_heads((qkv[:, 0:D] * scale).astype(jnp.bfloat16))          # (H, S, HD)
    kh = split_heads(qkv[:, D:2 * D].astype(jnp.bfloat16))
    vh = split_heads(qkv[:, 2 * D:3 * D].astype(jnp.bfloat16))

    s = jnp.einsum('hqd,hkd->hqk', qh, kh,
                   preferred_element_type=jnp.float32) + bias             # (H, S, S)
    s = s - jnp.max(s, axis=-1, keepdims=True)
    p = jnp.exp(s)
    p = p / jnp.sum(p, axis=-1, keepdims=True)                            # exact softmax
    ctx = jnp.einsum('hqk,hkd->hqd', p.astype(jnp.bfloat16), vh,
                     preferred_element_type=jnp.float32)                  # (H, S, HD)

    # Merge heads and project in ONE (S, D) x (D, D) MXU matmul; the head
    # reduction happens inside the MXU accumulator (no (H, S, D) temporary,
    # no VPU head-sum).
    ctx = jnp.swapaxes(ctx, 0, 1).reshape(S, D)
    attn = jnp.dot(ctx.astype(jnp.bfloat16), wo_ref[0],
                   preferred_element_type=jnp.float32) + bo_ref[0]        # (S, D)
    x = x + attn

    # ---- MLP block (quick GELU) ----
    h2 = layer_norm(x, ln2_g_ref[0], ln2_b_ref[0])
    f = jnp.dot(h2.astype(jnp.bfloat16), w1_ref[0],
                preferred_element_type=jnp.float32) + b1_ref[0]           # (S, FF)
    f = f * jax.nn.sigmoid(1.702 * f)        # quick_gelu (f32: v5e has no bf16 EUP)
    f = jnp.dot(f.astype(jnp.bfloat16), w2_ref[0],
                preferred_element_type=jnp.float32) + b2_ref[0]           # (S, D)
    x = x + f

    @pl.when(layer < n_layers - 1)
    def _():
        out_ref[0] = x

    # Final LayerNorm fused into the last layer iteration.
    @pl.when(layer == n_layers - 1)
    def _():
        out_ref[0] = layer_norm(x, fln_g_ref[...], fln_b_ref[...]).astype(out_ref.dtype)


# ---------------------------------------------------------------------------
# pallas_call wrapper: one call spans (batch, layers)
# ---------------------------------------------------------------------------
_LAYER_PARAM_ORDER = ("ln1_g", "ln1_b", "wqkv", "bqkv", "wo", "bo",
                      "ln2_g", "ln2_b", "w1", "b1", "w2", "b2")


def run_clip_encoder(x_emb, bias, params):
    """x_emb: (B, S, D) f32 embeddings; bias: (B, 1, S, S) f32 additive mask."""
    layer_ws = [params[name] for name in _LAYER_PARAM_ORDER]

    def per_layer_spec(arr):                 # stacked (LAYERS, ...) weights
        nd = arr.ndim
        return pl.BlockSpec((1,) + tuple(arr.shape[1:]),
                            lambda b, l, nd=nd: (l,) + (0,) * (nd - 1))

    def per_example_spec(arr):               # (B, ...) operands, one example/block
        nd = arr.ndim
        return pl.BlockSpec((1,) + tuple(arr.shape[1:]),
                            lambda b, l, nd=nd: (b,) + (0,) * (nd - 1))

    def shared_spec(arr):                    # grid-invariant operands
        nd = arr.ndim
        return pl.BlockSpec(tuple(arr.shape), lambda b, l, nd=nd: (0,) * nd)

    in_specs = ([per_example_spec(bias), per_example_spec(x_emb)]
                + [per_layer_spec(w) for w in layer_ws]
                + [shared_spec(params["final_ln_g"]),
                   shared_spec(params["final_ln_b"])])

    return pl.pallas_call(
        clip_encoder_kernel,
        out_shape=jax.ShapeDtypeStruct((B, S, D), jnp.float32),
        grid_spec=pltpu.PrefetchScalarGridSpec(
            num_scalar_prefetch=0,
            grid=(B, LAYERS),
            in_specs=in_specs,
            out_specs=pl.BlockSpec((1, S, D), lambda b, l: (b, 0, 0)),
        ),
        compiler_params=pltpu.CompilerParams(
            dimension_semantics=("parallel", "arbitrary")),
    )(bias, x_emb, *layer_ws, params["final_ln_g"], params["final_ln_b"])


# ---------------------------------------------------------------------------
# Parameter init (deterministic, synthetic); per-layer weights are stacked
# ---------------------------------------------------------------------------
def init_params(key):
    def normal(k, shape, std=0.02):
        return std * jax.random.normal(k, shape, jnp.float32)

    keys = jax.random.split(key, 2 + LAYERS)
    wqkv, wo, w1, w2 = [], [], [], []
    for l in range(LAYERS):
        k = jax.random.split(keys[2 + l], 4)
        wqkv.append(normal(k[0], (D, 3 * D)))
        wo.append(normal(k[1], (D, D)))
        w1.append(normal(k[2], (D, FF)))
        w2.append(normal(k[3], (FF, D)))

    f32 = jnp.float32
    return {
        "token_embedding": normal(keys[0], (VOCAB, D)),
        "position_embedding": normal(keys[1], (S, D), std=0.01),
        "final_ln_g": jnp.ones((1, D), f32),
        "final_ln_b": jnp.zeros((1, D), f32),
        # stacked per-layer params; MXU operands stored bf16, f32 accumulation
        "ln1_g": jnp.ones((LAYERS, 1, D), f32),
        "ln1_b": jnp.zeros((LAYERS, 1, D), f32),
        "wqkv": jnp.stack(wqkv).astype(jnp.bfloat16),
        "bqkv": jnp.zeros((LAYERS, 1, 3 * D), f32),
        "wo": jnp.stack(wo).astype(jnp.bfloat16),
        "bo": jnp.zeros((LAYERS, 1, D), f32),
        "ln2_g": jnp.ones((LAYERS, 1, D), f32),
        "ln2_b": jnp.zeros((LAYERS, 1, D), f32),
        "w1": jnp.stack(w1).astype(jnp.bfloat16),
        "b1": jnp.zeros((LAYERS, 1, FF), f32),
        "w2": jnp.stack(w2).astype(jnp.bfloat16),
        "b2": jnp.zeros((LAYERS, 1, D), f32),
    }


# ---------------------------------------------------------------------------
# FrozenCLIPEmbedder.forward equivalent
# ---------------------------------------------------------------------------
def frozen_clip_embedder_forward(input_ids, attention_mask, params):
    """input_ids: (B, S) int32, attention_mask: (B, S) int32 {0,1}."""
    # --- embeddings (gather is XLA glue) ---
    x = jnp.take(params["token_embedding"], input_ids, axis=0)      # (B, S, D)
    x = x + params["position_embedding"][None, :, :]

    # --- additive attention bias per example: causal + key padding,
    #     shaped (B, 1, S, S) so attention stays batched (no cross-example
    #     block-diagonal waste, no Python update-slice loop) ---
    idx = jnp.arange(S)
    causal = jnp.where(idx[None, :] > idx[:, None], NEG_BIAS, 0.0).astype(jnp.float32)
    pad = jnp.where(attention_mask == 0, NEG_BIAS, 0.0).astype(jnp.float32)   # (B, S)
    bias = (causal[None, :, :] + pad[:, None, :])[:, None, :, :]              # (B, 1, S, S)

    # --- fused encoder: all layers + final LayerNorm in one Pallas call ---
    last_hidden = run_clip_encoder(x, bias, params)                 # (B, S, D)

    # --- pooled output: hidden state at the EOS position (explicit EOS match,
    #     robust to EOS not being the max vocab id) ---
    eos_pos = jnp.argmax((input_ids == EOS_ID).astype(jnp.int32), axis=-1)
    pooled = last_hidden[jnp.arange(B), eos_pos]

    # --- attn_bias exactly as FrozenCLIPEmbedder.forward produces it ---
    attn_bias = jnp.where(attention_mask.astype(last_hidden.dtype) == 0,
                          -jnp.inf, 0.0).astype(last_hidden.dtype)

    # TODO(synk): HF CLIPTokenizer itself (string -> ids) has no Pallas/JAX
    # equivalent; token ids + attention mask are supplied directly instead.
    return {"last_hidden_state": last_hidden,
            "pooler_output": pooled,
            "attn_bias": attn_bias}


# ---------------------------------------------------------------------------
if __name__ == "__main__":
    key = jax.random.PRNGKey(0)
    pkey, tkey = jax.random.split(key)
    params = init_params(pkey)

    # Deterministic synthetic "tokenized" batch: BOS ... tokens ... EOS, padded.
    lengths = jnp.array([50, S], dtype=jnp.int32)
    rand_ids = jax.random.randint(tkey, (B, S), 2, EOS_ID - 1, dtype=jnp.int32)
    pos = jnp.arange(S)[None, :]
    attention_mask = (pos < lengths[:, None]).astype(jnp.int32)
    input_ids = jnp.where(pos == (lengths[:, None] - 1), EOS_ID, rand_ids)
    input_ids = jnp.where(pos >= lengths[:, None], 0, input_ids)     # pad id 0
    input_ids = input_ids.at[:, 0].set(1)                            # BOS id 1

    outputs = frozen_clip_embedder_forward(input_ids, attention_mask, params)
    jax.block_until_ready(outputs)

    lhs = outputs["last_hidden_state"]
    assert lhs.shape == (B, S, D) and lhs.dtype == jnp.float32
    assert outputs["pooler_output"].shape == (B, D)
    assert outputs["attn_bias"].shape == (B, S)
    assert bool(jnp.all(jnp.isfinite(lhs)))
    print("KERNEL_OK")
</pallas_src>

<mosaic_0001>
module attributes {stable_mosaic.version = 11 : i64} {
  func.func @clip_encoder_kernel(%arg0: i32, %arg1: i32, %arg2: memref<1x1x128x128xf32, #tpu.memory_space<vmem>>, %arg3: memref<1x128x128xf32, #tpu.memory_space<vmem>>, %arg4: memref<1x1x128xf32, #tpu.memory_space<vmem>>, %arg5: memref<1x1x128xf32, #tpu.memory_space<vmem>>, %arg6: memref<1x128x384xbf16, #tpu.memory_space<vmem>>, %arg7: memref<1x1x384xf32, #tpu.memory_space<vmem>>, %arg8: memref<1x128x128xbf16, #tpu.memory_space<vmem>>, %arg9: memref<1x1x128xf32, #tpu.memory_space<vmem>>, %arg10: memref<1x1x128xf32, #tpu.memory_space<vmem>>, %arg11: memref<1x1x128xf32, #tpu.memory_space<vmem>>, %arg12: memref<1x128x512xbf16, #tpu.memory_space<vmem>>, %arg13: memref<1x1x512xf32, #tpu.memory_space<vmem>>, %arg14: memref<1x512x128xbf16, #tpu.memory_space<vmem>>, %arg15: memref<1x1x128xf32, #tpu.memory_space<vmem>>, %arg16: memref<1x128xf32, #tpu.memory_space<vmem>>, %arg17: memref<1x128xf32, #tpu.memory_space<vmem>>, %arg18: memref<1x128x128xf32, #tpu.memory_space<vmem>>) attributes {dimension_semantics = [#tpu.dimension_semantics<parallel>, #tpu.dimension_semantics<arbitrary>], iteration_bounds = array<i64: 2, 2>, scalar_prefetch = 0 : i64, scratch_operands = 0 : i64, tpu.core_type = #tpu.core_type<tc>, window_params = [{transform_indices = @transform_0, window_bounds = array<i64: 1, 1, 128, 128>}, {transform_indices = @transform_1, window_bounds = array<i64: 1, 128, 128>}, {transform_indices = @transform_2, window_bounds = array<i64: 1, 1, 128>}, {transform_indices = @transform_3, window_bounds = array<i64: 1, 1, 128>}, {transform_indices = @transform_4, window_bounds = array<i64: 1, 128, 384>}, {transform_indices = @transform_5, window_bounds = array<i64: 1, 1, 384>}, {transform_indices = @transform_6, window_bounds = array<i64: 1, 128, 128>}, {transform_indices = @transform_7, window_bounds = array<i64: 1, 1, 128>}, {transform_indices = @transform_8, window_bounds = array<i64: 1, 1, 128>}, {transform_indices = @transform_9, window_bounds = array<i64: 1, 1, 128>}, {transform_indices = @transform_10, window_bounds = array<i64: 1, 128, 512>}, {transform_indices = @transform_11, window_bounds = array<i64: 1, 1, 512>}, {transform_indices = @transform_12, window_bounds = array<i64: 1, 512, 128>}, {transform_indices = @transform_13, window_bounds = array<i64: 1, 1, 128>}, {pipeline_mode = #tpu.pipeline_mode<synchronous>, transform_indices = @transform_14, window_bounds = array<i64: 1, 128>}, {pipeline_mode = #tpu.pipeline_mode<synchronous>, transform_indices = @transform_15, window_bounds = array<i64: 1, 128>}, {transform_indices = @transform_16, window_bounds = array<i64: 1, 128, 128>}]} {
    %c0_i32 = arith.constant 0 : i32
    %0 = arith.cmpi eq, %arg1, %c0_i32 : i32
    %1 = arith.extui %0 : i1 to i32
    %c0_i32_0 = arith.constant 0 : i32
    %2 = arith.cmpi ne, %1, %c0_i32_0 : i32
    scf.if %2 {
      %c0_66 = arith.constant 0 : index
      %c0_67 = arith.constant 0 : index
      %c0_68 = arith.constant 0 : index
      %137 = vector.load %arg3[%c0_66, %c0_67, %c0_68] : memref<1x128x128xf32, #tpu.memory_space<vmem>>, vector<1x128x128xf32>
      %138 = vector.shape_cast %137 : vector<1x128x128xf32> to vector<128x128xf32>
      %c0_69 = arith.constant 0 : index
      %c0_70 = arith.constant 0 : index
      %c0_71 = arith.constant 0 : index
      %139 = vector.load %arg18[%c0_69, %c0_70, %c0_71] : memref<1x128x128xf32, #tpu.memory_space<vmem>>, vector<1x128x128xf32>
      %140 = vector.shape_cast %139 : vector<1x128x128xf32> to vector<128x128xf32>
      %141 = vector.shape_cast %138 : vector<128x128xf32> to vector<1x128x128xf32>
      tpu.vector_store %arg18[%c0_69, %c0_70, %c0_71], %141 {strides = array<i32>} : memref<1x128x128xf32, #tpu.memory_space<vmem>>, vector<1x128x128xf32>,
    } else {
    }
    %c0 = arith.constant 0 : index
    %c0_1 = arith.constant 0 : index
    %c0_2 = arith.constant 0 : index
    %3 = vector.load %arg18[%c0, %c0_1, %c0_2] : memref<1x128x128xf32, #tpu.memory_space<vmem>>, vector<1x128x128xf32>
    %4 = vector.shape_cast %3 : vector<1x128x128xf32> to vector<128x128xf32>
    %c0_3 = arith.constant 0 : index
    %c0_4 = arith.constant 0 : index
    %c0_5 = arith.constant 0 : index
    %c0_6 = arith.constant 0 : index
    %5 = vector.load %arg2[%c0_3, %c0_4, %c0_5, %c0_6] : memref<1x1x128x128xf32, #tpu.memory_space<vmem>>, vector<1x1x128x128xf32>
    %6 = vector.shape_cast %5 : vector<1x1x128x128xf32> to vector<1x128x128xf32>
    %c0_7 = arith.constant 0 : index
    %c0_8 = arith.constant 0 : index
    %c0_9 = arith.constant 0 : index
    %7 = vector.load %arg4[%c0_7, %c0_8, %c0_9] : memref<1x1x128xf32, #tpu.memory_space<vmem>>, vector<1x1x128xf32>
    %8 = vector.shape_cast %7 : vector<1x1x128xf32> to vector<1x128xf32>
    %c0_10 = arith.constant 0 : index
    %c0_11 = arith.constant 0 : index
    %c0_12 = arith.constant 0 : index
    %9 = vector.load %arg5[%c0_10, %c0_11, %c0_12] : memref<1x1x128xf32, #tpu.memory_space<vmem>>, vector<1x1x128xf32>
    %10 = vector.shape_cast %9 : vector<1x1x128xf32> to vector<1x128xf32>
    %cst = arith.constant dense<0.000000e+00> : vector<128xf32>
    %11 = vector.multi_reduction <add>, %4, %cst [1] : vector<128x128xf32> to vector<128xf32>
    %12 = vector.shape_cast %11 : vector<128xf32> to vector<128x1xf32>
    %cst_13 = arith.constant 1.280000e+02 : f32
    %13 = vector.broadcast %cst_13 : f32 to vector<128x1xf32>
    %14 = arith.divf %12, %13 : vector<128x1xf32>
    %15 = vector.broadcast %14 : vector<128x1xf32> to vector<128x128xf32>
    %16 = arith.subf %4, %15 : vector<128x128xf32>
    %17 = arith.mulf %16, %16 : vector<128x128xf32>
    %cst_14 = arith.constant dense<0.000000e+00> : vector<128xf32>
    %18 = vector.multi_reduction <add>, %17, %cst_14 [1] : vector<128x128xf32> to vector<128xf32>
    %19 = vector.shape_cast %18 : vector<128xf32> to vector<128x1xf32>
    %cst_15 = arith.constant 1.280000e+02 : f32
    %20 = vector.broadcast %cst_15 : f32 to vector<128x1xf32>
    %21 = arith.divf %19, %20 : vector<128x1xf32>
    %22 = vector.broadcast %14 : vector<128x1xf32> to vector<128x128xf32>
    %23 = arith.subf %4, %22 : vector<128x128xf32>
    %cst_16 = arith.constant 9.99999974E-6 : f32
    %24 = vector.broadcast %cst_16 : f32 to vector<128x1xf32>
    %25 = arith.addf %21, %24 : vector<128x1xf32>
    %26 = math.rsqrt %25 : vector<128x1xf32>
    %27 = vector.broadcast %26 : vector<128x1xf32> to vector<128x128xf32>
    %28 = arith.mulf %23, %27 : vector<128x128xf32>
    %29 = vector.broadcast %8 : vector<1x128xf32> to vector<128x128xf32>
    %30 = arith.mulf %28, %29 : vector<128x128xf32>
    %31 = vector.broadcast %10 : vector<1x128xf32> to vector<128x128xf32>
    %32 = arith.addf %30, %31 : vector<128x128xf32>
    %33 = arith.truncf %32 : vector<128x128xf32> to vector<128x128xbf16>
    %c0_17 = arith.constant 0 : index
    %c0_18 = arith.constant 0 : index
    %c0_19 = arith.constant 0 : index
    %34 = vector.load %arg6[%c0_17, %c0_18, %c0_19] : memref<1x128x384xbf16, #tpu.memory_space<vmem>>, vector<1x128x384xbf16>
    %35 = vector.shape_cast %34 : vector<1x128x384xbf16> to vector<128x384xbf16>
    %cst_20 = arith.constant dense<0.000000e+00> : vector<128x384xf32>
    %36 = tpu.matmul %33, %35, %cst_20 {dimension_numbers = #tpu.dot_dimension_numbers<[1], [0], [0], [1], [0, 0, 1, 1], [], []>} : vector<128x128xbf16>, vector<128x384xbf16>, vector<128x384xf32> -> vector<128x384xf32>
    %c0_21 = arith.constant 0 : index
    %c0_22 = arith.constant 0 : index
    %c0_23 = arith.constant 0 : index
    %37 = vector.load %arg7[%c0_21, %c0_22, %c0_23] : memref<1x1x384xf32, #tpu.memory_space<vmem>>, vector<1x1x384xf32>
    %38 = vector.shape_cast %37 : vector<1x1x384xf32> to vector<1x384xf32>
    %39 = vector.broadcast %38 : vector<1x384xf32> to vector<128x384xf32>
    %40 = arith.addf %36, %39 : vector<128x384xf32>
    %41 = vector.extract_strided_slice %40 {offsets = [0, 0], sizes = [128, 128], strides = [1, 1]} : vector<128x384xf32> to vector<128x128xf32>
    %cst_24 = arith.constant 1.250000e-01 : f32
    %42 = vector.broadcast %cst_24 : f32 to vector<128x128xf32>
    %43 = arith.mulf %41, %42 : vector<128x128xf32>
    %44 = arith.truncf %43 : vector<128x128xf32> to vector<128x128xbf16>
    %45 = vector.shape_cast %44 : vector<128x128xbf16> to vector<128x2x64xbf16>
    %46 = tpu.transpose %45, [1, 0, 2] : vector<128x2x64xbf16> -> vector<2x128x64xbf16>
    %47 = vector.extract_strided_slice %40 {offsets = [0, 128], sizes = [128, 128], strides = [1, 1]} : vector<128x384xf32> to vector<128x128xf32>
    %48 = arith.truncf %47 : vector<128x128xf32> to vector<128x128xbf16>
    %49 = vector.shape_cast %48 : vector<128x128xbf16> to vector<128x2x64xbf16>
    %50 = tpu.transpose %49, [1, 0, 2] : vector<128x2x64xbf16> -> vector<2x128x64xbf16>
    %51 = vector.extract_strided_slice %40 {offsets = [0, 256], sizes = [128, 128], strides = [1, 1]} : vector<128x384xf32> to vector<128x128xf32>
    %52 = arith.truncf %51 : vector<128x128xf32> to vector<128x128xbf16>
    %53 = vector.shape_cast %52 : vector<128x128xbf16> to vector<128x2x64xbf16>
    %54 = tpu.transpose %53, [1, 0, 2] : vector<128x2x64xbf16> -> vector<2x128x64xbf16>
    "tpu.trace_start"() <{level = 10 : i32, message = "hqd,hkd->hqk"}> : () -> ()
    %cst_25 = arith.constant dense<0.000000e+00> : vector<2x128x128xf32>
    %55 = tpu.matmul %46, %50, %cst_25 {dimension_numbers = #tpu.dot_dimension_numbers<[2], [2], [1], [1], [0, 0, 0, 1, 1, 1], [0], [0]>} : vector<2x128x64xbf16>, vector<2x128x64xbf16>, vector<2x128x128xf32> -> vector<2x128x128xf32>
    "tpu.trace_stop"() : () -> ()
    %56 = vector.broadcast %6 : vector<1x128x128xf32> to vector<2x128x128xf32>
    %57 = arith.addf %55, %56 : vector<2x128x128xf32>
    %cst_26 = arith.constant dense<0xFF800000> : vector<2x128xf32>
    %58 = vector.multi_reduction <maximumf>, %57, %cst_26 [2] : vector<2x128x128xf32> to vector<2x128xf32>
    %59 = vector.shape_cast %58 : vector<2x128xf32> to vector<2x128x1xf32>
    %60 = vector.broadcast %59 : vector<2x128x1xf32> to vector<2x128x128xf32>
    %61 = arith.subf %57, %60 : vector<2x128x128xf32>
    %62 = math.exp %61 : vector<2x128x128xf32>
    %cst_27 = arith.constant dense<0.000000e+00> : vector<2x128xf32>
    %63 = vector.multi_reduction <add>, %62, %cst_27 [2] : vector<2x128x128xf32> to vector<2x128xf32>
    %64 = vector.shape_cast %63 : vector<2x128xf32> to vector<2x128x1xf32>
    %65 = vector.broadcast %64 : vector<2x128x1xf32> to vector<2x128x128xf32>
    %66 = arith.divf %62, %65 : vector<2x128x128xf32>
    %67 = arith.truncf %66 : vector<2x128x128xf32> to vector<2x128x128xbf16>
    "tpu.trace_start"() <{level = 10 : i32, message = "hqk,hkd->hqd"}> : () -> ()
    %cst_28 = arith.constant dense<0.000000e+00> : vector<2x128x64xf32>
    %68 = tpu.matmul %67, %54, %cst_28 {dimension_numbers = #tpu.dot_dimension_numbers<[2], [1], [1], [2], [0, 0, 0, 1, 1, 2], [0], [0]>} : vector<2x128x128xbf16>, vector<2x128x64xbf16>, vector<2x128x64xf32> -> vector<2x128x64xf32>
    "tpu.trace_stop"() : () -> ()
    %69 = tpu.transpose %68, [1, 0, 2] : vector<2x128x64xf32> -> vector<128x2x64xf32>
    %70 = vector.shape_cast %69 : vector<128x2x64xf32> to vector<128x128xf32>
    %71 = arith.truncf %70 : vector<128x128xf32> to vector<128x128xbf16>
    %c0_29 = arith.constant 0 : index
    %c0_30 = arith.constant 0 : index
    %c0_31 = arith.constant 0 : index
    %72 = vector.load %arg8[%c0_29, %c0_30, %c0_31] : memref<1x128x128xbf16, #tpu.memory_space<vmem>>, vector<1x128x128xbf16>
    %73 = vector.shape_cast %72 : vector<1x128x128xbf16> to vector<128x128xbf16>
    %cst_32 = arith.constant dense<0.000000e+00> : vector<128x128xf32>
    %74 = tpu.matmul %71, %73, %cst_32 {dimension_numbers = #tpu.dot_dimension_numbers<[1], [0], [0], [1], [0, 0, 1, 1], [], []>} : vector<128x128xbf16>, vector<128x128xbf16>, vector<128x128xf32> -> vector<128x128xf32>
    %c0_33 = arith.constant 0 : index
    %c0_34 = arith.constant 0 : index
    %c0_35 = arith.constant 0 : index
    %75 = vector.load %arg9[%c0_33, %c0_34, %c0_35] : memref<1x1x128xf32, #tpu.memory_space<vmem>>, vector<1x1x128xf32>
    %76 = vector.shape_cast %75 : vector<1x1x128xf32> to vector<1x128xf32>
    %77 = vector.broadcast %76 : vector<1x128xf32> to vector<128x128xf32>
    %78 = arith.addf %74, %77 : vector<128x128xf32>
    %79 = arith.addf %4, %78 : vector<128x128xf32>
    %c0_36 = arith.constant 0 : index
    %c0_37 = arith.constant 0 : index
    %c0_38 = arith.constant 0 : index
    %80 = vector.load %arg10[%c0_36, %c0_37, %c0_38] : memref<1x1x128xf32, #tpu.memory_space<vmem>>, vector<1x1x128xf32>
    %81 = vector.shape_cast %80 : vector<1x1x128xf32> to vector<1x128xf32>
    %c0_39 = arith.constant 0 : index
    %c0_40 = arith.constant 0 : index
    %c0_41 = arith.constant 0 : index
    %82 = vector.load %arg11[%c0_39, %c0_40, %c0_41] : memref<1x1x128xf32, #tpu.memory_space<vmem>>, vector<1x1x128xf32>
    %83 = vector.shape_cast %82 : vector<1x1x128xf32> to vector<1x128xf32>
    %cst_42 = arith.constant dense<0.000000e+00> : vector<128xf32>
    %84 = vector.multi_reduction <add>, %79, %cst_42 [1] : vector<128x128xf32> to vector<128xf32>
    %85 = vector.shape_cast %84 : vector<128xf32> to vector<128x1xf32>
    %cst_43 = arith.constant 1.280000e+02 : f32
    %86 = vector.broadcast %cst_43 : f32 to vector<128x1xf32>
    %87 = arith.divf %85, %86 : vector<128x1xf32>
    %88 = vector.broadcast %87 : vector<128x1xf32> to vector<128x128xf32>
    %89 = arith.subf %79, %88 : vector<128x128xf32>
    %90 = arith.mulf %89, %89 : vector<128x128xf32>
    %cst_44 = arith.constant dense<0.000000e+00> : vector<128xf32>
    %91 = vector.multi_reduction <add>, %90, %cst_44 [1] : vector<128x128xf32> to vector<128xf32>
    %92 = vector.shape_cast %91 : vector<128xf32> to vector<128x1xf32>
    %cst_45 = arith.constant 1.280000e+02 : f32
    %93 = vector.broadcast %cst_45 : f32 to vector<128x1xf32>
    %94 = arith.divf %92, %93 : vector<128x1xf32>
    %95 = vector.broadcast %87 : vector<128x1xf32> to vector<128x128xf32>
    %96 = arith.subf %79, %95 : vector<128x128xf32>
    %cst_46 = arith.constant 9.99999974E-6 : f32
    %97 = vector.broadcast %cst_46 : f32 to vector<128x1xf32>
    %98 = arith.addf %94, %97 : vector<128x1xf32>
    %99 = math.rsqrt %98 : vector<128x1xf32>
    %100 = vector.broadcast %99 : vector<128x1xf32> to vector<128x128xf32>
    %101 = arith.mulf %96, %100 : vector<128x128xf32>
    %102 = vector.broadcast %81 : vector<1x128xf32> to vector<128x128xf32>
    %103 = arith.mulf %101, %102 : vector<128x128xf32>
    %104 = vector.broadcast %83 : vector<1x128xf32> to vector<128x128xf32>
    %105 = arith.addf %103, %104 : vector<128x128xf32>
    %106 = arith.truncf %105 : vector<128x128xf32> to vector<128x128xbf16>
    %c0_47 = arith.constant 0 : index
    %c0_48 = arith.constant 0 : index
    %c0_49 = arith.constant 0 : index
    %107 = vector.load %arg12[%c0_47, %c0_48, %c0_49] : memref<1x128x512xbf16, #tpu.memory_space<vmem>>, vector<1x128x512xbf16>
    %108 = vector.shape_cast %107 : vector<1x128x512xbf16> to vector<128x512xbf16>
    %cst_50 = arith.constant dense<0.000000e+00> : vector<128x512xf32>
    %109 = tpu.matmul %106, %108, %cst_50 {dimension_numbers = #tpu.dot_dimension_numbers<[1], [0], [0], [1], [0, 0, 1, 1], [], []>} : vector<128x128xbf16>, vector<128x512xbf16>, vector<128x512xf32> -> vector<128x512xf32>
    %c0_51 = arith.constant 0 : index
    %c0_52 = arith.constant 0 : index
    %c0_53 = arith.constant 0 : index
    %110 = vector.load %arg13[%c0_51, %c0_52, %c0_53] : memref<1x1x512xf32, #tpu.memory_space<vmem>>, vector<1x1x512xf32>
    %111 = vector.shape_cast %110 : vector<1x1x512xf32> to vector<1x512xf32>
    %112 = vector.broadcast %111 : vector<1x512xf32> to vector<128x512xf32>
    %113 = arith.addf %109, %112 : vector<128x512xf32>
    %cst_54 = arith.constant 1.702000e+00 : f32
    %114 = vector.broadcast %cst_54 : f32 to vector<128x512xf32>
    %115 = arith.mulf %114, %113 : vector<128x512xf32>
    %116 = arith.negf %115 : vector<128x512xf32>
    %117 = math.exp %116 : vector<128x512xf32>
    %cst_55 = arith.constant 1.000000e+00 : f32
    %118 = vector.broadcast %cst_55 : f32 to vector<128x512xf32>
    %119 = arith.addf %118, %117 : vector<128x512xf32>
    %120 = arith.divf %118, %119 : vector<128x512xf32>
    %121 = arith.mulf %113, %120 : vector<128x512xf32>
    %122 = arith.truncf %121 : vector<128x512xf32> to vector<128x512xbf16>
    %c0_56 = arith.constant 0 : index
    %c0_57 = arith.constant 0 : index
    %c0_58 = arith.constant 0 : index
    %123 = vector.load %arg14[%c0_56, %c0_57, %c0_58] : memref<1x512x128xbf16, #tpu.memory_space<vmem>>, vector<1x512x128xbf16>
    %124 = vector.shape_cast %123 : vector<1x512x128xbf16> to vector<512x128xbf16>
    %cst_59 = arith.constant dense<0.000000e+00> : vector<128x128xf32>
    %125 = tpu.matmul %122, %124, %cst_59 {dimension_numbers = #tpu.dot_dimension_numbers<[1], [0], [0], [1], [0, 0, 1, 1], [], []>} : vector<128x512xbf16>, vector<512x128xbf16>, vector<128x128xf32> -> vector<128x128xf32>
    %c0_60 = arith.constant 0 : index
    %c0_61 = arith.constant 0 : index
    %c0_62 = arith.constant 0 : index
    %126 = vector.load %arg15[%c0_60, %c0_61, %c0_62] : memref<1x1x128xf32, #tpu.memory_space<vmem>>, vector<1x1x128xf32>
    %127 = vector.shape_cast %126 : vector<1x1x128xf32> to vector<1x128xf32>
    %128 = vector.broadcast %127 : vector<1x128xf32> to vector<128x128xf32>
    %129 = arith.addf %125, %128 : vector<128x128xf32>
    %130 = arith.addf %79, %129 : vector<128x128xf32>
    %c1_i32 = arith.constant 1 : i32
    %131 = arith.cmpi slt, %arg1, %c1_i32 : i32
    %132 = arith.extui %131 : i1 to i32
    %c0_i32_63 = arith.constant 0 : i32
    %133 = arith.cmpi ne, %132, %c0_i32_63 : i32
    scf.if %133 {
      %c0_66 = arith.constant 0 : index
      %c0_67 = arith.constant 0 : index
      %c0_68 = arith.constant 0 : index
      %137 = vector.load %arg18[%c0_66, %c0_67, %c0_68] : memref<1x128x128xf32, #tpu.memory_space<vmem>>, vector<1x128x128xf32>
      %138 = vector.shape_cast %137 : vector<1x128x128xf32> to vector<128x128xf32>
      %139 = vector.shape_cast %130 : vector<128x128xf32> to vector<1x128x128xf32>
      tpu.vector_store %arg18[%c0_66, %c0_67, %c0_68], %139 {strides = array<i32>} : memref<1x128x128xf32, #tpu.memory_space<vmem>>, vector<1x128x128xf32>,
    } else {
    }
    %c1_i32_64 = arith.constant 1 : i32
    %134 = arith.cmpi eq, %arg1, %c1_i32_64 : i32
    %135 = arith.extui %134 : i1 to i32
    %c0_i32_65 = arith.constant 0 : i32
    %136 = arith.cmpi ne, %135, %c0_i32_65 : i32
    scf.if %136 {
      %c0_66 = arith.constant 0 : index
      %c0_67 = arith.constant 0 : index
      %137 = vector.load %arg16[%c0_66, %c0_67] : memref<1x128xf32, #tpu.memory_space<vmem>>, vector<1x128xf32>
      %c0_68 = arith.constant 0 : index
      %c0_69 = arith.constant 0 : index
      %138 = vector.load %arg17[%c0_68, %c0_69] : memref<1x128xf32, #tpu.memory_space<vmem>>, vector<1x128xf32>
      %cst_70 = arith.constant dense<0.000000e+00> : vector<128xf32>
      %139 = vector.multi_reduction <add>, %130, %cst_70 [1] : vector<128x128xf32> to vector<128xf32>
      %140 = vector.shape_cast %139 : vector<128xf32> to vector<128x1xf32>
      %cst_71 = arith.constant 1.280000e+02 : f32
      %141 = vector.broadcast %cst_71 : f32 to vector<128x1xf32>
      %142 = arith.divf %140, %141 : vector<128x1xf32>
      %143 = vector.broadcast %142 : vector<128x1xf32> to vector<128x128xf32>
      %144 = arith.subf %130, %143 : vector<128x128xf32>
      %145 = arith.mulf %144, %144 : vector<128x128xf32>
      %cst_72 = arith.constant dense<0.000000e+00> : vector<128xf32>
      %146 = vector.multi_reduction <add>, %145, %cst_72 [1] : vector<128x128xf32> to vector<128xf32>
      %147 = vector.shape_cast %146 : vector<128xf32> to vector<128x1xf32>
      %cst_73 = arith.constant 1.280000e+02 : f32
      %148 = vector.broadcast %cst_73 : f32 to vector<128x1xf32>
      %149 = arith.divf %147, %148 : vector<128x1xf32>
      %150 = vector.broadcast %142 : vector<128x1xf32> to vector<128x128xf32>
      %151 = arith.subf %130, %150 : vector<128x128xf32>
      %cst_74 = arith.constant 9.99999974E-6 : f32
      %152 = vector.broadcast %cst_74 : f32 to vector<128x1xf32>
      %153 = arith.addf %149, %152 : vector<128x1xf32>
      %154 = math.rsqrt %153 : vector<128x1xf32>
      %155 = vector.broadcast %154 : vector<128x1xf32> to vector<128x128xf32>
      %156 = arith.mulf %151, %155 : vector<128x128xf32>
      %157 = vector.broadcast %137 : vector<1x128xf32> to vector<128x128xf32>
      %158 = arith.mulf %156, %157 : vector<128x128xf32>
      %159 = vector.broadcast %138 : vector<1x128xf32> to vector<128x128xf32>
      %160 = arith.addf %158, %159 : vector<128x128xf32>
      %c0_75 = arith.constant 0 : index
      %c0_76 = arith.constant 0 : index
      %c0_77 = arith.constant 0 : index
      %161 = vector.load %arg18[%c0_75, %c0_76, %c0_77] : memref<1x128x128xf32, #tpu.memory_space<vmem>>, vector<1x128x128xf32>
      %162 = vector.shape_cast %161 : vector<1x128x128xf32> to vector<128x128xf32>
      %163 = vector.shape_cast %160 : vector<128x128xf32> to vector<1x128x128xf32>
      tpu.vector_store %arg18[%c0_75, %c0_76, %c0_77], %163 {strides = array<i32>} : memref<1x128x128xf32, #tpu.memory_space<vmem>>, vector<1x128x128xf32>,
    } else {
    }
    return
  }
  func.func @transform_0(%arg0: i32, %arg1: i32) -> (i32, i32, i32, i32) {
    %c0_i32 = arith.constant 0 : i32
    %c0_i32_0 = arith.constant 0 : i32
    %c0_i32_1 = arith.constant 0 : i32
    %c0_i32_2 = arith.constant 0 : i32
    return %arg0, %c0_i32, %c0_i32_0, %c0_i32_1 : i32, i32, i32, i32
  }
  func.func @transform_1(%arg0: i32, %arg1: i32) -> (i32, i32, i32) {
    %c0_i32 = arith.constant 0 : i32
    %c0_i32_0 = arith.constant 0 : i32
    %c0_i32_1 = arith.constant 0 : i32
    return %arg0, %c0_i32, %c0_i32_0 : i32, i32, i32
  }
  func.func @transform_2(%arg0: i32, %arg1: i32) -> (i32, i32, i32) {
    %c0_i32 = arith.constant 0 : i32
    %c0_i32_0 = arith.constant 0 : i32
    %c0_i32_1 = arith.constant 0 : i32
    return %arg1, %c0_i32, %c0_i32_0 : i32, i32, i32
  }
  func.func @transform_3(%arg0: i32, %arg1: i32) -> (i32, i32, i32) {
    %c0_i32 = arith.constant 0 : i32
    %c0_i32_0 = arith.constant 0 : i32
    %c0_i32_1 = arith.constant 0 : i32
    return %arg1, %c0_i32, %c0_i32_0 : i32, i32, i32
  }
  func.func @transform_4(%arg0: i32, %arg1: i32) -> (i32, i32, i32) {
    %c0_i32 = arith.constant 0 : i32
    %c0_i32_0 = arith.constant 0 : i32
    %c0_i32_1 = arith.constant 0 : i32
    return %arg1, %c0_i32, %c0_i32_0 : i32, i32, i32
  }
  func.func @transform_5(%arg0: i32, %arg1: i32) -> (i32, i32, i32) {
    %c0_i32 = arith.constant 0 : i32
    %c0_i32_0 = arith.constant 0 : i32
    %c0_i32_1 = arith.constant 0 : i32
    return %arg1, %c0_i32, %c0_i32_0 : i32, i32, i32
  }
  func.func @transform_6(%arg0: i32, %arg1: i32) -> (i32, i32, i32) {
    %c0_i32 = arith.constant 0 : i32
    %c0_i32_0 = arith.constant 0 : i32
    %c0_i32_1 = arith.constant 0 : i32
    return %arg1, %c0_i32, %c0_i32_0 : i32, i32, i32
  }
  func.func @transform_7(%arg0: i32, %arg1: i32) -> (i32, i32, i32) {
    %c0_i32 = arith.constant 0 : i32
    %c0_i32_0 = arith.constant 0 : i32
    %c0_i32_1 = arith.constant 0 : i32
    return %arg1, %c0_i32, %c0_i32_0 : i32, i32, i32
  }
  func.func @transform_8(%arg0: i32, %arg1: i32) -> (i32, i32, i32) {
    %c0_i32 = arith.constant 0 : i32
    %c0_i32_0 = arith.constant 0 : i32
    %c0_i32_1 = arith.constant 0 : i32
    return %arg1, %c0_i32, %c0_i32_0 : i32, i32, i32
  }
  func.func @transform_9(%arg0: i32, %arg1: i32) -> (i32, i32, i32) {
    %c0_i32 = arith.constant 0 : i32
    %c0_i32_0 = arith.constant 0 : i32
    %c0_i32_1 = arith.constant 0 : i32
    return %arg1, %c0_i32, %c0_i32_0 : i32, i32, i32
  }
  func.func @transform_10(%arg0: i32, %arg1: i32) -> (i32, i32, i32) {
    %c0_i32 = arith.constant 0 : i32
    %c0_i32_0 = arith.constant 0 : i32
    %c0_i32_1 = arith.constant 0 : i32
    return %arg1, %c0_i32, %c0_i32_0 : i32, i32, i32
  }
  func.func @transform_11(%arg0: i32, %arg1: i32) -> (i32, i32, i32) {
    %c0_i32 = arith.constant 0 : i32
    %c0_i32_0 = arith.constant 0 : i32
    %c0_i32_1 = arith.constant 0 : i32
    return %arg1, %c0_i32, %c0_i32_0 : i32, i32, i32
  }
  func.func @transform_12(%arg0: i32, %arg1: i32) -> (i32, i32, i32) {
    %c0_i32 = arith.constant 0 : i32
    %c0_i32_0 = arith.constant 0 : i32
    %c0_i32_1 = arith.constant 0 : i32
    return %arg1, %c0_i32, %c0_i32_0 : i32, i32, i32
  }
  func.func @transform_13(%arg0: i32, %arg1: i32) -> (i32, i32, i32) {
    %c0_i32 = arith.constant 0 : i32
    %c0_i32_0 = arith.constant 0 : i32
    %c0_i32_1 = arith.constant 0 : i32
    return %arg1, %c0_i32, %c0_i32_0 : i32, i32, i32
  }
  func.func @transform_14(%arg0: i32, %arg1: i32) -> (i32, i32) {
    %c0_i32 = arith.constant 0 : i32
    %c0_i32_0 = arith.constant 0 : i32
    %c0_i32_1 = arith.constant 0 : i32
    return %c0_i32, %c0_i32_0 : i32, i32
  }
  func.func @transform_15(%arg0: i32, %arg1: i32) -> (i32, i32) {
    %c0_i32 = arith.constant 0 : i32
    %c0_i32_0 = arith.constant 0 : i32
    %c0_i32_1 = arith.constant 0 : i32
    return %c0_i32, %c0_i32_0 : i32, i32
  }
  func.func @transform_16(%arg0: i32, %arg1: i32) -> (i32, i32, i32) {
    %c0_i32 = arith.constant 0 : i32
    %c0_i32_0 = arith.constant 0 : i32
    %c0_i32_1 = arith.constant 0 : i32
    return %arg0, %c0_i32, %c0_i32_0 : i32, i32, i32
  }
}

</mosaic_0001>

<llo_original>
// kernel: tpu_custom_call.1
$region0: #{tpu_custom_call.1}
  #allocation0 [shape = 'u32[]', space=smem, size = 0x4, offset = 0x4, fixed_abs, tag = 'smem constant byte address 0x4 - core index']
  #allocation1 [shape = 'u32[144,128]{1,0:T(1,128)}', space=vmem, size = 0x12000, scoped, tag = 'internal scratch']
  %s0 = inlined_call_operand.hbm [shape: f32[2,1,128,128], index: 0, kind: input, shape index: {}]
  %s1 = inlined_call_operand.hbm [shape: f32[2,128,128], index: 1, kind: input, shape index: {}]
  %s2 = inlined_call_operand.hbm [shape: f32[2,1,128], index: 2, kind: input, shape index: {}]
  %s3 = inlined_call_operand.hbm [shape: f32[2,1,128], index: 3, kind: input, shape index: {}]
  %s4 = inlined_call_operand.hbm [shape: bf16[2,128,384], index: 4, kind: input, shape index: {}]
  %s5 = inlined_call_operand.vmem [shape: f32[2,1,384], index: 5, kind: input, shape index: {}]
  %s6 = inlined_call_operand.hbm [shape: bf16[2,128,128], index: 6, kind: input, shape index: {}]
  %s7 = inlined_call_operand.vmem [shape: f32[2,1,128], index: 7, kind: input, shape index: {}]
  %s8 = inlined_call_operand.vmem [shape: f32[2,1,128], index: 8, kind: input, shape index: {}]
  %s9 = inlined_call_operand.vmem [shape: f32[2,1,128], index: 9, kind: input, shape index: {}]
  %s10 = inlined_call_operand.hbm [shape: bf16[2,128,512], index: 10, kind: input, shape index: {}]
  %s11 = inlined_call_operand.vmem [shape: f32[2,1,512], index: 11, kind: input, shape index: {}]
  %s12 = inlined_call_operand.hbm [shape: bf16[2,512,128], index: 12, kind: input, shape index: {}]
  %s13 = inlined_call_operand.vmem [shape: f32[2,1,128], index: 13, kind: input, shape index: {}]
  %s14 = inlined_call_operand.vmem [shape: f32[1,128], index: 14, kind: input, shape index: {}]
  %s15 = inlined_call_operand.vmem [shape: f32[1,128], index: 15, kind: input, shape index: {}]
  %s16 = inlined_call_operand.hbm [shape: f32[2,128,128], index: 16, kind: output, shape index: {}]
  %s17 = sld [smem:[#allocation0]]
  $region141: #{tpu_custom_call.1} parent=0
    _
  %s19 = ssub.s32 1, %s17
  %s20 = scalar_select 0, %s19, %s17
  $region1: #{tpu_custom_call.1} parent=0
    #allocation2 [shape = 'u8[131072]{0}', space=vmem, size = 0x20000, scoped, tag = 'input window, operand 0']
    #allocation3 [shape = 's32[2]{0}', space=sflag, size = 0x8, scoped, tag = 'scoped memory for tpu_custom_call.1']
    #allocation4 [shape = 's32[2]{0}', space=sflag, size = 0x8, scoped, tag = 'scoped memory for tpu_custom_call.1']
    #allocation5 [shape = 'u8[131072]{0}', space=vmem, size = 0x20000, scoped, tag = 'input window, operand 1']
    #allocation6 [shape = 's32[2]{0}', space=sflag, size = 0x8, scoped, tag = 'scoped memory for tpu_custom_call.1']
    #allocation7 [shape = 'u8[1024]{0}', space=vmem, size = 0x400, scoped, tag = 'input window, operand 2']
    #allocation8 [shape = 'u8[1024]{0}', space=vmem, size = 0x400, scoped, tag = 'input window, operand 3']
    #allocation9 [shape = 's32[2]{0}', space=sflag, size = 0x8, scoped, tag = 'scoped memory for tpu_custom_call.1']
    #allocation10 [shape = 'u8[196608]{0}', space=vmem, size = 0x30000, scoped, tag = 'input window, operand 4']
    #allocation11 [shape = 'u8[65536]{0}', space=vmem, size = 0x10000, scoped, tag = 'input window, operand 6']
    #allocation12 [shape = 's32[2]{0}', space=sflag, size = 0x8, scoped, tag = 'scoped memory for tpu_custom_call.1']
    #allocation13 [shape = 'u8[262144]{0}', space=vmem, size = 0x40000, scoped, tag = 'input window, operand 10']
    #allocation14 [shape = 'u8[262144]{0}', space=vmem, size = 0x40000, scoped, tag = 'input window, operand 12']
    #allocation15 [shape = 's32[2]{0}', space=sflag, size = 0x8, scoped, tag = 'scoped memory for tpu_custom_call.1']
    #allocation16 [shape = 'u8[131072]{0}', space=vmem, size = 0x20000, scoped, tag = 'output window, operand 0']
    %21 = vsyncpa [#allocation3], 0
    %s22 = scalar_lea.sflag [#allocation3], 1
    %23 = vsyncpa %s22, 0
    %24 = vsyncpa [#allocation6], 0
    %s25 = scalar_lea.sflag [#allocation6], 1
    %26 = vsyncpa %s25, 0
    %27 = vsyncpa [#allocation9], 0
    %s28 = scalar_lea.sflag [#allocation9], 1
    %29 = vsyncpa %s28, 0
    %30 = vsyncpa [#allocation12], 0
    %s31 = scalar_lea.sflag [#allocation12], 1
    %32 = vsyncpa %s31, 0
    %33 = vsyncpa [#allocation15], 0
    %s34 = scalar_lea.sflag [#allocation15], 1
    %35 = vsyncpa %s34, 0
    %36 = vsyncpa [#allocation4], 0
    %s37 = scalar_lea.sflag [#allocation4], 1
    %38 = vsyncpa %s37, 0
    loop: start=0, step=1, limit=6
    $region2: #{tpu_custom_call.1} parent=1 // loop_pre_header
      _
    $region3: #{tpu_custom_call.1} parent=1 // loop_header
      %s40 = sphi 0, %s44
      %p41 = scmp.ge.s32.totalorder %s40, 6
      %s47 = sphi 0, %s59
      %s48 = sphi 0, %s55
      %s49 = sphi 0, %s47
      %s50 = sphi 0, %s48
      %s51 = sphi 0, %s49
      %s52 = sphi 0, %s50
      %s62 = sphi 0, %s64
      %s65 = sphi 0, %s62
      %s66 = sphi 0, %s65
      %s82 = sphi 0, %s66
      %s88 = sphi 0, %s90
      %s91 = sphi 0, %s88
      %s92 = sphi 0, %s91
      %s108 = sphi 0, %s92
      %s114 = sphi 0, %s116
      %s117 = sphi 0, %s114
      %s118 = sphi 0, %s117
      %s134 = sphi 0, %s118
      %s140 = sphi 0, %s142
      %s143 = sphi 0, %s140
      %s144 = sphi 0, %s143
      %s160 = sphi 0, %s144
      %s166 = sphi 0, %s168
      %s169 = sphi 0, %s166
      %s170 = sphi 0, %s169
      %s186 = sphi 0, %s170
      %s192 = sphi 0, %s194
      %s195 = sphi 0, %s192
      %s196 = sphi 0, %s195
      %s212 = sphi 0, %s196
      %s218 = sphi 0, %s220
      %s221 = sphi 0, %s218
      %s222 = sphi 0, %s221
      %s238 = sphi 0, %s222
      %s244 = sphi 0, %s246
      %s247 = sphi 0, %s244
      %s248 = sphi 0, %s247
      %s264 = sphi 0, %s248
      %s270 = sphi 0, %s272
      %s273 = sphi 0, %s270
      %s274 = sphi 0, %s273
      %s290 = sphi 0, %s274
      %s296 = sphi 0, %s298
      %s299 = sphi 0, %s296
      %s300 = sphi 0, %s299
      %s316 = sphi 0, %s300
      %s322 = sphi 0, %s324
      %s325 = sphi 0, %s322
      %s326 = sphi 0, %s325
      %s342 = sphi 0, %s326
      %s348 = sphi 0, %s350
      %s351 = sphi 0, %s348
      %s352 = sphi 0, %s351
      %s368 = sphi 0, %s352
      %s374 = sphi 0, %s376
      %s377 = sphi 0, %s374
      %s378 = sphi 0, %s377
      %s394 = sphi 0, %s378
      %s400 = sphi 0, %s402
      %s403 = sphi 0, %s400
      %s404 = sphi 0, %s403
      %s420 = sphi 0, %s404
      %s424 = sphi 0, %s424
      %s426 = sphi 0, %s424
      %s427 = sphi 0, %s426
      %s441 = sphi 0, %s427
      %s445 = sphi 0, %s445
      %s447 = sphi 0, %s445
      %s448 = sphi 0, %s447
      %s462 = sphi 0, %s448
      %s468 = sphi 0, %s470
      %s471 = sphi 0, %s468
      %s472 = sphi 0, %s471
      %s488 = sphi 0, %s472
    $region4: #{tpu_custom_call.1} parent=1 // loop_header_branch
      %43 = sbr.rel (%p41) target = $region8
    $region5: #{tpu_custom_call.1} parent=1 // loop_body
      %s45 = ssub.s32 %s40, 1
      %s46 = ssub.s32 %s40, 2
      %s53 = sadd.s32 1, %s48
      %p54 = scmp.ge.s32.totalorder %s53, 2
      %s55 = scalar_select %p54, 0, %s53
      %s56 = sadd.s32 1, %s47
      %s57 = scalar_select %p54, %s56, %s47
      %p58 = scmp.ge.s32.totalorder %s57, 2
      %s59 = scalar_select %p58, 0, %s57
      %s60 = ssub.s32 %s47, %s59
      %p61 = scmp.eq.s32.totalorder %s60, 0
      %s63 = sadd.s32 %s62, 1
      %s64 = scalar_select %p61, %s62, %s63
      %p67 = pneg %p61
      %p68 = scmp.eq.s32.totalorder %s40, 3
      %p69 = por %p67, %p68
      %p70 = scmp.ne.s32.totalorder %s62, %s65
      %p71 = scmp.eq.s32.totalorder %s40, 0
      %p72 = por %p70, %p71
      %p73 = scmp.ne.s32.totalorder %s62, %s65
      %p74 = scmp.eq.s32.totalorder %s45, 3
      %p75 = por %p73, %p74
      %p76 = scmp.ne.s32.totalorder %s65, %s66
      %p77 = scmp.eq.s32.totalorder %s45, 0
      %p78 = por %p76, %p77
      %p79 = scmp.ne.s32.totalorder %s65, %s66
      %p80 = scmp.eq.s32.totalorder %s46, 3
      %p81 = por %p79, %p80
      %p83 = scmp.ne.s32.totalorder %s66, %s82
      %p84 = scmp.eq.s32.totalorder %s46, 0
      %p85 = por %p83, %p84
      %s86 = ssub.s32 %s47, %s59
      %p87 = scmp.eq.s32.totalorder %s86, 0
      %s89 = sadd.s32 %s88, 1
      %s90 = scalar_select %p87, %s88, %s89
      %p93 = pneg %p87
      %p94 = scmp.eq.s32.totalorder %s40, 3
      %p95 = por %p93, %p94
      %p96 = scmp.ne.s32.totalorder %s88, %s91
      %p97 = scmp.eq.s32.totalorder %s40, 0
      %p98 = por %p96, %p97
      %p99 = scmp.ne.s32.totalorder %s88, %s91
      %p100 = scmp.eq.s32.totalorder %s45, 3
      %p101 = por %p99, %p100
      %p102 = scmp.ne.s32.totalorder %s91, %s92
      %p103 = scmp.eq.s32.totalorder %s45, 0
      %p104 = por %p102, %p103
      %p105 = scmp.ne.s32.totalorder %s91, %s92
      %p106 = scmp.eq.s32.totalorder %s46, 3
      %p107 = por %p105, %p106
      %p109 = scmp.ne.s32.totalorder %s92, %s108
      %p110 = scmp.eq.s32.totalorder %s46, 0
      %p111 = por %p109, %p110
      %s112 = ssub.s32 %s48, %s55
      %p113 = scmp.eq.s32.totalorder %s112, 0
      %s115 = sadd.s32 %s114, 1
      %s116 = scalar_select %p113, %s114, %s115
      %p119 = pneg %p113
      %p120 = scmp.eq.s32.totalorder %s40, 3
      %p121 = por %p119, %p120
      %p122 = scmp.ne.s32.totalorder %s114, %s117
      %p123 = scmp.eq.s32.totalorder %s40, 0
      %p124 = por %p122, %p123
      %p125 = scmp.ne.s32.totalorder %s114, %s117
      %p126 = scmp.eq.s32.totalorder %s45, 3
      %p127 = por %p125, %p126
      %p128 = scmp.ne.s32.totalorder %s117, %s118
      %p129 = scmp.eq.s32.totalorder %s45, 0
      %p130 = por %p128, %p129
      %p131 = scmp.ne.s32.totalorder %s117, %s118
      %p132 = scmp.eq.s32.totalorder %s46, 3
      %p133 = por %p131, %p132
      %p135 = scmp.ne.s32.totalorder %s118, %s134
      %p136 = scmp.eq.s32.totalorder %s46, 0
      %p137 = por %p135, %p136
      %s138 = ssub.s32 %s48, %s55
      %p139 = scmp.eq.s32.totalorder %s138, 0
      %s141 = sadd.s32 %s140, 1
      %s142 = scalar_select %p139, %s140, %s141
      %p145 = pneg %p139
      %p146 = scmp.eq.s32.totalorder %s40, 3
      %p147 = por %p145, %p146
      %p148 = scmp.ne.s32.totalorder %s140, %s143
      %p149 = scmp.eq.s32.totalorder %s40, 0
      %p150 = por %p148, %p149
      %p151 = scmp.ne.s32.totalorder %s140, %s143
      %p152 = scmp.eq.s32.totalorder %s45, 3
      %p153 = por %p151, %p152
      %p154 = scmp.ne.s32.totalorder %s143, %s144
      %p155 = scmp.eq.s32.totalorder %s45, 0
      %p156 = por %p154, %p155
      %p157 = scmp.ne.s32.totalorder %s143, %s144
      %p158 = scmp.eq.s32.totalorder %s46, 3
      %p159 = por %p157, %p158
      %p161 = scmp.ne.s32.totalorder %s144, %s160
      %p162 = scmp.eq.s32.totalorder %s46, 0
      %p163 = por %p161, %p162
      %s164 = ssub.s32 %s48, %s55
      %p165 = scmp.eq.s32.totalorder %s164, 0
      %s167 = sadd.s32 %s166, 1
      %s168 = scalar_select %p165, %s166, %s167
      %p171 = pneg %p165
      %p172 = scmp.eq.s32.totalorder %s40, 3
      %p173 = por %p171, %p172
      %p174 = scmp.ne.s32.totalorder %s166, %s169
      %p175 = scmp.eq.s32.totalorder %s40, 0
      %p176 = por %p174, %p175
      %p177 = scmp.ne.s32.totalorder %s166, %s169
      %p178 = scmp.eq.s32.totalorder %s45, 3
      %p179 = por %p177, %p178
      %p180 = scmp.ne.s32.totalorder %s169, %s170
      %p181 = scmp.eq.s32.totalorder %s45, 0
      %p182 = por %p180, %p181
      %p183 = scmp.ne.s32.totalorder %s169, %s170
      %p184 = scmp.eq.s32.totalorder %s46, 3
      %p185 = por %p183, %p184
      %p187 = scmp.ne.s32.totalorder %s170, %s186
      %p188 = scmp.eq.s32.totalorder %s46, 0
      %p189 = por %p187, %p188
      %s190 = ssub.s32 %s48, %s55
      %p191 = scmp.eq.s32.totalorder %s190, 0
      %s193 = sadd.s32 %s192, 1
      %s194 = scalar_select %p191, %s192, %s193
      %p197 = pneg %p191
      %p198 = scmp.eq.s32.totalorder %s40, 3
      %p199 = por %p197, %p198
      %p200 = scmp.ne.s32.totalorder %s192, %s195
      %p201 = scmp.eq.s32.totalorder %s40, 0
      %p202 = por %p200, %p201
      %p203 = scmp.ne.s32.totalorder %s192, %s195
      %p204 = scmp.eq.s32.totalorder %s45, 3
      %p205 = por %p203, %p204
      %p206 = scmp.ne.s32.totalorder %s195, %s196
      %p207 = scmp.eq.s32.totalorder %s45, 0
      %p208 = por %p206, %p207
      %p209 = scmp.ne.s32.totalorder %s195, %s196
      %p210 = scmp.eq.s32.totalorder %s46, 3
      %p211 = por %p209, %p210
      %p213 = scmp.ne.s32.totalorder %s196, %s212
      %p214 = scmp.eq.s32.totalorder %s46, 0
      %p215 = por %p213, %p214
      %s216 = ssub.s32 %s48, %s55
      %p217 = scmp.eq.s32.totalorder %s216, 0
      %s219 = sadd.s32 %s218, 1
      %s220 = scalar_select %p217, %s218, %s219
      %p223 = pneg %p217
      %p224 = scmp.eq.s32.totalorder %s40, 3
      %p225 = por %p223, %p224
      %p226 = scmp.ne.s32.totalorder %s218, %s221
      %p227 = scmp.eq.s32.totalorder %s40, 0
      %p228 = por %p226, %p227
      %p229 = scmp.ne.s32.totalorder %s218, %s221
      %p230 = scmp.eq.s32.totalorder %s45, 3
      %p231 = por %p229, %p230
      %p232 = scmp.ne.s32.totalorder %s221, %s222
      %p233 = scmp.eq.s32.totalorder %s45, 0
      %p234 = por %p232, %p233
      %p235 = scmp.ne.s32.totalorder %s221, %s222
      %p236 = scmp.eq.s32.totalorder %s46, 3
      %p237 = por %p235, %p236
      %p239 = scmp.ne.s32.totalorder %s222, %s238
      %p240 = scmp.eq.s32.totalorder %s46, 0
      %p241 = por %p239, %p240
      %s242 = ssub.s32 %s48, %s55
      %p243 = scmp.eq.s32.totalorder %s242, 0
      %s245 = sadd.s32 %s244, 1
      %s246 = scalar_select %p243, %s244, %s245
      %p249 = pneg %p243
      %p250 = scmp.eq.s32.totalorder %s40, 3
      %p251 = por %p249, %p250
      %p252 = scmp.ne.s32.totalorder %s244, %s247
      %p253 = scmp.eq.s32.totalorder %s40, 0
      %p254 = por %p252, %p253
      %p255 = scmp.ne.s32.totalorder %s244, %s247
      %p256 = scmp.eq.s32.totalorder %s45, 3
      %p257 = por %p255, %p256
      %p258 = scmp.ne.s32.totalorder %s247, %s248
      %p259 = scmp.eq.s32.totalorder %s45, 0
      %p260 = por %p258, %p259
      %p261 = scmp.ne.s32.totalorder %s247, %s248
      %p262 = scmp.eq.s32.totalorder %s46, 3
      %p263 = por %p261, %p262
      %p265 = scmp.ne.s32.totalorder %s248, %s264
      %p266 = scmp.eq.s32.totalorder %s46, 0
      %p267 = por %p265, %p266
      %s268 = ssub.s32 %s48, %s55
      %p269 = scmp.eq.s32.totalorder %s268, 0
      %s271 = sadd.s32 %s270, 1
      %s272 = scalar_select %p269, %s270, %s271
      %p275 = pneg %p269
      %p276 = scmp.eq.s32.totalorder %s40, 3
      %p277 = por %p275, %p276
      %p278 = scmp.ne.s32.totalorder %s270, %s273
      %p279 = scmp.eq.s32.totalorder %s40, 0
      %p280 = por %p278, %p279
      %p281 = scmp.ne.s32.totalorder %s270, %s273
      %p282 = scmp.eq.s32.totalorder %s45, 3
      %p283 = por %p281, %p282
      %p284 = scmp.ne.s32.totalorder %s273, %s274
      %p285 = scmp.eq.s32.totalorder %s45, 0
      %p286 = por %p284, %p285
      %p287 = scmp.ne.s32.totalorder %s273, %s274
      %p288 = scmp.eq.s32.totalorder %s46, 3
      %p289 = por %p287, %p288
      %p291 = scmp.ne.s32.totalorder %s274, %s290
      %p292 = scmp.eq.s32.totalorder %s46, 0
      %p293 = por %p291, %p292
      %s294 = ssub.s32 %s48, %s55
      %p295 = scmp.eq.s32.totalorder %s294, 0
      %s297 = sadd.s32 %s296, 1
      %s298 = scalar_select %p295, %s296, %s297
      %p301 = pneg %p295
      %p302 = scmp.eq.s32.totalorder %s40, 3
      %p303 = por %p301, %p302
      %p304 = scmp.ne.s32.totalorder %s296, %s299
      %p305 = scmp.eq.s32.totalorder %s40, 0
      %p306 = por %p304, %p305
      %p307 = scmp.ne.s32.totalorder %s296, %s299
      %p308 = scmp.eq.s32.totalorder %s45, 3
      %p309 = por %p307, %p308
      %p310 = scmp.ne.s32.totalorder %s299, %s300
      %p311 = scmp.eq.s32.totalorder %s45, 0
      %p312 = por %p310, %p311
      %p313 = scmp.ne.s32.totalorder %s299, %s300
      %p314 = scmp.eq.s32.totalorder %s46, 3
      %p315 = por %p313, %p314
      %p317 = scmp.ne.s32.totalorder %s300, %s316
      %p318 = scmp.eq.s32.totalorder %s46, 0
      %p319 = por %p317, %p318
      %s320 = ssub.s32 %s48, %s55
      %p321 = scmp.eq.s32.totalorder %s320, 0
      %s323 = sadd.s32 %s322, 1
      %s324 = scalar_select %p321, %s322, %s323
      %p327 = pneg %p321
      %p328 = scmp.eq.s32.totalorder %s40, 3
      %p329 = por %p327, %p328
      %p330 = scmp.ne.s32.totalorder %s322, %s325
      %p331 = scmp.eq.s32.totalorder %s40, 0
      %p332 = por %p330, %p331
      %p333 = scmp.ne.s32.totalorder %s322, %s325
      %p334 = scmp.eq.s32.totalorder %s45, 3
      %p335 = por %p333, %p334
      %p336 = scmp.ne.s32.totalorder %s325, %s326
      %p337 = scmp.eq.s32.totalorder %s45, 0
      %p338 = por %p336, %p337
      %p339 = scmp.ne.s32.totalorder %s325, %s326
      %p340 = scmp.eq.s32.totalorder %s46, 3
      %p341 = por %p339, %p340
      %p343 = scmp.ne.s32.totalorder %s326, %s342
      %p344 = scmp.eq.s32.totalorder %s46, 0
      %p345 = por %p343, %p344
      %s346 = ssub.s32 %s48, %s55
      %p347 = scmp.eq.s32.totalorder %s346, 0
      %s349 = sadd.s32 %s348, 1
      %s350 = scalar_select %p347, %s348, %s349
      %p353 = pneg %p347
      %p354 = scmp.eq.s32.totalorder %s40, 3
      %p355 = por %p353, %p354
      %p356 = scmp.ne.s32.totalorder %s348, %s351
      %p357 = scmp.eq.s32.totalorder %s40, 0
      %p358 = por %p356, %p357
      %p359 = scmp.ne.s32.totalorder %s348, %s351
      %p360 = scmp.eq.s32.totalorder %s45, 3
      %p361 = por %p359, %p360
      %p362 = scmp.ne.s32.totalorder %s351, %s352
      %p363 = scmp.eq.s32.totalorder %s45, 0
      %p364 = por %p362, %p363
      %p365 = scmp.ne.s32.totalorder %s351, %s352
      %p366 = scmp.eq.s32.totalorder %s46, 3
      %p367 = por %p365, %p366
      %p369 = scmp.ne.s32.totalorder %s352, %s368
      %p370 = scmp.eq.s32.totalorder %s46, 0
      %p371 = por %p369, %p370
      %s372 = ssub.s32 %s48, %s55
      %p373 = scmp.eq.s32.totalorder %s372, 0
      %s375 = sadd.s32 %s374, 1
      %s376 = scalar_select %p373, %s374, %s375
      %p379 = pneg %p373
      %p380 = scmp.eq.s32.totalorder %s40, 3
      %p381 = por %p379, %p380
      %p382 = scmp.ne.s32.totalorder %s374, %s377
      %p383 = scmp.eq.s32.totalorder %s40, 0
      %p384 = por %p382, %p383
      %p385 = scmp.ne.s32.totalorder %s374, %s377
      %p386 = scmp.eq.s32.totalorder %s45, 3
      %p387 = por %p385, %p386
      %p388 = scmp.ne.s32.totalorder %s377, %s378
      %p389 = scmp.eq.s32.totalorder %s45, 0
      %p390 = por %p388, %p389
      %p391 = scmp.ne.s32.totalorder %s377, %s378
      %p392 = scmp.eq.s32.totalorder %s46, 3
      %p393 = por %p391, %p392
      %p395 = scmp.ne.s32.totalorder %s378, %s394
      %p396 = scmp.eq.s32.totalorder %s46, 0
      %p397 = por %p395, %p396
      %s398 = ssub.s32 %s48, %s55
      %p399 = scmp.eq.s32.totalorder %s398, 0
      %s401 = sadd.s32 %s400, 1
      %s402 = scalar_select %p399, %s400, %s401
      %p405 = pneg %p399
      %p406 = scmp.eq.s32.totalorder %s40, 3
      %p407 = por %p405, %p406
      %p408 = scmp.ne.s32.totalorder %s400, %s403
      %p409 = scmp.eq.s32.totalorder %s40, 0
      %p410 = por %p408, %p409
      %p411 = scmp.ne.s32.totalorder %s400, %s403
      %p412 = scmp.eq.s32.totalorder %s45, 3
      %p413 = por %p411, %p412
      %p414 = scmp.ne.s32.totalorder %s403, %s404
      %p415 = scmp.eq.s32.totalorder %s45, 0
      %p416 = por %p414, %p415
      %p417 = scmp.ne.s32.totalorder %s403, %s404
      %p418 = scmp.eq.s32.totalorder %s46, 3
      %p419 = por %p417, %p418
      %p421 = scmp.ne.s32.totalorder %s404, %s420
      %p422 = scmp.eq.s32.totalorder %s46, 0
      %p423 = por %p421, %p422
      %s425 = sadd.s32 %s424, 1
      %p428 = scmp.eq.s32.totalorder %s40, 3
      %p429 = scmp.ne.s32.totalorder %s424, %s426
      %p430 = scmp.eq.s32.totalorder %s40, 0
      %p431 = por %p429, %p430
      %p432 = scmp.ne.s32.totalorder %s424, %s426
      %p433 = scmp.eq.s32.totalorder %s45, 3
      %p434 = por %p432, %p433
      %p435 = scmp.ne.s32.totalorder %s426, %s427
      %p436 = scmp.eq.s32.totalorder %s45, 0
      %p437 = por %p435, %p436
      %p438 = scmp.ne.s32.totalorder %s426, %s427
      %p439 = scmp.eq.s32.totalorder %s46, 3
      %p440 = por %p438, %p439
      %p442 = scmp.ne.s32.totalorder %s427, %s441
      %p443 = scmp.eq.s32.totalorder %s46, 0
      %p444 = por %p442, %p443
      %s446 = sadd.s32 %s445, 1
      %p449 = scmp.eq.s32.totalorder %s40, 3
      %p450 = scmp.ne.s32.totalorder %s445, %s447
      %p451 = scmp.eq.s32.totalorder %s40, 0
      %p452 = por %p450, %p451
      %p453 = scmp.ne.s32.totalorder %s445, %s447
      %p454 = scmp.eq.s32.totalorder %s45, 3
      %p455 = por %p453, %p454
      %p456 = scmp.ne.s32.totalorder %s447, %s448
      %p457 = scmp.eq.s32.totalorder %s45, 0
      %p458 = por %p456, %p457
      %p459 = scmp.ne.s32.totalorder %s447, %s448
      %p460 = scmp.eq.s32.totalorder %s46, 3
      %p461 = por %p459, %p460
      %p463 = scmp.ne.s32.totalorder %s448, %s462
      %p464 = scmp.eq.s32.totalorder %s46, 0
      %p465 = por %p463, %p464
      %s466 = ssub.s32 %s47, %s59
      %p467 = scmp.eq.s32.totalorder %s466, 0
      %s469 = sadd.s32 %s468, 1
      %s470 = scalar_select %p467, %s468, %s469
      %p473 = pneg %p467
      %p474 = scmp.eq.s32.totalorder %s40, 3
      %p475 = por %p473, %p474
      %p476 = scmp.ne.s32.totalorder %s468, %s471
      %p477 = scmp.eq.s32.totalorder %s40, 0
      %p478 = por %p476, %p477
      %p479 = scmp.ne.s32.totalorder %s468, %s471
      %p480 = scmp.eq.s32.totalorder %s45, 3
      %p481 = por %p479, %p480
      %p482 = scmp.ne.s32.totalorder %s471, %s472
      %p483 = scmp.eq.s32.totalorder %s45, 0
      %p484 = por %p482, %p483
      %p485 = scmp.ne.s32.totalorder %s471, %s472
      %p486 = scmp.eq.s32.totalorder %s46, 3
      %p487 = por %p485, %p486
      %p489 = scmp.ne.s32.totalorder %s472, %s488
      %p490 = scmp.eq.s32.totalorder %s46, 0
      %p491 = por %p489, %p490
      %p492 = scmp.le.s32.totalorder 1, %s40
      %p493 = scmp.lt.s32.totalorder %s40, 5
      %p494 = pnand %p492, %p493
      %p495 = pneg %p494
      // Predicated region
      $region9: #{tpu_custom_call.1} parent=5 // pred_check
        _
      $region10: #{tpu_custom_call.1} parent=5 // pred_check_branch
        %497 = sbr.rel (%p494) target = $region12
      $region11: #{tpu_custom_call.1} parent=5 // pred_region
        %s498 = ssub.s32 %s40, 1
        // Predicated region
        $region13: #{tpu_custom_call.1} parent=11 // pred_check
          %p499 = pneg %p437
        $region14: #{tpu_custom_call.1} parent=11 // pred_check_branch
          %501 = sbr.rel (%p499) target = $region16
        $region15: #{tpu_custom_call.1} parent=11 // pred_region
          _
        $region16: #{tpu_custom_call.1} parent=11 // pred_fallthru
          _
        // Predicated region
        $region17: #{tpu_custom_call.1} parent=11 // pred_check
          %p502 = pneg %p458
        $region18: #{tpu_custom_call.1} parent=11 // pred_check_branch
          %504 = sbr.rel (%p502) target = $region20
        $region19: #{tpu_custom_call.1} parent=11 // pred_region
          _
        $region20: #{tpu_custom_call.1} parent=11 // pred_fallthru
          _
      $region12: #{tpu_custom_call.1} parent=5 // pred_fallthru
        _
      %p505 = scmp.lt.s32.totalorder %s40, 4
      // Predicated region
      $region21: #{tpu_custom_call.1} parent=5 // pred_check
        %p506 = pneg %p505
      $region22: #{tpu_custom_call.1} parent=5 // pred_check_branch
        %508 = sbr.rel (%p506) target = $region24
      $region23: #{tpu_custom_call.1} parent=5 // pred_region
        // Predicated region
        $region25: #{tpu_custom_call.1} parent=23 // pred_check
          %p509 = pneg %p72
        $region26: #{tpu_custom_call.1} parent=23 // pred_check_branch
          %511 = sbr.rel (%p509) target = $region28
        $region27: #{tpu_custom_call.1} parent=23 // pred_region
          %s512 = sand.u32 %s62, 1
          %s513 = scalar_lea.sflag [#allocation3], %s512
          %s514 = sand.u32 %s62, 1
          %s515 = smul.addr %s514, 128
          %s516 = scalar_lea.vmem [#allocation2], %s515
          %s518 = ssub.s32 2048, 2048
          %519 = vsyncadd %s513, %s518
          %s520 = smul.addr %s47, 16
          %s521 = smul.addr %s520, 128
          %s522 = scalar_lea.hbm %s0, %s521
          %s523 = sshll.u32 %s516, 4
          %s524 = int_to_ptr.vmem [resolvable:$true] %s523
          %529 = dma.hbm_to_vmem [thread:$0]  %s522, 2048, %s524, %s513, 128, 128, 8
        $region28: #{tpu_custom_call.1} parent=23 // pred_fallthru
          _
        // Predicated region
        $region29: #{tpu_custom_call.1} parent=23 // pred_check
          %p530 = pneg %p98
        $region30: #{tpu_custom_call.1} parent=23 // pred_check_branch
          %532 = sbr.rel (%p530) target = $region32
        $region31: #{tpu_custom_call.1} parent=23 // pred_region
          %s533 = sand.u32 %s40, 1
          %s534 = scalar_lea.sflag [#allocation6], %s533
          %s535 = sand.u32 %s88, 1
          %s536 = smul.addr %s535, 128
          %s537 = scalar_lea.vmem [#allocation5], %s536
          %s539 = ssub.s32 2048, 2048
          %540 = vsyncadd %s534, %s539
          %s541 = smul.addr %s47, 16
          %s542 = smul.addr %s541, 128
          %s543 = scalar_lea.hbm %s1, %s542
          %s544 = sshll.u32 %s537, 4
          %s545 = int_to_ptr.vmem [resolvable:$true] %s544
          %550 = dma.hbm_to_vmem [thread:$0]  %s543, 2048, %s545, %s534, 128, 128, 8
        $region32: #{tpu_custom_call.1} parent=23 // pred_fallthru
          _
        // Predicated region
        $region33: #{tpu_custom_call.1} parent=23 // pred_check
          %p551 = pneg %p124
        $region34: #{tpu_custom_call.1} parent=23 // pred_check_branch
          %553 = sbr.rel (%p551) target = $region36
        $region35: #{tpu_custom_call.1} parent=23 // pred_region
          %s554 = sand.u32 %s40, 1
          %s555 = scalar_lea.sflag [#allocation6], %s554
          %s556 = sand.u32 %s114, 1
          %s557 = scalar_lea.vmem [#allocation7], %s556
          %s559 = ssub.s32 16, 16
          %560 = vsyncadd %s555, %s559
          %s561 = smul.addr %s48, 16
          %s562 = scalar_lea.hbm %s2, %s561
          %s564 = sshll.u32 %s557, 4
          %s565 = int_to_ptr.vmem [resolvable:$true] %s564
          %567 = dma.hbm_to_vmem [thread:$0]  %s562, 16, %s565, %s555
        $region36: #{tpu_custom_call.1} parent=23 // pred_fallthru
          _
        // Predicated region
        $region37: #{tpu_custom_call.1} parent=23 // pred_check
          %p568 = pneg %p150
        $region38: #{tpu_custom_call.1} parent=23 // pred_check_branch
          %570 = sbr.rel (%p568) target = $region40
        $region39: #{tpu_custom_call.1} parent=23 // pred_region
          %s571 = sand.u32 %s40, 1
          %s572 = scalar_lea.sflag [#allocation9], %s571
          %s573 = sand.u32 %s140, 1
          %s574 = scalar_lea.vmem [#allocation8], %s573
          %s576 = ssub.s32 16, 16
          %577 = vsyncadd %s572, %s576
          %s578 = smul.addr %s48, 16
          %s579 = scalar_lea.hbm %s3, %s578
          %s581 = sshll.u32 %s574, 4
          %s582 = int_to_ptr.vmem [resolvable:$true] %s581
          %584 = dma.hbm_to_vmem [thread:$0]  %s579, 16, %s582, %s572
        $region40: #{tpu_custom_call.1} parent=23 // pred_fallthru
          _
        // Predicated region
        $region41: #{tpu_custom_call.1} parent=23 // pred_check
          %p585 = pneg %p176
        $region42: #{tpu_custom_call.1} parent=23 // pred_check_branch
          %587 = sbr.rel (%p585) target = $region44
        $region43: #{tpu_custom_call.1} parent=23 // pred_region
          %s588 = sand.u32 %s40, 1
          %s589 = scalar_lea.sflag [#allocation9], %s588
          %s590 = sand.u32 %s166, 1
          %s591 = smul.addr %s590, 192
          %s592 = scalar_lea.vmem [#allocation10], %s591
          %s594 = ssub.s32 3072, 3072
          %595 = vsyncadd %s589, %s594
          %s596 = smul.addr %s48, 48
          %s597 = smul.addr %s596, 64
          %s598 = scalar_lea.hbm %s4, %s597
          %s599 = sshll.u32 %s592, 4
          %s600 = int_to_ptr.vmem [resolvable:$true] %s599
          %605 = dma.hbm_to_vmem [thread:$0]  %s598, 3072, %s600, %s589, 192, 192, 12
        $region44: #{tpu_custom_call.1} parent=23 // pred_fallthru
          _
        // Predicated region
        $region45: #{tpu_custom_call.1} parent=23 // pred_check
          %p606 = pneg %p202
        $region46: #{tpu_custom_call.1} parent=23 // pred_check_branch
          %608 = sbr.rel (%p606) target = $region48
        $region47: #{tpu_custom_call.1} parent=23 // pred_region
          %p609 = scmp.lt.s32.totalorder %s48, 1
          %s610 = scalar_select %p609, %s48, 1
          %s611 = smul.addr %s610, 3
          %s612 = scalar_lea.vmem %s5, %s611
        $region48: #{tpu_custom_call.1} parent=23 // pred_fallthru
          _
        // Predicated region
        $region49: #{tpu_custom_call.1} parent=23 // pred_check
          %p613 = pneg %p228
        $region50: #{tpu_custom_call.1} parent=23 // pred_check_branch
          %615 = sbr.rel (%p613) target = $region52
        $region51: #{tpu_custom_call.1} parent=23 // pred_region
          %s616 = sand.u32 %s40, 1
          %s617 = scalar_lea.sflag [#allocation12], %s616
          %s618 = sand.u32 %s218, 1
          %s619 = smul.addr %s618, 64
          %s620 = scalar_lea.vmem [#allocation11], %s619
          %s622 = ssub.s32 1024, 1024
          %623 = vsyncadd %s617, %s622
          %s624 = smul.addr %s48, 16
          %s625 = smul.addr %s624, 64
          %s626 = scalar_lea.hbm %s6, %s625
          %s627 = sshll.u32 %s620, 4
          %s628 = int_to_ptr.vmem [resolvable:$true] %s627
          %633 = dma.hbm_to_vmem [thread:$0]  %s626, 1024, %s628, %s617, 64, 64, 4
        $region52: #{tpu_custom_call.1} parent=23 // pred_fallthru
          _
        // Predicated region
        $region53: #{tpu_custom_call.1} parent=23 // pred_check
          %p634 = pneg %p254
        $region54: #{tpu_custom_call.1} parent=23 // pred_check_branch
          %636 = sbr.rel (%p634) target = $region56
        $region55: #{tpu_custom_call.1} parent=23 // pred_region
          %p637 = scmp.lt.s32.totalorder %s48, 1
          %s638 = scalar_select %p637, %s48, 1
          %s639 = scalar_lea.vmem %s7, %s638
        $region56: #{tpu_custom_call.1} parent=23 // pred_fallthru
          _
        // Predicated region
        $region57: #{tpu_custom_call.1} parent=23 // pred_check
          %p640 = pneg %p280
        $region58: #{tpu_custom_call.1} parent=23 // pred_check_branch
          %642 = sbr.rel (%p640) target = $region60
        $region59: #{tpu_custom_call.1} parent=23 // pred_region
          %p643 = scmp.lt.s32.totalorder %s48, 1
          %s644 = scalar_select %p643, %s48, 1
          %s645 = scalar_lea.vmem %s8, %s644
        $region60: #{tpu_custom_call.1} parent=23 // pred_fallthru
          _
        // Predicated region
        $region61: #{tpu_custom_call.1} parent=23 // pred_check
          %p646 = pneg %p306
        $region62: #{tpu_custom_call.1} parent=23 // pred_check_branch
          %648 = sbr.rel (%p646) target = $region64
        $region63: #{tpu_custom_call.1} parent=23 // pred_region
          %p649 = scmp.lt.s32.totalorder %s48, 1
          %s650 = scalar_select %p649, %s48, 1
          %s651 = scalar_lea.vmem %s9, %s650
        $region64: #{tpu_custom_call.1} parent=23 // pred_fallthru
          _
        // Predicated region
        $region65: #{tpu_custom_call.1} parent=23 // pred_check
          %p652 = pneg %p332
        $region66: #{tpu_custom_call.1} parent=23 // pred_check_branch
          %654 = sbr.rel (%p652) target = $region68
        $region67: #{tpu_custom_call.1} parent=23 // pred_region
          %s655 = sand.u32 %s40, 1
          %s656 = scalar_lea.sflag [#allocation12], %s655
          %s657 = sand.u32 %s322, 1
          %s658 = smul.addr %s657, 256
          %s659 = scalar_lea.vmem [#allocation13], %s658
          %s661 = ssub.s32 4096, 4096
          %662 = vsyncadd %s656, %s661
          %s663 = smul.addr %s48, 64
          %s664 = smul.addr %s663, 64
          %s665 = scalar_lea.hbm %s10, %s664
          %s666 = sshll.u32 %s659, 4
          %s667 = int_to_ptr.vmem [resolvable:$true] %s666
          %672 = dma.hbm_to_vmem [thread:$0]  %s665, 4096, %s667, %s656, 256, 256, 16
        $region68: #{tpu_custom_call.1} parent=23 // pred_fallthru
          _
        // Predicated region
        $region69: #{tpu_custom_call.1} parent=23 // pred_check
          %p673 = pneg %p358
        $region70: #{tpu_custom_call.1} parent=23 // pred_check_branch
          %675 = sbr.rel (%p673) target = $region72
        $region71: #{tpu_custom_call.1} parent=23 // pred_region
          %p676 = scmp.lt.s32.totalorder %s48, 1
          %s677 = scalar_select %p676, %s48, 1
          %s678 = smul.addr %s677, 4
          %s679 = scalar_lea.vmem %s11, %s678
        $region72: #{tpu_custom_call.1} parent=23 // pred_fallthru
          _
        // Predicated region
        $region73: #{tpu_custom_call.1} parent=23 // pred_check
          %p680 = pneg %p384
        $region74: #{tpu_custom_call.1} parent=23 // pred_check_branch
          %682 = sbr.rel (%p680) target = $region76
        $region75: #{tpu_custom_call.1} parent=23 // pred_region
          %s683 = sand.u32 %s374, 1
          %s684 = scalar_lea.sflag [#allocation15], %s683
          %s685 = sand.u32 %s374, 1
          %s686 = smul.addr %s685, 256
          %s687 = scalar_lea.vmem [#allocation14], %s686
          %s689 = ssub.s32 4096, 4096
          %690 = vsyncadd %s684, %s689
          %s691 = smul.addr %s48, 64
          %s692 = smul.addr %s691, 64
          %s693 = scalar_lea.hbm %s12, %s692
          %s694 = sshll.u32 %s687, 4
          %s695 = int_to_ptr.vmem [resolvable:$true] %s694
          %700 = dma.hbm_to_vmem [thread:$0]  %s693, 4096, %s695, %s684, 64, 64, 4
        $region76: #{tpu_custom_call.1} parent=23 // pred_fallthru
          _
        // Predicated region
        $region77: #{tpu_custom_call.1} parent=23 // pred_check
          %p701 = pneg %p410
        $region78: #{tpu_custom_call.1} parent=23 // pred_check_branch
          %703 = sbr.rel (%p701) target = $region80
        $region79: #{tpu_custom_call.1} parent=23 // pred_region
          %p704 = scmp.lt.s32.totalorder %s48, 1
          %s705 = scalar_select %p704, %s48, 1
          %s706 = scalar_lea.vmem %s13, %s705
        $region80: #{tpu_custom_call.1} parent=23 // pred_fallthru
          _
      $region24: #{tpu_custom_call.1} parent=5 // pred_fallthru
        _
      %p707 = scmp.le.s32.totalorder 1, %s40
      %p708 = scmp.lt.s32.totalorder %s40, 5
      %p709 = pnand %p707, %p708
      %p710 = pneg %p709
      // Predicated region
      $region81: #{tpu_custom_call.1} parent=5 // pred_check
        _
      $region82: #{tpu_custom_call.1} parent=5 // pred_check_branch
        %712 = sbr.rel (%p709) target = $region84
      $region83: #{tpu_custom_call.1} parent=5 // pred_region
        %s713 = ssub.s32 %s40, 1
        %s714 = sand.u32 %s65, 1
        %s715 = scalar_lea.sflag [#allocation3], %s714
        %s716 = sand.u32 %s65, 1
        %s717 = smul.addr %s716, 128
        %s718 = scalar_lea.vmem [#allocation2], %s717
        // Predicated region
        $region85: #{tpu_custom_call.1} parent=83 // pred_check
          %p719 = pneg %p78
        $region86: #{tpu_custom_call.1} parent=83 // pred_check_branch
          %721 = sbr.rel (%p719) target = $region88
        $region87: #{tpu_custom_call.1} parent=83 // pred_region
          %722 = dma.done %s715, 2048
        $region88: #{tpu_custom_call.1} parent=83 // pred_fallthru
          _
        %s723 = sand.u32 %s45, 1
        %s724 = scalar_lea.sflag [#allocation6], %s723
        %s725 = sand.u32 %s91, 1
        %s726 = smul.addr %s725, 128
        %s727 = scalar_lea.vmem [#allocation5], %s726
        // Predicated region
        $region89: #{tpu_custom_call.1} parent=83 // pred_check
          %p728 = pneg %p104
        $region90: #{tpu_custom_call.1} parent=83 // pred_check_branch
          %730 = sbr.rel (%p728) target = $region92
        $region91: #{tpu_custom_call.1} parent=83 // pred_region
          %731 = dma.done %s724, 2048
        $region92: #{tpu_custom_call.1} parent=83 // pred_fallthru
          _
        %s732 = sand.u32 %s45, 1
        %s733 = scalar_lea.sflag [#allocation6], %s732
        %s734 = sand.u32 %s117, 1
        %s735 = scalar_lea.vmem [#allocation7], %s734
        // Predicated region
        $region93: #{tpu_custom_call.1} parent=83 // pred_check
          %p736 = pneg %p130
        $region94: #{tpu_custom_call.1} parent=83 // pred_check_branch
          %738 = sbr.rel (%p736) target = $region96
        $region95: #{tpu_custom_call.1} parent=83 // pred_region
          %739 = dma.done %s733, 16
        $region96: #{tpu_custom_call.1} parent=83 // pred_fallthru
          _
        %s740 = sand.u32 %s45, 1
        %s741 = scalar_lea.sflag [#allocation9], %s740
        %s742 = sand.u32 %s143, 1
        %s743 = scalar_lea.vmem [#allocation8], %s742
        // Predicated region
        $region97: #{tpu_custom_call.1} parent=83 // pred_check
          %p744 = pneg %p156
        $region98: #{tpu_custom_call.1} parent=83 // pred_check_branch
          %746 = sbr.rel (%p744) target = $region100
        $region99: #{tpu_custom_call.1} parent=83 // pred_region
          %747 = dma.done %s741, 16
        $region100: #{tpu_custom_call.1} parent=83 // pred_fallthru
          _
        %s748 = sand.u32 %s45, 1
        %s749 = scalar_lea.sflag [#allocation9], %s748
        %s750 = sand.u32 %s169, 1
        %s751 = smul.addr %s750, 192
        %s752 = scalar_lea.vmem [#allocation10], %s751
        // Predicated region
        $region101: #{tpu_custom_call.1} parent=83 // pred_check
          %p753 = pneg %p182
        $region102: #{tpu_custom_call.1} parent=83 // pred_check_branch
          %755 = sbr.rel (%p753) target = $region104
        $region103: #{tpu_custom_call.1} parent=83 // pred_region
          %756 = dma.done %s749, 3072
        $region104: #{tpu_custom_call.1} parent=83 // pred_fallthru
          _
        %s757 = sand.u32 %s45, 1
        %s758 = scalar_lea.sflag [#allocation12], %s757
        %s759 = sand.u32 %s221, 1
        %s760 = smul.addr %s759, 64
        %s761 = scalar_lea.vmem [#allocation11], %s760
        // Predicated region
        $region105: #{tpu_custom_call.1} parent=83 // pred_check
          %p762 = pneg %p234
        $region106: #{tpu_custom_call.1} parent=83 // pred_check_branch
          %764 = sbr.rel (%p762) target = $region108
        $region107: #{tpu_custom_call.1} parent=83 // pred_region
          %765 = dma.done %s758, 1024
        $region108: #{tpu_custom_call.1} parent=83 // pred_fallthru
          _
        %s766 = sand.u32 %s45, 1
        %s767 = scalar_lea.sflag [#allocation12], %s766
        %s768 = sand.u32 %s325, 1
        %s769 = smul.addr %s768, 256
        %s770 = scalar_lea.vmem [#allocation13], %s769
        // Predicated region
        $region109: #{tpu_custom_call.1} parent=83 // pred_check
          %p771 = pneg %p338
        $region110: #{tpu_custom_call.1} parent=83 // pred_check_branch
          %773 = sbr.rel (%p771) target = $region112
        $region111: #{tpu_custom_call.1} parent=83 // pred_region
          %774 = dma.done %s767, 4096
        $region112: #{tpu_custom_call.1} parent=83 // pred_fallthru
          _
        %s775 = sand.u32 %s377, 1
        %s776 = scalar_lea.sflag [#allocation15], %s775
        %s777 = sand.u32 %s377, 1
        %s778 = smul.addr %s777, 256
        %s779 = scalar_lea.vmem [#allocation14], %s778
        // Predicated region
        $region113: #{tpu_custom_call.1} parent=83 // pred_check
          %p780 = pneg %p390
        $region114: #{tpu_custom_call.1} parent=83 // pred_check_branch
          %782 = sbr.rel (%p780) target = $region116
        $region115: #{tpu_custom_call.1} parent=83 // pred_region
          %783 = dma.done %s776, 4096
        $region116: #{tpu_custom_call.1} parent=83 // pred_fallthru
          _
        %s784 = sand.u32 %s65, 1
        %s785 = scalar_lea.sflag [#allocation3], %s784
        %s786 = sand.u32 %s65, 1
        %s787 = smul.addr %s786, 128
        %s788 = scalar_lea.vmem [#allocation2], %s787
        %p789 = pneg %p78
        %p790 = pneg %p75
        %s791 = sand.u32 %s45, 1
        %s792 = scalar_lea.sflag [#allocation6], %s791
        %s793 = sand.u32 %s91, 1
        %s794 = smul.addr %s793, 128
        %s795 = scalar_lea.vmem [#allocation5], %s794
        %p796 = pneg %p104
        %p797 = pneg %p101
        %s798 = sand.u32 %s45, 1
        %s799 = scalar_lea.sflag [#allocation6], %s798
        %s800 = sand.u32 %s117, 1
        %s801 = scalar_lea.vmem [#allocation7], %s800
        %p802 = pneg %p130
        %p803 = pneg %p127
        %s804 = sand.u32 %s45, 1
        %s805 = scalar_lea.sflag [#allocation9], %s804
        %s806 = sand.u32 %s143, 1
        %s807 = scalar_lea.vmem [#allocation8], %s806
        %p808 = pneg %p156
        %p809 = pneg %p153
        %s810 = sand.u32 %s45, 1
        %s811 = scalar_lea.sflag [#allocation9], %s810
        %s812 = sand.u32 %s169, 1
        %s813 = smul.addr %s812, 192
        %s814 = scalar_lea.vmem [#allocation10], %s813
        %p815 = pneg %p182
        %p816 = pneg %p179
        %p817 = scmp.lt.s32.totalorder %s50, 1
        %s818 = scalar_select %p817, %s50, 1
        %s819 = smul.addr %s818, 3
        %s820 = scalar_lea.vmem %s5, %s819
        %p821 = pneg %p208
        %p822 = pneg %p205
        %s823 = sand.u32 %s45, 1
        %s824 = scalar_lea.sflag [#allocation12], %s823
        %s825 = sand.u32 %s221, 1
        %s826 = smul.addr %s825, 64
        %s827 = scalar_lea.vmem [#allocation11], %s826
        %p828 = pneg %p234
        %p829 = pneg %p231
        %p830 = scmp.lt.s32.totalorder %s50, 1
        %s831 = scalar_select %p830, %s50, 1
        %s832 = scalar_lea.vmem %s7, %s831
        %p833 = pneg %p260
        %p834 = pneg %p257
        %p835 = scmp.lt.s32.totalorder %s50, 1
        %s836 = scalar_select %p835, %s50, 1
        %s837 = scalar_lea.vmem %s8, %s836
        %p838 = pneg %p286
        %p839 = pneg %p283
        %p840 = scmp.lt.s32.totalorder %s50, 1
        %s841 = scalar_select %p840, %s50, 1
        %s842 = scalar_lea.vmem %s9, %s841
        %p843 = pneg %p312
        %p844 = pneg %p309
        %s845 = sand.u32 %s45, 1
        %s846 = scalar_lea.sflag [#allocation12], %s845
        %s847 = sand.u32 %s325, 1
        %s848 = smul.addr %s847, 256
        %s849 = scalar_lea.vmem [#allocation13], %s848
        %p850 = pneg %p338
        %p851 = pneg %p335
        %p852 = scmp.lt.s32.totalorder %s50, 1
        %s853 = scalar_select %p852, %s50, 1
        %s854 = smul.addr %s853, 4
        %s855 = scalar_lea.vmem %s11, %s854
        %p856 = pneg %p364
        %p857 = pneg %p361
        %s858 = sand.u32 %s377, 1
        %s859 = scalar_lea.sflag [#allocation15], %s858
        %s860 = sand.u32 %s377, 1
        %s861 = smul.addr %s860, 256
        %s862 = scalar_lea.vmem [#allocation14], %s861
        %p863 = pneg %p390
        %p864 = pneg %p387
        %p865 = scmp.lt.s32.totalorder %s50, 1
        %s866 = scalar_select %p865, %s50, 1
        %s867 = scalar_lea.vmem %s13, %s866
        %p868 = pneg %p416
        %p869 = pneg %p413
        %p870 = pneg %p437
        %p871 = pneg %p434
        %p872 = pneg %p458
        %p873 = pneg %p455
        %p874 = pneg %p484
        %p875 = pneg %p481
        %s876 = sand.u32 %s471, 1
        %s877 = scalar_lea.sflag [#allocation4], %s876
        %s878 = sand.u32 %s471, 1
        %s879 = smul.addr %s878, 128
        %s880 = scalar_lea.vmem [#allocation16], %s879
        %p881 = scmp.lt.s32.totalorder %s50, 1
        %s882 = scalar_select %p881, %s50, 1
        %s883 = smul.addr %s882, 3
        %s884 = scalar_lea.vmem %s5, %s883
        %p885 = scmp.lt.s32.totalorder %s50, 1
        %s886 = scalar_select %p885, %s50, 1
        %s887 = scalar_lea.vmem %s7, %s886
        %p888 = scmp.lt.s32.totalorder %s50, 1
        %s889 = scalar_select %p888, %s50, 1
        %s890 = scalar_lea.vmem %s8, %s889
        %p891 = scmp.lt.s32.totalorder %s50, 1
        %s892 = scalar_select %p891, %s50, 1
        %s893 = scalar_lea.vmem %s9, %s892
        %p894 = scmp.lt.s32.totalorder %s50, 1
        %s895 = scalar_select %p894, %s50, 1
        %s896 = smul.addr %s895, 4
        %s897 = scalar_lea.vmem %s11, %s896
        %p898 = scmp.lt.s32.totalorder %s50, 1
        %s899 = scalar_select %p898, %s50, 1
        %s900 = scalar_lea.vmem %s13, %s899
        %p902 = scmp.eq.s32.totalorder %s50, 0
        // Predicated region
        $region117: #{tpu_custom_call.1} parent=83 // pred_check
          %p903 = pneg %p902
        $region118: #{tpu_custom_call.1} parent=83 // pred_check_branch
          %905 = sbr.rel (%p903) target = $region120
        $region119: #{tpu_custom_call.1} parent=83 // pred_region
          %v906 = vld [vmem:[%s727] sm:$0xff]
          %v907 = vld [vmem:[%s727 + $0x8] sm:$0xff]
          %v908 = vld [vmem:[%s727 + $0x10] sm:$0xff]
          %v909 = vld [vmem:[%s727 + $0x18] sm:$0xff]
          %v910 = vld [vmem:[%s727 + $0x20] sm:$0xff]
          %v911 = vld [vmem:[%s727 + $0x28] sm:$0xff]
          %v912 = vld [vmem:[%s727 + $0x30] sm:$0xff]
          %v913 = vld [vmem:[%s727 + $0x38] sm:$0xff]
          %v914 = vld [vmem:[%s727 + $0x40] sm:$0xff]
          %v915 = vld [vmem:[%s727 + $0x48] sm:$0xff]
          %v916 = vld [vmem:[%s727 + $0x50] sm:$0xff]
          %v917 = vld [vmem:[%s727 + $0x58] sm:$0xff]
          %v918 = vld [vmem:[%s727 + $0x60] sm:$0xff]
          %v919 = vld [vmem:[%s727 + $0x68] sm:$0xff]
          %v920 = vld [vmem:[%s727 + $0x70] sm:$0xff]
          %v921 = vld [vmem:[%s727 + $0x78] sm:$0xff]
          %922 = vst [vmem:[%s880] sm:$0xff] %v906
          %923 = vst [vmem:[%s880 + $0x8] sm:$0xff] %v907
          %924 = vst [vmem:[%s880 + $0x10] sm:$0xff] %v908
          %925 = vst [vmem:[%s880 + $0x18] sm:$0xff] %v909
          %926 = vst [vmem:[%s880 + $0x20] sm:$0xff] %v910
          %927 = vst [vmem:[%s880 + $0x28] sm:$0xff] %v911
          %928 = vst [vmem:[%s880 + $0x30] sm:$0xff] %v912
          %929 = vst [vmem:[%s880 + $0x38] sm:$0xff] %v913
          %930 = vst [vmem:[%s880 + $0x40] sm:$0xff] %v914
          %931 = vst [vmem:[%s880 + $0x48] sm:$0xff] %v915
          %932 = vst [vmem:[%s880 + $0x50] sm:$0xff] %v916
          %933 = vst [vmem:[%s880 + $0x58] sm:$0xff] %v917
          %934 = vst [vmem:[%s880 + $0x60] sm:$0xff] %v918
          %935 = vst [vmem:[%s880 + $0x68] sm:$0xff] %v919
          %936 = vst [vmem:[%s880 + $0x70] sm:$0xff] %v920
          %937 = vst [vmem:[%s880 + $0x78] sm:$0xff] %v921
        $region120: #{tpu_custom_call.1} parent=83 // pred_fallthru
          _
        %v938 = vld [vmem:[%s880] sm:$0xff]
        %v939 = vld [vmem:[%s880 + $0x8] sm:$0xff]
        %v940 = vld [vmem:[%s880 + $0x10] sm:$0xff]
        %v941 = vld [vmem:[%s880 + $0x18] sm:$0xff]
        %v942 = vld [vmem:[%s880 + $0x20] sm:$0xff]
        %v943 = vld [vmem:[%s880 + $0x28] sm:$0xff]
        %v944 = vld [vmem:[%s880 + $0x30] sm:$0xff]
        %v945 = vld [vmem:[%s880 + $0x38] sm:$0xff]
        %v946 = vld [vmem:[%s880 + $0x40] sm:$0xff]
        %v947 = vld [vmem:[%s880 + $0x48] sm:$0xff]
        %v948 = vld [vmem:[%s880 + $0x50] sm:$0xff]
        %v949 = vld [vmem:[%s880 + $0x58] sm:$0xff]
        %v950 = vld [vmem:[%s880 + $0x60] sm:$0xff]
        %v951 = vld [vmem:[%s880 + $0x68] sm:$0xff]
        %v952 = vld [vmem:[%s880 + $0x70] sm:$0xff]
        %v953 = vld [vmem:[%s880 + $0x78] sm:$0xff]
        %v954 = vld [vmem:[%s718] sm:$0xff]
        %v955 = vld [vmem:[%s718 + $0x8] sm:$0xff]
        %v956 = vld [vmem:[%s718 + $0x10] sm:$0xff]
        %v957 = vld [vmem:[%s718 + $0x18] sm:$0xff]
        %v958 = vld [vmem:[%s718 + $0x20] sm:$0xff]
        %v959 = vld [vmem:[%s718 + $0x28] sm:$0xff]
        %v960 = vld [vmem:[%s718 + $0x30] sm:$0xff]
        %v961 = vld [vmem:[%s718 + $0x38] sm:$0xff]
        %v962 = vld [vmem:[%s718 + $0x40] sm:$0xff]
        %v963 = vld [vmem:[%s718 + $0x48] sm:$0xff]
        %v964 = vld [vmem:[%s718 + $0x50] sm:$0xff]
        %v965 = vld [vmem:[%s718 + $0x58] sm:$0xff]
        %v966 = vld [vmem:[%s718 + $0x60] sm:$0xff]
        %v967 = vld [vmem:[%s718 + $0x68] sm:$0xff]
        %v968 = vld [vmem:[%s718 + $0x70] sm:$0xff]
        %v969 = vld [vmem:[%s718 + $0x78] sm:$0xff]
        %v970 = vld [vmem:[%s735] sm:$0x1]
        %v971 = vld [vmem:[%s743] sm:$0x1]
        %972 = vadd.xlane.f32.xlu0 %v938
        %v973 = vpop.xlane.xlu0 %972
        %974 = vadd.xlane.f32.xlu0 %v939
        %v975 = vpop.xlane.xlu0 %974
        %976 = vadd.xlane.f32.xlu0 %v940
        %v977 = vpop.xlane.xlu0 %976
        %978 = vadd.xlane.f32.xlu0 %v941
        %v979 = vpop.xlane.xlu0 %978
        %980 = vadd.xlane.f32.xlu0 %v942
        %v981 = vpop.xlane.xlu0 %980
        %982 = vadd.xlane.f32.xlu0 %v943
        %v983 = vpop.xlane.xlu0 %982
        %984 = vadd.xlane.f32.xlu0 %v944
        %v985 = vpop.xlane.xlu0 %984
        %986 = vadd.xlane.f32.xlu0 %v945
        %v987 = vpop.xlane.xlu0 %986
        %988 = vadd.xlane.f32.xlu0 %v946
        %v989 = vpop.xlane.xlu0 %988
        %990 = vadd.xlane.f32.xlu0 %v947
        %v991 = vpop.xlane.xlu0 %990
        %992 = vadd.xlane.f32.xlu0 %v948
        %v993 = vpop.xlane.xlu0 %992
        %994 = vadd.xlane.f32.xlu0 %v949
        %v995 = vpop.xlane.xlu0 %994
        %996 = vadd.xlane.f32.xlu0 %v950
        %v997 = vpop.xlane.xlu0 %996
        %998 = vadd.xlane.f32.xlu0 %v951
        %v999 = vpop.xlane.xlu0 %998
        %1000 = vadd.xlane.f32.xlu0 %v952
        %v1001 = vpop.xlane.xlu0 %1000
        %1002 = vadd.xlane.f32.xlu0 %v953
        %v1003 = vpop.xlane.xlu0 %1002
        %v1004 = vrcp.pop 128.0
        %v1005 = vmul.f32 %v973, %v1004
        %v1006 = vmul.f32 %v975, %v1004
        %v1007 = vmul.f32 %v977, %v1004
        %v1008 = vmul.f32 %v979, %v1004
        %v1009 = vmul.f32 %v981, %v1004
        %v1010 = vmul.f32 %v983, %v1004
        %v1011 = vmul.f32 %v985, %v1004
        %v1012 = vmul.f32 %v987, %v1004
        %v1013 = vmul.f32 %v989, %v1004
        %v1014 = vmul.f32 %v991, %v1004
        %v1015 = vmul.f32 %v993, %v1004
        %v1016 = vmul.f32 %v995, %v1004
        %v1017 = vmul.f32 %v997, %v1004
        %v1018 = vmul.f32 %v999, %v1004
        %v1019 = vmul.f32 %v1001, %v1004
        %v1020 = vmul.f32 %v1003, %v1004
        %v1021 = vsub.f32 %v938, %v1005
        %v1022 = vsub.f32 %v939, %v1006
        %v1023 = vsub.f32 %v940, %v1007
        %v1024 = vsub.f32 %v941, %v1008
        %v1025 = vsub.f32 %v942, %v1009
        %v1026 = vsub.f32 %v943, %v1010
        %v1027 = vsub.f32 %v944, %v1011
        %v1028 = vsub.f32 %v945, %v1012
        %v1029 = vsub.f32 %v946, %v1013
        %v1030 = vsub.f32 %v947, %v1014
        %v1031 = vsub.f32 %v948, %v1015
        %v1032 = vsub.f32 %v949, %v1016
        %v1033 = vsub.f32 %v950, %v1017
        %v1034 = vsub.f32 %v951, %v1018
        %v1035 = vsub.f32 %v952, %v1019
        %v1036 = vsub.f32 %v953, %v1020
        %v1037 = vmul.f32 %v1021, %v1021
        %v1038 = vmul.f32 %v1022, %v1022
        %v1039 = vmul.f32 %v1023, %v1023
        %v1040 = vmul.f32 %v1024, %v1024
        %v1041 = vmul.f32 %v1025, %v1025
        %v1042 = vmul.f32 %v1026, %v1026
        %v1043 = vmul.f32 %v1027, %v1027
        %v1044 = vmul.f32 %v1028, %v1028
        %v1045 = vmul.f32 %v1029, %v1029
        %v1046 = vmul.f32 %v1030, %v1030
        %v1047 = vmul.f32 %v1031, %v1031
        %v1048 = vmul.f32 %v1032, %v1032
        %v1049 = vmul.f32 %v1033, %v1033
        %v1050 = vmul.f32 %v1034, %v1034
        %v1051 = vmul.f32 %v1035, %v1035
        %v1052 = vmul.f32 %v1036, %v1036
        %1053 = vadd.xlane.f32.xlu0 %v1037
        %v1054 = vpop.xlane.xlu0 %1053
        %1055 = vadd.xlane.f32.xlu0 %v1038
        %v1056 = vpop.xlane.xlu0 %1055
        %1057 = vadd.xlane.f32.xlu0 %v1039
        %v1058 = vpop.xlane.xlu0 %1057
        %1059 = vadd.xlane.f32.xlu0 %v1040
        %v1060 = vpop.xlane.xlu0 %1059
        %1061 = vadd.xlane.f32.xlu0 %v1041
        %v1062 = vpop.xlane.xlu0 %1061
        %1063 = vadd.xlane.f32.xlu0 %v1042
        %v1064 = vpop.xlane.xlu0 %1063
        %1065 = vadd.xlane.f32.xlu0 %v1043
        %v1066 = vpop.xlane.xlu0 %1065
        %1067 = vadd.xlane.f32.xlu0 %v1044
        %v1068 = vpop.xlane.xlu0 %1067
        %1069 = vadd.xlane.f32.xlu0 %v1045
        %v1070 = vpop.xlane.xlu0 %1069
        %1071 = vadd.xlane.f32.xlu0 %v1046
        %v1072 = vpop.xlane.xlu0 %1071
        %1073 = vadd.xlane.f32.xlu0 %v1047
        %v1074 = vpop.xlane.xlu0 %1073
        %1075 = vadd.xlane.f32.xlu0 %v1048
        %v1076 = vpop.xlane.xlu0 %1075
        %1077 = vadd.xlane.f32.xlu0 %v1049
        %v1078 = vpop.xlane.xlu0 %1077
        %1079 = vadd.xlane.f32.xlu0 %v1050
        %v1080 = vpop.xlane.xlu0 %1079
        %1081 = vadd.xlane.f32.xlu0 %v1051
        %v1082 = vpop.xlane.xlu0 %1081
        %1083 = vadd.xlane.f32.xlu0 %v1052
        %v1084 = vpop.xlane.xlu0 %1083
        %v1085 = vmul.f32 %v1054, %v1004
        %v1086 = vmul.f32 %v1056, %v1004
        %v1087 = vmul.f32 %v1058, %v1004
        %v1088 = vmul.f32 %v1060, %v1004
        %v1089 = vmul.f32 %v1062, %v1004
        %v1090 = vmul.f32 %v1064, %v1004
        %v1091 = vmul.f32 %v1066, %v1004
        %v1092 = vmul.f32 %v1068, %v1004
        %v1093 = vmul.f32 %v1070, %v1004
        %v1094 = vmul.f32 %v1072, %v1004
        %v1095 = vmul.f32 %v1074, %v1004
        %v1096 = vmul.f32 %v1076, %v1004
        %v1097 = vmul.f32 %v1078, %v1004
        %v1098 = vmul.f32 %v1080, %v1004
        %v1099 = vmul.f32 %v1082, %v1004
        %v1100 = vmul.f32 %v1084, %v1004
        %v1101 = vadd.f32 %v1085, 1e-05
        %v1102 = vadd.f32 %v1086, 1e-05
        %v1103 = vadd.f32 %v1087, 1e-05
        %v1104 = vadd.f32 %v1088, 1e-05
        %v1105 = vadd.f32 %v1089, 1e-05
        %v1106 = vadd.f32 %v1090, 1e-05
        %v1107 = vadd.f32 %v1091, 1e-05
        %v1108 = vadd.f32 %v1092, 1e-05
        %v1109 = vadd.f32 %v1093, 1e-05
        %v1110 = vadd.f32 %v1094, 1e-05
        %v1111 = vadd.f32 %v1095, 1e-05
        %v1112 = vadd.f32 %v1096, 1e-05
        %v1113 = vadd.f32 %v1097, 1e-05
        %v1114 = vadd.f32 %v1098, 1e-05
        %v1115 = vadd.f32 %v1099, 1e-05
        %v1116 = vadd.f32 %v1100, 1e-05
        %v1117 = vrsqrt.pop %v1101
        %v1118 = vrsqrt.pop %v1102
        %v1119 = vrsqrt.pop %v1103
        %v1120 = vrsqrt.pop %v1104
        %v1121 = vrsqrt.pop %v1105
        %v1122 = vrsqrt.pop %v1106
        %v1123 = vrsqrt.pop %v1107
        %v1124 = vrsqrt.pop %v1108
        %v1125 = vrsqrt.pop %v1109
        %v1126 = vrsqrt.pop %v1110
        %v1127 = vrsqrt.pop %v1111
        %v1128 = vrsqrt.pop %v1112
        %v1129 = vrsqrt.pop %v1113
        %v1130 = vrsqrt.pop %v1114
        %v1131 = vrsqrt.pop %v1115
        %v1132 = vrsqrt.pop %v1116
        %v1133 = vmul.f32 %v1021, %v1117
        %v1134 = vmul.f32 %v1022, %v1118
        %v1135 = vmul.f32 %v1023, %v1119
        %v1136 = vmul.f32 %v1024, %v1120
        %v1137 = vmul.f32 %v1025, %v1121
        %v1138 = vmul.f32 %v1026, %v1122
        %v1139 = vmul.f32 %v1027, %v1123
        %v1140 = vmul.f32 %v1028, %v1124
        %v1141 = vmul.f32 %v1029, %v1125
        %v1142 = vmul.f32 %v1030, %v1126
        %v1143 = vmul.f32 %v1031, %v1127
        %v1144 = vmul.f32 %v1032, %v1128
        %v1145 = vmul.f32 %v1033, %v1129
        %v1146 = vmul.f32 %v1034, %v1130
        %v1147 = vmul.f32 %v1035, %v1131
        %v1148 = vmul.f32 %v1036, %v1132
        %v1150 = vlaneseq
        %v1151 = vshrl.u32 %v1150, 7
        %v1152 = vsub.s32 0, %v1151
        %v1153 = vrot.slane %v970, %v1152
        %v1155 = vmul.f32 %v1133, %v1153
        %v1156 = vmul.f32 %v1134, %v1153
        %v1157 = vmul.f32 %v1135, %v1153
        %v1158 = vmul.f32 %v1136, %v1153
        %v1159 = vmul.f32 %v1137, %v1153
        %v1160 = vmul.f32 %v1138, %v1153
        %v1161 = vmul.f32 %v1139, %v1153
        %v1162 = vmul.f32 %v1140, %v1153
        %v1163 = vmul.f32 %v1141, %v1153
        %v1164 = vmul.f32 %v1142, %v1153
        %v1165 = vmul.f32 %v1143, %v1153
        %v1166 = vmul.f32 %v1144, %v1153
        %v1167 = vmul.f32 %v1145, %v1153
        %v1168 = vmul.f32 %v1146, %v1153
        %v1169 = vmul.f32 %v1147, %v1153
        %v1170 = vmul.f32 %v1148, %v1153
        %v1172 = vlaneseq
        %v1173 = vshrl.u32 %v1172, 7
        %v1174 = vsub.s32 0, %v1173
        %v1175 = vrot.slane %v971, %v1174
        %v1177 = vadd.f32 %v1155, %v1175
        %v1178 = vadd.f32 %v1156, %v1175
        %v1179 = vadd.f32 %v1157, %v1175
        %v1180 = vadd.f32 %v1158, %v1175
        %v1181 = vadd.f32 %v1159, %v1175
        %v1182 = vadd.f32 %v1160, %v1175
        %v1183 = vadd.f32 %v1161, %v1175
        %v1184 = vadd.f32 %v1162, %v1175
        %v1185 = vadd.f32 %v1163, %v1175
        %v1186 = vadd.f32 %v1164, %v1175
        %v1187 = vadd.f32 %v1165, %v1175
        %v1188 = vadd.f32 %v1166, %v1175
        %v1189 = vadd.f32 %v1167, %v1175
        %v1190 = vadd.f32 %v1168, %v1175
        %v1191 = vadd.f32 %v1169, %v1175
        %v1192 = vadd.f32 %v1170, %v1175
        %v1193 = vpack.c.bf16 %v1178, %v1177
        %v1194 = vpack.c.bf16 %v1180, %v1179
        %v1195 = vpack.c.bf16 %v1182, %v1181
        %v1196 = vpack.c.bf16 %v1184, %v1183
        %v1197 = vpack.c.bf16 %v1186, %v1185
        %v1198 = vpack.c.bf16 %v1188, %v1187
        %v1199 = vpack.c.bf16 %v1190, %v1189
        %v1200 = vpack.c.bf16 %v1192, %v1191
        %v1201 = vld [vmem:[%s752] sm:$0xff]
        %v1202 = vld [vmem:[%s752 + $0x8] sm:$0xf]
        %v1203 = vld [vmem:[%s752 + $0xc] sm:$0xff]
        %v1204 = vld [vmem:[%s752 + $0x14] sm:$0xf]
        %v1205 = vld [vmem:[%s752 + $0x18] sm:$0xff]
        %v1206 = vld [vmem:[%s752 + $0x20] sm:$0xf]
        %v1207 = vld [vmem:[%s752 + $0x24] sm:$0xff]
        %v1208 = vld [vmem:[%s752 + $0x2c] sm:$0xf]
        %v1209 = vld [vmem:[%s752 + $0x30] sm:$0xff]
        %v1210 = vld [vmem:[%s752 + $0x38] sm:$0xf]
        %v1211 = vld [vmem:[%s752 + $0x3c] sm:$0xff]
        %v1212 = vld [vmem:[%s752 + $0x44] sm:$0xf]
        %v1213 = vld [vmem:[%s752 + $0x48] sm:$0xff]
        %v1214 = vld [vmem:[%s752 + $0x50] sm:$0xf]
        %v1215 = vld [vmem:[%s752 + $0x54] sm:$0xff]
        %v1216 = vld [vmem:[%s752 + $0x5c] sm:$0xf]
        %v1217 = vld [vmem:[%s752 + $0x60] sm:$0xff]
        %v1218 = vld [vmem:[%s752 + $0x68] sm:$0xf]
        %v1219 = vld [vmem:[%s752 + $0x6c] sm:$0xff]
        %v1220 = vld [vmem:[%s752 + $0x74] sm:$0xf]
        %v1221 = vld [vmem:[%s752 + $0x78] sm:$0xff]
        %v1222 = vld [vmem:[%s752 + $0x80] sm:$0xf]
        %v1223 = vld [vmem:[%s752 + $0x84] sm:$0xff]
        %v1224 = vld [vmem:[%s752 + $0x8c] sm:$0xf]
        %v1225 = vld [vmem:[%s752 + $0x90] sm:$0xff]
        %v1226 = vld [vmem:[%s752 + $0x98] sm:$0xf]
        %v1227 = vld [vmem:[%s752 + $0x9c] sm:$0xff]
        %v1228 = vld [vmem:[%s752 + $0xa4] sm:$0xf]
        %v1229 = vld [vmem:[%s752 + $0xa8] sm:$0xff]
        %v1230 = vld [vmem:[%s752 + $0xb0] sm:$0xf]
        %v1231 = vld [vmem:[%s752 + $0xb4] sm:$0xff]
        %v1232 = vld [vmem:[%s752 + $0xbc] sm:$0xf]
        %v1233 = vld [vmem:[%s884] sm:$0x7]
        %v1235 = vlaneseq
        %v1236 = vshrl.u32 %v1235, 7
        %v1237 = vsub.s32 0, %v1236
        %v1238 = vrot.slane %v1233, %v1237
        %v1239 = vlaneseq
        %v1240 = vshrl.u32 %v1239, 7
        %v1241 = vsub.s32 1, %v1240
        %v1242 = vrot.slane %v1233, %v1241
        %v1243 = vlaneseq
        %v1244 = vshrl.u32 %v1243, 7
        %v1245 = vsub.s32 2, %v1244
        %v1246 = vrot.slane %v1233, %v1245
        %v1282 = vunpack.c.l.b16 %v1201
        %v1283 = vunpack.c.h.b16 %v1201
        %v1284 = vunpack.c.l.b16 %v1202
        %v1285 = vunpack.c.l.b16 %v1203
        %v1286 = vunpack.c.h.b16 %v1203
        %v1287 = vunpack.c.l.b16 %v1204
        %v1288 = vunpack.c.l.b16 %v1205
        %v1289 = vunpack.c.h.b16 %v1205
        %v1290 = vunpack.c.l.b16 %v1206
        %v1291 = vunpack.c.l.b16 %v1207
        %v1292 = vunpack.c.h.b16 %v1207
        %v1293 = vunpack.c.l.b16 %v1208
        %v1294 = vunpack.c.l.b16 %v1209
        %v1295 = vunpack.c.h.b16 %v1209
        %v1296 = vunpack.c.l.b16 %v1210
        %v1297 = vunpack.c.l.b16 %v1211
        %v1298 = vunpack.c.h.b16 %v1211
        %v1299 = vunpack.c.l.b16 %v1212
        %v1300 = vunpack.c.l.b16 %v1213
        %v1301 = vunpack.c.h.b16 %v1213
        %v1302 = vunpack.c.l.b16 %v1214
        %v1303 = vunpack.c.l.b16 %v1215
        %v1304 = vunpack.c.h.b16 %v1215
        %v1305 = vunpack.c.l.b16 %v1216
        %v1306 = vunpack.c.l.b16 %v1217
        %v1307 = vunpack.c.h.b16 %v1217
        %v1308 = vunpack.c.l.b16 %v1218
        %v1309 = vunpack.c.l.b16 %v1219
        %v1310 = vunpack.c.h.b16 %v1219
        %v1311 = vunpack.c.l.b16 %v1220
        %v1312 = vunpack.c.l.b16 %v1221
        %v1313 = vunpack.c.h.b16 %v1221
        %v1314 = vunpack.c.l.b16 %v1222
        %v1315 = vunpack.c.l.b16 %v1223
        %v1316 = vunpack.c.h.b16 %v1223
        %v1317 = vunpack.c.l.b16 %v1224
        %v1318 = vunpack.c.l.b16 %v1225
        %v1319 = vunpack.c.h.b16 %v1225
        %v1320 = vunpack.c.l.b16 %v1226
        %v1321 = vunpack.c.l.b16 %v1227
        %v1322 = vunpack.c.h.b16 %v1227
        %v1323 = vunpack.c.l.b16 %v1228
        %v1324 = vunpack.c.l.b16 %v1229
        %v1325 = vunpack.c.h.b16 %v1229
        %v1326 = vunpack.c.l.b16 %v1230
        %v1327 = vunpack.c.l.b16 %v1231
        %v1328 = vunpack.c.h.b16 %v1231
        %v1329 = vunpack.c.l.b16 %v1232
        %v1330 = vpack.c.b16 %v1285, %v1282
        %v1331 = vpack.c.b16 %v1286, %v1283
        %v1332 = vpack.c.b16 %v1287, %v1284
        %v1333 = vpack.c.b16 %v1291, %v1288
        %v1334 = vpack.c.b16 %v1292, %v1289
        %v1335 = vpack.c.b16 %v1293, %v1290
        %v1336 = vpack.c.b16 %v1297, %v1294
        %v1337 = vpack.c.b16 %v1298, %v1295
        %v1338 = vpack.c.b16 %v1299, %v1296
        %v1339 = vpack.c.b16 %v1303, %v1300
        %v1340 = vpack.c.b16 %v1304, %v1301
        %v1341 = vpack.c.b16 %v1305, %v1302
        %v1342 = vpack.c.b16 %v1309, %v1306
        %v1343 = vpack.c.b16 %v1310, %v1307
        %v1344 = vpack.c.b16 %v1311, %v1308
        %v1345 = vpack.c.b16 %v1315, %v1312
        %v1346 = vpack.c.b16 %v1316, %v1313
        %v1347 = vpack.c.b16 %v1317, %v1314
        %v1348 = vpack.c.b16 %v1321, %v1318
        %v1349 = vpack.c.b16 %v1322, %v1319
        %v1350 = vpack.c.b16 %v1323, %v1320
        %v1351 = vpack.c.b16 %v1327, %v1324
        %v1352 = vpack.c.b16 %v1328, %v1325
        %v1353 = vpack.c.b16 %v1329, %v1326
        %1378 = vmatprep.subr.bf16.mxu0 %v1331
        %1379 = vmatpush1.bf16.msra.mxu0 %v1330
        %1380 = vmatprep.subr.bf16.mxu0 %v1334
        %1381 = vmatpush1.bf16.msra.mxu0 %v1333
        %1382 = vmatprep.subr.bf16.mxu0 %v1337
        %1383 = vmatpush1.bf16.msra.mxu0 %v1336
        %1384 = vmatprep.subr.bf16.mxu0 %v1340
        %1385 = vmatpush1.bf16.msra.mxu0 %v1339
        %1386 = vmatprep.subr.bf16.mxu0 %v1343
        %1387 = vmatpush1.bf16.msra.mxu0 %v1342
        %1388 = vmatprep.subr.bf16.mxu0 %v1346
        %1389 = vmatpush1.bf16.msra.mxu0 %v1345
        %1390 = vmatprep.subr.bf16.mxu0 %v1349
        %1391 = vmatpush1.bf16.msra.mxu0 %v1348
        %1392 = vmatprep.subr.bf16.mxu0 %v1352
        %1393 = vmatpush1.bf16.msra.mxu0 %v1351
        %1394 = vmatprep.subr.bf16.mxu0 0
        %1395 = vmatpush1.bf16.msra.mxu0 0
        %1396 = vmatprep.subr.bf16.mxu0 0
        %1397 = vmatpush1.bf16.msra.mxu0 0
        %1398 = vmatprep.subr.bf16.mxu0 0
        %1399 = vmatpush1.bf16.msra.mxu0 0
        %1400 = vmatprep.subr.bf16.mxu0 0
        %1401 = vmatpush1.bf16.msra.mxu0 0
        %1402 = vmatprep.subr.bf16.mxu0 0
        %1403 = vmatpush1.bf16.msra.mxu0 0
        %1404 = vmatprep.subr.bf16.mxu0 0
        %1405 = vmatpush1.bf16.msra.mxu0 0
        %1406 = vmatprep.subr.bf16.mxu0 0
        %1407 = vmatpush1.bf16.msra.mxu0 0
        %1408 = vmatprep.subr.bf16.mxu0 0
        %1409 = vmatpush1.bf16.msra.mxu0 0
        %1410 = vmatprep.mubr.bf16.mxu0 0
        %1411 = vmatmul.mubr.bf16.gmra.mrb[0].mxu0 %v1193
        %v1412 = vpop.f32.mrb[0].mxu0
        %v1413 = vadd.f32 %v1238, %v1412
        %v1414 = vpop.f32.mrb[0].mxu0
        %v1415 = vadd.f32 %v1242, %v1414
        %v1416 = vpop.f32.mrb[0].mxu0
        %v1417 = vadd.f32 %v1238, %v1416
        %v1418 = vpop.f32.mrb[0].mxu0
        %v1419 = vadd.f32 %v1242, %v1418
        %1420 = vmatprep.mubr.bf16.mxu0 0
        %1421 = vmatmul.mubr.bf16.gmra.mrb[0].mxu0 %v1194
        %v1422 = vpop.f32.mrb[0].mxu0
        %v1423 = vadd.f32 %v1238, %v1422
        %v1424 = vpop.f32.mrb[0].mxu0
        %v1425 = vadd.f32 %v1242, %v1424
        %v1426 = vpop.f32.mrb[0].mxu0
        %v1427 = vadd.f32 %v1238, %v1426
        %v1428 = vpop.f32.mrb[0].mxu0
        %v1429 = vadd.f32 %v1242, %v1428
        %1430 = vmatprep.mubr.bf16.mxu0 0
        %1431 = vmatmul.mubr.bf16.gmra.mrb[0].mxu0 %v1195
        %v1432 = vpop.f32.mrb[0].mxu0
        %v1433 = vadd.f32 %v1238, %v1432
        %v1434 = vpop.f32.mrb[0].mxu0
        %v1435 = vadd.f32 %v1242, %v1434
        %v1436 = vpop.f32.mrb[0].mxu0
        %v1437 = vadd.f32 %v1238, %v1436
        %v1438 = vpop.f32.mrb[0].mxu0
        %v1439 = vadd.f32 %v1242, %v1438
        %1440 = vmatprep.mubr.bf16.mxu0 0
        %1441 = vmatmul.mubr.bf16.gmra.mrb[0].mxu0 %v1196
        %v1442 = vpop.f32.mrb[0].mxu0
        %v1443 = vadd.f32 %v1238, %v1442
        %v1444 = vpop.f32.mrb[0].mxu0
        %v1445 = vadd.f32 %v1242, %v1444
        %v1446 = vpop.f32.mrb[0].mxu0
        %v1447 = vadd.f32 %v1238, %v1446
        %v1448 = vpop.f32.mrb[0].mxu0
        %v1449 = vadd.f32 %v1242, %v1448
        %1450 = vmatprep.mubr.bf16.mxu0 0
        %1451 = vmatmul.mubr.bf16.gmra.mrb[0].mxu0 %v1197
        %v1452 = vpop.f32.mrb[0].mxu0
        %v1453 = vadd.f32 %v1238, %v1452
        %v1454 = vpop.f32.mrb[0].mxu0
        %v1455 = vadd.f32 %v1242, %v1454
        %v1456 = vpop.f32.mrb[0].mxu0
        %v1457 = vadd.f32 %v1238, %v1456
        %v1458 = vpop.f32.mrb[0].mxu0
        %v1459 = vadd.f32 %v1242, %v1458
        %1460 = vmatprep.mubr.bf16.mxu0 0
        %1461 = vmatmul.mubr.bf16.gmra.mrb[0].mxu0 %v1198
        %v1462 = vpop.f32.mrb[0].mxu0
        %v1463 = vadd.f32 %v1238, %v1462
        %v1464 = vpop.f32.mrb[0].mxu0
        %v1465 = vadd.f32 %v1242, %v1464
        %v1466 = vpop.f32.mrb[0].mxu0
        %v1467 = vadd.f32 %v1238, %v1466
        %v1468 = vpop.f32.mrb[0].mxu0
        %v1469 = vadd.f32 %v1242, %v1468
        %1470 = vmatprep.mubr.bf16.mxu0 0
        %1471 = vmatmul.mubr.bf16.gmra.mrb[0].mxu0 %v1199
        %v1472 = vpop.f32.mrb[0].mxu0
        %v1473 = vadd.f32 %v1238, %v1472
        %v1474 = vpop.f32.mrb[0].mxu0
        %v1475 = vadd.f32 %v1242, %v1474
        %v1476 = vpop.f32.mrb[0].mxu0
        %v1477 = vadd.f32 %v1238, %v1476
        %v1478 = vpop.f32.mrb[0].mxu0
        %v1479 = vadd.f32 %v1242, %v1478
        %1480 = vmatprep.mubr.bf16.mxu0 0
        %1481 = vmatmul.mubr.bf16.gmra.mrb[0].mxu0 %v1200
        %v1482 = vpop.f32.mrb[0].mxu0
        %v1483 = vadd.f32 %v1238, %v1482
        %v1484 = vpop.f32.mrb[0].mxu0
        %v1485 = vadd.f32 %v1242, %v1484
        %v1486 = vpop.f32.mrb[0].mxu0
        %v1487 = vadd.f32 %v1238, %v1486
        %v1488 = vpop.f32.mrb[0].mxu0
        %v1489 = vadd.f32 %v1242, %v1488
        %1490 = vdwg.mxu0
        %1491 = vmatprep.subr.bf16.mxu0 0
        %1492 = vmatpush1.bf16.msra.mxu0 %v1332
        %1493 = vmatprep.subr.bf16.mxu0 0
        %1494 = vmatpush1.bf16.msra.mxu0 %v1335
        %1495 = vmatprep.subr.bf16.mxu0 0
        %1496 = vmatpush1.bf16.msra.mxu0 %v1338
        %1497 = vmatprep.subr.bf16.mxu0 0
        %1498 = vmatpush1.bf16.msra.mxu0 %v1341
        %1499 = vmatprep.subr.bf16.mxu0 0
        %1500 = vmatpush1.bf16.msra.mxu0 %v1344
        %1501 = vmatprep.subr.bf16.mxu0 0
        %1502 = vmatpush1.bf16.msra.mxu0 %v1347
        %1503 = vmatprep.subr.bf16.mxu0 0
        %1504 = vmatpush1.bf16.msra.mxu0 %v1350
        %1505 = vmatprep.subr.bf16.mxu0 0
        %1506 = vmatpush1.bf16.msra.mxu0 %v1353
        %1507 = vmatprep.subr.bf16.mxu0 0
        %1508 = vmatpush1.bf16.msra.mxu0 0
        %1509 = vmatprep.subr.bf16.mxu0 0
        %1510 = vmatpush1.bf16.msra.mxu0 0
        %1511 = vmatprep.subr.bf16.mxu0 0
        %1512 = vmatpush1.bf16.msra.mxu0 0
        %1513 = vmatprep.subr.bf16.mxu0 0
        %1514 = vmatpush1.bf16.msra.mxu0 0
        %1515 = vmatprep.subr.bf16.mxu0 0
        %1516 = vmatpush1.bf16.msra.mxu0 0
        %1517 = vmatprep.subr.bf16.mxu0 0
        %1518 = vmatpush1.bf16.msra.mxu0 0
        %1519 = vmatprep.subr.bf16.mxu0 0
        %1520 = vmatpush1.bf16.msra.mxu0 0
        %1521 = vmatprep.subr.bf16.mxu0 0
        %1522 = vmatpush1.bf16.msra.mxu0 0
        %1523 = vmatprep.mubr.bf16.mxu0 0
        %1524 = vmatmul.mubr.bf16.gmra.mrb[0].mxu0 %v1193
        %v1525 = vpop.f32.mrb[0].mxu0
        %v1526 = vadd.f32 %v1246, %v1525
        %v1527 = vpop.f32.mrb[0].mxu0
        %v1528 = vpop.f32.mrb[0].mxu0
        %v1529 = vadd.f32 %v1246, %v1528
        %v1530 = vpop.f32.mrb[0].mxu0
        %1531 = vmatprep.mubr.bf16.mxu0 0
        %1532 = vmatmul.mubr.bf16.gmra.mrb[0].mxu0 %v1194
        %v1533 = vpop.f32.mrb[0].mxu0
        %v1534 = vadd.f32 %v1246, %v1533
        %v1535 = vpop.f32.mrb[0].mxu0
        %v1536 = vpop.f32.mrb[0].mxu0
        %v1537 = vadd.f32 %v1246, %v1536
        %v1538 = vpop.f32.mrb[0].mxu0
        %1539 = vmatprep.mubr.bf16.mxu0 0
        %1540 = vmatmul.mubr.bf16.gmra.mrb[0].mxu0 %v1195
        %v1541 = vpop.f32.mrb[0].mxu0
        %v1542 = vadd.f32 %v1246, %v1541
        %v1543 = vpop.f32.mrb[0].mxu0
        %v1544 = vpop.f32.mrb[0].mxu0
        %v1545 = vadd.f32 %v1246, %v1544
        %v1546 = vpop.f32.mrb[0].mxu0
        %1547 = vmatprep.mubr.bf16.mxu0 0
        %1548 = vmatmul.mubr.bf16.gmra.mrb[0].mxu0 %v1196
        %v1549 = vpop.f32.mrb[0].mxu0
        %v1550 = vadd.f32 %v1246, %v1549
        %v1551 = vpop.f32.mrb[0].mxu0
        %v1552 = vpop.f32.mrb[0].mxu0
        %v1553 = vadd.f32 %v1246, %v1552
        %v1554 = vpop.f32.mrb[0].mxu0
        %1555 = vmatprep.mubr.bf16.mxu0 0
        %1556 = vmatmul.mubr.bf16.gmra.mrb[0].mxu0 %v1197
        %v1557 = vpop.f32.mrb[0].mxu0
        %v1558 = vadd.f32 %v1246, %v1557
        %v1559 = vpop.f32.mrb[0].mxu0
        %v1560 = vpop.f32.mrb[0].mxu0
        %v1561 = vadd.f32 %v1246, %v1560
        %v1562 = vpop.f32.mrb[0].mxu0
        %1563 = vmatprep.mubr.bf16.mxu0 0
        %1564 = vmatmul.mubr.bf16.gmra.mrb[0].mxu0 %v1198
        %v1565 = vpop.f32.mrb[0].mxu0
        %v1566 = vadd.f32 %v1246, %v1565
        %v1567 = vpop.f32.mrb[0].mxu0
        %v1568 = vpop.f32.mrb[0].mxu0
        %v1569 = vadd.f32 %v1246, %v1568
        %v1570 = vpop.f32.mrb[0].mxu0
        %1571 = vmatprep.mubr.bf16.mxu0 0
        %1572 = vmatmul.mubr.bf16.gmra.mrb[0].mxu0 %v1199
        %v1573 = vpop.f32.mrb[0].mxu0
        %v1574 = vadd.f32 %v1246, %v1573
        %v1575 = vpop.f32.mrb[0].mxu0
        %v1576 = vpop.f32.mrb[0].mxu0
        %v1577 = vadd.f32 %v1246, %v1576
        %v1578 = vpop.f32.mrb[0].mxu0
        %1579 = vmatprep.mubr.bf16.mxu0 0
        %1580 = vmatmul.mubr.bf16.gmra.mrb[0].mxu0 %v1200
        %v1581 = vpop.f32.mrb[0].mxu0
        %v1582 = vadd.f32 %v1246, %v1581
        %v1583 = vpop.f32.mrb[0].mxu0
        %v1584 = vpop.f32.mrb[0].mxu0
        %v1585 = vadd.f32 %v1246, %v1584
        %v1586 = vpop.f32.mrb[0].mxu0
        %1587 = vdwg.mxu0
        %v1588 = vmul.f32 %v1413, 0.125
        %v1589 = vmul.f32 %v1417, 0.125
        %v1590 = vmul.f32 %v1423, 0.125
        %v1591 = vmul.f32 %v1427, 0.125
        %v1592 = vmul.f32 %v1433, 0.125
        %v1593 = vmul.f32 %v1437, 0.125
        %v1594 = vmul.f32 %v1443, 0.125
        %v1595 = vmul.f32 %v1447, 0.125
        %v1596 = vmul.f32 %v1453, 0.125
        %v1597 = vmul.f32 %v1457, 0.125
        %v1598 = vmul.f32 %v1463, 0.125
        %v1599 = vmul.f32 %v1467, 0.125
        %v1600 = vmul.f32 %v1473, 0.125
        %v1601 = vmul.f32 %v1477, 0.125
        %v1602 = vmul.f32 %v1483, 0.125
        %v1603 = vmul.f32 %v1487, 0.125
        %v1604 = vpack.c.bf16 %v1589, %v1588
        %v1605 = vpack.c.bf16 %v1591, %v1590
        %v1606 = vpack.c.bf16 %v1593, %v1592
        %v1607 = vpack.c.bf16 %v1595, %v1594
        %v1608 = vpack.c.bf16 %v1597, %v1596
        %v1609 = vpack.c.bf16 %v1599, %v1598
        %v1610 = vpack.c.bf16 %v1601, %v1600
        %v1611 = vpack.c.bf16 %v1603, %v1602
        %1620 = vrot.lane.b32.xlu0 %v1604, 64
        %v1621 = vpop.permute.xlu0 %1620
        %1622 = vrot.lane.b32.xlu0 %v1605, 64
        %v1623 = vpop.permute.xlu0 %1622
        %1624 = vrot.lane.b32.xlu0 %v1606, 64
        %v1625 = vpop.permute.xlu0 %1624
        %1626 = vrot.lane.b32.xlu0 %v1607, 64
        %v1627 = vpop.permute.xlu0 %1626
        %1628 = vrot.lane.b32.xlu0 %v1608, 64
        %v1629 = vpop.permute.xlu0 %1628
        %1630 = vrot.lane.b32.xlu0 %v1609, 64
        %v1631 = vpop.permute.xlu0 %1630
        %1632 = vrot.lane.b32.xlu0 %v1610, 64
        %v1633 = vpop.permute.xlu0 %1632
        %1634 = vrot.lane.b32.xlu0 %v1611, 64
        %v1635 = vpop.permute.xlu0 %1634
        %v1638 = vpack.i.b16 %v1621, %v1604
        %v1640 = vshrl.u32 %v1604, 16
        %v1641 = vshrl.u32 %v1621, 16
        %v1642 = vpack.i.b16 %v1641, %v1640
        %v1645 = vpack.i.b16 0, 0
        %v1647 = vshrl.u32 0, 16
        %v1648 = vpack.i.b16 %v1647, %v1647
        %v1652 = vpack.i.b16 %v1623, %v1605
        %v1654 = vshrl.u32 %v1605, 16
        %v1655 = vshrl.u32 %v1623, 16
        %v1656 = vpack.i.b16 %v1655, %v1654
        %v1660 = vpack.i.b16 %v1625, %v1606
        %v1662 = vshrl.u32 %v1606, 16
        %v1663 = vshrl.u32 %v1625, 16
        %v1664 = vpack.i.b16 %v1663, %v1662
        %v1668 = vpack.i.b16 %v1627, %v1607
        %v1670 = vshrl.u32 %v1607, 16
        %v1671 = vshrl.u32 %v1627, 16
        %v1672 = vpack.i.b16 %v1671, %v1670
        %v1676 = vpack.i.b16 %v1629, %v1608
        %v1678 = vshrl.u32 %v1608, 16
        %v1679 = vshrl.u32 %v1629, 16
        %v1680 = vpack.i.b16 %v1679, %v1678
        %v1684 = vpack.i.b16 %v1631, %v1609
        %v1686 = vshrl.u32 %v1609, 16
        %v1687 = vshrl.u32 %v1631, 16
        %v1688 = vpack.i.b16 %v1687, %v1686
        %v1692 = vpack.i.b16 %v1633, %v1610
        %v1694 = vshrl.u32 %v1610, 16
        %v1695 = vshrl.u32 %v1633, 16
        %v1696 = vpack.i.b16 %v1695, %v1694
        %v1700 = vpack.i.b16 %v1635, %v1611
        %v1702 = vshrl.u32 %v1611, 16
        %v1703 = vshrl.u32 %v1635, 16
        %v1704 = vpack.i.b16 %v1703, %v1702
        %v1706 = vcombine.high %v1638, %v1645
        %v1708 = vunpack.c.l.s4 1983009808
        %v1709 = vunpack.c.0.s8 %v1708
        %v1710 = vlaneseq
        %v1711 = vshrl.u32 %v1710, 7
        %v1712 = vsub.s32 %v1709, %v1711
        %v1713 = vrot.slane %v1638, %v1712
        %v1715 = vunpack.c.l.s4 1983009808
        %v1716 = vunpack.c.0.s8 %v1715
        %v1717 = vlaneseq
        %v1718 = vshrl.u32 %v1717, 7
        %v1719 = vsub.s32 %v1716, %v1718
        %v1720 = vrot.slane %v1706, %v1719
        %v1721 = vcombine.high %v1713, 0
        %v1723 = vunpack.c.l.s4 1934713408
        %v1724 = vunpack.c.0.s8 %v1723
        %v1725 = vlaneseq
        %v1726 = vshrl.u32 %v1725, 7
        %v1727 = vsub.s32 %v1724, %v1726
        %v1728 = vrot.slane %v1713, %v1727
        %v1730 = vunpack.c.l.s4 1934713408
        %v1731 = vunpack.c.0.s8 %v1730
        %v1732 = vlaneseq
        %v1733 = vshrl.u32 %v1732, 7
        %v1734 = vsub.s32 %v1731, %v1733
        %v1735 = vrot.slane %v1721, %v1734
        %v1736 = vcombine.high %v1720, 0
        %v1738 = vunpack.c.l.s4 1934713408
        %v1739 = vunpack.c.0.s8 %v1738
        %v1740 = vlaneseq
        %v1741 = vshrl.u32 %v1740, 7
        %v1742 = vsub.s32 %v1739, %v1741
        %v1743 = vrot.slane %v1720, %v1742
        %v1745 = vunpack.c.l.s4 1934713408
        %v1746 = vunpack.c.0.s8 %v1745
        %v1747 = vlaneseq
        %v1748 = vshrl.u32 %v1747, 7
        %v1749 = vsub.s32 %v1746, %v1748
        %v1750 = vrot.slane %v1736, %v1749
        %v1751 = vcombine.high %v1728, 0
        %v1752 = vcombine.high %v1735, 0
        %v1753 = vcombine.high %v1743, 0
        %v1754 = vcombine.high %v1750, 0
        %v1755 = vcombine.high %v1642, %v1648
        %v1757 = vunpack.c.l.s4 1983009808
        %v1758 = vunpack.c.0.s8 %v1757
        %v1759 = vlaneseq
        %v1760 = vshrl.u32 %v1759, 7
        %v1761 = vsub.s32 %v1758, %v1760
        %v1762 = vrot.slane %v1642, %v1761
        %v1764 = vunpack.c.l.s4 1983009808
        %v1765 = vunpack.c.0.s8 %v1764
        %v1766 = vlaneseq
        %v1767 = vshrl.u32 %v1766, 7
        %v1768 = vsub.s32 %v1765, %v1767
        %v1769 = vrot.slane %v1755, %v1768
        %v1770 = vcombine.high %v1762, 0
        %v1772 = vunpack.c.l.s4 1934713408
        %v1773 = vunpack.c.0.s8 %v1772
        %v1774 = vlaneseq
        %v1775 = vshrl.u32 %v1774, 7
        %v1776 = vsub.s32 %v1773, %v1775
        %v1777 = vrot.slane %v1762, %v1776
        %v1779 = vunpack.c.l.s4 1934713408
        %v1780 = vunpack.c.0.s8 %v1779
        %v1781 = vlaneseq
        %v1782 = vshrl.u32 %v1781, 7
        %v1783 = vsub.s32 %v1780, %v1782
        %v1784 = vrot.slane %v1770, %v1783
        %v1785 = vcombine.high %v1769, 0
        %v1787 = vunpack.c.l.s4 1934713408
        %v1788 = vunpack.c.0.s8 %v1787
        %v1789 = vlaneseq
        %v1790 = vshrl.u32 %v1789, 7
        %v1791 = vsub.s32 %v1788, %v1790
        %v1792 = vrot.slane %v1769, %v1791
        %v1794 = vunpack.c.l.s4 1934713408
        %v1795 = vunpack.c.0.s8 %v1794
        %v1796 = vlaneseq
        %v1797 = vshrl.u32 %v1796, 7
        %v1798 = vsub.s32 %v1795, %v1797
        %v1799 = vrot.slane %v1785, %v1798
        %v1800 = vcombine.high %v1777, 0
        %v1801 = vcombine.high %v1784, 0
        %v1802 = vcombine.high %v1792, 0
        %v1803 = vcombine.high %v1799, 0
        %v1804 = vcombine.high %v1652, %v1645
        %v1806 = vunpack.c.l.s4 1983009808
        %v1807 = vunpack.c.0.s8 %v1806
        %v1808 = vlaneseq
        %v1809 = vshrl.u32 %v1808, 7
        %v1810 = vsub.s32 %v1807, %v1809
        %v1811 = vrot.slane %v1652, %v1810
        %v1813 = vunpack.c.l.s4 1983009808
        %v1814 = vunpack.c.0.s8 %v1813
        %v1815 = vlaneseq
        %v1816 = vshrl.u32 %v1815, 7
        %v1817 = vsub.s32 %v1814, %v1816
        %v1818 = vrot.slane %v1804, %v1817
        %v1819 = vcombine.high %v1811, 0
        %v1821 = vunpack.c.l.s4 1934713408
        %v1822 = vunpack.c.0.s8 %v1821
        %v1823 = vlaneseq
        %v1824 = vshrl.u32 %v1823, 7
        %v1825 = vsub.s32 %v1822, %v1824
        %v1826 = vrot.slane %v1811, %v1825
        %v1828 = vunpack.c.l.s4 1934713408
        %v1829 = vunpack.c.0.s8 %v1828
        %v1830 = vlaneseq
        %v1831 = vshrl.u32 %v1830, 7
        %v1832 = vsub.s32 %v1829, %v1831
        %v1833 = vrot.slane %v1819, %v1832
        %v1834 = vcombine.high %v1818, 0
        %v1836 = vunpack.c.l.s4 1934713408
        %v1837 = vunpack.c.0.s8 %v1836
        %v1838 = vlaneseq
        %v1839 = vshrl.u32 %v1838, 7
        %v1840 = vsub.s32 %v1837, %v1839
        %v1841 = vrot.slane %v1818, %v1840
        %v1843 = vunpack.c.l.s4 1934713408
        %v1844 = vunpack.c.0.s8 %v1843
        %v1845 = vlaneseq
        %v1846 = vshrl.u32 %v1845, 7
        %v1847 = vsub.s32 %v1844, %v1846
        %v1848 = vrot.slane %v1834, %v1847
        %v1849 = vcombine.high %v1826, 0
        %v1850 = vcombine.high %v1833, 0
        %v1851 = vcombine.high %v1841, 0
        %v1852 = vcombine.high %v1848, 0
        %v1853 = vcombine.high %v1656, %v1648
        %v1855 = vunpack.c.l.s4 1983009808
        %v1856 = vunpack.c.0.s8 %v1855
        %v1857 = vlaneseq
        %v1858 = vshrl.u32 %v1857, 7
        %v1859 = vsub.s32 %v1856, %v1858
        %v1860 = vrot.slane %v1656, %v1859
        %v1862 = vunpack.c.l.s4 1983009808
        %v1863 = vunpack.c.0.s8 %v1862
        %v1864 = vlaneseq
        %v1865 = vshrl.u32 %v1864, 7
        %v1866 = vsub.s32 %v1863, %v1865
        %v1867 = vrot.slane %v1853, %v1866
        %v1868 = vcombine.high %v1860, 0
        %v1870 = vunpack.c.l.s4 1934713408
        %v1871 = vunpack.c.0.s8 %v1870
        %v1872 = vlaneseq
        %v1873 = vshrl.u32 %v1872, 7
        %v1874 = vsub.s32 %v1871, %v1873
        %v1875 = vrot.slane %v1860, %v1874
        %v1877 = vunpack.c.l.s4 1934713408
        %v1878 = vunpack.c.0.s8 %v1877
        %v1879 = vlaneseq
        %v1880 = vshrl.u32 %v1879, 7
        %v1881 = vsub.s32 %v1878, %v1880
        %v1882 = vrot.slane %v1868, %v1881
        %v1883 = vcombine.high %v1867, 0
        %v1885 = vunpack.c.l.s4 1934713408
        %v1886 = vunpack.c.0.s8 %v1885
        %v1887 = vlaneseq
        %v1888 = vshrl.u32 %v1887, 7
        %v1889 = vsub.s32 %v1886, %v1888
        %v1890 = vrot.slane %v1867, %v1889
        %v1892 = vunpack.c.l.s4 1934713408
        %v1893 = vunpack.c.0.s8 %v1892
        %v1894 = vlaneseq
        %v1895 = vshrl.u32 %v1894, 7
        %v1896 = vsub.s32 %v1893, %v1895
        %v1897 = vrot.slane %v1883, %v1896
        %v1898 = vcombine.high %v1875, 0
        %v1899 = vcombine.high %v1882, 0
        %v1900 = vcombine.high %v1890, 0
        %v1901 = vcombine.high %v1897, 0
        %v1902 = vcombine.high %v1660, %v1645
        %v1904 = vunpack.c.l.s4 1983009808
        %v1905 = vunpack.c.0.s8 %v1904
        %v1906 = vlaneseq
        %v1907 = vshrl.u32 %v1906, 7
        %v1908 = vsub.s32 %v1905, %v1907
        %v1909 = vrot.slane %v1660, %v1908
        %v1911 = vunpack.c.l.s4 1983009808
        %v1912 = vunpack.c.0.s8 %v1911
        %v1913 = vlaneseq
        %v1914 = vshrl.u32 %v1913, 7
        %v1915 = vsub.s32 %v1912, %v1914
        %v1916 = vrot.slane %v1902, %v1915
        %v1917 = vcombine.high %v1909, 0
        %v1919 = vunpack.c.l.s4 1934713408
        %v1920 = vunpack.c.0.s8 %v1919
        %v1921 = vlaneseq
        %v1922 = vshrl.u32 %v1921, 7
        %v1923 = vsub.s32 %v1920, %v1922
        %v1924 = vrot.slane %v1909, %v1923
        %v1926 = vunpack.c.l.s4 1934713408
        %v1927 = vunpack.c.0.s8 %v1926
        %v1928 = vlaneseq
        %v1929 = vshrl.u32 %v1928, 7
        %v1930 = vsub.s32 %v1927, %v1929
        %v1931 = vrot.slane %v1917, %v1930
        %v1932 = vcombine.high %v1916, 0
        %v1934 = vunpack.c.l.s4 1934713408
        %v1935 = vunpack.c.0.s8 %v1934
        %v1936 = vlaneseq
        %v1937 = vshrl.u32 %v1936, 7
        %v1938 = vsub.s32 %v1935, %v1937
        %v1939 = vrot.slane %v1916, %v1938
        %v1941 = vunpack.c.l.s4 1934713408
        %v1942 = vunpack.c.0.s8 %v1941
        %v1943 = vlaneseq
        %v1944 = vshrl.u32 %v1943, 7
        %v1945 = vsub.s32 %v1942, %v1944
        %v1946 = vrot.slane %v1932, %v1945
        %v1947 = vcombine.high %v1924, 0
        %v1948 = vcombine.high %v1931, 0
        %v1949 = vcombine.high %v1939, 0
        %v1950 = vcombine.high %v1946, 0
        %v1951 = vcombine.high %v1664, %v1648
        %v1953 = vunpack.c.l.s4 1983009808
        %v1954 = vunpack.c.0.s8 %v1953
        %v1955 = vlaneseq
        %v1956 = vshrl.u32 %v1955, 7
        %v1957 = vsub.s32 %v1954, %v1956
        %v1958 = vrot.slane %v1664, %v1957
        %v1960 = vunpack.c.l.s4 1983009808
        %v1961 = vunpack.c.0.s8 %v1960
        %v1962 = vlaneseq
        %v1963 = vshrl.u32 %v1962, 7
        %v1964 = vsub.s32 %v1961, %v1963
        %v1965 = vrot.slane %v1951, %v1964
        %v1966 = vcombine.high %v1958, 0
        %v1968 = vunpack.c.l.s4 1934713408
        %v1969 = vunpack.c.0.s8 %v1968
        %v1970 = vlaneseq
        %v1971 = vshrl.u32 %v1970, 7
        %v1972 = vsub.s32 %v1969, %v1971
        %v1973 = vrot.slane %v1958, %v1972
        %v1975 = vunpack.c.l.s4 1934713408
        %v1976 = vunpack.c.0.s8 %v1975
        %v1977 = vlaneseq
        %v1978 = vshrl.u32 %v1977, 7
        %v1979 = vsub.s32 %v1976, %v1978
        %v1980 = vrot.slane %v1966, %v1979
        %v1981 = vcombine.high %v1965, 0
        %v1983 = vunpack.c.l.s4 1934713408
        %v1984 = vunpack.c.0.s8 %v1983
        %v1985 = vlaneseq
        %v1986 = vshrl.u32 %v1985, 7
        %v1987 = vsub.s32 %v1984, %v1986
        %v1988 = vrot.slane %v1965, %v1987
        %v1990 = vunpack.c.l.s4 1934713408
        %v1991 = vunpack.c.0.s8 %v1990
        %v1992 = vlaneseq
        %v1993 = vshrl.u32 %v1992, 7
        %v1994 = vsub.s32 %v1991, %v1993
        %v1995 = vrot.slane %v1981, %v1994
        %v1996 = vcombine.high %v1973, 0
        %v1997 = vcombine.high %v1980, 0
        %v1998 = vcombine.high %v1988, 0
        %v1999 = vcombine.high %v1995, 0
        %v2000 = vcombine.high %v1668, %v1645
        %v2002 = vunpack.c.l.s4 1983009808
        %v2003 = vunpack.c.0.s8 %v2002
        %v2004 = vlaneseq
        %v2005 = vshrl.u32 %v2004, 7
        %v2006 = vsub.s32 %v2003, %v2005
        %v2007 = vrot.slane %v1668, %v2006
        %v2009 = vunpack.c.l.s4 1983009808
        %v2010 = vunpack.c.0.s8 %v2009
        %v2011 = vlaneseq
        %v2012 = vshrl.u32 %v2011, 7
        %v2013 = vsub.s32 %v2010, %v2012
        %v2014 = vrot.slane %v2000, %v2013
        %v2015 = vcombine.high %v2007, 0
        %v2017 = vunpack.c.l.s4 1934713408
        %v2018 = vunpack.c.0.s8 %v2017
        %v2019 = vlaneseq
        %v2020 = vshrl.u32 %v2019, 7
        %v2021 = vsub.s32 %v2018, %v2020
        %v2022 = vrot.slane %v2007, %v2021
        %v2024 = vunpack.c.l.s4 1934713408
        %v2025 = vunpack.c.0.s8 %v2024
        %v2026 = vlaneseq
        %v2027 = vshrl.u32 %v2026, 7
        %v2028 = vsub.s32 %v2025, %v2027
        %v2029 = vrot.slane %v2015, %v2028
        %v2030 = vcombine.high %v2014, 0
        %v2032 = vunpack.c.l.s4 1934713408
        %v2033 = vunpack.c.0.s8 %v2032
        %v2034 = vlaneseq
        %v2035 = vshrl.u32 %v2034, 7
        %v2036 = vsub.s32 %v2033, %v2035
        %v2037 = vrot.slane %v2014, %v2036
        %v2039 = vunpack.c.l.s4 1934713408
        %v2040 = vunpack.c.0.s8 %v2039
        %v2041 = vlaneseq
        %v2042 = vshrl.u32 %v2041, 7
        %v2043 = vsub.s32 %v2040, %v2042
        %v2044 = vrot.slane %v2030, %v2043
        %v2045 = vcombine.high %v2022, 0
        %v2046 = vcombine.high %v2029, 0
        %v2047 = vcombine.high %v2037, 0
        %v2048 = vcombine.high %v2044, 0
        %v2049 = vcombine.high %v1672, %v1648
        %v2051 = vunpack.c.l.s4 1983009808
        %v2052 = vunpack.c.0.s8 %v2051
        %v2053 = vlaneseq
        %v2054 = vshrl.u32 %v2053, 7
        %v2055 = vsub.s32 %v2052, %v2054
        %v2056 = vrot.slane %v1672, %v2055
        %v2058 = vunpack.c.l.s4 1983009808
        %v2059 = vunpack.c.0.s8 %v2058
        %v2060 = vlaneseq
        %v2061 = vshrl.u32 %v2060, 7
        %v2062 = vsub.s32 %v2059, %v2061
        %v2063 = vrot.slane %v2049, %v2062
        %v2064 = vcombine.high %v2056, 0
        %v2066 = vunpack.c.l.s4 1934713408
        %v2067 = vunpack.c.0.s8 %v2066
        %v2068 = vlaneseq
        %v2069 = vshrl.u32 %v2068, 7
        %v2070 = vsub.s32 %v2067, %v2069
        %v2071 = vrot.slane %v2056, %v2070
        %v2073 = vunpack.c.l.s4 1934713408
        %v2074 = vunpack.c.0.s8 %v2073
        %v2075 = vlaneseq
        %v2076 = vshrl.u32 %v2075, 7
        %v2077 = vsub.s32 %v2074, %v2076
        %v2078 = vrot.slane %v2064, %v2077
        %v2079 = vcombine.high %v2063, 0
        %v2081 = vunpack.c.l.s4 1934713408
        %v2082 = vunpack.c.0.s8 %v2081
        %v2083 = vlaneseq
        %v2084 = vshrl.u32 %v2083, 7
        %v2085 = vsub.s32 %v2082, %v2084
        %v2086 = vrot.slane %v2063, %v2085
        %v2088 = vunpack.c.l.s4 1934713408
        %v2089 = vunpack.c.0.s8 %v2088
        %v2090 = vlaneseq
        %v2091 = vshrl.u32 %v2090, 7
        %v2092 = vsub.s32 %v2089, %v2091
        %v2093 = vrot.slane %v2079, %v2092
        %v2094 = vcombine.high %v2071, 0
        %v2095 = vcombine.high %v2078, 0
        %v2096 = vcombine.high %v2086, 0
        %v2097 = vcombine.high %v2093, 0
        %v2098 = vcombine.high %v1676, %v1645
        %v2100 = vunpack.c.l.s4 1983009808
        %v2101 = vunpack.c.0.s8 %v2100
        %v2102 = vlaneseq
        %v2103 = vshrl.u32 %v2102, 7
        %v2104 = vsub.s32 %v2101, %v2103
        %v2105 = vrot.slane %v1676, %v2104
        %v2107 = vunpack.c.l.s4 1983009808
        %v2108 = vunpack.c.0.s8 %v2107
        %v2109 = vlaneseq
        %v2110 = vshrl.u32 %v2109, 7
        %v2111 = vsub.s32 %v2108, %v2110
        %v2112 = vrot.slane %v2098, %v2111
        %v2113 = vcombine.high %v2105, 0
        %v2115 = vunpack.c.l.s4 1934713408
        %v2116 = vunpack.c.0.s8 %v2115
        %v2117 = vlaneseq
        %v2118 = vshrl.u32 %v2117, 7
        %v2119 = vsub.s32 %v2116, %v2118
        %v2120 = vrot.slane %v2105, %v2119
        %v2122 = vunpack.c.l.s4 1934713408
        %v2123 = vunpack.c.0.s8 %v2122
        %v2124 = vlaneseq
        %v2125 = vshrl.u32 %v2124, 7
        %v2126 = vsub.s32 %v2123, %v2125
        %v2127 = vrot.slane %v2113, %v2126
        %v2128 = vcombine.high %v2112, 0
        %v2130 = vunpack.c.l.s4 1934713408
        %v2131 = vunpack.c.0.s8 %v2130
        %v2132 = vlaneseq
        %v2133 = vshrl.u32 %v2132, 7
        %v2134 = vsub.s32 %v2131, %v2133
        %v2135 = vrot.slane %v2112, %v2134
        %v2137 = vunpack.c.l.s4 1934713408
        %v2138 = vunpack.c.0.s8 %v2137
        %v2139 = vlaneseq
        %v2140 = vshrl.u32 %v2139, 7
        %v2141 = vsub.s32 %v2138, %v2140
        %v2142 = vrot.slane %v2128, %v2141
        %v2143 = vcombine.high %v2120, 0
        %v2144 = vcombine.high %v2127, 0
        %v2145 = vcombine.high %v2135, 0
        %v2146 = vcombine.high %v2142, 0
        %v2147 = vcombine.high %v1680, %v1648
        %v2149 = vunpack.c.l.s4 1983009808
        %v2150 = vunpack.c.0.s8 %v2149
        %v2151 = vlaneseq
        %v2152 = vshrl.u32 %v2151, 7
        %v2153 = vsub.s32 %v2150, %v2152
        %v2154 = vrot.slane %v1680, %v2153
        %v2156 = vunpack.c.l.s4 1983009808
        %v2157 = vunpack.c.0.s8 %v2156
        %v2158 = vlaneseq
        %v2159 = vshrl.u32 %v2158, 7
        %v2160 = vsub.s32 %v2157, %v2159
        %v2161 = vrot.slane %v2147, %v2160
        %v2162 = vcombine.high %v2154, 0
        %v2164 = vunpack.c.l.s4 1934713408
        %v2165 = vunpack.c.0.s8 %v2164
        %v2166 = vlaneseq
        %v2167 = vshrl.u32 %v2166, 7
        %v2168 = vsub.s32 %v2165, %v2167
        %v2169 = vrot.slane %v2154, %v2168
        %v2171 = vunpack.c.l.s4 1934713408
        %v2172 = vunpack.c.0.s8 %v2171
        %v2173 = vlaneseq
        %v2174 = vshrl.u32 %v2173, 7
        %v2175 = vsub.s32 %v2172, %v2174
        %v2176 = vrot.slane %v2162, %v2175
        %v2177 = vcombine.high %v2161, 0
        %v2179 = vunpack.c.l.s4 1934713408
        %v2180 = vunpack.c.0.s8 %v2179
        %v2181 = vlaneseq
        %v2182 = vshrl.u32 %v2181, 7
        %v2183 = vsub.s32 %v2180, %v2182
        %v2184 = vrot.slane %v2161, %v2183
        %v2186 = vunpack.c.l.s4 1934713408
        %v2187 = vunpack.c.0.s8 %v2186
        %v2188 = vlaneseq
        %v2189 = vshrl.u32 %v2188, 7
        %v2190 = vsub.s32 %v2187, %v2189
        %v2191 = vrot.slane %v2177, %v2190
        %v2192 = vcombine.high %v2169, 0
        %v2193 = vcombine.high %v2176, 0
        %v2194 = vcombine.high %v2184, 0
        %v2195 = vcombine.high %v2191, 0
        %v2196 = vcombine.high %v1684, %v1645
        %v2198 = vunpack.c.l.s4 1983009808
        %v2199 = vunpack.c.0.s8 %v2198
        %v2200 = vlaneseq
        %v2201 = vshrl.u32 %v2200, 7
        %v2202 = vsub.s32 %v2199, %v2201
        %v2203 = vrot.slane %v1684, %v2202
        %v2205 = vunpack.c.l.s4 1983009808
        %v2206 = vunpack.c.0.s8 %v2205
        %v2207 = vlaneseq
        %v2208 = vshrl.u32 %v2207, 7
        %v2209 = vsub.s32 %v2206, %v2208
        %v2210 = vrot.slane %v2196, %v2209
        %v2211 = vcombine.high %v2203, 0
        %v2213 = vunpack.c.l.s4 1934713408
        %v2214 = vunpack.c.0.s8 %v2213
        %v2215 = vlaneseq
        %v2216 = vshrl.u32 %v2215, 7
        %v2217 = vsub.s32 %v2214, %v2216
        %v2218 = vrot.slane %v2203, %v2217
        %v2220 = vunpack.c.l.s4 1934713408
        %v2221 = vunpack.c.0.s8 %v2220
        %v2222 = vlaneseq
        %v2223 = vshrl.u32 %v2222, 7
        %v2224 = vsub.s32 %v2221, %v2223
        %v2225 = vrot.slane %v2211, %v2224
        %v2226 = vcombine.high %v2210, 0
        %v2228 = vunpack.c.l.s4 1934713408
        %v2229 = vunpack.c.0.s8 %v2228
        %v2230 = vlaneseq
        %v2231 = vshrl.u32 %v2230, 7
        %v2232 = vsub.s32 %v2229, %v2231
        %v2233 = vrot.slane %v2210, %v2232
        %v2235 = vunpack.c.l.s4 1934713408
        %v2236 = vunpack.c.0.s8 %v2235
        %v2237 = vlaneseq
        %v2238 = vshrl.u32 %v2237, 7
        %v2239 = vsub.s32 %v2236, %v2238
        %v2240 = vrot.slane %v2226, %v2239
        %v2241 = vcombine.high %v2218, 0
        %v2242 = vcombine.high %v2225, 0
        %v2243 = vcombine.high %v2233, 0
        %v2244 = vcombine.high %v2240, 0
        %v2245 = vcombine.high %v1688, %v1648
        %v2247 = vunpack.c.l.s4 1983009808
        %v2248 = vunpack.c.0.s8 %v2247
        %v2249 = vlaneseq
        %v2250 = vshrl.u32 %v2249, 7
        %v2251 = vsub.s32 %v2248, %v2250
        %v2252 = vrot.slane %v1688, %v2251
        %v2254 = vunpack.c.l.s4 1983009808
        %v2255 = vunpack.c.0.s8 %v2254
        %v2256 = vlaneseq
        %v2257 = vshrl.u32 %v2256, 7
        %v2258 = vsub.s32 %v2255, %v2257
        %v2259 = vrot.slane %v2245, %v2258
        %v2260 = vcombine.high %v2252, 0
        %v2262 = vunpack.c.l.s4 1934713408
        %v2263 = vunpack.c.0.s8 %v2262
        %v2264 = vlaneseq
        %v2265 = vshrl.u32 %v2264, 7
        %v2266 = vsub.s32 %v2263, %v2265
        %v2267 = vrot.slane %v2252, %v2266
        %v2269 = vunpack.c.l.s4 1934713408
        %v2270 = vunpack.c.0.s8 %v2269
        %v2271 = vlaneseq
        %v2272 = vshrl.u32 %v2271, 7
        %v2273 = vsub.s32 %v2270, %v2272
        %v2274 = vrot.slane %v2260, %v2273
        %v2275 = vcombine.high %v2259, 0
        %v2277 = vunpack.c.l.s4 1934713408
        %v2278 = vunpack.c.0.s8 %v2277
        %v2279 = vlaneseq
        %v2280 = vshrl.u32 %v2279, 7
        %v2281 = vsub.s32 %v2278, %v2280
        %v2282 = vrot.slane %v2259, %v2281
        %v2284 = vunpack.c.l.s4 1934713408
        %v2285 = vunpack.c.0.s8 %v2284
        %v2286 = vlaneseq
        %v2287 = vshrl.u32 %v2286, 7
        %v2288 = vsub.s32 %v2285, %v2287
        %v2289 = vrot.slane %v2275, %v2288
        %v2290 = vcombine.high %v2267, 0
        %v2291 = vcombine.high %v2274, 0
        %v2292 = vcombine.high %v2282, 0
        %v2293 = vcombine.high %v2289, 0
        %v2294 = vcombine.high %v1692, %v1645
        %v2296 = vunpack.c.l.s4 1983009808
        %v2297 = vunpack.c.0.s8 %v2296
        %v2298 = vlaneseq
        %v2299 = vshrl.u32 %v2298, 7
        %v2300 = vsub.s32 %v2297, %v2299
        %v2301 = vrot.slane %v1692, %v2300
        %v2303 = vunpack.c.l.s4 1983009808
        %v2304 = vunpack.c.0.s8 %v2303
        %v2305 = vlaneseq
        %v2306 = vshrl.u32 %v2305, 7
        %v2307 = vsub.s32 %v2304, %v2306
        %v2308 = vrot.slane %v2294, %v2307
        %v2309 = vcombine.high %v2301, 0
        %v2311 = vunpack.c.l.s4 1934713408
        %v2312 = vunpack.c.0.s8 %v2311
        %v2313 = vlaneseq
        %v2314 = vshrl.u32 %v2313, 7
        %v2315 = vsub.s32 %v2312, %v2314
        %v2316 = vrot.slane %v2301, %v2315
        %v2318 = vunpack.c.l.s4 1934713408
        %v2319 = vunpack.c.0.s8 %v2318
        %v2320 = vlaneseq
        %v2321 = vshrl.u32 %v2320, 7
        %v2322 = vsub.s32 %v2319, %v2321
        %v2323 = vrot.slane %v2309, %v2322
        %v2324 = vcombine.high %v2308, 0
        %v2326 = vunpack.c.l.s4 1934713408
        %v2327 = vunpack.c.0.s8 %v2326
        %v2328 = vlaneseq
        %v2329 = vshrl.u32 %v2328, 7
        %v2330 = vsub.s32 %v2327, %v2329
        %v2331 = vrot.slane %v2308, %v2330
        %v2333 = vunpack.c.l.s4 1934713408
        %v2334 = vunpack.c.0.s8 %v2333
        %v2335 = vlaneseq
        %v2336 = vshrl.u32 %v2335, 7
        %v2337 = vsub.s32 %v2334, %v2336
        %v2338 = vrot.slane %v2324, %v2337
        %v2339 = vcombine.high %v2316, 0
        %v2340 = vcombine.high %v2323, 0
        %v2341 = vcombine.high %v2331, 0
        %v2342 = vcombine.high %v2338, 0
        %v2343 = vcombine.high %v1696, %v1648
        %v2345 = vunpack.c.l.s4 1983009808
        %v2346 = vunpack.c.0.s8 %v2345
        %v2347 = vlaneseq
        %v2348 = vshrl.u32 %v2347, 7
        %v2349 = vsub.s32 %v2346, %v2348
        %v2350 = vrot.slane %v1696, %v2349
        %v2352 = vunpack.c.l.s4 1983009808
        %v2353 = vunpack.c.0.s8 %v2352
        %v2354 = vlaneseq
        %v2355 = vshrl.u32 %v2354, 7
        %v2356 = vsub.s32 %v2353, %v2355
        %v2357 = vrot.slane %v2343, %v2356
        %v2358 = vcombine.high %v2350, 0
        %v2360 = vunpack.c.l.s4 1934713408
        %v2361 = vunpack.c.0.s8 %v2360
        %v2362 = vlaneseq
        %v2363 = vshrl.u32 %v2362, 7
        %v2364 = vsub.s32 %v2361, %v2363
        %v2365 = vrot.slane %v2350, %v2364
        %v2367 = vunpack.c.l.s4 1934713408
        %v2368 = vunpack.c.0.s8 %v2367
        %v2369 = vlaneseq
        %v2370 = vshrl.u32 %v2369, 7
        %v2371 = vsub.s32 %v2368, %v2370
        %v2372 = vrot.slane %v2358, %v2371
        %v2373 = vcombine.high %v2357, 0
        %v2375 = vunpack.c.l.s4 1934713408
        %v2376 = vunpack.c.0.s8 %v2375
        %v2377 = vlaneseq
        %v2378 = vshrl.u32 %v2377, 7
        %v2379 = vsub.s32 %v2376, %v2378
        %v2380 = vrot.slane %v2357, %v2379
        %v2382 = vunpack.c.l.s4 1934713408
        %v2383 = vunpack.c.0.s8 %v2382
        %v2384 = vlaneseq
        %v2385 = vshrl.u32 %v2384, 7
        %v2386 = vsub.s32 %v2383, %v2385
        %v2387 = vrot.slane %v2373, %v2386
        %v2388 = vcombine.high %v2365, 0
        %v2389 = vcombine.high %v2372, 0
        %v2390 = vcombine.high %v2380, 0
        %v2391 = vcombine.high %v2387, 0
        %v2392 = vcombine.high %v1700, %v1645
        %v2394 = vunpack.c.l.s4 1983009808
        %v2395 = vunpack.c.0.s8 %v2394
        %v2396 = vlaneseq
        %v2397 = vshrl.u32 %v2396, 7
        %v2398 = vsub.s32 %v2395, %v2397
        %v2399 = vrot.slane %v1700, %v2398
        %v2401 = vunpack.c.l.s4 1983009808
        %v2402 = vunpack.c.0.s8 %v2401
        %v2403 = vlaneseq
        %v2404 = vshrl.u32 %v2403, 7
        %v2405 = vsub.s32 %v2402, %v2404
        %v2406 = vrot.slane %v2392, %v2405
        %v2407 = vcombine.high %v2399, 0
        %v2409 = vunpack.c.l.s4 1934713408
        %v2410 = vunpack.c.0.s8 %v2409
        %v2411 = vlaneseq
        %v2412 = vshrl.u32 %v2411, 7
        %v2413 = vsub.s32 %v2410, %v2412
        %v2414 = vrot.slane %v2399, %v2413
        %v2416 = vunpack.c.l.s4 1934713408
        %v2417 = vunpack.c.0.s8 %v2416
        %v2418 = vlaneseq
        %v2419 = vshrl.u32 %v2418, 7
        %v2420 = vsub.s32 %v2417, %v2419
        %v2421 = vrot.slane %v2407, %v2420
        %v2422 = vcombine.high %v2406, 0
        %v2424 = vunpack.c.l.s4 1934713408
        %v2425 = vunpack.c.0.s8 %v2424
        %v2426 = vlaneseq
        %v2427 = vshrl.u32 %v2426, 7
        %v2428 = vsub.s32 %v2425, %v2427
        %v2429 = vrot.slane %v2406, %v2428
        %v2431 = vunpack.c.l.s4 1934713408
        %v2432 = vunpack.c.0.s8 %v2431
        %v2433 = vlaneseq
        %v2434 = vshrl.u32 %v2433, 7
        %v2435 = vsub.s32 %v2432, %v2434
        %v2436 = vrot.slane %v2422, %v2435
        %v2437 = vcombine.high %v2414, 0
        %v2438 = vcombine.high %v2421, 0
        %v2439 = vcombine.high %v2429, 0
        %v2440 = vcombine.high %v2436, 0
        %v2441 = vcombine.high %v1704, %v1648
        %v2443 = vunpack.c.l.s4 1983009808
        %v2444 = vunpack.c.0.s8 %v2443
        %v2445 = vlaneseq
        %v2446 = vshrl.u32 %v2445, 7
        %v2447 = vsub.s32 %v2444, %v2446
        %v2448 = vrot.slane %v1704, %v2447
        %v2450 = vunpack.c.l.s4 1983009808
        %v2451 = vunpack.c.0.s8 %v2450
        %v2452 = vlaneseq
        %v2453 = vshrl.u32 %v2452, 7
        %v2454 = vsub.s32 %v2451, %v2453
        %v2455 = vrot.slane %v2441, %v2454
        %v2456 = vcombine.high %v2448, 0
        %v2458 = vunpack.c.l.s4 1934713408
        %v2459 = vunpack.c.0.s8 %v2458
        %v2460 = vlaneseq
        %v2461 = vshrl.u32 %v2460, 7
        %v2462 = vsub.s32 %v2459, %v2461
        %v2463 = vrot.slane %v2448, %v2462
        %v2465 = vunpack.c.l.s4 1934713408
        %v2466 = vunpack.c.0.s8 %v2465
        %v2467 = vlaneseq
        %v2468 = vshrl.u32 %v2467, 7
        %v2469 = vsub.s32 %v2466, %v2468
        %v2470 = vrot.slane %v2456, %v2469
        %v2471 = vcombine.high %v2455, 0
        %v2473 = vunpack.c.l.s4 1934713408
        %v2474 = vunpack.c.0.s8 %v2473
        %v2475 = vlaneseq
        %v2476 = vshrl.u32 %v2475, 7
        %v2477 = vsub.s32 %v2474, %v2476
        %v2478 = vrot.slane %v2455, %v2477
        %v2480 = vunpack.c.l.s4 1934713408
        %v2481 = vunpack.c.0.s8 %v2480
        %v2482 = vlaneseq
        %v2483 = vshrl.u32 %v2482, 7
        %v2484 = vsub.s32 %v2481, %v2483
        %v2485 = vrot.slane %v2471, %v2484
        %v2486 = vcombine.high %v2463, 0
        %v2487 = vcombine.high %v2470, 0
        %v2488 = vcombine.high %v2478, 0
        %v2489 = vcombine.high %v2485, 0
        %v2490 = vcombine.low %v1728, %v1735
        %v2492 = vunpack.c.l.s4 1983009808
        %v2493 = vunpack.c.0.s8 %v2492
        %v2494 = vlaneseq
        %v2495 = vshrl.u32 %v2494, 7
        %v2496 = vsub.s32 %v2493, %v2495
        %v2497 = vrot.slane %v2490, %v2496
        %v2498 = vcombine.low %v1751, %v1752
        %v2500 = vunpack.c.l.s4 1983009808
        %v2501 = vunpack.c.0.s8 %v2500
        %v2502 = vlaneseq
        %v2503 = vshrl.u32 %v2502, 7
        %v2504 = vsub.s32 %v2501, %v2503
        %v2505 = vrot.slane %v2498, %v2504
        %v2506 = vcombine.low %v1743, %v1750
        %v2508 = vunpack.c.l.s4 1983009808
        %v2509 = vunpack.c.0.s8 %v2508
        %v2510 = vlaneseq
        %v2511 = vshrl.u32 %v2510, 7
        %v2512 = vsub.s32 %v2509, %v2511
        %v2513 = vrot.slane %v2506, %v2512
        %v2514 = vcombine.low %v1753, %v1754
        %v2516 = vunpack.c.l.s4 1983009808
        %v2517 = vunpack.c.0.s8 %v2516
        %v2518 = vlaneseq
        %v2519 = vshrl.u32 %v2518, 7
        %v2520 = vsub.s32 %v2517, %v2519
        %v2521 = vrot.slane %v2514, %v2520
        %v2522 = vcombine.low %v2497, %v2505
        %v2524 = vunpack.c.l.s4 1934713408
        %v2525 = vunpack.c.0.s8 %v2524
        %v2526 = vlaneseq
        %v2527 = vshrl.u32 %v2526, 7
        %v2528 = vsub.s32 %v2525, %v2527
        %v2529 = vrot.slane %v2522, %v2528
        %v2530 = vcombine.low %v2513, %v2521
        %v2532 = vunpack.c.l.s4 1934713408
        %v2533 = vunpack.c.0.s8 %v2532
        %v2534 = vlaneseq
        %v2535 = vshrl.u32 %v2534, 7
        %v2536 = vsub.s32 %v2533, %v2535
        %v2537 = vrot.slane %v2530, %v2536
        %v2538 = vcombine.low %v2529, %v2537
        %v2539 = vcombine.low %v1777, %v1784
        %v2541 = vunpack.c.l.s4 1983009808
        %v2542 = vunpack.c.0.s8 %v2541
        %v2543 = vlaneseq
        %v2544 = vshrl.u32 %v2543, 7
        %v2545 = vsub.s32 %v2542, %v2544
        %v2546 = vrot.slane %v2539, %v2545
        %v2547 = vcombine.low %v1800, %v1801
        %v2549 = vunpack.c.l.s4 1983009808
        %v2550 = vunpack.c.0.s8 %v2549
        %v2551 = vlaneseq
        %v2552 = vshrl.u32 %v2551, 7
        %v2553 = vsub.s32 %v2550, %v2552
        %v2554 = vrot.slane %v2547, %v2553
        %v2555 = vcombine.low %v1792, %v1799
        %v2557 = vunpack.c.l.s4 1983009808
        %v2558 = vunpack.c.0.s8 %v2557
        %v2559 = vlaneseq
        %v2560 = vshrl.u32 %v2559, 7
        %v2561 = vsub.s32 %v2558, %v2560
        %v2562 = vrot.slane %v2555, %v2561
        %v2563 = vcombine.low %v1802, %v1803
        %v2565 = vunpack.c.l.s4 1983009808
        %v2566 = vunpack.c.0.s8 %v2565
        %v2567 = vlaneseq
        %v2568 = vshrl.u32 %v2567, 7
        %v2569 = vsub.s32 %v2566, %v2568
        %v2570 = vrot.slane %v2563, %v2569
        %v2571 = vcombine.low %v2546, %v2554
        %v2573 = vunpack.c.l.s4 1934713408
        %v2574 = vunpack.c.0.s8 %v2573
        %v2575 = vlaneseq
        %v2576 = vshrl.u32 %v2575, 7
        %v2577 = vsub.s32 %v2574, %v2576
        %v2578 = vrot.slane %v2571, %v2577
        %v2579 = vcombine.low %v2562, %v2570
        %v2581 = vunpack.c.l.s4 1934713408
        %v2582 = vunpack.c.0.s8 %v2581
        %v2583 = vlaneseq
        %v2584 = vshrl.u32 %v2583, 7
        %v2585 = vsub.s32 %v2582, %v2584
        %v2586 = vrot.slane %v2579, %v2585
        %v2587 = vcombine.low %v2578, %v2586
        %v2588 = vcombine.low %v1826, %v1833
        %v2590 = vunpack.c.l.s4 1983009808
        %v2591 = vunpack.c.0.s8 %v2590
        %v2592 = vlaneseq
        %v2593 = vshrl.u32 %v2592, 7
        %v2594 = vsub.s32 %v2591, %v2593
        %v2595 = vrot.slane %v2588, %v2594
        %v2596 = vcombine.low %v1849, %v1850
        %v2598 = vunpack.c.l.s4 1983009808
        %v2599 = vunpack.c.0.s8 %v2598
        %v2600 = vlaneseq
        %v2601 = vshrl.u32 %v2600, 7
        %v2602 = vsub.s32 %v2599, %v2601
        %v2603 = vrot.slane %v2596, %v2602
        %v2604 = vcombine.low %v1841, %v1848
        %v2606 = vunpack.c.l.s4 1983009808
        %v2607 = vunpack.c.0.s8 %v2606
        %v2608 = vlaneseq
        %v2609 = vshrl.u32 %v2608, 7
        %v2610 = vsub.s32 %v2607, %v2609
        %v2611 = vrot.slane %v2604, %v2610
        %v2612 = vcombine.low %v1851, %v1852
        %v2614 = vunpack.c.l.s4 1983009808
        %v2615 = vunpack.c.0.s8 %v2614
        %v2616 = vlaneseq
        %v2617 = vshrl.u32 %v2616, 7
        %v2618 = vsub.s32 %v2615, %v2617
        %v2619 = vrot.slane %v2612, %v2618
        %v2620 = vcombine.low %v2595, %v2603
        %v2622 = vunpack.c.l.s4 1934713408
        %v2623 = vunpack.c.0.s8 %v2622
        %v2624 = vlaneseq
        %v2625 = vshrl.u32 %v2624, 7
        %v2626 = vsub.s32 %v2623, %v2625
        %v2627 = vrot.slane %v2620, %v2626
        %v2628 = vcombine.low %v2611, %v2619
        %v2630 = vunpack.c.l.s4 1934713408
        %v2631 = vunpack.c.0.s8 %v2630
        %v2632 = vlaneseq
        %v2633 = vshrl.u32 %v2632, 7
        %v2634 = vsub.s32 %v2631, %v2633
        %v2635 = vrot.slane %v2628, %v2634
        %v2636 = vcombine.low %v2627, %v2635
        %v2637 = vcombine.low %v1875, %v1882
        %v2639 = vunpack.c.l.s4 1983009808
        %v2640 = vunpack.c.0.s8 %v2639
        %v2641 = vlaneseq
        %v2642 = vshrl.u32 %v2641, 7
        %v2643 = vsub.s32 %v2640, %v2642
        %v2644 = vrot.slane %v2637, %v2643
        %v2645 = vcombine.low %v1898, %v1899
        %v2647 = vunpack.c.l.s4 1983009808
        %v2648 = vunpack.c.0.s8 %v2647
        %v2649 = vlaneseq
        %v2650 = vshrl.u32 %v2649, 7
        %v2651 = vsub.s32 %v2648, %v2650
        %v2652 = vrot.slane %v2645, %v2651
        %v2653 = vcombine.low %v1890, %v1897
        %v2655 = vunpack.c.l.s4 1983009808
        %v2656 = vunpack.c.0.s8 %v2655
        %v2657 = vlaneseq
        %v2658 = vshrl.u32 %v2657, 7
        %v2659 = vsub.s32 %v2656, %v2658
        %v2660 = vrot.slane %v2653, %v2659
        %v2661 = vcombine.low %v1900, %v1901
        %v2663 = vunpack.c.l.s4 1983009808
        %v2664 = vunpack.c.0.s8 %v2663
        %v2665 = vlaneseq
        %v2666 = vshrl.u32 %v2665, 7
        %v2667 = vsub.s32 %v2664, %v2666
        %v2668 = vrot.slane %v2661, %v2667
        %v2669 = vcombine.low %v2644, %v2652
        %v2671 = vunpack.c.l.s4 1934713408
        %v2672 = vunpack.c.0.s8 %v2671
        %v2673 = vlaneseq
        %v2674 = vshrl.u32 %v2673, 7
        %v2675 = vsub.s32 %v2672, %v2674
        %v2676 = vrot.slane %v2669, %v2675
        %v2677 = vcombine.low %v2660, %v2668
        %v2679 = vunpack.c.l.s4 1934713408
        %v2680 = vunpack.c.0.s8 %v2679
        %v2681 = vlaneseq
        %v2682 = vshrl.u32 %v2681, 7
        %v2683 = vsub.s32 %v2680, %v2682
        %v2684 = vrot.slane %v2677, %v2683
        %v2685 = vcombine.low %v2676, %v2684
        %v2686 = vcombine.low %v1924, %v1931
        %v2688 = vunpack.c.l.s4 1983009808
        %v2689 = vunpack.c.0.s8 %v2688
        %v2690 = vlaneseq
        %v2691 = vshrl.u32 %v2690, 7
        %v2692 = vsub.s32 %v2689, %v2691
        %v2693 = vrot.slane %v2686, %v2692
        %v2694 = vcombine.low %v1947, %v1948
        %v2696 = vunpack.c.l.s4 1983009808
        %v2697 = vunpack.c.0.s8 %v2696
        %v2698 = vlaneseq
        %v2699 = vshrl.u32 %v2698, 7
        %v2700 = vsub.s32 %v2697, %v2699
        %v2701 = vrot.slane %v2694, %v2700
        %v2702 = vcombine.low %v1939, %v1946
        %v2704 = vunpack.c.l.s4 1983009808
        %v2705 = vunpack.c.0.s8 %v2704
        %v2706 = vlaneseq
        %v2707 = vshrl.u32 %v2706, 7
        %v2708 = vsub.s32 %v2705, %v2707
        %v2709 = vrot.slane %v2702, %v2708
        %v2710 = vcombine.low %v1949, %v1950
        %v2712 = vunpack.c.l.s4 1983009808
        %v2713 = vunpack.c.0.s8 %v2712
        %v2714 = vlaneseq
        %v2715 = vshrl.u32 %v2714, 7
        %v2716 = vsub.s32 %v2713, %v2715
        %v2717 = vrot.slane %v2710, %v2716
        %v2718 = vcombine.low %v2693, %v2701
        %v2720 = vunpack.c.l.s4 1934713408
        %v2721 = vunpack.c.0.s8 %v2720
        %v2722 = vlaneseq
        %v2723 = vshrl.u32 %v2722, 7
        %v2724 = vsub.s32 %v2721, %v2723
        %v2725 = vrot.slane %v2718, %v2724
        %v2726 = vcombine.low %v2709, %v2717
        %v2728 = vunpack.c.l.s4 1934713408
        %v2729 = vunpack.c.0.s8 %v2728
        %v2730 = vlaneseq
        %v2731 = vshrl.u32 %v2730, 7
        %v2732 = vsub.s32 %v2729, %v2731
        %v2733 = vrot.slane %v2726, %v2732
        %v2734 = vcombine.low %v2725, %v2733
        %v2735 = vcombine.low %v1973, %v1980
        %v2737 = vunpack.c.l.s4 1983009808
        %v2738 = vunpack.c.0.s8 %v2737
        %v2739 = vlaneseq
        %v2740 = vshrl.u32 %v2739, 7
        %v2741 = vsub.s32 %v2738, %v2740
        %v2742 = vrot.slane %v2735, %v2741
        %v2743 = vcombine.low %v1996, %v1997
        %v2745 = vunpack.c.l.s4 1983009808
        %v2746 = vunpack.c.0.s8 %v2745
        %v2747 = vlaneseq
        %v2748 = vshrl.u32 %v2747, 7
        %v2749 = vsub.s32 %v2746, %v2748
        %v2750 = vrot.slane %v2743, %v2749
        %v2751 = vcombine.low %v1988, %v1995
        %v2753 = vunpack.c.l.s4 1983009808
        %v2754 = vunpack.c.0.s8 %v2753
        %v2755 = vlaneseq
        %v2756 = vshrl.u32 %v2755, 7
        %v2757 = vsub.s32 %v2754, %v2756
        %v2758 = vrot.slane %v2751, %v2757
        %v2759 = vcombine.low %v1998, %v1999
        %v2761 = vunpack.c.l.s4 1983009808
        %v2762 = vunpack.c.0.s8 %v2761
        %v2763 = vlaneseq
        %v2764 = vshrl.u32 %v2763, 7
        %v2765 = vsub.s32 %v2762, %v2764
        %v2766 = vrot.slane %v2759, %v2765
        %v2767 = vcombine.low %v2742, %v2750
        %v2769 = vunpack.c.l.s4 1934713408
        %v2770 = vunpack.c.0.s8 %v2769
        %v2771 = vlaneseq
        %v2772 = vshrl.u32 %v2771, 7
        %v2773 = vsub.s32 %v2770, %v2772
        %v2774 = vrot.slane %v2767, %v2773
        %v2775 = vcombine.low %v2758, %v2766
        %v2777 = vunpack.c.l.s4 1934713408
        %v2778 = vunpack.c.0.s8 %v2777
        %v2779 = vlaneseq
        %v2780 = vshrl.u32 %v2779, 7
        %v2781 = vsub.s32 %v2778, %v2780
        %v2782 = vrot.slane %v2775, %v2781
        %v2783 = vcombine.low %v2774, %v2782
        %v2784 = vcombine.low %v2022, %v2029
        %v2786 = vunpack.c.l.s4 1983009808
        %v2787 = vunpack.c.0.s8 %v2786
        %v2788 = vlaneseq
        %v2789 = vshrl.u32 %v2788, 7
        %v2790 = vsub.s32 %v2787, %v2789
        %v2791 = vrot.slane %v2784, %v2790
        %v2792 = vcombine.low %v2045, %v2046
        %v2794 = vunpack.c.l.s4 1983009808
        %v2795 = vunpack.c.0.s8 %v2794
        %v2796 = vlaneseq
        %v2797 = vshrl.u32 %v2796, 7
        %v2798 = vsub.s32 %v2795, %v2797
        %v2799 = vrot.slane %v2792, %v2798
        %v2800 = vcombine.low %v2037, %v2044
        %v2802 = vunpack.c.l.s4 1983009808
        %v2803 = vunpack.c.0.s8 %v2802
        %v2804 = vlaneseq
        %v2805 = vshrl.u32 %v2804, 7
        %v2806 = vsub.s32 %v2803, %v2805
        %v2807 = vrot.slane %v2800, %v2806
        %v2808 = vcombine.low %v2047, %v2048
        %v2810 = vunpack.c.l.s4 1983009808
        %v2811 = vunpack.c.0.s8 %v2810
        %v2812 = vlaneseq
        %v2813 = vshrl.u32 %v2812, 7
        %v2814 = vsub.s32 %v2811, %v2813
        %v2815 = vrot.slane %v2808, %v2814
        %v2816 = vcombine.low %v2791, %v2799
        %v2818 = vunpack.c.l.s4 1934713408
        %v2819 = vunpack.c.0.s8 %v2818
        %v2820 = vlaneseq
        %v2821 = vshrl.u32 %v2820, 7
        %v2822 = vsub.s32 %v2819, %v2821
        %v2823 = vrot.slane %v2816, %v2822
        %v2824 = vcombine.low %v2807, %v2815
        %v2826 = vunpack.c.l.s4 1934713408
        %v2827 = vunpack.c.0.s8 %v2826
        %v2828 = vlaneseq
        %v2829 = vshrl.u32 %v2828, 7
        %v2830 = vsub.s32 %v2827, %v2829
        %v2831 = vrot.slane %v2824, %v2830
        %v2832 = vcombine.low %v2823, %v2831
        %v2833 = vcombine.low %v2071, %v2078
        %v2835 = vunpack.c.l.s4 1983009808
        %v2836 = vunpack.c.0.s8 %v2835
        %v2837 = vlaneseq
        %v2838 = vshrl.u32 %v2837, 7
        %v2839 = vsub.s32 %v2836, %v2838
        %v2840 = vrot.slane %v2833, %v2839
        %v2841 = vcombine.low %v2094, %v2095
        %v2843 = vunpack.c.l.s4 1983009808
        %v2844 = vunpack.c.0.s8 %v2843
        %v2845 = vlaneseq
        %v2846 = vshrl.u32 %v2845, 7
        %v2847 = vsub.s32 %v2844, %v2846
        %v2848 = vrot.slane %v2841, %v2847
        %v2849 = vcombine.low %v2086, %v2093
        %v2851 = vunpack.c.l.s4 1983009808
        %v2852 = vunpack.c.0.s8 %v2851
        %v2853 = vlaneseq
        %v2854 = vshrl.u32 %v2853, 7
        %v2855 = vsub.s32 %v2852, %v2854
        %v2856 = vrot.slane %v2849, %v2855
        %v2857 = vcombine.low %v2096, %v2097
        %v2859 = vunpack.c.l.s4 1983009808
        %v2860 = vunpack.c.0.s8 %v2859
        %v2861 = vlaneseq
        %v2862 = vshrl.u32 %v2861, 7
        %v2863 = vsub.s32 %v2860, %v2862
        %v2864 = vrot.slane %v2857, %v2863
        %v2865 = vcombine.low %v2840, %v2848
        %v2867 = vunpack.c.l.s4 1934713408
        %v2868 = vunpack.c.0.s8 %v2867
        %v2869 = vlaneseq
        %v2870 = vshrl.u32 %v2869, 7
        %v2871 = vsub.s32 %v2868, %v2870
        %v2872 = vrot.slane %v2865, %v2871
        %v2873 = vcombine.low %v2856, %v2864
        %v2875 = vunpack.c.l.s4 1934713408
        %v2876 = vunpack.c.0.s8 %v2875
        %v2877 = vlaneseq
        %v2878 = vshrl.u32 %v2877, 7
        %v2879 = vsub.s32 %v2876, %v2878
        %v2880 = vrot.slane %v2873, %v2879
        %v2881 = vcombine.low %v2872, %v2880
        %v2882 = vcombine.low %v2120, %v2127
        %v2884 = vunpack.c.l.s4 1983009808
        %v2885 = vunpack.c.0.s8 %v2884
        %v2886 = vlaneseq
        %v2887 = vshrl.u32 %v2886, 7
        %v2888 = vsub.s32 %v2885, %v2887
        %v2889 = vrot.slane %v2882, %v2888
        %v2890 = vcombine.low %v2143, %v2144
        %v2892 = vunpack.c.l.s4 1983009808
        %v2893 = vunpack.c.0.s8 %v2892
        %v2894 = vlaneseq
        %v2895 = vshrl.u32 %v2894, 7
        %v2896 = vsub.s32 %v2893, %v2895
        %v2897 = vrot.slane %v2890, %v2896
        %v2898 = vcombine.low %v2135, %v2142
        %v2900 = vunpack.c.l.s4 1983009808
        %v2901 = vunpack.c.0.s8 %v2900
        %v2902 = vlaneseq
        %v2903 = vshrl.u32 %v2902, 7
        %v2904 = vsub.s32 %v2901, %v2903
        %v2905 = vrot.slane %v2898, %v2904
        %v2906 = vcombine.low %v2145, %v2146
        %v2908 = vunpack.c.l.s4 1983009808
        %v2909 = vunpack.c.0.s8 %v2908
        %v2910 = vlaneseq
        %v2911 = vshrl.u32 %v2910, 7
        %v2912 = vsub.s32 %v2909, %v2911
        %v2913 = vrot.slane %v2906, %v2912
        %v2914 = vcombine.low %v2889, %v2897
        %v2916 = vunpack.c.l.s4 1934713408
        %v2917 = vunpack.c.0.s8 %v2916
        %v2918 = vlaneseq
        %v2919 = vshrl.u32 %v2918, 7
        %v2920 = vsub.s32 %v2917, %v2919
        %v2921 = vrot.slane %v2914, %v2920
        %v2922 = vcombine.low %v2905, %v2913
        %v2924 = vunpack.c.l.s4 1934713408
        %v2925 = vunpack.c.0.s8 %v2924
        %v2926 = vlaneseq
        %v2927 = vshrl.u32 %v2926, 7
        %v2928 = vsub.s32 %v2925, %v2927
        %v2929 = vrot.slane %v2922, %v2928
        %v2930 = vcombine.low %v2921, %v2929
        %v2931 = vcombine.low %v2169, %v2176
        %v2933 = vunpack.c.l.s4 1983009808
        %v2934 = vunpack.c.0.s8 %v2933
        %v2935 = vlaneseq
        %v2936 = vshrl.u32 %v2935, 7
        %v2937 = vsub.s32 %v2934, %v2936
        %v2938 = vrot.slane %v2931, %v2937
        %v2939 = vcombine.low %v2192, %v2193
        %v2941 = vunpack.c.l.s4 1983009808
        %v2942 = vunpack.c.0.s8 %v2941
        %v2943 = vlaneseq
        %v2944 = vshrl.u32 %v2943, 7
        %v2945 = vsub.s32 %v2942, %v2944
        %v2946 = vrot.slane %v2939, %v2945
        %v2947 = vcombine.low %v2184, %v2191
        %v2949 = vunpack.c.l.s4 1983009808
        %v2950 = vunpack.c.0.s8 %v2949
        %v2951 = vlaneseq
        %v2952 = vshrl.u32 %v2951, 7
        %v2953 = vsub.s32 %v2950, %v2952
        %v2954 = vrot.slane %v2947, %v2953
        %v2955 = vcombine.low %v2194, %v2195
        %v2957 = vunpack.c.l.s4 1983009808
        %v2958 = vunpack.c.0.s8 %v2957
        %v2959 = vlaneseq
        %v2960 = vshrl.u32 %v2959, 7
        %v2961 = vsub.s32 %v2958, %v2960
        %v2962 = vrot.slane %v2955, %v2961
        %v2963 = vcombine.low %v2938, %v2946
        %v2965 = vunpack.c.l.s4 1934713408
        %v2966 = vunpack.c.0.s8 %v2965
        %v2967 = vlaneseq
        %v2968 = vshrl.u32 %v2967, 7
        %v2969 = vsub.s32 %v2966, %v2968
        %v2970 = vrot.slane %v2963, %v2969
        %v2971 = vcombine.low %v2954, %v2962
        %v2973 = vunpack.c.l.s4 1934713408
        %v2974 = vunpack.c.0.s8 %v2973
        %v2975 = vlaneseq
        %v2976 = vshrl.u32 %v2975, 7
        %v2977 = vsub.s32 %v2974, %v2976
        %v2978 = vrot.slane %v2971, %v2977
        %v2979 = vcombine.low %v2970, %v2978
        %v2980 = vcombine.low %v2218, %v2225
        %v2982 = vunpack.c.l.s4 1983009808
        %v2983 = vunpack.c.0.s8 %v2982
        %v2984 = vlaneseq
        %v2985 = vshrl.u32 %v2984, 7
        %v2986 = vsub.s32 %v2983, %v2985
        %v2987 = vrot.slane %v2980, %v2986
        %v2988 = vcombine.low %v2241, %v2242
        %v2990 = vunpack.c.l.s4 1983009808
        %v2991 = vunpack.c.0.s8 %v2990
        %v2992 = vlaneseq
        %v2993 = vshrl.u32 %v2992, 7
        %v2994 = vsub.s32 %v2991, %v2993
        %v2995 = vrot.slane %v2988, %v2994
        %v2996 = vcombine.low %v2233, %v2240
        %v2998 = vunpack.c.l.s4 1983009808
        %v2999 = vunpack.c.0.s8 %v2998
        %v3000 = vlaneseq
        %v3001 = vshrl.u32 %v3000, 7
        %v3002 = vsub.s32 %v2999, %v3001
        %v3003 = vrot.slane %v2996, %v3002
        %v3004 = vcombine.low %v2243, %v2244
        %v3006 = vunpack.c.l.s4 1983009808
        %v3007 = vunpack.c.0.s8 %v3006
        %v3008 = vlaneseq
        %v3009 = vshrl.u32 %v3008, 7
        %v3010 = vsub.s32 %v3007, %v3009
        %v3011 = vrot.slane %v3004, %v3010
        %v3012 = vcombine.low %v2987, %v2995
        %v3014 = vunpack.c.l.s4 1934713408
        %v3015 = vunpack.c.0.s8 %v3014
        %v3016 = vlaneseq
        %v3017 = vshrl.u32 %v3016, 7
        %v3018 = vsub.s32 %v3015, %v3017
        %v3019 = vrot.slane %v3012, %v3018
        %v3020 = vcombine.low %v3003, %v3011
        %v3022 = vunpack.c.l.s4 1934713408
        %v3023 = vunpack.c.0.s8 %v3022
        %v3024 = vlaneseq
        %v3025 = vshrl.u32 %v3024, 7
        %v3026 = vsub.s32 %v3023, %v3025
        %v3027 = vrot.slane %v3020, %v3026
        %v3028 = vcombine.low %v3019, %v3027
        %v3029 = vcombine.low %v2267, %v2274
        %v3031 = vunpack.c.l.s4 1983009808
        %v3032 = vunpack.c.0.s8 %v3031
        %v3033 = vlaneseq
        %v3034 = vshrl.u32 %v3033, 7
        %v3035 = vsub.s32 %v3032, %v3034
        %v3036 = vrot.slane %v3029, %v3035
        %v3037 = vcombine.low %v2290, %v2291
        %v3039 = vunpack.c.l.s4 1983009808
        %v3040 = vunpack.c.0.s8 %v3039
        %v3041 = vlaneseq
        %v3042 = vshrl.u32 %v3041, 7
        %v3043 = vsub.s32 %v3040, %v3042
        %v3044 = vrot.slane %v3037, %v3043
        %v3045 = vcombine.low %v2282, %v2289
        %v3047 = vunpack.c.l.s4 1983009808
        %v3048 = vunpack.c.0.s8 %v3047
        %v3049 = vlaneseq
        %v3050 = vshrl.u32 %v3049, 7
        %v3051 = vsub.s32 %v3048, %v3050
        %v3052 = vrot.slane %v3045, %v3051
        %v3053 = vcombine.low %v2292, %v2293
        %v3055 = vunpack.c.l.s4 1983009808
        %v3056 = vunpack.c.0.s8 %v3055
        %v3057 = vlaneseq
        %v3058 = vshrl.u32 %v3057, 7
        %v3059 = vsub.s32 %v3056, %v3058
        %v3060 = vrot.slane %v3053, %v3059
        %v3061 = vcombine.low %v3036, %v3044
        %v3063 = vunpack.c.l.s4 1934713408
        %v3064 = vunpack.c.0.s8 %v3063
        %v3065 = vlaneseq
        %v3066 = vshrl.u32 %v3065, 7
        %v3067 = vsub.s32 %v3064, %v3066
        %v3068 = vrot.slane %v3061, %v3067
        %v3069 = vcombine.low %v3052, %v3060
        %v3071 = vunpack.c.l.s4 1934713408
        %v3072 = vunpack.c.0.s8 %v3071
        %v3073 = vlaneseq
        %v3074 = vshrl.u32 %v3073, 7
        %v3075 = vsub.s32 %v3072, %v3074
        %v3076 = vrot.slane %v3069, %v3075
        %v3077 = vcombine.low %v3068, %v3076
        %v3078 = vcombine.low %v2316, %v2323
        %v3080 = vunpack.c.l.s4 1983009808
        %v3081 = vunpack.c.0.s8 %v3080
        %v3082 = vlaneseq
        %v3083 = vshrl.u32 %v3082, 7
        %v3084 = vsub.s32 %v3081, %v3083
        %v3085 = vrot.slane %v3078, %v3084
        %v3086 = vcombine.low %v2339, %v2340
        %v3088 = vunpack.c.l.s4 1983009808
        %v3089 = vunpack.c.0.s8 %v3088
        %v3090 = vlaneseq
        %v3091 = vshrl.u32 %v3090, 7
        %v3092 = vsub.s32 %v3089, %v3091
        %v3093 = vrot.slane %v3086, %v3092
        %v3094 = vcombine.low %v2331, %v2338
        %v3096 = vunpack.c.l.s4 1983009808
        %v3097 = vunpack.c.0.s8 %v3096
        %v3098 = vlaneseq
        %v3099 = vshrl.u32 %v3098, 7
        %v3100 = vsub.s32 %v3097, %v3099
        %v3101 = vrot.slane %v3094, %v3100
        %v3102 = vcombine.low %v2341, %v2342
        %v3104 = vunpack.c.l.s4 1983009808
        %v3105 = vunpack.c.0.s8 %v3104
        %v3106 = vlaneseq
        %v3107 = vshrl.u32 %v3106, 7
        %v3108 = vsub.s32 %v3105, %v3107
        %v3109 = vrot.slane %v3102, %v3108
        %v3110 = vcombine.low %v3085, %v3093
        %v3112 = vunpack.c.l.s4 1934713408
        %v3113 = vunpack.c.0.s8 %v3112
        %v3114 = vlaneseq
        %v3115 = vshrl.u32 %v3114, 7
        %v3116 = vsub.s32 %v3113, %v3115
        %v3117 = vrot.slane %v3110, %v3116
        %v3118 = vcombine.low %v3101, %v3109
        %v3120 = vunpack.c.l.s4 1934713408
        %v3121 = vunpack.c.0.s8 %v3120
        %v3122 = vlaneseq
        %v3123 = vshrl.u32 %v3122, 7
        %v3124 = vsub.s32 %v3121, %v3123
        %v3125 = vrot.slane %v3118, %v3124
        %v3126 = vcombine.low %v3117, %v3125
        %v3127 = vcombine.low %v2365, %v2372
        %v3129 = vunpack.c.l.s4 1983009808
        %v3130 = vunpack.c.0.s8 %v3129
        %v3131 = vlaneseq
        %v3132 = vshrl.u32 %v3131, 7
        %v3133 = vsub.s32 %v3130, %v3132
        %v3134 = vrot.slane %v3127, %v3133
        %v3135 = vcombine.low %v2388, %v2389
        %v3137 = vunpack.c.l.s4 1983009808
        %v3138 = vunpack.c.0.s8 %v3137
        %v3139 = vlaneseq
        %v3140 = vshrl.u32 %v3139, 7
        %v3141 = vsub.s32 %v3138, %v3140
        %v3142 = vrot.slane %v3135, %v3141
        %v3143 = vcombine.low %v2380, %v2387
        %v3145 = vunpack.c.l.s4 1983009808
        %v3146 = vunpack.c.0.s8 %v3145
        %v3147 = vlaneseq
        %v3148 = vshrl.u32 %v3147, 7
        %v3149 = vsub.s32 %v3146, %v3148
        %v3150 = vrot.slane %v3143, %v3149
        %v3151 = vcombine.low %v2390, %v2391
        %v3153 = vunpack.c.l.s4 1983009808
        %v3154 = vunpack.c.0.s8 %v3153
        %v3155 = vlaneseq
        %v3156 = vshrl.u32 %v3155, 7
        %v3157 = vsub.s32 %v3154, %v3156
        %v3158 = vrot.slane %v3151, %v3157
        %v3159 = vcombine.low %v3134, %v3142
        %v3161 = vunpack.c.l.s4 1934713408
        %v3162 = vunpack.c.0.s8 %v3161
        %v3163 = vlaneseq
        %v3164 = vshrl.u32 %v3163, 7
        %v3165 = vsub.s32 %v3162, %v3164
        %v3166 = vrot.slane %v3159, %v3165
        %v3167 = vcombine.low %v3150, %v3158
        %v3169 = vunpack.c.l.s4 1934713408
        %v3170 = vunpack.c.0.s8 %v3169
        %v3171 = vlaneseq
        %v3172 = vshrl.u32 %v3171, 7
        %v3173 = vsub.s32 %v3170, %v3172
        %v3174 = vrot.slane %v3167, %v3173
        %v3175 = vcombine.low %v3166, %v3174
        %v3176 = vcombine.low %v2414, %v2421
        %v3178 = vunpack.c.l.s4 1983009808
        %v3179 = vunpack.c.0.s8 %v3178
        %v3180 = vlaneseq
        %v3181 = vshrl.u32 %v3180, 7
        %v3182 = vsub.s32 %v3179, %v3181
        %v3183 = vrot.slane %v3176, %v3182
        %v3184 = vcombine.low %v2437, %v2438
        %v3186 = vunpack.c.l.s4 1983009808
        %v3187 = vunpack.c.0.s8 %v3186
        %v3188 = vlaneseq
        %v3189 = vshrl.u32 %v3188, 7
        %v3190 = vsub.s32 %v3187, %v3189
        %v3191 = vrot.slane %v3184, %v3190
        %v3192 = vcombine.low %v2429, %v2436
        %v3194 = vunpack.c.l.s4 1983009808
        %v3195 = vunpack.c.0.s8 %v3194
        %v3196 = vlaneseq
        %v3197 = vshrl.u32 %v3196, 7
        %v3198 = vsub.s32 %v3195, %v3197
        %v3199 = vrot.slane %v3192, %v3198
        %v3200 = vcombine.low %v2439, %v2440
        %v3202 = vunpack.c.l.s4 1983009808
        %v3203 = vunpack.c.0.s8 %v3202
        %v3204 = vlaneseq
        %v3205 = vshrl.u32 %v3204, 7
        %v3206 = vsub.s32 %v3203, %v3205
        %v3207 = vrot.slane %v3200, %v3206
        %v3208 = vcombine.low %v3183, %v3191
        %v3210 = vunpack.c.l.s4 1934713408
        %v3211 = vunpack.c.0.s8 %v3210
        %v3212 = vlaneseq
        %v3213 = vshrl.u32 %v3212, 7
        %v3214 = vsub.s32 %v3211, %v3213
        %v3215 = vrot.slane %v3208, %v3214
        %v3216 = vcombine.low %v3199, %v3207
        %v3218 = vunpack.c.l.s4 1934713408
        %v3219 = vunpack.c.0.s8 %v3218
        %v3220 = vlaneseq
        %v3221 = vshrl.u32 %v3220, 7
        %v3222 = vsub.s32 %v3219, %v3221
        %v3223 = vrot.slane %v3216, %v3222
        %v3224 = vcombine.low %v3215, %v3223
        %v3225 = vcombine.low %v2463, %v2470
        %v3227 = vunpack.c.l.s4 1983009808
        %v3228 = vunpack.c.0.s8 %v3227
        %v3229 = vlaneseq
        %v3230 = vshrl.u32 %v3229, 7
        %v3231 = vsub.s32 %v3228, %v3230
        %v3232 = vrot.slane %v3225, %v3231
        %v3233 = vcombine.low %v2486, %v2487
        %v3235 = vunpack.c.l.s4 1983009808
        %v3236 = vunpack.c.0.s8 %v3235
        %v3237 = vlaneseq
        %v3238 = vshrl.u32 %v3237, 7
        %v3239 = vsub.s32 %v3236, %v3238
        %v3240 = vrot.slane %v3233, %v3239
        %v3241 = vcombine.low %v2478, %v2485
        %v3243 = vunpack.c.l.s4 1983009808
        %v3244 = vunpack.c.0.s8 %v3243
        %v3245 = vlaneseq
        %v3246 = vshrl.u32 %v3245, 7
        %v3247 = vsub.s32 %v3244, %v3246
        %v3248 = vrot.slane %v3241, %v3247
        %v3249 = vcombine.low %v2488, %v2489
        %v3251 = vunpack.c.l.s4 1983009808
        %v3252 = vunpack.c.0.s8 %v3251
        %v3253 = vlaneseq
        %v3254 = vshrl.u32 %v3253, 7
        %v3255 = vsub.s32 %v3252, %v3254
        %v3256 = vrot.slane %v3249, %v3255
        %v3257 = vcombine.low %v3232, %v3240
        %v3259 = vunpack.c.l.s4 1934713408
        %v3260 = vunpack.c.0.s8 %v3259
        %v3261 = vlaneseq
        %v3262 = vshrl.u32 %v3261, 7
        %v3263 = vsub.s32 %v3260, %v3262
        %v3264 = vrot.slane %v3257, %v3263
        %v3265 = vcombine.low %v3248, %v3256
        %v3267 = vunpack.c.l.s4 1934713408
        %v3268 = vunpack.c.0.s8 %v3267
        %v3269 = vlaneseq
        %v3270 = vshrl.u32 %v3269, 7
        %v3271 = vsub.s32 %v3268, %v3270
        %v3272 = vrot.slane %v3265, %v3271
        %v3273 = vcombine.low %v3264, %v3272
        %v3276 = vpack.i.b16 %v2587, %v2538
        %v3277 = vshrl.u32 %v2538, 16
        %v3278 = vshrl.u32 %v2587, 16
        %v3279 = vpack.i.b16 %v3278, %v3277
        %v3282 = vpack.i.b16 %v2685, %v2636
        %v3283 = vshrl.u32 %v2636, 16
        %v3284 = vshrl.u32 %v2685, 16
        %v3285 = vpack.i.b16 %v3284, %v3283
        %v3288 = vpack.i.b16 %v2783, %v2734
        %v3289 = vshrl.u32 %v2734, 16
        %v3290 = vshrl.u32 %v2783, 16
        %v3291 = vpack.i.b16 %v3290, %v3289
        %v3294 = vpack.i.b16 %v2881, %v2832
        %v3295 = vshrl.u32 %v2832, 16
        %v3296 = vshrl.u32 %v2881, 16
        %v3297 = vpack.i.b16 %v3296, %v3295
        %v3300 = vpack.i.b16 %v2979, %v2930
        %v3301 = vshrl.u32 %v2930, 16
        %v3302 = vshrl.u32 %v2979, 16
        %v3303 = vpack.i.b16 %v3302, %v3301
        %v3306 = vpack.i.b16 %v3077, %v3028
        %v3307 = vshrl.u32 %v3028, 16
        %v3308 = vshrl.u32 %v3077, 16
        %v3309 = vpack.i.b16 %v3308, %v3307
        %v3312 = vpack.i.b16 %v3175, %v3126
        %v3313 = vshrl.u32 %v3126, 16
        %v3314 = vshrl.u32 %v3175, 16
        %v3315 = vpack.i.b16 %v3314, %v3313
        %v3318 = vpack.i.b16 %v3273, %v3224
        %v3319 = vshrl.u32 %v3224, 16
        %v3320 = vshrl.u32 %v3273, 16
        %v3321 = vpack.i.b16 %v3320, %v3319
        %v3322 = vpack.c.bf16 %v1419, %v1415
        %v3323 = vpack.c.bf16 %v1429, %v1425
        %v3324 = vpack.c.bf16 %v1439, %v1435
        %v3325 = vpack.c.bf16 %v1449, %v1445
        %v3326 = vpack.c.bf16 %v1459, %v1455
        %v3327 = vpack.c.bf16 %v1469, %v1465
        %v3328 = vpack.c.bf16 %v1479, %v1475
        %v3329 = vpack.c.bf16 %v1489, %v1485
        %3338 = vrot.lane.b32.xlu0 %v3322, 64
        %v3339 = vpop.permute.xlu0 %3338
        %3340 = vrot.lane.b32.xlu0 %v3323, 64
        %v3341 = vpop.permute.xlu0 %3340
        %3342 = vrot.lane.b32.xlu0 %v3324, 64
        %v3343 = vpop.permute.xlu0 %3342
        %3344 = vrot.lane.b32.xlu0 %v3325, 64
        %v3345 = vpop.permute.xlu0 %3344
        %3346 = vrot.lane.b32.xlu0 %v3326, 64
        %v3347 = vpop.permute.xlu0 %3346
        %3348 = vrot.lane.b32.xlu0 %v3327, 64
        %v3349 = vpop.permute.xlu0 %3348
        %3350 = vrot.lane.b32.xlu0 %v3328, 64
        %v3351 = vpop.permute.xlu0 %3350
        %3352 = vrot.lane.b32.xlu0 %v3329, 64
        %v3353 = vpop.permute.xlu0 %3352
        %v3356 = vpack.i.b16 %v3339, %v3322
        %v3358 = vshrl.u32 %v3322, 16
        %v3359 = vshrl.u32 %v3339, 16
        %v3360 = vpack.i.b16 %v3359, %v3358
        %v3364 = vpack.i.b16 %v3341, %v3323
        %v3366 = vshrl.u32 %v3323, 16
        %v3367 = vshrl.u32 %v3341, 16
        %v3368 = vpack.i.b16 %v3367, %v3366
        %v3372 = vpack.i.b16 %v3343, %v3324
        %v3374 = vshrl.u32 %v3324, 16
        %v3375 = vshrl.u32 %v3343, 16
        %v3376 = vpack.i.b16 %v3375, %v3374
        %v3380 = vpack.i.b16 %v3345, %v3325
        %v3382 = vshrl.u32 %v3325, 16
        %v3383 = vshrl.u32 %v3345, 16
        %v3384 = vpack.i.b16 %v3383, %v3382
        %v3388 = vpack.i.b16 %v3347, %v3326
        %v3390 = vshrl.u32 %v3326, 16
        %v3391 = vshrl.u32 %v3347, 16
        %v3392 = vpack.i.b16 %v3391, %v3390
        %v3396 = vpack.i.b16 %v3349, %v3327
        %v3398 = vshrl.u32 %v3327, 16
        %v3399 = vshrl.u32 %v3349, 16
        %v3400 = vpack.i.b16 %v3399, %v3398
        %v3404 = vpack.i.b16 %v3351, %v3328
        %v3406 = vshrl.u32 %v3328, 16
        %v3407 = vshrl.u32 %v3351, 16
        %v3408 = vpack.i.b16 %v3407, %v3406
        %v3412 = vpack.i.b16 %v3353, %v3329
        %v3414 = vshrl.u32 %v3329, 16
        %v3415 = vshrl.u32 %v3353, 16
        %v3416 = vpack.i.b16 %v3415, %v3414
        %v3418 = vcombine.high %v3356, %v1645
        %v3420 = vunpack.c.l.s4 1983009808
        %v3421 = vunpack.c.0.s8 %v3420
        %v3422 = vlaneseq
        %v3423 = vshrl.u32 %v3422, 7
        %v3424 = vsub.s32 %v3421, %v3423
        %v3425 = vrot.slane %v3356, %v3424
        %v3427 = vunpack.c.l.s4 1983009808
        %v3428 = vunpack.c.0.s8 %v3427
        %v3429 = vlaneseq
        %v3430 = vshrl.u32 %v3429, 7
        %v3431 = vsub.s32 %v3428, %v3430
        %v3432 = vrot.slane %v3418, %v3431
        %v3433 = vcombine.high %v3425, 0
        %v3435 = vunpack.c.l.s4 1934713408
        %v3436 = vunpack.c.0.s8 %v3435
        %v3437 = vlaneseq
        %v3438 = vshrl.u32 %v3437, 7
        %v3439 = vsub.s32 %v3436, %v3438
        %v3440 = vrot.slane %v3425, %v3439
        %v3442 = vunpack.c.l.s4 1934713408
        %v3443 = vunpack.c.0.s8 %v3442
        %v3444 = vlaneseq
        %v3445 = vshrl.u32 %v3444, 7
        %v3446 = vsub.s32 %v3443, %v3445
        %v3447 = vrot.slane %v3433, %v3446
        %v3448 = vcombine.high %v3432, 0
        %v3450 = vunpack.c.l.s4 1934713408
        %v3451 = vunpack.c.0.s8 %v3450
        %v3452 = vlaneseq
        %v3453 = vshrl.u32 %v3452, 7
        %v3454 = vsub.s32 %v3451, %v3453
        %v3455 = vrot.slane %v3432, %v3454
        %v3457 = vunpack.c.l.s4 1934713408
        %v3458 = vunpack.c.0.s8 %v3457
        %v3459 = vlaneseq
        %v3460 = vshrl.u32 %v3459, 7
        %v3461 = vsub.s32 %v3458, %v3460
        %v3462 = vrot.slane %v3448, %v3461
        %v3463 = vcombine.high %v3440, 0
        %v3464 = vcombine.high %v3447, 0
        %v3465 = vcombine.high %v3455, 0
        %v3466 = vcombine.high %v3462, 0
        %v3467 = vcombine.high %v3360, %v1648
        %v3469 = vunpack.c.l.s4 1983009808
        %v3470 = vunpack.c.0.s8 %v3469
        %v3471 = vlaneseq
        %v3472 = vshrl.u32 %v3471, 7
        %v3473 = vsub.s32 %v3470, %v3472
        %v3474 = vrot.slane %v3360, %v3473
        %v3476 = vunpack.c.l.s4 1983009808
        %v3477 = vunpack.c.0.s8 %v3476
        %v3478 = vlaneseq
        %v3479 = vshrl.u32 %v3478, 7
        %v3480 = vsub.s32 %v3477, %v3479
        %v3481 = vrot.slane %v3467, %v3480
        %v3482 = vcombine.high %v3474, 0
        %v3484 = vunpack.c.l.s4 1934713408
        %v3485 = vunpack.c.0.s8 %v3484
        %v3486 = vlaneseq
        %v3487 = vshrl.u32 %v3486, 7
        %v3488 = vsub.s32 %v3485, %v3487
        %v3489 = vrot.slane %v3474, %v3488
        %v3491 = vunpack.c.l.s4 1934713408
        %v3492 = vunpack.c.0.s8 %v3491
        %v3493 = vlaneseq
        %v3494 = vshrl.u32 %v3493, 7
        %v3495 = vsub.s32 %v3492, %v3494
        %v3496 = vrot.slane %v3482, %v3495
        %v3497 = vcombine.high %v3481, 0
        %v3499 = vunpack.c.l.s4 1934713408
        %v3500 = vunpack.c.0.s8 %v3499
        %v3501 = vlaneseq
        %v3502 = vshrl.u32 %v3501, 7
        %v3503 = vsub.s32 %v3500, %v3502
        %v3504 = vrot.slane %v3481, %v3503
        %v3506 = vunpack.c.l.s4 1934713408
        %v3507 = vunpack.c.0.s8 %v3506
        %v3508 = vlaneseq
        %v3509 = vshrl.u32 %v3508, 7
        %v3510 = vsub.s32 %v3507, %v3509
        %v3511 = vrot.slane %v3497, %v3510
        %v3512 = vcombine.high %v3489, 0
        %v3513 = vcombine.high %v3496, 0
        %v3514 = vcombine.high %v3504, 0
        %v3515 = vcombine.high %v3511, 0
        %v3516 = vcombine.high %v3364, %v1645
        %v3518 = vunpack.c.l.s4 1983009808
        %v3519 = vunpack.c.0.s8 %v3518
        %v3520 = vlaneseq
        %v3521 = vshrl.u32 %v3520, 7
        %v3522 = vsub.s32 %v3519, %v3521
        %v3523 = vrot.slane %v3364, %v3522
        %v3525 = vunpack.c.l.s4 1983009808
        %v3526 = vunpack.c.0.s8 %v3525
        %v3527 = vlaneseq
        %v3528 = vshrl.u32 %v3527, 7
        %v3529 = vsub.s32 %v3526, %v3528
        %v3530 = vrot.slane %v3516, %v3529
        %v3531 = vcombine.high %v3523, 0
        %v3533 = vunpack.c.l.s4 1934713408
        %v3534 = vunpack.c.0.s8 %v3533
        %v3535 = vlaneseq
        %v3536 = vshrl.u32 %v3535, 7
        %v3537 = vsub.s32 %v3534, %v3536
        %v3538 = vrot.slane %v3523, %v3537
        %v3540 = vunpack.c.l.s4 1934713408
        %v3541 = vunpack.c.0.s8 %v3540
        %v3542 = vlaneseq
        %v3543 = vshrl.u32 %v3542, 7
        %v3544 = vsub.s32 %v3541, %v3543
        %v3545 = vrot.slane %v3531, %v3544
        %v3546 = vcombine.high %v3530, 0
        %v3548 = vunpack.c.l.s4 1934713408
        %v3549 = vunpack.c.0.s8 %v3548
        %v3550 = vlaneseq
        %v3551 = vshrl.u32 %v3550, 7
        %v3552 = vsub.s32 %v3549, %v3551
        %v3553 = vrot.slane %v3530, %v3552
        %v3555 = vunpack.c.l.s4 1934713408
        %v3556 = vunpack.c.0.s8 %v3555
        %v3557 = vlaneseq
        %v3558 = vshrl.u32 %v3557, 7
        %v3559 = vsub.s32 %v3556, %v3558
        %v3560 = vrot.slane %v3546, %v3559
        %v3561 = vcombine.high %v3538, 0
        %v3562 = vcombine.high %v3545, 0
        %v3563 = vcombine.high %v3553, 0
        %v3564 = vcombine.high %v3560, 0
        %v3565 = vcombine.high %v3368, %v1648
        %v3567 = vunpack.c.l.s4 1983009808
        %v3568 = vunpack.c.0.s8 %v3567
        %v3569 = vlaneseq
        %v3570 = vshrl.u32 %v3569, 7
        %v3571 = vsub.s32 %v3568, %v3570
        %v3572 = vrot.slane %v3368, %v3571
        %v3574 = vunpack.c.l.s4 1983009808
        %v3575 = vunpack.c.0.s8 %v3574
        %v3576 = vlaneseq
        %v3577 = vshrl.u32 %v3576, 7
        %v3578 = vsub.s32 %v3575, %v3577
        %v3579 = vrot.slane %v3565, %v3578
        %v3580 = vcombine.high %v3572, 0
        %v3582 = vunpack.c.l.s4 1934713408
        %v3583 = vunpack.c.0.s8 %v3582
        %v3584 = vlaneseq
        %v3585 = vshrl.u32 %v3584, 7
        %v3586 = vsub.s32 %v3583, %v3585
        %v3587 = vrot.slane %v3572, %v3586
        %v3589 = vunpack.c.l.s4 1934713408
        %v3590 = vunpack.c.0.s8 %v3589
        %v3591 = vlaneseq
        %v3592 = vshrl.u32 %v3591, 7
        %v3593 = vsub.s32 %v3590, %v3592
        %v3594 = vrot.slane %v3580, %v3593
        %v3595 = vcombine.high %v3579, 0
        %v3597 = vunpack.c.l.s4 1934713408
        %v3598 = vunpack.c.0.s8 %v3597
        %v3599 = vlaneseq
        %v3600 = vshrl.u32 %v3599, 7
        %v3601 = vsub.s32 %v3598, %v3600
        %v3602 = vrot.slane %v3579, %v3601
        %v3604 = vunpack.c.l.s4 1934713408
        %v3605 = vunpack.c.0.s8 %v3604
        %v3606 = vlaneseq
        %v3607 = vshrl.u32 %v3606, 7
        %v3608 = vsub.s32 %v3605, %v3607
        %v3609 = vrot.slane %v3595, %v3608
        %v3610 = vcombine.high %v3587, 0
        %v3611 = vcombine.high %v3594, 0
        %v3612 = vcombine.high %v3602, 0
        %v3613 = vcombine.high %v3609, 0
        %v3614 = vcombine.high %v3372, %v1645
        %v3616 = vunpack.c.l.s4 1983009808
        %v3617 = vunpack.c.0.s8 %v3616
        %v3618 = vlaneseq
        %v3619 = vshrl.u32 %v3618, 7
        %v3620 = vsub.s32 %v3617, %v3619
        %v3621 = vrot.slane %v3372, %v3620
        %v3623 = vunpack.c.l.s4 1983009808
        %v3624 = vunpack.c.0.s8 %v3623
        %v3625 = vlaneseq
        %v3626 = vshrl.u32 %v3625, 7
        %v3627 = vsub.s32 %v3624, %v3626
        %v3628 = vrot.slane %v3614, %v3627
        %v3629 = vcombine.high %v3621, 0
        %v3631 = vunpack.c.l.s4 1934713408
        %v3632 = vunpack.c.0.s8 %v3631
        %v3633 = vlaneseq
        %v3634 = vshrl.u32 %v3633, 7
        %v3635 = vsub.s32 %v3632, %v3634
        %v3636 = vrot.slane %v3621, %v3635
        %v3638 = vunpack.c.l.s4 1934713408
        %v3639 = vunpack.c.0.s8 %v3638
        %v3640 = vlaneseq
        %v3641 = vshrl.u32 %v3640, 7
        %v3642 = vsub.s32 %v3639, %v3641
        %v3643 = vrot.slane %v3629, %v3642
        %v3644 = vcombine.high %v3628, 0
        %v3646 = vunpack.c.l.s4 1934713408
        %v3647 = vunpack.c.0.s8 %v3646
        %v3648 = vlaneseq
        %v3649 = vshrl.u32 %v3648, 7
        %v3650 = vsub.s32 %v3647, %v3649
        %v3651 = vrot.slane %v3628, %v3650
        %v3653 = vunpack.c.l.s4 1934713408
        %v3654 = vunpack.c.0.s8 %v3653
        %v3655 = vlaneseq
        %v3656 = vshrl.u32 %v3655, 7
        %v3657 = vsub.s32 %v3654, %v3656
        %v3658 = vrot.slane %v3644, %v3657
        %v3659 = vcombine.high %v3636, 0
        %v3660 = vcombine.high %v3643, 0
        %v3661 = vcombine.high %v3651, 0
        %v3662 = vcombine.high %v3658, 0
        %v3663 = vcombine.high %v3376, %v1648
        %v3665 = vunpack.c.l.s4 1983009808
        %v3666 = vunpack.c.0.s8 %v3665
        %v3667 = vlaneseq
        %v3668 = vshrl.u32 %v3667, 7
        %v3669 = vsub.s32 %v3666, %v3668
        %v3670 = vrot.slane %v3376, %v3669
        %v3672 = vunpack.c.l.s4 1983009808
        %v3673 = vunpack.c.0.s8 %v3672
        %v3674 = vlaneseq
        %v3675 = vshrl.u32 %v3674, 7
        %v3676 = vsub.s32 %v3673, %v3675
        %v3677 = vrot.slane %v3663, %v3676
        %v3678 = vcombine.high %v3670, 0
        %v3680 = vunpack.c.l.s4 1934713408
        %v3681 = vunpack.c.0.s8 %v3680
        %v3682 = vlaneseq
        %v3683 = vshrl.u32 %v3682, 7
        %v3684 = vsub.s32 %v3681, %v3683
        %v3685 = vrot.slane %v3670, %v3684
        %v3687 = vunpack.c.l.s4 1934713408
        %v3688 = vunpack.c.0.s8 %v3687
        %v3689 = vlaneseq
        %v3690 = vshrl.u32 %v3689, 7
        %v3691 = vsub.s32 %v3688, %v3690
        %v3692 = vrot.slane %v3678, %v3691
        %v3693 = vcombine.high %v3677, 0
        %v3695 = vunpack.c.l.s4 1934713408
        %v3696 = vunpack.c.0.s8 %v3695
        %v3697 = vlaneseq
        %v3698 = vshrl.u32 %v3697, 7
        %v3699 = vsub.s32 %v3696, %v3698
        %v3700 = vrot.slane %v3677, %v3699
        %v3702 = vunpack.c.l.s4 1934713408
        %v3703 = vunpack.c.0.s8 %v3702
        %v3704 = vlaneseq
        %v3705 = vshrl.u32 %v3704, 7
        %v3706 = vsub.s32 %v3703, %v3705
        %v3707 = vrot.slane %v3693, %v3706
        %v3708 = vcombine.high %v3685, 0
        %v3709 = vcombine.high %v3692, 0
        %v3710 = vcombine.high %v3700, 0
        %v3711 = vcombine.high %v3707, 0
        %v3712 = vcombine.high %v3380, %v1645
        %v3714 = vunpack.c.l.s4 1983009808
        %v3715 = vunpack.c.0.s8 %v3714
        %v3716 = vlaneseq
        %v3717 = vshrl.u32 %v3716, 7
        %v3718 = vsub.s32 %v3715, %v3717
        %v3719 = vrot.slane %v3380, %v3718
        %v3721 = vunpack.c.l.s4 1983009808
        %v3722 = vunpack.c.0.s8 %v3721
        %v3723 = vlaneseq
        %v3724 = vshrl.u32 %v3723, 7
        %v3725 = vsub.s32 %v3722, %v3724
        %v3726 = vrot.slane %v3712, %v3725
        %v3727 = vcombine.high %v3719, 0
        %v3729 = vunpack.c.l.s4 1934713408
        %v3730 = vunpack.c.0.s8 %v3729
        %v3731 = vlaneseq
        %v3732 = vshrl.u32 %v3731, 7
        %v3733 = vsub.s32 %v3730, %v3732
        %v3734 = vrot.slane %v3719, %v3733
        %v3736 = vunpack.c.l.s4 1934713408
        %v3737 = vunpack.c.0.s8 %v3736
        %v3738 = vlaneseq
        %v3739 = vshrl.u32 %v3738, 7
        %v3740 = vsub.s32 %v3737, %v3739
        %v3741 = vrot.slane %v3727, %v3740
        %v3742 = vcombine.high %v3726, 0
        %v3744 = vunpack.c.l.s4 1934713408
        %v3745 = vunpack.c.0.s8 %v3744
        %v3746 = vlaneseq
        %v3747 = vshrl.u32 %v3746, 7
        %v3748 = vsub.s32 %v3745, %v3747
        %v3749 = vrot.slane %v3726, %v3748
        %v3751 = vunpack.c.l.s4 1934713408
        %v3752 = vunpack.c.0.s8 %v3751
        %v3753 = vlaneseq
        %v3754 = vshrl.u32 %v3753, 7
        %v3755 = vsub.s32 %v3752, %v3754
        %v3756 = vrot.slane %v3742, %v3755
        %v3757 = vcombine.high %v3734, 0
        %v3758 = vcombine.high %v3741, 0
        %v3759 = vcombine.high %v3749, 0
        %v3760 = vcombine.high %v3756, 0
        %v3761 = vcombine.high %v3384, %v1648
        %v3763 = vunpack.c.l.s4 1983009808
        %v3764 = vunpack.c.0.s8 %v3763
        %v3765 = vlaneseq
        %v3766 = vshrl.u32 %v3765, 7
        %v3767 = vsub.s32 %v3764, %v3766
        %v3768 = vrot.slane %v3384, %v3767
        %v3770 = vunpack.c.l.s4 1983009808
        %v3771 = vunpack.c.0.s8 %v3770
        %v3772 = vlaneseq
        %v3773 = vshrl.u32 %v3772, 7
        %v3774 = vsub.s32 %v3771, %v3773
        %v3775 = vrot.slane %v3761, %v3774
        %v3776 = vcombine.high %v3768, 0
        %v3778 = vunpack.c.l.s4 1934713408
        %v3779 = vunpack.c.0.s8 %v3778
        %v3780 = vlaneseq
        %v3781 = vshrl.u32 %v3780, 7
        %v3782 = vsub.s32 %v3779, %v3781
        %v3783 = vrot.slane %v3768, %v3782
        %v3785 = vunpack.c.l.s4 1934713408
        %v3786 = vunpack.c.0.s8 %v3785
        %v3787 = vlaneseq
        %v3788 = vshrl.u32 %v3787, 7
        %v3789 = vsub.s32 %v3786, %v3788
        %v3790 = vrot.slane %v3776, %v3789
        %v3791 = vcombine.high %v3775, 0
        %v3793 = vunpack.c.l.s4 1934713408
        %v3794 = vunpack.c.0.s8 %v3793
        %v3795 = vlaneseq
        %v3796 = vshrl.u32 %v3795, 7
        %v3797 = vsub.s32 %v3794, %v3796
        %v3798 = vrot.slane %v3775, %v3797
        %v3800 = vunpack.c.l.s4 1934713408
        %v3801 = vunpack.c.0.s8 %v3800
        %v3802 = vlaneseq
        %v3803 = vshrl.u32 %v3802, 7
        %v3804 = vsub.s32 %v3801, %v3803
        %v3805 = vrot.slane %v3791, %v3804
        %v3806 = vcombine.high %v3783, 0
        %v3807 = vcombine.high %v3790, 0
        %v3808 = vcombine.high %v3798, 0
        %v3809 = vcombine.high %v3805, 0
        %v3810 = vcombine.high %v3388, %v1645
        %v3812 = vunpack.c.l.s4 1983009808
        %v3813 = vunpack.c.0.s8 %v3812
        %v3814 = vlaneseq
        %v3815 = vshrl.u32 %v3814, 7
        %v3816 = vsub.s32 %v3813, %v3815
        %v3817 = vrot.slane %v3388, %v3816
        %v3819 = vunpack.c.l.s4 1983009808
        %v3820 = vunpack.c.0.s8 %v3819
        %v3821 = vlaneseq
        %v3822 = vshrl.u32 %v3821, 7
        %v3823 = vsub.s32 %v3820, %v3822
        %v3824 = vrot.slane %v3810, %v3823
        %v3825 = vcombine.high %v3817, 0
        %v3827 = vunpack.c.l.s4 1934713408
        %v3828 = vunpack.c.0.s8 %v3827
        %v3829 = vlaneseq
        %v3830 = vshrl.u32 %v3829, 7
        %v3831 = vsub.s32 %v3828, %v3830
        %v3832 = vrot.slane %v3817, %v3831
        %v3834 = vunpack.c.l.s4 1934713408
        %v3835 = vunpack.c.0.s8 %v3834
        %v3836 = vlaneseq
        %v3837 = vshrl.u32 %v3836, 7
        %v3838 = vsub.s32 %v3835, %v3837
        %v3839 = vrot.slane %v3825, %v3838
        %v3840 = vcombine.high %v3824, 0
        %v3842 = vunpack.c.l.s4 1934713408
        %v3843 = vunpack.c.0.s8 %v3842
        %v3844 = vlaneseq
        %v3845 = vshrl.u32 %v3844, 7
        %v3846 = vsub.s32 %v3843, %v3845
        %v3847 = vrot.slane %v3824, %v3846
        %v3849 = vunpack.c.l.s4 1934713408
        %v3850 = vunpack.c.0.s8 %v3849
        %v3851 = vlaneseq
        %v3852 = vshrl.u32 %v3851, 7
        %v3853 = vsub.s32 %v3850, %v3852
        %v3854 = vrot.slane %v3840, %v3853
        %v3855 = vcombine.high %v3832, 0
        %v3856 = vcombine.high %v3839, 0
        %v3857 = vcombine.high %v3847, 0
        %v3858 = vcombine.high %v3854, 0
        %v3859 = vcombine.high %v3392, %v1648
        %v3861 = vunpack.c.l.s4 1983009808
        %v3862 = vunpack.c.0.s8 %v3861
        %v3863 = vlaneseq
        %v3864 = vshrl.u32 %v3863, 7
        %v3865 = vsub.s32 %v3862, %v3864
        %v3866 = vrot.slane %v3392, %v3865
        %v3868 = vunpack.c.l.s4 1983009808
        %v3869 = vunpack.c.0.s8 %v3868
        %v3870 = vlaneseq
        %v3871 = vshrl.u32 %v3870, 7
        %v3872 = vsub.s32 %v3869, %v3871
        %v3873 = vrot.slane %v3859, %v3872
        %v3874 = vcombine.high %v3866, 0
        %v3876 = vunpack.c.l.s4 1934713408
        %v3877 = vunpack.c.0.s8 %v3876
        %v3878 = vlaneseq
        %v3879 = vshrl.u32 %v3878, 7
        %v3880 = vsub.s32 %v3877, %v3879
        %v3881 = vrot.slane %v3866, %v3880
        %v3883 = vunpack.c.l.s4 1934713408
        %v3884 = vunpack.c.0.s8 %v3883
        %v3885 = vlaneseq
        %v3886 = vshrl.u32 %v3885, 7
        %v3887 = vsub.s32 %v3884, %v3886
        %v3888 = vrot.slane %v3874, %v3887
        %v3889 = vcombine.high %v3873, 0
        %v3891 = vunpack.c.l.s4 1934713408
        %v3892 = vunpack.c.0.s8 %v3891
        %v3893 = vlaneseq
        %v3894 = vshrl.u32 %v3893, 7
        %v3895 = vsub.s32 %v3892, %v3894
        %v3896 = vrot.slane %v3873, %v3895
        %v3898 = vunpack.c.l.s4 1934713408
        %v3899 = vunpack.c.0.s8 %v3898
        %v3900 = vlaneseq
        %v3901 = vshrl.u32 %v3900, 7
        %v3902 = vsub.s32 %v3899, %v3901
        %v3903 = vrot.slane %v3889, %v3902
        %v3904 = vcombine.high %v3881, 0
        %v3905 = vcombine.high %v3888, 0
        %v3906 = vcombine.high %v3896, 0
        %v3907 = vcombine.high %v3903, 0
        %v3908 = vcombine.high %v3396, %v1645
        %v3910 = vunpack.c.l.s4 1983009808
        %v3911 = vunpack.c.0.s8 %v3910
        %v3912 = vlaneseq
        %v3913 = vshrl.u32 %v3912, 7
        %v3914 = vsub.s32 %v3911, %v3913
        %v3915 = vrot.slane %v3396, %v3914
        %v3917 = vunpack.c.l.s4 1983009808
        %v3918 = vunpack.c.0.s8 %v3917
        %v3919 = vlaneseq
        %v3920 = vshrl.u32 %v3919, 7
        %v3921 = vsub.s32 %v3918, %v3920
        %v3922 = vrot.slane %v3908, %v3921
        %v3923 = vcombine.high %v3915, 0
        %v3925 = vunpack.c.l.s4 1934713408
        %v3926 = vunpack.c.0.s8 %v3925
        %v3927 = vlaneseq
        %v3928 = vshrl.u32 %v3927, 7
        %v3929 = vsub.s32 %v3926, %v3928
        %v3930 = vrot.slane %v3915, %v3929
        %v3932 = vunpack.c.l.s4 1934713408
        %v3933 = vunpack.c.0.s8 %v3932
        %v3934 = vlaneseq
        %v3935 = vshrl.u32 %v3934, 7
        %v3936 = vsub.s32 %v3933, %v3935
        %v3937 = vrot.slane %v3923, %v3936
        %v3938 = vcombine.high %v3922, 0
        %v3940 = vunpack.c.l.s4 1934713408
        %v3941 = vunpack.c.0.s8 %v3940
        %v3942 = vlaneseq
        %v3943 = vshrl.u32 %v3942, 7
        %v3944 = vsub.s32 %v3941, %v3943
        %v3945 = vrot.slane %v3922, %v3944
        %v3947 = vunpack.c.l.s4 1934713408
        %v3948 = vunpack.c.0.s8 %v3947
        %v3949 = vlaneseq
        %v3950 = vshrl.u32 %v3949, 7
        %v3951 = vsub.s32 %v3948, %v3950
        %v3952 = vrot.slane %v3938, %v3951
        %v3953 = vcombine.high %v3930, 0
        %v3954 = vcombine.high %v3937, 0
        %v3955 = vcombine.high %v3945, 0
        %v3956 = vcombine.high %v3952, 0
        %v3957 = vcombine.high %v3400, %v1648
        %v3959 = vunpack.c.l.s4 1983009808
        %v3960 = vunpack.c.0.s8 %v3959
        %v3961 = vlaneseq
        %v3962 = vshrl.u32 %v3961, 7
        %v3963 = vsub.s32 %v3960, %v3962
        %v3964 = vrot.slane %v3400, %v3963
        %v3966 = vunpack.c.l.s4 1983009808
        %v3967 = vunpack.c.0.s8 %v3966
        %v3968 = vlaneseq
        %v3969 = vshrl.u32 %v3968, 7
        %v3970 = vsub.s32 %v3967, %v3969
        %v3971 = vrot.slane %v3957, %v3970
        %v3972 = vcombine.high %v3964, 0
        %v3974 = vunpack.c.l.s4 1934713408
        %v3975 = vunpack.c.0.s8 %v3974
        %v3976 = vlaneseq
        %v3977 = vshrl.u32 %v3976, 7
        %v3978 = vsub.s32 %v3975, %v3977
        %v3979 = vrot.slane %v3964, %v3978
        %v3981 = vunpack.c.l.s4 1934713408
        %v3982 = vunpack.c.0.s8 %v3981
        %v3983 = vlaneseq
        %v3984 = vshrl.u32 %v3983, 7
        %v3985 = vsub.s32 %v3982, %v3984
        %v3986 = vrot.slane %v3972, %v3985
        %v3987 = vcombine.high %v3971, 0
        %v3989 = vunpack.c.l.s4 1934713408
        %v3990 = vunpack.c.0.s8 %v3989
        %v3991 = vlaneseq
        %v3992 = vshrl.u32 %v3991, 7
        %v3993 = vsub.s32 %v3990, %v3992
        %v3994 = vrot.slane %v3971, %v3993
        %v3996 = vunpack.c.l.s4 1934713408
        %v3997 = vunpack.c.0.s8 %v3996
        %v3998 = vlaneseq
        %v3999 = vshrl.u32 %v3998, 7
        %v4000 = vsub.s32 %v3997, %v3999
        %v4001 = vrot.slane %v3987, %v4000
        %v4002 = vcombine.high %v3979, 0
        %v4003 = vcombine.high %v3986, 0
        %v4004 = vcombine.high %v3994, 0
        %v4005 = vcombine.high %v4001, 0
        %v4006 = vcombine.high %v3404, %v1645
        %v4008 = vunpack.c.l.s4 1983009808
        %v4009 = vunpack.c.0.s8 %v4008
        %v4010 = vlaneseq
        %v4011 = vshrl.u32 %v4010, 7
        %v4012 = vsub.s32 %v4009, %v4011
        %v4013 = vrot.slane %v3404, %v4012
        %v4015 = vunpack.c.l.s4 1983009808
        %v4016 = vunpack.c.0.s8 %v4015
        %v4017 = vlaneseq
        %v4018 = vshrl.u32 %v4017, 7
        %v4019 = vsub.s32 %v4016, %v4018
        %v4020 = vrot.slane %v4006, %v4019
        %v4021 = vcombine.high %v4013, 0
        %v4023 = vunpack.c.l.s4 1934713408
        %v4024 = vunpack.c.0.s8 %v4023
        %v4025 = vlaneseq
        %v4026 = vshrl.u32 %v4025, 7
        %v4027 = vsub.s32 %v4024, %v4026
        %v4028 = vrot.slane %v4013, %v4027
        %v4030 = vunpack.c.l.s4 1934713408
        %v4031 = vunpack.c.0.s8 %v4030
        %v4032 = vlaneseq
        %v4033 = vshrl.u32 %v4032, 7
        %v4034 = vsub.s32 %v4031, %v4033
        %v4035 = vrot.slane %v4021, %v4034
        %v4036 = vcombine.high %v4020, 0
        %v4038 = vunpack.c.l.s4 1934713408
        %v4039 = vunpack.c.0.s8 %v4038
        %v4040 = vlaneseq
        %v4041 = vshrl.u32 %v4040, 7
        %v4042 = vsub.s32 %v4039, %v4041
        %v4043 = vrot.slane %v4020, %v4042
        %v4045 = vunpack.c.l.s4 1934713408
        %v4046 = vunpack.c.0.s8 %v4045
        %v4047 = vlaneseq
        %v4048 = vshrl.u32 %v4047, 7
        %v4049 = vsub.s32 %v4046, %v4048
        %v4050 = vrot.slane %v4036, %v4049
        %v4051 = vcombine.high %v4028, 0
        %v4052 = vcombine.high %v4035, 0
        %v4053 = vcombine.high %v4043, 0
        %v4054 = vcombine.high %v4050, 0
        %v4055 = vcombine.high %v3408, %v1648
        %v4057 = vunpack.c.l.s4 1983009808
        %v4058 = vunpack.c.0.s8 %v4057
        %v4059 = vlaneseq
        %v4060 = vshrl.u32 %v4059, 7
        %v4061 = vsub.s32 %v4058, %v4060
        %v4062 = vrot.slane %v3408, %v4061
        %v4064 = vunpack.c.l.s4 1983009808
        %v4065 = vunpack.c.0.s8 %v4064
        %v4066 = vlaneseq
        %v4067 = vshrl.u32 %v4066, 7
        %v4068 = vsub.s32 %v4065, %v4067
        %v4069 = vrot.slane %v4055, %v4068
        %v4070 = vcombine.high %v4062, 0
        %v4072 = vunpack.c.l.s4 1934713408
        %v4073 = vunpack.c.0.s8 %v4072
        %v4074 = vlaneseq
        %v4075 = vshrl.u32 %v4074, 7
        %v4076 = vsub.s32 %v4073, %v4075
        %v4077 = vrot.slane %v4062, %v4076
        %v4079 = vunpack.c.l.s4 1934713408
        %v4080 = vunpack.c.0.s8 %v4079
        %v4081 = vlaneseq
        %v4082 = vshrl.u32 %v4081, 7
        %v4083 = vsub.s32 %v4080, %v4082
        %v4084 = vrot.slane %v4070, %v4083
        %v4085 = vcombine.high %v4069, 0
        %v4087 = vunpack.c.l.s4 1934713408
        %v4088 = vunpack.c.0.s8 %v4087
        %v4089 = vlaneseq
        %v4090 = vshrl.u32 %v4089, 7
        %v4091 = vsub.s32 %v4088, %v4090
        %v4092 = vrot.slane %v4069, %v4091
        %v4094 = vunpack.c.l.s4 1934713408
        %v4095 = vunpack.c.0.s8 %v4094
        %v4096 = vlaneseq
        %v4097 = vshrl.u32 %v4096, 7
        %v4098 = vsub.s32 %v4095, %v4097
        %v4099 = vrot.slane %v4085, %v4098
        %v4100 = vcombine.high %v4077, 0
        %v4101 = vcombine.high %v4084, 0
        %v4102 = vcombine.high %v4092, 0
        %v4103 = vcombine.high %v4099, 0
        %v4104 = vcombine.high %v3412, %v1645
        %v4106 = vunpack.c.l.s4 1983009808
        %v4107 = vunpack.c.0.s8 %v4106
        %v4108 = vlaneseq
        %v4109 = vshrl.u32 %v4108, 7
        %v4110 = vsub.s32 %v4107, %v4109
        %v4111 = vrot.slane %v3412, %v4110
        %v4113 = vunpack.c.l.s4 1983009808
        %v4114 = vunpack.c.0.s8 %v4113
        %v4115 = vlaneseq
        %v4116 = vshrl.u32 %v4115, 7
        %v4117 = vsub.s32 %v4114, %v4116
        %v4118 = vrot.slane %v4104, %v4117
        %v4119 = vcombine.high %v4111, 0
        %v4121 = vunpack.c.l.s4 1934713408
        %v4122 = vunpack.c.0.s8 %v4121
        %v4123 = vlaneseq
        %v4124 = vshrl.u32 %v4123, 7
        %v4125 = vsub.s32 %v4122, %v4124
        %v4126 = vrot.slane %v4111, %v4125
        %v4128 = vunpack.c.l.s4 1934713408
        %v4129 = vunpack.c.0.s8 %v4128
        %v4130 = vlaneseq
        %v4131 = vshrl.u32 %v4130, 7
        %v4132 = vsub.s32 %v4129, %v4131
        %v4133 = vrot.slane %v4119, %v4132
        %v4134 = vcombine.high %v4118, 0
        %v4136 = vunpack.c.l.s4 1934713408
        %v4137 = vunpack.c.0.s8 %v4136
        %v4138 = vlaneseq
        %v4139 = vshrl.u32 %v4138, 7
        %v4140 = vsub.s32 %v4137, %v4139
        %v4141 = vrot.slane %v4118, %v4140
        %v4143 = vunpack.c.l.s4 1934713408
        %v4144 = vunpack.c.0.s8 %v4143
        %v4145 = vlaneseq
        %v4146 = vshrl.u32 %v4145, 7
        %v4147 = vsub.s32 %v4144, %v4146
        %v4148 = vrot.slane %v4134, %v4147
        %v4149 = vcombine.high %v4126, 0
        %v4150 = vcombine.high %v4133, 0
        %v4151 = vcombine.high %v4141, 0
        %v4152 = vcombine.high %v4148, 0
        %v4153 = vcombine.high %v3416, %v1648
        %v4155 = vunpack.c.l.s4 1983009808
        %v4156 = vunpack.c.0.s8 %v4155
        %v4157 = vlaneseq
        %v4158 = vshrl.u32 %v4157, 7
        %v4159 = vsub.s32 %v4156, %v4158
        %v4160 = vrot.slane %v3416, %v4159
        %v4162 = vunpack.c.l.s4 1983009808
        %v4163 = vunpack.c.0.s8 %v4162
        %v4164 = vlaneseq
        %v4165 = vshrl.u32 %v4164, 7
        %v4166 = vsub.s32 %v4163, %v4165
        %v4167 = vrot.slane %v4153, %v4166
        %v4168 = vcombine.high %v4160, 0
        %v4170 = vunpack.c.l.s4 1934713408
        %v4171 = vunpack.c.0.s8 %v4170
        %v4172 = vlaneseq
        %v4173 = vshrl.u32 %v4172, 7
        %v4174 = vsub.s32 %v4171, %v4173
        %v4175 = vrot.slane %v4160, %v4174
        %v4177 = vunpack.c.l.s4 1934713408
        %v4178 = vunpack.c.0.s8 %v4177
        %v4179 = vlaneseq
        %v4180 = vshrl.u32 %v4179, 7
        %v4181 = vsub.s32 %v4178, %v4180
        %v4182 = vrot.slane %v4168, %v4181
        %v4183 = vcombine.high %v4167, 0
        %v4185 = vunpack.c.l.s4 1934713408
        %v4186 = vunpack.c.0.s8 %v4185
        %v4187 = vlaneseq
        %v4188 = vshrl.u32 %v4187, 7
        %v4189 = vsub.s32 %v4186, %v4188
        %v4190 = vrot.slane %v4167, %v4189
        %v4192 = vunpack.c.l.s4 1934713408
        %v4193 = vunpack.c.0.s8 %v4192
        %v4194 = vlaneseq
        %v4195 = vshrl.u32 %v4194, 7
        %v4196 = vsub.s32 %v4193, %v4195
        %v4197 = vrot.slane %v4183, %v4196
        %v4198 = vcombine.high %v4175, 0
        %v4199 = vcombine.high %v4182, 0
        %v4200 = vcombine.high %v4190, 0
        %v4201 = vcombine.high %v4197, 0
        %v4202 = vcombine.low %v3440, %v3447
        %v4204 = vunpack.c.l.s4 1983009808
        %v4205 = vunpack.c.0.s8 %v4204
        %v4206 = vlaneseq
        %v4207 = vshrl.u32 %v4206, 7
        %v4208 = vsub.s32 %v4205, %v4207
        %v4209 = vrot.slane %v4202, %v4208
        %v4210 = vcombine.low %v3463, %v3464
        %v4212 = vunpack.c.l.s4 1983009808
        %v4213 = vunpack.c.0.s8 %v4212
        %v4214 = vlaneseq
        %v4215 = vshrl.u32 %v4214, 7
        %v4216 = vsub.s32 %v4213, %v4215
        %v4217 = vrot.slane %v4210, %v4216
        %v4218 = vcombine.low %v3455, %v3462
        %v4220 = vunpack.c.l.s4 1983009808
        %v4221 = vunpack.c.0.s8 %v4220
        %v4222 = vlaneseq
        %v4223 = vshrl.u32 %v4222, 7
        %v4224 = vsub.s32 %v4221, %v4223
        %v4225 = vrot.slane %v4218, %v4224
        %v4226 = vcombine.low %v3465, %v3466
        %v4228 = vunpack.c.l.s4 1983009808
        %v4229 = vunpack.c.0.s8 %v4228
        %v4230 = vlaneseq
        %v4231 = vshrl.u32 %v4230, 7
        %v4232 = vsub.s32 %v4229, %v4231
        %v4233 = vrot.slane %v4226, %v4232
        %v4234 = vcombine.low %v4209, %v4217
        %v4236 = vunpack.c.l.s4 1934713408
        %v4237 = vunpack.c.0.s8 %v4236
        %v4238 = vlaneseq
        %v4239 = vshrl.u32 %v4238, 7
        %v4240 = vsub.s32 %v4237, %v4239
        %v4241 = vrot.slane %v4234, %v4240
        %v4242 = vcombine.low %v4225, %v4233
        %v4244 = vunpack.c.l.s4 1934713408
        %v4245 = vunpack.c.0.s8 %v4244
        %v4246 = vlaneseq
        %v4247 = vshrl.u32 %v4246, 7
        %v4248 = vsub.s32 %v4245, %v4247
        %v4249 = vrot.slane %v4242, %v4248
        %v4250 = vcombine.low %v4241, %v4249
        %v4251 = vcombine.low %v3489, %v3496
        %v4253 = vunpack.c.l.s4 1983009808
        %v4254 = vunpack.c.0.s8 %v4253
        %v4255 = vlaneseq
        %v4256 = vshrl.u32 %v4255, 7
        %v4257 = vsub.s32 %v4254, %v4256
        %v4258 = vrot.slane %v4251, %v4257
        %v4259 = vcombine.low %v3512, %v3513
        %v4261 = vunpack.c.l.s4 1983009808
        %v4262 = vunpack.c.0.s8 %v4261
        %v4263 = vlaneseq
        %v4264 = vshrl.u32 %v4263, 7
        %v4265 = vsub.s32 %v4262, %v4264
        %v4266 = vrot.slane %v4259, %v4265
        %v4267 = vcombine.low %v3504, %v3511
        %v4269 = vunpack.c.l.s4 1983009808
        %v4270 = vunpack.c.0.s8 %v4269
        %v4271 = vlaneseq
        %v4272 = vshrl.u32 %v4271, 7
        %v4273 = vsub.s32 %v4270, %v4272
        %v4274 = vrot.slane %v4267, %v4273
        %v4275 = vcombine.low %v3514, %v3515
        %v4277 = vunpack.c.l.s4 1983009808
        %v4278 = vunpack.c.0.s8 %v4277
        %v4279 = vlaneseq
        %v4280 = vshrl.u32 %v4279, 7
        %v4281 = vsub.s32 %v4278, %v4280
        %v4282 = vrot.slane %v4275, %v4281
        %v4283 = vcombine.low %v4258, %v4266
        %v4285 = vunpack.c.l.s4 1934713408
        %v4286 = vunpack.c.0.s8 %v4285
        %v4287 = vlaneseq
        %v4288 = vshrl.u32 %v4287, 7
        %v4289 = vsub.s32 %v4286, %v4288
        %v4290 = vrot.slane %v4283, %v4289
        %v4291 = vcombine.low %v4274, %v4282
        %v4293 = vunpack.c.l.s4 1934713408
        %v4294 = vunpack.c.0.s8 %v4293
        %v4295 = vlaneseq
        %v4296 = vshrl.u32 %v4295, 7
        %v4297 = vsub.s32 %v4294, %v4296
        %v4298 = vrot.slane %v4291, %v4297
        %v4299 = vcombine.low %v4290, %v4298
        %v4300 = vcombine.low %v3538, %v3545
        %v4302 = vunpack.c.l.s4 1983009808
        %v4303 = vunpack.c.0.s8 %v4302
        %v4304 = vlaneseq
        %v4305 = vshrl.u32 %v4304, 7
        %v4306 = vsub.s32 %v4303, %v4305
        %v4307 = vrot.slane %v4300, %v4306
        %v4308 = vcombine.low %v3561, %v3562
        %v4310 = vunpack.c.l.s4 1983009808
        %v4311 = vunpack.c.0.s8 %v4310
        %v4312 = vlaneseq
        %v4313 = vshrl.u32 %v4312, 7
        %v4314 = vsub.s32 %v4311, %v4313
        %v4315 = vrot.slane %v4308, %v4314
        %v4316 = vcombine.low %v3553, %v3560
        %v4318 = vunpack.c.l.s4 1983009808
        %v4319 = vunpack.c.0.s8 %v4318
        %v4320 = vlaneseq
        %v4321 = vshrl.u32 %v4320, 7
        %v4322 = vsub.s32 %v4319, %v4321
        %v4323 = vrot.slane %v4316, %v4322
        %v4324 = vcombine.low %v3563, %v3564
        %v4326 = vunpack.c.l.s4 1983009808
        %v4327 = vunpack.c.0.s8 %v4326
        %v4328 = vlaneseq
        %v4329 = vshrl.u32 %v4328, 7
        %v4330 = vsub.s32 %v4327, %v4329
        %v4331 = vrot.slane %v4324, %v4330
        %v4332 = vcombine.low %v4307, %v4315
        %v4334 = vunpack.c.l.s4 1934713408
        %v4335 = vunpack.c.0.s8 %v4334
        %v4336 = vlaneseq
        %v4337 = vshrl.u32 %v4336, 7
        %v4338 = vsub.s32 %v4335, %v4337
        %v4339 = vrot.slane %v4332, %v4338
        %v4340 = vcombine.low %v4323, %v4331
        %v4342 = vunpack.c.l.s4 1934713408
        %v4343 = vunpack.c.0.s8 %v4342
        %v4344 = vlaneseq
        %v4345 = vshrl.u32 %v4344, 7
        %v4346 = vsub.s32 %v4343, %v4345
        %v4347 = vrot.slane %v4340, %v4346
        %v4348 = vcombine.low %v4339, %v4347
        %v4349 = vcombine.low %v3587, %v3594
        %v4351 = vunpack.c.l.s4 1983009808
        %v4352 = vunpack.c.0.s8 %v4351
        %v4353 = vlaneseq
        %v4354 = vshrl.u32 %v4353, 7
        %v4355 = vsub.s32 %v4352, %v4354
        %v4356 = vrot.slane %v4349, %v4355
        %v4357 = vcombine.low %v3610, %v3611
        %v4359 = vunpack.c.l.s4 1983009808
        %v4360 = vunpack.c.0.s8 %v4359
        %v4361 = vlaneseq
        %v4362 = vshrl.u32 %v4361, 7
        %v4363 = vsub.s32 %v4360, %v4362
        %v4364 = vrot.slane %v4357, %v4363
        %v4365 = vcombine.low %v3602, %v3609
        %v4367 = vunpack.c.l.s4 1983009808
        %v4368 = vunpack.c.0.s8 %v4367
        %v4369 = vlaneseq
        %v4370 = vshrl.u32 %v4369, 7
        %v4371 = vsub.s32 %v4368, %v4370
        %v4372 = vrot.slane %v4365, %v4371
        %v4373 = vcombine.low %v3612, %v3613
        %v4375 = vunpack.c.l.s4 1983009808
        %v4376 = vunpack.c.0.s8 %v4375
        %v4377 = vlaneseq
        %v4378 = vshrl.u32 %v4377, 7
        %v4379 = vsub.s32 %v4376, %v4378
        %v4380 = vrot.slane %v4373, %v4379
        %v4381 = vcombine.low %v4356, %v4364
        %v4383 = vunpack.c.l.s4 1934713408
        %v4384 = vunpack.c.0.s8 %v4383
        %v4385 = vlaneseq
        %v4386 = vshrl.u32 %v4385, 7
        %v4387 = vsub.s32 %v4384, %v4386
        %v4388 = vrot.slane %v4381, %v4387
        %v4389 = vcombine.low %v4372, %v4380
        %v4391 = vunpack.c.l.s4 1934713408
        %v4392 = vunpack.c.0.s8 %v4391
        %v4393 = vlaneseq
        %v4394 = vshrl.u32 %v4393, 7
        %v4395 = vsub.s32 %v4392, %v4394
        %v4396 = vrot.slane %v4389, %v4395
        %v4397 = vcombine.low %v4388, %v4396
        %v4398 = vcombine.low %v3636, %v3643
        %v4400 = vunpack.c.l.s4 1983009808
        %v4401 = vunpack.c.0.s8 %v4400
        %v4402 = vlaneseq
        %v4403 = vshrl.u32 %v4402, 7
        %v4404 = vsub.s32 %v4401, %v4403
        %v4405 = vrot.slane %v4398, %v4404
        %v4406 = vcombine.low %v3659, %v3660
        %v4408 = vunpack.c.l.s4 1983009808
        %v4409 = vunpack.c.0.s8 %v4408
        %v4410 = vlaneseq
        %v4411 = vshrl.u32 %v4410, 7
        %v4412 = vsub.s32 %v4409, %v4411
        %v4413 = vrot.slane %v4406, %v4412
        %v4414 = vcombine.low %v3651, %v3658
        %v4416 = vunpack.c.l.s4 1983009808
        %v4417 = vunpack.c.0.s8 %v4416
        %v4418 = vlaneseq
        %v4419 = vshrl.u32 %v4418, 7
        %v4420 = vsub.s32 %v4417, %v4419
        %v4421 = vrot.slane %v4414, %v4420
        %v4422 = vcombine.low %v3661, %v3662
        %v4424 = vunpack.c.l.s4 1983009808
        %v4425 = vunpack.c.0.s8 %v4424
        %v4426 = vlaneseq
        %v4427 = vshrl.u32 %v4426, 7
        %v4428 = vsub.s32 %v4425, %v4427
        %v4429 = vrot.slane %v4422, %v4428
        %v4430 = vcombine.low %v4405, %v4413
        %v4432 = vunpack.c.l.s4 1934713408
        %v4433 = vunpack.c.0.s8 %v4432
        %v4434 = vlaneseq
        %v4435 = vshrl.u32 %v4434, 7
        %v4436 = vsub.s32 %v4433, %v4435
        %v4437 = vrot.slane %v4430, %v4436
        %v4438 = vcombine.low %v4421, %v4429
        %v4440 = vunpack.c.l.s4 1934713408
        %v4441 = vunpack.c.0.s8 %v4440
        %v4442 = vlaneseq
        %v4443 = vshrl.u32 %v4442, 7
        %v4444 = vsub.s32 %v4441, %v4443
        %v4445 = vrot.slane %v4438, %v4444
        %v4446 = vcombine.low %v4437, %v4445
        %v4447 = vcombine.low %v3685, %v3692
        %v4449 = vunpack.c.l.s4 1983009808
        %v4450 = vunpack.c.0.s8 %v4449
        %v4451 = vlaneseq
        %v4452 = vshrl.u32 %v4451, 7
        %v4453 = vsub.s32 %v4450, %v4452
        %v4454 = vrot.slane %v4447, %v4453
        %v4455 = vcombine.low %v3708, %v3709
        %v4457 = vunpack.c.l.s4 1983009808
        %v4458 = vunpack.c.0.s8 %v4457
        %v4459 = vlaneseq
        %v4460 = vshrl.u32 %v4459, 7
        %v4461 = vsub.s32 %v4458, %v4460
        %v4462 = vrot.slane %v4455, %v4461
        %v4463 = vcombine.low %v3700, %v3707
        %v4465 = vunpack.c.l.s4 1983009808
        %v4466 = vunpack.c.0.s8 %v4465
        %v4467 = vlaneseq
        %v4468 = vshrl.u32 %v4467, 7
        %v4469 = vsub.s32 %v4466, %v4468
        %v4470 = vrot.slane %v4463, %v4469
        %v4471 = vcombine.low %v3710, %v3711
        %v4473 = vunpack.c.l.s4 1983009808
        %v4474 = vunpack.c.0.s8 %v4473
        %v4475 = vlaneseq
        %v4476 = vshrl.u32 %v4475, 7
        %v4477 = vsub.s32 %v4474, %v4476
        %v4478 = vrot.slane %v4471, %v4477
        %v4479 = vcombine.low %v4454, %v4462
        %v4481 = vunpack.c.l.s4 1934713408
        %v4482 = vunpack.c.0.s8 %v4481
        %v4483 = vlaneseq
        %v4484 = vshrl.u32 %v4483, 7
        %v4485 = vsub.s32 %v4482, %v4484
        %v4486 = vrot.slane %v4479, %v4485
        %v4487 = vcombine.low %v4470, %v4478
        %v4489 = vunpack.c.l.s4 1934713408
        %v4490 = vunpack.c.0.s8 %v4489
        %v4491 = vlaneseq
        %v4492 = vshrl.u32 %v4491, 7
        %v4493 = vsub.s32 %v4490, %v4492
        %v4494 = vrot.slane %v4487, %v4493
        %v4495 = vcombine.low %v4486, %v4494
        %v4496 = vcombine.low %v3734, %v3741
        %v4498 = vunpack.c.l.s4 1983009808
        %v4499 = vunpack.c.0.s8 %v4498
        %v4500 = vlaneseq
        %v4501 = vshrl.u32 %v4500, 7
        %v4502 = vsub.s32 %v4499, %v4501
        %v4503 = vrot.slane %v4496, %v4502
        %v4504 = vcombine.low %v3757, %v3758
        %v4506 = vunpack.c.l.s4 1983009808
        %v4507 = vunpack.c.0.s8 %v4506
        %v4508 = vlaneseq
        %v4509 = vshrl.u32 %v4508, 7
        %v4510 = vsub.s32 %v4507, %v4509
        %v4511 = vrot.slane %v4504, %v4510
        %v4512 = vcombine.low %v3749, %v3756
        %v4514 = vunpack.c.l.s4 1983009808
        %v4515 = vunpack.c.0.s8 %v4514
        %v4516 = vlaneseq
        %v4517 = vshrl.u32 %v4516, 7
        %v4518 = vsub.s32 %v4515, %v4517
        %v4519 = vrot.slane %v4512, %v4518
        %v4520 = vcombine.low %v3759, %v3760
        %v4522 = vunpack.c.l.s4 1983009808
        %v4523 = vunpack.c.0.s8 %v4522
        %v4524 = vlaneseq
        %v4525 = vshrl.u32 %v4524, 7
        %v4526 = vsub.s32 %v4523, %v4525
        %v4527 = vrot.slane %v4520, %v4526
        %v4528 = vcombine.low %v4503, %v4511
        %v4530 = vunpack.c.l.s4 1934713408
        %v4531 = vunpack.c.0.s8 %v4530
        %v4532 = vlaneseq
        %v4533 = vshrl.u32 %v4532, 7
        %v4534 = vsub.s32 %v4531, %v4533
        %v4535 = vrot.slane %v4528, %v4534
        %v4536 = vcombine.low %v4519, %v4527
        %v4538 = vunpack.c.l.s4 1934713408
        %v4539 = vunpack.c.0.s8 %v4538
        %v4540 = vlaneseq
        %v4541 = vshrl.u32 %v4540, 7
        %v4542 = vsub.s32 %v4539, %v4541
        %v4543 = vrot.slane %v4536, %v4542
        %v4544 = vcombine.low %v4535, %v4543
        %v4545 = vcombine.low %v3783, %v3790
        %v4547 = vunpack.c.l.s4 1983009808
        %v4548 = vunpack.c.0.s8 %v4547
        %v4549 = vlaneseq
        %v4550 = vshrl.u32 %v4549, 7
        %v4551 = vsub.s32 %v4548, %v4550
        %v4552 = vrot.slane %v4545, %v4551
        %v4553 = vcombine.low %v3806, %v3807
        %v4555 = vunpack.c.l.s4 1983009808
        %v4556 = vunpack.c.0.s8 %v4555
        %v4557 = vlaneseq
        %v4558 = vshrl.u32 %v4557, 7
        %v4559 = vsub.s32 %v4556, %v4558
        %v4560 = vrot.slane %v4553, %v4559
        %v4561 = vcombine.low %v3798, %v3805
        %v4563 = vunpack.c.l.s4 1983009808
        %v4564 = vunpack.c.0.s8 %v4563
        %v4565 = vlaneseq
        %v4566 = vshrl.u32 %v4565, 7
        %v4567 = vsub.s32 %v4564, %v4566
        %v4568 = vrot.slane %v4561, %v4567
        %v4569 = vcombine.low %v3808, %v3809
        %v4571 = vunpack.c.l.s4 1983009808
        %v4572 = vunpack.c.0.s8 %v4571
        %v4573 = vlaneseq
        %v4574 = vshrl.u32 %v4573, 7
        %v4575 = vsub.s32 %v4572, %v4574
        %v4576 = vrot.slane %v4569, %v4575
        %v4577 = vcombine.low %v4552, %v4560
        %v4579 = vunpack.c.l.s4 1934713408
        %v4580 = vunpack.c.0.s8 %v4579
        %v4581 = vlaneseq
        %v4582 = vshrl.u32 %v4581, 7
        %v4583 = vsub.s32 %v4580, %v4582
        %v4584 = vrot.slane %v4577, %v4583
        %v4585 = vcombine.low %v4568, %v4576
        %v4587 = vunpack.c.l.s4 1934713408
        %v4588 = vunpack.c.0.s8 %v4587
        %v4589 = vlaneseq
        %v4590 = vshrl.u32 %v4589, 7
        %v4591 = vsub.s32 %v4588, %v4590
        %v4592 = vrot.slane %v4585, %v4591
        %v4593 = vcombine.low %v4584, %v4592
        %v4594 = vcombine.low %v3832, %v3839
        %v4596 = vunpack.c.l.s4 1983009808
        %v4597 = vunpack.c.0.s8 %v4596
        %v4598 = vlaneseq
        %v4599 = vshrl.u32 %v4598, 7
        %v4600 = vsub.s32 %v4597, %v4599
        %v4601 = vrot.slane %v4594, %v4600
        %v4602 = vcombine.low %v3855, %v3856
        %v4604 = vunpack.c.l.s4 1983009808
        %v4605 = vunpack.c.0.s8 %v4604
        %v4606 = vlaneseq
        %v4607 = vshrl.u32 %v4606, 7
        %v4608 = vsub.s32 %v4605, %v4607
        %v4609 = vrot.slane %v4602, %v4608
        %v4610 = vcombine.low %v3847, %v3854
        %v4612 = vunpack.c.l.s4 1983009808
        %v4613 = vunpack.c.0.s8 %v4612
        %v4614 = vlaneseq
        %v4615 = vshrl.u32 %v4614, 7
        %v4616 = vsub.s32 %v4613, %v4615
        %v4617 = vrot.slane %v4610, %v4616
        %v4618 = vcombine.low %v3857, %v3858
        %v4620 = vunpack.c.l.s4 1983009808
        %v4621 = vunpack.c.0.s8 %v4620
        %v4622 = vlaneseq
        %v4623 = vshrl.u32 %v4622, 7
        %v4624 = vsub.s32 %v4621, %v4623
        %v4625 = vrot.slane %v4618, %v4624
        %v4626 = vcombine.low %v4601, %v4609
        %v4628 = vunpack.c.l.s4 1934713408
        %v4629 = vunpack.c.0.s8 %v4628
        %v4630 = vlaneseq
        %v4631 = vshrl.u32 %v4630, 7
        %v4632 = vsub.s32 %v4629, %v4631
        %v4633 = vrot.slane %v4626, %v4632
        %v4634 = vcombine.low %v4617, %v4625
        %v4636 = vunpack.c.l.s4 1934713408
        %v4637 = vunpack.c.0.s8 %v4636
        %v4638 = vlaneseq
        %v4639 = vshrl.u32 %v4638, 7
        %v4640 = vsub.s32 %v4637, %v4639
        %v4641 = vrot.slane %v4634, %v4640
        %v4642 = vcombine.low %v4633, %v4641
        %v4643 = vcombine.low %v3881, %v3888
        %v4645 = vunpack.c.l.s4 1983009808
        %v4646 = vunpack.c.0.s8 %v4645
        %v4647 = vlaneseq
        %v4648 = vshrl.u32 %v4647, 7
        %v4649 = vsub.s32 %v4646, %v4648
        %v4650 = vrot.slane %v4643, %v4649
        %v4651 = vcombine.low %v3904, %v3905
        %v4653 = vunpack.c.l.s4 1983009808
        %v4654 = vunpack.c.0.s8 %v4653
        %v4655 = vlaneseq
        %v4656 = vshrl.u32 %v4655, 7
        %v4657 = vsub.s32 %v4654, %v4656
        %v4658 = vrot.slane %v4651, %v4657
        %v4659 = vcombine.low %v3896, %v3903
        %v4661 = vunpack.c.l.s4 1983009808
        %v4662 = vunpack.c.0.s8 %v4661
        %v4663 = vlaneseq
        %v4664 = vshrl.u32 %v4663, 7
        %v4665 = vsub.s32 %v4662, %v4664
        %v4666 = vrot.slane %v4659, %v4665
        %v4667 = vcombine.low %v3906, %v3907
        %v4669 = vunpack.c.l.s4 1983009808
        %v4670 = vunpack.c.0.s8 %v4669
        %v4671 = vlaneseq
        %v4672 = vshrl.u32 %v4671, 7
        %v4673 = vsub.s32 %v4670, %v4672
        %v4674 = vrot.slane %v4667, %v4673
        %v4675 = vcombine.low %v4650, %v4658
        %v4677 = vunpack.c.l.s4 1934713408
        %v4678 = vunpack.c.0.s8 %v4677
        %v4679 = vlaneseq
        %v4680 = vshrl.u32 %v4679, 7
        %v4681 = vsub.s32 %v4678, %v4680
        %v4682 = vrot.slane %v4675, %v4681
        %v4683 = vcombine.low %v4666, %v4674
        %v4685 = vunpack.c.l.s4 1934713408
        %v4686 = vunpack.c.0.s8 %v4685
        %v4687 = vlaneseq
        %v4688 = vshrl.u32 %v4687, 7
        %v4689 = vsub.s32 %v4686, %v4688
        %v4690 = vrot.slane %v4683, %v4689
        %v4691 = vcombine.low %v4682, %v4690
        %v4692 = vcombine.low %v3930, %v3937
        %v4694 = vunpack.c.l.s4 1983009808
        %v4695 = vunpack.c.0.s8 %v4694
        %v4696 = vlaneseq
        %v4697 = vshrl.u32 %v4696, 7
        %v4698 = vsub.s32 %v4695, %v4697
        %v4699 = vrot.slane %v4692, %v4698
        %v4700 = vcombine.low %v3953, %v3954
        %v4702 = vunpack.c.l.s4 1983009808
        %v4703 = vunpack.c.0.s8 %v4702
        %v4704 = vlaneseq
        %v4705 = vshrl.u32 %v4704, 7
        %v4706 = vsub.s32 %v4703, %v4705
        %v4707 = vrot.slane %v4700, %v4706
        %v4708 = vcombine.low %v3945, %v3952
        %v4710 = vunpack.c.l.s4 1983009808
        %v4711 = vunpack.c.0.s8 %v4710
        %v4712 = vlaneseq
        %v4713 = vshrl.u32 %v4712, 7
        %v4714 = vsub.s32 %v4711, %v4713
        %v4715 = vrot.slane %v4708, %v4714
        %v4716 = vcombine.low %v3955, %v3956
        %v4718 = vunpack.c.l.s4 1983009808
        %v4719 = vunpack.c.0.s8 %v4718
        %v4720 = vlaneseq
        %v4721 = vshrl.u32 %v4720, 7
        %v4722 = vsub.s32 %v4719, %v4721
        %v4723 = vrot.slane %v4716, %v4722
        %v4724 = vcombine.low %v4699, %v4707
        %v4726 = vunpack.c.l.s4 1934713408
        %v4727 = vunpack.c.0.s8 %v4726
        %v4728 = vlaneseq
        %v4729 = vshrl.u32 %v4728, 7
        %v4730 = vsub.s32 %v4727, %v4729
        %v4731 = vrot.slane %v4724, %v4730
        %v4732 = vcombine.low %v4715, %v4723
        %v4734 = vunpack.c.l.s4 1934713408
        %v4735 = vunpack.c.0.s8 %v4734
        %v4736 = vlaneseq
        %v4737 = vshrl.u32 %v4736, 7
        %v4738 = vsub.s32 %v4735, %v4737
        %v4739 = vrot.slane %v4732, %v4738
        %v4740 = vcombine.low %v4731, %v4739
        %v4741 = vcombine.low %v3979, %v3986
        %v4743 = vunpack.c.l.s4 1983009808
        %v4744 = vunpack.c.0.s8 %v4743
        %v4745 = vlaneseq
        %v4746 = vshrl.u32 %v4745, 7
        %v4747 = vsub.s32 %v4744, %v4746
        %v4748 = vrot.slane %v4741, %v4747
        %v4749 = vcombine.low %v4002, %v4003
        %v4751 = vunpack.c.l.s4 1983009808
        %v4752 = vunpack.c.0.s8 %v4751
        %v4753 = vlaneseq
        %v4754 = vshrl.u32 %v4753, 7
        %v4755 = vsub.s32 %v4752, %v4754
        %v4756 = vrot.slane %v4749, %v4755
        %v4757 = vcombine.low %v3994, %v4001
        %v4759 = vunpack.c.l.s4 1983009808
        %v4760 = vunpack.c.0.s8 %v4759
        %v4761 = vlaneseq
        %v4762 = vshrl.u32 %v4761, 7
        %v4763 = vsub.s32 %v4760, %v4762
        %v4764 = vrot.slane %v4757, %v4763
        %v4765 = vcombine.low %v4004, %v4005
        %v4767 = vunpack.c.l.s4 1983009808
        %v4768 = vunpack.c.0.s8 %v4767
        %v4769 = vlaneseq
        %v4770 = vshrl.u32 %v4769, 7
        %v4771 = vsub.s32 %v4768, %v4770
        %v4772 = vrot.slane %v4765, %v4771
        %v4773 = vcombine.low %v4748, %v4756
        %v4775 = vunpack.c.l.s4 1934713408
        %v4776 = vunpack.c.0.s8 %v4775
        %v4777 = vlaneseq
        %v4778 = vshrl.u32 %v4777, 7
        %v4779 = vsub.s32 %v4776, %v4778
        %v4780 = vrot.slane %v4773, %v4779
        %v4781 = vcombine.low %v4764, %v4772
        %v4783 = vunpack.c.l.s4 1934713408
        %v4784 = vunpack.c.0.s8 %v4783
        %v4785 = vlaneseq
        %v4786 = vshrl.u32 %v4785, 7
        %v4787 = vsub.s32 %v4784, %v4786
        %v4788 = vrot.slane %v4781, %v4787
        %v4789 = vcombine.low %v4780, %v4788
        %v4790 = vcombine.low %v4028, %v4035
        %v4792 = vunpack.c.l.s4 1983009808
        %v4793 = vunpack.c.0.s8 %v4792
        %v4794 = vlaneseq
        %v4795 = vshrl.u32 %v4794, 7
        %v4796 = vsub.s32 %v4793, %v4795
        %v4797 = vrot.slane %v4790, %v4796
        %v4798 = vcombine.low %v4051, %v4052
        %v4800 = vunpack.c.l.s4 1983009808
        %v4801 = vunpack.c.0.s8 %v4800
        %v4802 = vlaneseq
        %v4803 = vshrl.u32 %v4802, 7
        %v4804 = vsub.s32 %v4801, %v4803
        %v4805 = vrot.slane %v4798, %v4804
        %v4806 = vcombine.low %v4043, %v4050
        %v4808 = vunpack.c.l.s4 1983009808
        %v4809 = vunpack.c.0.s8 %v4808
        %v4810 = vlaneseq
        %v4811 = vshrl.u32 %v4810, 7
        %v4812 = vsub.s32 %v4809, %v4811
        %v4813 = vrot.slane %v4806, %v4812
        %v4814 = vcombine.low %v4053, %v4054
        %v4816 = vunpack.c.l.s4 1983009808
        %v4817 = vunpack.c.0.s8 %v4816
        %v4818 = vlaneseq
        %v4819 = vshrl.u32 %v4818, 7
        %v4820 = vsub.s32 %v4817, %v4819
        %v4821 = vrot.slane %v4814, %v4820
        %v4822 = vcombine.low %v4797, %v4805
        %v4824 = vunpack.c.l.s4 1934713408
        %v4825 = vunpack.c.0.s8 %v4824
        %v4826 = vlaneseq
        %v4827 = vshrl.u32 %v4826, 7
        %v4828 = vsub.s32 %v4825, %v4827
        %v4829 = vrot.slane %v4822, %v4828
        %v4830 = vcombine.low %v4813, %v4821
        %v4832 = vunpack.c.l.s4 1934713408
        %v4833 = vunpack.c.0.s8 %v4832
        %v4834 = vlaneseq
        %v4835 = vshrl.u32 %v4834, 7
        %v4836 = vsub.s32 %v4833, %v4835
        %v4837 = vrot.slane %v4830, %v4836
        %v4838 = vcombine.low %v4829, %v4837
        %v4839 = vcombine.low %v4077, %v4084
        %v4841 = vunpack.c.l.s4 1983009808
        %v4842 = vunpack.c.0.s8 %v4841
        %v4843 = vlaneseq
        %v4844 = vshrl.u32 %v4843, 7
        %v4845 = vsub.s32 %v4842, %v4844
        %v4846 = vrot.slane %v4839, %v4845
        %v4847 = vcombine.low %v4100, %v4101
        %v4849 = vunpack.c.l.s4 1983009808
        %v4850 = vunpack.c.0.s8 %v4849
        %v4851 = vlaneseq
        %v4852 = vshrl.u32 %v4851, 7
        %v4853 = vsub.s32 %v4850, %v4852
        %v4854 = vrot.slane %v4847, %v4853
        %v4855 = vcombine.low %v4092, %v4099
        %v4857 = vunpack.c.l.s4 1983009808
        %v4858 = vunpack.c.0.s8 %v4857
        %v4859 = vlaneseq
        %v4860 = vshrl.u32 %v4859, 7
        %v4861 = vsub.s32 %v4858, %v4860
        %v4862 = vrot.slane %v4855, %v4861
        %v4863 = vcombine.low %v4102, %v4103
        %v4865 = vunpack.c.l.s4 1983009808
        %v4866 = vunpack.c.0.s8 %v4865
        %v4867 = vlaneseq
        %v4868 = vshrl.u32 %v4867, 7
        %v4869 = vsub.s32 %v4866, %v4868
        %v4870 = vrot.slane %v4863, %v4869
        %v4871 = vcombine.low %v4846, %v4854
        %v4873 = vunpack.c.l.s4 1934713408
        %v4874 = vunpack.c.0.s8 %v4873
        %v4875 = vlaneseq
        %v4876 = vshrl.u32 %v4875, 7
        %v4877 = vsub.s32 %v4874, %v4876
        %v4878 = vrot.slane %v4871, %v4877
        %v4879 = vcombine.low %v4862, %v4870
        %v4881 = vunpack.c.l.s4 1934713408
        %v4882 = vunpack.c.0.s8 %v4881
        %v4883 = vlaneseq
        %v4884 = vshrl.u32 %v4883, 7
        %v4885 = vsub.s32 %v4882, %v4884
        %v4886 = vrot.slane %v4879, %v4885
        %v4887 = vcombine.low %v4878, %v4886
        %v4888 = vcombine.low %v4126, %v4133
        %v4890 = vunpack.c.l.s4 1983009808
        %v4891 = vunpack.c.0.s8 %v4890
        %v4892 = vlaneseq
        %v4893 = vshrl.u32 %v4892, 7
        %v4894 = vsub.s32 %v4891, %v4893
        %v4895 = vrot.slane %v4888, %v4894
        %v4896 = vcombine.low %v4149, %v4150
        %v4898 = vunpack.c.l.s4 1983009808
        %v4899 = vunpack.c.0.s8 %v4898
        %v4900 = vlaneseq
        %v4901 = vshrl.u32 %v4900, 7
        %v4902 = vsub.s32 %v4899, %v4901
        %v4903 = vrot.slane %v4896, %v4902
        %v4904 = vcombine.low %v4141, %v4148
        %v4906 = vunpack.c.l.s4 1983009808
        %v4907 = vunpack.c.0.s8 %v4906
        %v4908 = vlaneseq
        %v4909 = vshrl.u32 %v4908, 7
        %v4910 = vsub.s32 %v4907, %v4909
        %v4911 = vrot.slane %v4904, %v4910
        %v4912 = vcombine.low %v4151, %v4152
        %v4914 = vunpack.c.l.s4 1983009808
        %v4915 = vunpack.c.0.s8 %v4914
        %v4916 = vlaneseq
        %v4917 = vshrl.u32 %v4916, 7
        %v4918 = vsub.s32 %v4915, %v4917
        %v4919 = vrot.slane %v4912, %v4918
        %v4920 = vcombine.low %v4895, %v4903
        %v4922 = vunpack.c.l.s4 1934713408
        %v4923 = vunpack.c.0.s8 %v4922
        %v4924 = vlaneseq
        %v4925 = vshrl.u32 %v4924, 7
        %v4926 = vsub.s32 %v4923, %v4925
        %v4927 = vrot.slane %v4920, %v4926
        %v4928 = vcombine.low %v4911, %v4919
        %v4930 = vunpack.c.l.s4 1934713408
        %v4931 = vunpack.c.0.s8 %v4930
        %v4932 = vlaneseq
        %v4933 = vshrl.u32 %v4932, 7
        %v4934 = vsub.s32 %v4931, %v4933
        %v4935 = vrot.slane %v4928, %v4934
        %v4936 = vcombine.low %v4927, %v4935
        %v4937 = vcombine.low %v4175, %v4182
        %v4939 = vunpack.c.l.s4 1983009808
        %v4940 = vunpack.c.0.s8 %v4939
        %v4941 = vlaneseq
        %v4942 = vshrl.u32 %v4941, 7
        %v4943 = vsub.s32 %v4940, %v4942
        %v4944 = vrot.slane %v4937, %v4943
        %v4945 = vcombine.low %v4198, %v4199
        %v4947 = vunpack.c.l.s4 1983009808
        %v4948 = vunpack.c.0.s8 %v4947
        %v4949 = vlaneseq
        %v4950 = vshrl.u32 %v4949, 7
        %v4951 = vsub.s32 %v4948, %v4950
        %v4952 = vrot.slane %v4945, %v4951
        %v4953 = vcombine.low %v4190, %v4197
        %v4955 = vunpack.c.l.s4 1983009808
        %v4956 = vunpack.c.0.s8 %v4955
        %v4957 = vlaneseq
        %v4958 = vshrl.u32 %v4957, 7
        %v4959 = vsub.s32 %v4956, %v4958
        %v4960 = vrot.slane %v4953, %v4959
        %v4961 = vcombine.low %v4200, %v4201
        %v4963 = vunpack.c.l.s4 1983009808
        %v4964 = vunpack.c.0.s8 %v4963
        %v4965 = vlaneseq
        %v4966 = vshrl.u32 %v4965, 7
        %v4967 = vsub.s32 %v4964, %v4966
        %v4968 = vrot.slane %v4961, %v4967
        %v4969 = vcombine.low %v4944, %v4952
        %v4971 = vunpack.c.l.s4 1934713408
        %v4972 = vunpack.c.0.s8 %v4971
        %v4973 = vlaneseq
        %v4974 = vshrl.u32 %v4973, 7
        %v4975 = vsub.s32 %v4972, %v4974
        %v4976 = vrot.slane %v4969, %v4975
        %v4977 = vcombine.low %v4960, %v4968
        %v4979 = vunpack.c.l.s4 1934713408
        %v4980 = vunpack.c.0.s8 %v4979
        %v4981 = vlaneseq
        %v4982 = vshrl.u32 %v4981, 7
        %v4983 = vsub.s32 %v4980, %v4982
        %v4984 = vrot.slane %v4977, %v4983
        %v4985 = vcombine.low %v4976, %v4984
        %v4988 = vpack.i.b16 %v4299, %v4250
        %v4989 = vshrl.u32 %v4250, 16
        %v4990 = vshrl.u32 %v4299, 16
        %v4991 = vpack.i.b16 %v4990, %v4989
        %v4994 = vpack.i.b16 %v4397, %v4348
        %v4995 = vshrl.u32 %v4348, 16
        %v4996 = vshrl.u32 %v4397, 16
        %v4997 = vpack.i.b16 %v4996, %v4995
        %v5000 = vpack.i.b16 %v4495, %v4446
        %v5001 = vshrl.u32 %v4446, 16
        %v5002 = vshrl.u32 %v4495, 16
        %v5003 = vpack.i.b16 %v5002, %v5001
        %v5006 = vpack.i.b16 %v4593, %v4544
        %v5007 = vshrl.u32 %v4544, 16
        %v5008 = vshrl.u32 %v4593, 16
        %v5009 = vpack.i.b16 %v5008, %v5007
        %v5012 = vpack.i.b16 %v4691, %v4642
        %v5013 = vshrl.u32 %v4642, 16
        %v5014 = vshrl.u32 %v4691, 16
        %v5015 = vpack.i.b16 %v5014, %v5013
        %v5018 = vpack.i.b16 %v4789, %v4740
        %v5019 = vshrl.u32 %v4740, 16
        %v5020 = vshrl.u32 %v4789, 16
        %v5021 = vpack.i.b16 %v5020, %v5019
        %v5024 = vpack.i.b16 %v4887, %v4838
        %v5025 = vshrl.u32 %v4838, 16
        %v5026 = vshrl.u32 %v4887, 16
        %v5027 = vpack.i.b16 %v5026, %v5025
        %v5030 = vpack.i.b16 %v4985, %v4936
        %v5031 = vshrl.u32 %v4936, 16
        %v5032 = vshrl.u32 %v4985, 16
        %v5033 = vpack.i.b16 %v5032, %v5031
        %v5034 = vpack.c.bf16 %v1529, %v1526
        %v5035 = vpack.c.bf16 %v1537, %v1534
        %v5036 = vpack.c.bf16 %v1545, %v1542
        %v5037 = vpack.c.bf16 %v1553, %v1550
        %v5038 = vpack.c.bf16 %v1561, %v1558
        %v5039 = vpack.c.bf16 %v1569, %v1566
        %v5040 = vpack.c.bf16 %v1577, %v1574
        %v5041 = vpack.c.bf16 %v1585, %v1582
        %5050 = vrot.lane.b32.xlu0 %v5034, 64
        %v5051 = vpop.permute.xlu0 %5050
        %5052 = vrot.lane.b32.xlu0 %v5035, 64
        %v5053 = vpop.permute.xlu0 %5052
        %5054 = vrot.lane.b32.xlu0 %v5036, 64
        %v5055 = vpop.permute.xlu0 %5054
        %5056 = vrot.lane.b32.xlu0 %v5037, 64
        %v5057 = vpop.permute.xlu0 %5056
        %5058 = vrot.lane.b32.xlu0 %v5038, 64
        %v5059 = vpop.permute.xlu0 %5058
        %5060 = vrot.lane.b32.xlu0 %v5039, 64
        %v5061 = vpop.permute.xlu0 %5060
        %5062 = vrot.lane.b32.xlu0 %v5040, 64
        %v5063 = vpop.permute.xlu0 %5062
        %5064 = vrot.lane.b32.xlu0 %v5041, 64
        %v5065 = vpop.permute.xlu0 %5064
        %v5068 = vpack.i.b16 %v5051, %v5034
        %v5070 = vshrl.u32 %v5034, 16
        %v5071 = vshrl.u32 %v5051, 16
        %v5072 = vpack.i.b16 %v5071, %v5070
        %v5076 = vpack.i.b16 %v5053, %v5035
        %v5078 = vshrl.u32 %v5035, 16
        %v5079 = vshrl.u32 %v5053, 16
        %v5080 = vpack.i.b16 %v5079, %v5078
        %v5084 = vpack.i.b16 %v5055, %v5036
        %v5086 = vshrl.u32 %v5036, 16
        %v5087 = vshrl.u32 %v5055, 16
        %v5088 = vpack.i.b16 %v5087, %v5086
        %v5092 = vpack.i.b16 %v5057, %v5037
        %v5094 = vshrl.u32 %v5037, 16
        %v5095 = vshrl.u32 %v5057, 16
        %v5096 = vpack.i.b16 %v5095, %v5094
        %v5100 = vpack.i.b16 %v5059, %v5038
        %v5102 = vshrl.u32 %v5038, 16
        %v5103 = vshrl.u32 %v5059, 16
        %v5104 = vpack.i.b16 %v5103, %v5102
        %v5108 = vpack.i.b16 %v5061, %v5039
        %v5110 = vshrl.u32 %v5039, 16
        %v5111 = vshrl.u32 %v5061, 16
        %v5112 = vpack.i.b16 %v5111, %v5110
        %v5116 = vpack.i.b16 %v5063, %v5040
        %v5118 = vshrl.u32 %v5040, 16
        %v5119 = vshrl.u32 %v5063, 16
        %v5120 = vpack.i.b16 %v5119, %v5118
        %v5124 = vpack.i.b16 %v5065, %v5041
        %v5126 = vshrl.u32 %v5041, 16
        %v5127 = vshrl.u32 %v5065, 16
        %v5128 = vpack.i.b16 %v5127, %v5126
        %v5130 = vcombine.high %v5068, %v1645
        %v5132 = vunpack.c.l.s4 1983009808
        %v5133 = vunpack.c.0.s8 %v5132
        %v5134 = vlaneseq
        %v5135 = vshrl.u32 %v5134, 7
        %v5136 = vsub.s32 %v5133, %v5135
        %v5137 = vrot.slane %v5068, %v5136
        %v5139 = vunpack.c.l.s4 1983009808
        %v5140 = vunpack.c.0.s8 %v5139
        %v5141 = vlaneseq
        %v5142 = vshrl.u32 %v5141, 7
        %v5143 = vsub.s32 %v5140, %v5142
        %v5144 = vrot.slane %v5130, %v5143
        %v5145 = vcombine.high %v5137, 0
        %v5147 = vunpack.c.l.s4 1934713408
        %v5148 = vunpack.c.0.s8 %v5147
        %v5149 = vlaneseq
        %v5150 = vshrl.u32 %v5149, 7
        %v5151 = vsub.s32 %v5148, %v5150
        %v5152 = vrot.slane %v5137, %v5151
        %v5154 = vunpack.c.l.s4 1934713408
        %v5155 = vunpack.c.0.s8 %v5154
        %v5156 = vlaneseq
        %v5157 = vshrl.u32 %v5156, 7
        %v5158 = vsub.s32 %v5155, %v5157
        %v5159 = vrot.slane %v5145, %v5158
        %v5160 = vcombine.high %v5144, 0
        %v5162 = vunpack.c.l.s4 1934713408
        %v5163 = vunpack.c.0.s8 %v5162
        %v5164 = vlaneseq
        %v5165 = vshrl.u32 %v5164, 7
        %v5166 = vsub.s32 %v5163, %v5165
        %v5167 = vrot.slane %v5144, %v5166
        %v5169 = vunpack.c.l.s4 1934713408
        %v5170 = vunpack.c.0.s8 %v5169
        %v5171 = vlaneseq
        %v5172 = vshrl.u32 %v5171, 7
        %v5173 = vsub.s32 %v5170, %v5172
        %v5174 = vrot.slane %v5160, %v5173
        %v5175 = vcombine.high %v5152, 0
        %v5176 = vcombine.high %v5159, 0
        %v5177 = vcombine.high %v5167, 0
        %v5178 = vcombine.high %v5174, 0
        %v5179 = vcombine.high %v5072, %v1648
        %v5181 = vunpack.c.l.s4 1983009808
        %v5182 = vunpack.c.0.s8 %v5181
        %v5183 = vlaneseq
        %v5184 = vshrl.u32 %v5183, 7
        %v5185 = vsub.s32 %v5182, %v5184
        %v5186 = vrot.slane %v5072, %v5185
        %v5188 = vunpack.c.l.s4 1983009808
        %v5189 = vunpack.c.0.s8 %v5188
        %v5190 = vlaneseq
        %v5191 = vshrl.u32 %v5190, 7
        %v5192 = vsub.s32 %v5189, %v5191
        %v5193 = vrot.slane %v5179, %v5192
        %v5194 = vcombine.high %v5186, 0
        %v5196 = vunpack.c.l.s4 1934713408
        %v5197 = vunpack.c.0.s8 %v5196
        %v5198 = vlaneseq
        %v5199 = vshrl.u32 %v5198, 7
        %v5200 = vsub.s32 %v5197, %v5199
        %v5201 = vrot.slane %v5186, %v5200
        %v5203 = vunpack.c.l.s4 1934713408
        %v5204 = vunpack.c.0.s8 %v5203
        %v5205 = vlaneseq
        %v5206 = vshrl.u32 %v5205, 7
        %v5207 = vsub.s32 %v5204, %v5206
        %v5208 = vrot.slane %v5194, %v5207
        %v5209 = vcombine.high %v5193, 0
        %v5211 = vunpack.c.l.s4 1934713408
        %v5212 = vunpack.c.0.s8 %v5211
        %v5213 = vlaneseq
        %v5214 = vshrl.u32 %v5213, 7
        %v5215 = vsub.s32 %v5212, %v5214
        %v5216 = vrot.slane %v5193, %v5215
        %v5218 = vunpack.c.l.s4 1934713408
        %v5219 = vunpack.c.0.s8 %v5218
        %v5220 = vlaneseq
        %v5221 = vshrl.u32 %v5220, 7
        %v5222 = vsub.s32 %v5219, %v5221
        %v5223 = vrot.slane %v5209, %v5222
        %v5224 = vcombine.high %v5201, 0
        %v5225 = vcombine.high %v5208, 0
        %v5226 = vcombine.high %v5216, 0
        %v5227 = vcombine.high %v5223, 0
        %v5228 = vcombine.high %v5076, %v1645
        %v5230 = vunpack.c.l.s4 1983009808
        %v5231 = vunpack.c.0.s8 %v5230
        %v5232 = vlaneseq
        %v5233 = vshrl.u32 %v5232, 7
        %v5234 = vsub.s32 %v5231, %v5233
        %v5235 = vrot.slane %v5076, %v5234
        %v5237 = vunpack.c.l.s4 1983009808
        %v5238 = vunpack.c.0.s8 %v5237
        %v5239 = vlaneseq
        %v5240 = vshrl.u32 %v5239, 7
        %v5241 = vsub.s32 %v5238, %v5240
        %v5242 = vrot.slane %v5228, %v5241
        %v5243 = vcombine.high %v5235, 0
        %v5245 = vunpack.c.l.s4 1934713408
        %v5246 = vunpack.c.0.s8 %v5245
        %v5247 = vlaneseq
        %v5248 = vshrl.u32 %v5247, 7
        %v5249 = vsub.s32 %v5246, %v5248
        %v5250 = vrot.slane %v5235, %v5249
        %v5252 = vunpack.c.l.s4 1934713408
        %v5253 = vunpack.c.0.s8 %v5252
        %v5254 = vlaneseq
        %v5255 = vshrl.u32 %v5254, 7
        %v5256 = vsub.s32 %v5253, %v5255
        %v5257 = vrot.slane %v5243, %v5256
        %v5258 = vcombine.high %v5242, 0
        %v5260 = vunpack.c.l.s4 1934713408
        %v5261 = vunpack.c.0.s8 %v5260
        %v5262 = vlaneseq
        %v5263 = vshrl.u32 %v5262, 7
        %v5264 = vsub.s32 %v5261, %v5263
        %v5265 = vrot.slane %v5242, %v5264
        %v5267 = vunpack.c.l.s4 1934713408
        %v5268 = vunpack.c.0.s8 %v5267
        %v5269 = vlaneseq
        %v5270 = vshrl.u32 %v5269, 7
        %v5271 = vsub.s32 %v5268, %v5270
        %v5272 = vrot.slane %v5258, %v5271
        %v5273 = vcombine.high %v5250, 0
        %v5274 = vcombine.high %v5257, 0
        %v5275 = vcombine.high %v5265, 0
        %v5276 = vcombine.high %v5272, 0
        %v5277 = vcombine.high %v5080, %v1648
        %v5279 = vunpack.c.l.s4 1983009808
        %v5280 = vunpack.c.0.s8 %v5279
        %v5281 = vlaneseq
        %v5282 = vshrl.u32 %v5281, 7
        %v5283 = vsub.s32 %v5280, %v5282
        %v5284 = vrot.slane %v5080, %v5283
        %v5286 = vunpack.c.l.s4 1983009808
        %v5287 = vunpack.c.0.s8 %v5286
        %v5288 = vlaneseq
        %v5289 = vshrl.u32 %v5288, 7
        %v5290 = vsub.s32 %v5287, %v5289
        %v5291 = vrot.slane %v5277, %v5290
        %v5292 = vcombine.high %v5284, 0
        %v5294 = vunpack.c.l.s4 1934713408
        %v5295 = vunpack.c.0.s8 %v5294
        %v5296 = vlaneseq
        %v5297 = vshrl.u32 %v5296, 7
        %v5298 = vsub.s32 %v5295, %v5297
        %v5299 = vrot.slane %v5284, %v5298
        %v5301 = vunpack.c.l.s4 1934713408
        %v5302 = vunpack.c.0.s8 %v5301
        %v5303 = vlaneseq
        %v5304 = vshrl.u32 %v5303, 7
        %v5305 = vsub.s32 %v5302, %v5304
        %v5306 = vrot.slane %v5292, %v5305
        %v5307 = vcombine.high %v5291, 0
        %v5309 = vunpack.c.l.s4 1934713408
        %v5310 = vunpack.c.0.s8 %v5309
        %v5311 = vlaneseq
        %v5312 = vshrl.u32 %v5311, 7
        %v5313 = vsub.s32 %v5310, %v5312
        %v5314 = vrot.slane %v5291, %v5313
        %v5316 = vunpack.c.l.s4 1934713408
        %v5317 = vunpack.c.0.s8 %v5316
        %v5318 = vlaneseq
        %v5319 = vshrl.u32 %v5318, 7
        %v5320 = vsub.s32 %v5317, %v5319
        %v5321 = vrot.slane %v5307, %v5320
        %v5322 = vcombine.high %v5299, 0
        %v5323 = vcombine.high %v5306, 0
        %v5324 = vcombine.high %v5314, 0
        %v5325 = vcombine.high %v5321, 0
        %v5326 = vcombine.high %v5084, %v1645
        %v5328 = vunpack.c.l.s4 1983009808
        %v5329 = vunpack.c.0.s8 %v5328
        %v5330 = vlaneseq
        %v5331 = vshrl.u32 %v5330, 7
        %v5332 = vsub.s32 %v5329, %v5331
        %v5333 = vrot.slane %v5084, %v5332
        %v5335 = vunpack.c.l.s4 1983009808
        %v5336 = vunpack.c.0.s8 %v5335
        %v5337 = vlaneseq
        %v5338 = vshrl.u32 %v5337, 7
        %v5339 = vsub.s32 %v5336, %v5338
        %v5340 = vrot.slane %v5326, %v5339
        %v5341 = vcombine.high %v5333, 0
        %v5343 = vunpack.c.l.s4 1934713408
        %v5344 = vunpack.c.0.s8 %v5343
        %v5345 = vlaneseq
        %v5346 = vshrl.u32 %v5345, 7
        %v5347 = vsub.s32 %v5344, %v5346
        %v5348 = vrot.slane %v5333, %v5347
        %v5350 = vunpack.c.l.s4 1934713408
        %v5351 = vunpack.c.0.s8 %v5350
        %v5352 = vlaneseq
        %v5353 = vshrl.u32 %v5352, 7
        %v5354 = vsub.s32 %v5351, %v5353
        %v5355 = vrot.slane %v5341, %v5354
        %v5356 = vcombine.high %v5340, 0
        %v5358 = vunpack.c.l.s4 1934713408
        %v5359 = vunpack.c.0.s8 %v5358
        %v5360 = vlaneseq
        %v5361 = vshrl.u32 %v5360, 7
        %v5362 = vsub.s32 %v5359, %v5361
        %v5363 = vrot.slane %v5340, %v5362
        %v5365 = vunpack.c.l.s4 1934713408
        %v5366 = vunpack.c.0.s8 %v5365
        %v5367 = vlaneseq
        %v5368 = vshrl.u32 %v5367, 7
        %v5369 = vsub.s32 %v5366, %v5368
        %v5370 = vrot.slane %v5356, %v5369
        %v5371 = vcombine.high %v5348, 0
        %v5372 = vcombine.high %v5355, 0
        %v5373 = vcombine.high %v5363, 0
        %v5374 = vcombine.high %v5370, 0
        %v5375 = vcombine.high %v5088, %v1648
        %v5377 = vunpack.c.l.s4 1983009808
        %v5378 = vunpack.c.0.s8 %v5377
        %v5379 = vlaneseq
        %v5380 = vshrl.u32 %v5379, 7
        %v5381 = vsub.s32 %v5378, %v5380
        %v5382 = vrot.slane %v5088, %v5381
        %v5384 = vunpack.c.l.s4 1983009808
        %v5385 = vunpack.c.0.s8 %v5384
        %v5386 = vlaneseq
        %v5387 = vshrl.u32 %v5386, 7
        %v5388 = vsub.s32 %v5385, %v5387
        %v5389 = vrot.slane %v5375, %v5388
        %v5390 = vcombine.high %v5382, 0
        %v5392 = vunpack.c.l.s4 1934713408
        %v5393 = vunpack.c.0.s8 %v5392
        %v5394 = vlaneseq
        %v5395 = vshrl.u32 %v5394, 7
        %v5396 = vsub.s32 %v5393, %v5395
        %v5397 = vrot.slane %v5382, %v5396
        %v5399 = vunpack.c.l.s4 1934713408
        %v5400 = vunpack.c.0.s8 %v5399
        %v5401 = vlaneseq
        %v5402 = vshrl.u32 %v5401, 7
        %v5403 = vsub.s32 %v5400, %v5402
        %v5404 = vrot.slane %v5390, %v5403
        %v5405 = vcombine.high %v5389, 0
        %v5407 = vunpack.c.l.s4 1934713408
        %v5408 = vunpack.c.0.s8 %v5407
        %v5409 = vlaneseq
        %v5410 = vshrl.u32 %v5409, 7
        %v5411 = vsub.s32 %v5408, %v5410
        %v5412 = vrot.slane %v5389, %v5411
        %v5414 = vunpack.c.l.s4 1934713408
        %v5415 = vunpack.c.0.s8 %v5414
        %v5416 = vlaneseq
        %v5417 = vshrl.u32 %v5416, 7
        %v5418 = vsub.s32 %v5415, %v5417
        %v5419 = vrot.slane %v5405, %v5418
        %v5420 = vcombine.high %v5397, 0
        %v5421 = vcombine.high %v5404, 0
        %v5422 = vcombine.high %v5412, 0
        %v5423 = vcombine.high %v5419, 0
        %v5424 = vcombine.high %v5092, %v1645
        %v5426 = vunpack.c.l.s4 1983009808
        %v5427 = vunpack.c.0.s8 %v5426
        %v5428 = vlaneseq
        %v5429 = vshrl.u32 %v5428, 7
        %v5430 = vsub.s32 %v5427, %v5429
        %v5431 = vrot.slane %v5092, %v5430
        %v5433 = vunpack.c.l.s4 1983009808
        %v5434 = vunpack.c.0.s8 %v5433
        %v5435 = vlaneseq
        %v5436 = vshrl.u32 %v5435, 7
        %v5437 = vsub.s32 %v5434, %v5436
        %v5438 = vrot.slane %v5424, %v5437
        %v5439 = vcombine.high %v5431, 0
        %v5441 = vunpack.c.l.s4 1934713408
        %v5442 = vunpack.c.0.s8 %v5441
        %v5443 = vlaneseq
        %v5444 = vshrl.u32 %v5443, 7
        %v5445 = vsub.s32 %v5442, %v5444
        %v5446 = vrot.slane %v5431, %v5445
        %v5448 = vunpack.c.l.s4 1934713408
        %v5449 = vunpack.c.0.s8 %v5448
        %v5450 = vlaneseq
        %v5451 = vshrl.u32 %v5450, 7
        %v5452 = vsub.s32 %v5449, %v5451
        %v5453 = vrot.slane %v5439, %v5452
        %v5454 = vcombine.high %v5438, 0
        %v5456 = vunpack.c.l.s4 1934713408
        %v5457 = vunpack.c.0.s8 %v5456
        %v5458 = vlaneseq
        %v5459 = vshrl.u32 %v5458, 7
        %v5460 = vsub.s32 %v5457, %v5459
        %v5461 = vrot.slane %v5438, %v5460
        %v5463 = vunpack.c.l.s4 1934713408
        %v5464 = vunpack.c.0.s8 %v5463
        %v5465 = vlaneseq
        %v5466 = vshrl.u32 %v5465, 7
        %v5467 = vsub.s32 %v5464, %v5466
        %v5468 = vrot.slane %v5454, %v5467
        %v5469 = vcombine.high %v5446, 0
        %v5470 = vcombine.high %v5453, 0
        %v5471 = vcombine.high %v5461, 0
        %v5472 = vcombine.high %v5468, 0
        %v5473 = vcombine.high %v5096, %v1648
        %v5475 = vunpack.c.l.s4 1983009808
        %v5476 = vunpack.c.0.s8 %v5475
        %v5477 = vlaneseq
        %v5478 = vshrl.u32 %v5477, 7
        %v5479 = vsub.s32 %v5476, %v5478
        %v5480 = vrot.slane %v5096, %v5479
        %v5482 = vunpack.c.l.s4 1983009808
        %v5483 = vunpack.c.0.s8 %v5482
        %v5484 = vlaneseq
        %v5485 = vshrl.u32 %v5484, 7
        %v5486 = vsub.s32 %v5483, %v5485
        %v5487 = vrot.slane %v5473, %v5486
        %v5488 = vcombine.high %v5480, 0
        %v5490 = vunpack.c.l.s4 1934713408
        %v5491 = vunpack.c.0.s8 %v5490
        %v5492 = vlaneseq
        %v5493 = vshrl.u32 %v5492, 7
        %v5494 = vsub.s32 %v5491, %v5493
        %v5495 = vrot.slane %v5480, %v5494
        %v5497 = vunpack.c.l.s4 1934713408
        %v5498 = vunpack.c.0.s8 %v5497
        %v5499 = vlaneseq
        %v5500 = vshrl.u32 %v5499, 7
        %v5501 = vsub.s32 %v5498, %v5500
        %v5502 = vrot.slane %v5488, %v5501
        %v5503 = vcombine.high %v5487, 0
        %v5505 = vunpack.c.l.s4 1934713408
        %v5506 = vunpack.c.0.s8 %v5505
        %v5507 = vlaneseq
        %v5508 = vshrl.u32 %v5507, 7
        %v5509 = vsub.s32 %v5506, %v5508
        %v5510 = vrot.slane %v5487, %v5509
        %v5512 = vunpack.c.l.s4 1934713408
        %v5513 = vunpack.c.0.s8 %v5512
        %v5514 = vlaneseq
        %v5515 = vshrl.u32 %v5514, 7
        %v5516 = vsub.s32 %v5513, %v5515
        %v5517 = vrot.slane %v5503, %v5516
        %v5518 = vcombine.high %v5495, 0
        %v5519 = vcombine.high %v5502, 0
        %v5520 = vcombine.high %v5510, 0
        %v5521 = vcombine.high %v5517, 0
        %v5522 = vcombine.high %v5100, %v1645
        %v5524 = vunpack.c.l.s4 1983009808
        %v5525 = vunpack.c.0.s8 %v5524
        %v5526 = vlaneseq
        %v5527 = vshrl.u32 %v5526, 7
        %v5528 = vsub.s32 %v5525, %v5527
        %v5529 = vrot.slane %v5100, %v5528
        %v5531 = vunpack.c.l.s4 1983009808
        %v5532 = vunpack.c.0.s8 %v5531
        %v5533 = vlaneseq
        %v5534 = vshrl.u32 %v5533, 7
        %v5535 = vsub.s32 %v5532, %v5534
        %v5536 = vrot.slane %v5522, %v5535
        %v5537 = vcombine.high %v5529, 0
        %v5539 = vunpack.c.l.s4 1934713408
        %v5540 = vunpack.c.0.s8 %v5539
        %v5541 = vlaneseq
        %v5542 = vshrl.u32 %v5541, 7
        %v5543 = vsub.s32 %v5540, %v5542
        %v5544 = vrot.slane %v5529, %v5543
        %v5546 = vunpack.c.l.s4 1934713408
        %v5547 = vunpack.c.0.s8 %v5546
        %v5548 = vlaneseq
        %v5549 = vshrl.u32 %v5548, 7
        %v5550 = vsub.s32 %v5547, %v5549
        %v5551 = vrot.slane %v5537, %v5550
        %v5552 = vcombine.high %v5536, 0
        %v5554 = vunpack.c.l.s4 1934713408
        %v5555 = vunpack.c.0.s8 %v5554
        %v5556 = vlaneseq
        %v5557 = vshrl.u32 %v5556, 7
        %v5558 = vsub.s32 %v5555, %v5557
        %v5559 = vrot.slane %v5536, %v5558
        %v5561 = vunpack.c.l.s4 1934713408
        %v5562 = vunpack.c.0.s8 %v5561
        %v5563 = vlaneseq
        %v5564 = vshrl.u32 %v5563, 7
        %v5565 = vsub.s32 %v5562, %v5564
        %v5566 = vrot.slane %v5552, %v5565
        %v5567 = vcombine.high %v5544, 0
        %v5568 = vcombine.high %v5551, 0
        %v5569 = vcombine.high %v5559, 0
        %v5570 = vcombine.high %v5566, 0
        %v5571 = vcombine.high %v5104, %v1648
        %v5573 = vunpack.c.l.s4 1983009808
        %v5574 = vunpack.c.0.s8 %v5573
        %v5575 = vlaneseq
        %v5576 = vshrl.u32 %v5575, 7
        %v5577 = vsub.s32 %v5574, %v5576
        %v5578 = vrot.slane %v5104, %v5577
        %v5580 = vunpack.c.l.s4 1983009808
        %v5581 = vunpack.c.0.s8 %v5580
        %v5582 = vlaneseq
        %v5583 = vshrl.u32 %v5582, 7
        %v5584 = vsub.s32 %v5581, %v5583
        %v5585 = vrot.slane %v5571, %v5584
        %v5586 = vcombine.high %v5578, 0
        %v5588 = vunpack.c.l.s4 1934713408
        %v5589 = vunpack.c.0.s8 %v5588
        %v5590 = vlaneseq
        %v5591 = vshrl.u32 %v5590, 7
        %v5592 = vsub.s32 %v5589, %v5591
        %v5593 = vrot.slane %v5578, %v5592
        %v5595 = vunpack.c.l.s4 1934713408
        %v5596 = vunpack.c.0.s8 %v5595
        %v5597 = vlaneseq
        %v5598 = vshrl.u32 %v5597, 7
        %v5599 = vsub.s32 %v5596, %v5598
        %v5600 = vrot.slane %v5586, %v5599
        %v5601 = vcombine.high %v5585, 0
        %v5603 = vunpack.c.l.s4 1934713408
        %v5604 = vunpack.c.0.s8 %v5603
        %v5605 = vlaneseq
        %v5606 = vshrl.u32 %v5605, 7
        %v5607 = vsub.s32 %v5604, %v5606
        %v5608 = vrot.slane %v5585, %v5607
        %v5610 = vunpack.c.l.s4 1934713408
        %v5611 = vunpack.c.0.s8 %v5610
        %v5612 = vlaneseq
        %v5613 = vshrl.u32 %v5612, 7
        %v5614 = vsub.s32 %v5611, %v5613
        %v5615 = vrot.slane %v5601, %v5614
        %v5616 = vcombine.high %v5593, 0
        %v5617 = vcombine.high %v5600, 0
        %v5618 = vcombine.high %v5608, 0
        %v5619 = vcombine.high %v5615, 0
        %v5620 = vcombine.high %v5108, %v1645
        %v5622 = vunpack.c.l.s4 1983009808
        %v5623 = vunpack.c.0.s8 %v5622
        %v5624 = vlaneseq
        %v5625 = vshrl.u32 %v5624, 7
        %v5626 = vsub.s32 %v5623, %v5625
        %v5627 = vrot.slane %v5108, %v5626
        %v5629 = vunpack.c.l.s4 1983009808
        %v5630 = vunpack.c.0.s8 %v5629
        %v5631 = vlaneseq
        %v5632 = vshrl.u32 %v5631, 7
        %v5633 = vsub.s32 %v5630, %v5632
        %v5634 = vrot.slane %v5620, %v5633
        %v5635 = vcombine.high %v5627, 0
        %v5637 = vunpack.c.l.s4 1934713408
        %v5638 = vunpack.c.0.s8 %v5637
        %v5639 = vlaneseq
        %v5640 = vshrl.u32 %v5639, 7
        %v5641 = vsub.s32 %v5638, %v5640
        %v5642 = vrot.slane %v5627, %v5641
        %v5644 = vunpack.c.l.s4 1934713408
        %v5645 = vunpack.c.0.s8 %v5644
        %v5646 = vlaneseq
        %v5647 = vshrl.u32 %v5646, 7
        %v5648 = vsub.s32 %v5645, %v5647
        %v5649 = vrot.slane %v5635, %v5648
        %v5650 = vcombine.high %v5634, 0
        %v5652 = vunpack.c.l.s4 1934713408
        %v5653 = vunpack.c.0.s8 %v5652
        %v5654 = vlaneseq
        %v5655 = vshrl.u32 %v5654, 7
        %v5656 = vsub.s32 %v5653, %v5655
        %v5657 = vrot.slane %v5634, %v5656
        %v5659 = vunpack.c.l.s4 1934713408
        %v5660 = vunpack.c.0.s8 %v5659
        %v5661 = vlaneseq
        %v5662 = vshrl.u32 %v5661, 7
        %v5663 = vsub.s32 %v5660, %v5662
        %v5664 = vrot.slane %v5650, %v5663
        %v5665 = vcombine.high %v5642, 0
        %v5666 = vcombine.high %v5649, 0
        %v5667 = vcombine.high %v5657, 0
        %v5668 = vcombine.high %v5664, 0
        %v5669 = vcombine.high %v5112, %v1648
        %v5671 = vunpack.c.l.s4 1983009808
        %v5672 = vunpack.c.0.s8 %v5671
        %v5673 = vlaneseq
        %v5674 = vshrl.u32 %v5673, 7
        %v5675 = vsub.s32 %v5672, %v5674
        %v5676 = vrot.slane %v5112, %v5675
        %v5678 = vunpack.c.l.s4 1983009808
        %v5679 = vunpack.c.0.s8 %v5678
        %v5680 = vlaneseq
        %v5681 = vshrl.u32 %v5680, 7
        %v5682 = vsub.s32 %v5679, %v5681
        %v5683 = vrot.slane %v5669, %v5682
        %v5684 = vcombine.high %v5676, 0
        %v5686 = vunpack.c.l.s4 1934713408
        %v5687 = vunpack.c.0.s8 %v5686
        %v5688 = vlaneseq
        %v5689 = vshrl.u32 %v5688, 7
        %v5690 = vsub.s32 %v5687, %v5689
        %v5691 = vrot.slane %v5676, %v5690
        %v5693 = vunpack.c.l.s4 1934713408
        %v5694 = vunpack.c.0.s8 %v5693
        %v5695 = vlaneseq
        %v5696 = vshrl.u32 %v5695, 7
        %v5697 = vsub.s32 %v5694, %v5696
        %v5698 = vrot.slane %v5684, %v5697
        %v5699 = vcombine.high %v5683, 0
        %v5701 = vunpack.c.l.s4 1934713408
        %v5702 = vunpack.c.0.s8 %v5701
        %v5703 = vlaneseq
        %v5704 = vshrl.u32 %v5703, 7
        %v5705 = vsub.s32 %v5702, %v5704
        %v5706 = vrot.slane %v5683, %v5705
        %v5708 = vunpack.c.l.s4 1934713408
        %v5709 = vunpack.c.0.s8 %v5708
        %v5710 = vlaneseq
        %v5711 = vshrl.u32 %v5710, 7
        %v5712 = vsub.s32 %v5709, %v5711
        %v5713 = vrot.slane %v5699, %v5712
        %v5714 = vcombine.high %v5691, 0
        %v5715 = vcombine.high %v5698, 0
        %v5716 = vcombine.high %v5706, 0
        %v5717 = vcombine.high %v5713, 0
        %v5718 = vcombine.high %v5116, %v1645
        %v5720 = vunpack.c.l.s4 1983009808
        %v5721 = vunpack.c.0.s8 %v5720
        %v5722 = vlaneseq
        %v5723 = vshrl.u32 %v5722, 7
        %v5724 = vsub.s32 %v5721, %v5723
        %v5725 = vrot.slane %v5116, %v5724
        %v5727 = vunpack.c.l.s4 1983009808
        %v5728 = vunpack.c.0.s8 %v5727
        %v5729 = vlaneseq
        %v5730 = vshrl.u32 %v5729, 7
        %v5731 = vsub.s32 %v5728, %v5730
        %v5732 = vrot.slane %v5718, %v5731
        %v5733 = vcombine.high %v5725, 0
        %v5735 = vunpack.c.l.s4 1934713408
        %v5736 = vunpack.c.0.s8 %v5735
        %v5737 = vlaneseq
        %v5738 = vshrl.u32 %v5737, 7
        %v5739 = vsub.s32 %v5736, %v5738
        %v5740 = vrot.slane %v5725, %v5739
        %v5742 = vunpack.c.l.s4 1934713408
        %v5743 = vunpack.c.0.s8 %v5742
        %v5744 = vlaneseq
        %v5745 = vshrl.u32 %v5744, 7
        %v5746 = vsub.s32 %v5743, %v5745
        %v5747 = vrot.slane %v5733, %v5746
        %v5748 = vcombine.high %v5732, 0
        %v5750 = vunpack.c.l.s4 1934713408
        %v5751 = vunpack.c.0.s8 %v5750
        %v5752 = vlaneseq
        %v5753 = vshrl.u32 %v5752, 7
        %v5754 = vsub.s32 %v5751, %v5753
        %v5755 = vrot.slane %v5732, %v5754
        %v5757 = vunpack.c.l.s4 1934713408
        %v5758 = vunpack.c.0.s8 %v5757
        %v5759 = vlaneseq
        %v5760 = vshrl.u32 %v5759, 7
        %v5761 = vsub.s32 %v5758, %v5760
        %v5762 = vrot.slane %v5748, %v5761
        %v5763 = vcombine.high %v5740, 0
        %v5764 = vcombine.high %v5747, 0
        %v5765 = vcombine.high %v5755, 0
        %v5766 = vcombine.high %v5762, 0
        %v5767 = vcombine.high %v5120, %v1648
        %v5769 = vunpack.c.l.s4 1983009808
        %v5770 = vunpack.c.0.s8 %v5769
        %v5771 = vlaneseq
        %v5772 = vshrl.u32 %v5771, 7
        %v5773 = vsub.s32 %v5770, %v5772
        %v5774 = vrot.slane %v5120, %v5773
        %v5776 = vunpack.c.l.s4 1983009808
        %v5777 = vunpack.c.0.s8 %v5776
        %v5778 = vlaneseq
        %v5779 = vshrl.u32 %v5778, 7
        %v5780 = vsub.s32 %v5777, %v5779
        %v5781 = vrot.slane %v5767, %v5780
        %v5782 = vcombine.high %v5774, 0
        %v5784 = vunpack.c.l.s4 1934713408
        %v5785 = vunpack.c.0.s8 %v5784
        %v5786 = vlaneseq
        %v5787 = vshrl.u32 %v5786, 7
        %v5788 = vsub.s32 %v5785, %v5787
        %v5789 = vrot.slane %v5774, %v5788
        %v5791 = vunpack.c.l.s4 1934713408
        %v5792 = vunpack.c.0.s8 %v5791
        %v5793 = vlaneseq
        %v5794 = vshrl.u32 %v5793, 7
        %v5795 = vsub.s32 %v5792, %v5794
        %v5796 = vrot.slane %v5782, %v5795
        %v5797 = vcombine.high %v5781, 0
        %v5799 = vunpack.c.l.s4 1934713408
        %v5800 = vunpack.c.0.s8 %v5799
        %v5801 = vlaneseq
        %v5802 = vshrl.u32 %v5801, 7
        %v5803 = vsub.s32 %v5800, %v5802
        %v5804 = vrot.slane %v5781, %v5803
        %v5806 = vunpack.c.l.s4 1934713408
        %v5807 = vunpack.c.0.s8 %v5806
        %v5808 = vlaneseq
        %v5809 = vshrl.u32 %v5808, 7
        %v5810 = vsub.s32 %v5807, %v5809
        %v5811 = vrot.slane %v5797, %v5810
        %v5812 = vcombine.high %v5789, 0
        %v5813 = vcombine.high %v5796, 0
        %v5814 = vcombine.high %v5804, 0
        %v5815 = vcombine.high %v5811, 0
        %v5816 = vcombine.high %v5124, %v1645
        %v5818 = vunpack.c.l.s4 1983009808
        %v5819 = vunpack.c.0.s8 %v5818
        %v5820 = vlaneseq
        %v5821 = vshrl.u32 %v5820, 7
        %v5822 = vsub.s32 %v5819, %v5821
        %v5823 = vrot.slane %v5124, %v5822
        %v5825 = vunpack.c.l.s4 1983009808
        %v5826 = vunpack.c.0.s8 %v5825
        %v5827 = vlaneseq
        %v5828 = vshrl.u32 %v5827, 7
        %v5829 = vsub.s32 %v5826, %v5828
        %v5830 = vrot.slane %v5816, %v5829
        %v5831 = vcombine.high %v5823, 0
        %v5833 = vunpack.c.l.s4 1934713408
        %v5834 = vunpack.c.0.s8 %v5833
        %v5835 = vlaneseq
        %v5836 = vshrl.u32 %v5835, 7
        %v5837 = vsub.s32 %v5834, %v5836
        %v5838 = vrot.slane %v5823, %v5837
        %v5840 = vunpack.c.l.s4 1934713408
        %v5841 = vunpack.c.0.s8 %v5840
        %v5842 = vlaneseq
        %v5843 = vshrl.u32 %v5842, 7
        %v5844 = vsub.s32 %v5841, %v5843
        %v5845 = vrot.slane %v5831, %v5844
        %v5846 = vcombine.high %v5830, 0
        %v5848 = vunpack.c.l.s4 1934713408
        %v5849 = vunpack.c.0.s8 %v5848
        %v5850 = vlaneseq
        %v5851 = vshrl.u32 %v5850, 7
        %v5852 = vsub.s32 %v5849, %v5851
        %v5853 = vrot.slane %v5830, %v5852
        %v5855 = vunpack.c.l.s4 1934713408
        %v5856 = vunpack.c.0.s8 %v5855
        %v5857 = vlaneseq
        %v5858 = vshrl.u32 %v5857, 7
        %v5859 = vsub.s32 %v5856, %v5858
        %v5860 = vrot.slane %v5846, %v5859
        %v5861 = vcombine.high %v5838, 0
        %v5862 = vcombine.high %v5845, 0
        %v5863 = vcombine.high %v5853, 0
        %v5864 = vcombine.high %v5860, 0
        %v5865 = vcombine.high %v5128, %v1648
        %v5867 = vunpack.c.l.s4 1983009808
        %v5868 = vunpack.c.0.s8 %v5867
        %v5869 = vlaneseq
        %v5870 = vshrl.u32 %v5869, 7
        %v5871 = vsub.s32 %v5868, %v5870
        %v5872 = vrot.slane %v5128, %v5871
        %v5874 = vunpack.c.l.s4 1983009808
        %v5875 = vunpack.c.0.s8 %v5874
        %v5876 = vlaneseq
        %v5877 = vshrl.u32 %v5876, 7
        %v5878 = vsub.s32 %v5875, %v5877
        %v5879 = vrot.slane %v5865, %v5878
        %v5880 = vcombine.high %v5872, 0
        %v5882 = vunpack.c.l.s4 1934713408
        %v5883 = vunpack.c.0.s8 %v5882
        %v5884 = vlaneseq
        %v5885 = vshrl.u32 %v5884, 7
        %v5886 = vsub.s32 %v5883, %v5885
        %v5887 = vrot.slane %v5872, %v5886
        %v5889 = vunpack.c.l.s4 1934713408
        %v5890 = vunpack.c.0.s8 %v5889
        %v5891 = vlaneseq
        %v5892 = vshrl.u32 %v5891, 7
        %v5893 = vsub.s32 %v5890, %v5892
        %v5894 = vrot.slane %v5880, %v5893
        %v5895 = vcombine.high %v5879, 0
        %v5897 = vunpack.c.l.s4 1934713408
        %v5898 = vunpack.c.0.s8 %v5897
        %v5899 = vlaneseq
        %v5900 = vshrl.u32 %v5899, 7
        %v5901 = vsub.s32 %v5898, %v5900
        %v5902 = vrot.slane %v5879, %v5901
        %v5904 = vunpack.c.l.s4 1934713408
        %v5905 = vunpack.c.0.s8 %v5904
        %v5906 = vlaneseq
        %v5907 = vshrl.u32 %v5906, 7
        %v5908 = vsub.s32 %v5905, %v5907
        %v5909 = vrot.slane %v5895, %v5908
        %v5910 = vcombine.high %v5887, 0
        %v5911 = vcombine.high %v5894, 0
        %v5912 = vcombine.high %v5902, 0
        %v5913 = vcombine.high %v5909, 0
        %v5914 = vcombine.low %v5152, %v5159
        %v5916 = vunpack.c.l.s4 1983009808
        %v5917 = vunpack.c.0.s8 %v5916
        %v5918 = vlaneseq
        %v5919 = vshrl.u32 %v5918, 7
        %v5920 = vsub.s32 %v5917, %v5919
        %v5921 = vrot.slane %v5914, %v5920
        %v5922 = vcombine.low %v5175, %v5176
        %v5924 = vunpack.c.l.s4 1983009808
        %v5925 = vunpack.c.0.s8 %v5924
        %v5926 = vlaneseq
        %v5927 = vshrl.u32 %v5926, 7
        %v5928 = vsub.s32 %v5925, %v5927
        %v5929 = vrot.slane %v5922, %v5928
        %v5930 = vcombine.low %v5167, %v5174
        %v5932 = vunpack.c.l.s4 1983009808
        %v5933 = vunpack.c.0.s8 %v5932
        %v5934 = vlaneseq
        %v5935 = vshrl.u32 %v5934, 7
        %v5936 = vsub.s32 %v5933, %v5935
        %v5937 = vrot.slane %v5930, %v5936
        %v5938 = vcombine.low %v5177, %v5178
        %v5940 = vunpack.c.l.s4 1983009808
        %v5941 = vunpack.c.0.s8 %v5940
        %v5942 = vlaneseq
        %v5943 = vshrl.u32 %v5942, 7
        %v5944 = vsub.s32 %v5941, %v5943
        %v5945 = vrot.slane %v5938, %v5944
        %v5946 = vcombine.low %v5921, %v5929
        %v5948 = vunpack.c.l.s4 1934713408
        %v5949 = vunpack.c.0.s8 %v5948
        %v5950 = vlaneseq
        %v5951 = vshrl.u32 %v5950, 7
        %v5952 = vsub.s32 %v5949, %v5951
        %v5953 = vrot.slane %v5946, %v5952
        %v5954 = vcombine.low %v5937, %v5945
        %v5956 = vunpack.c.l.s4 1934713408
        %v5957 = vunpack.c.0.s8 %v5956
        %v5958 = vlaneseq
        %v5959 = vshrl.u32 %v5958, 7
        %v5960 = vsub.s32 %v5957, %v5959
        %v5961 = vrot.slane %v5954, %v5960
        %v5962 = vcombine.low %v5953, %v5961
        %v5963 = vcombine.low %v5201, %v5208
        %v5965 = vunpack.c.l.s4 1983009808
        %v5966 = vunpack.c.0.s8 %v5965
        %v5967 = vlaneseq
        %v5968 = vshrl.u32 %v5967, 7
        %v5969 = vsub.s32 %v5966, %v5968
        %v5970 = vrot.slane %v5963, %v5969
        %v5971 = vcombine.low %v5224, %v5225
        %v5973 = vunpack.c.l.s4 1983009808
        %v5974 = vunpack.c.0.s8 %v5973
        %v5975 = vlaneseq
        %v5976 = vshrl.u32 %v5975, 7
        %v5977 = vsub.s32 %v5974, %v5976
        %v5978 = vrot.slane %v5971, %v5977
        %v5979 = vcombine.low %v5216, %v5223
        %v5981 = vunpack.c.l.s4 1983009808
        %v5982 = vunpack.c.0.s8 %v5981
        %v5983 = vlaneseq
        %v5984 = vshrl.u32 %v5983, 7
        %v5985 = vsub.s32 %v5982, %v5984
        %v5986 = vrot.slane %v5979, %v5985
        %v5987 = vcombine.low %v5226, %v5227
        %v5989 = vunpack.c.l.s4 1983009808
        %v5990 = vunpack.c.0.s8 %v5989
        %v5991 = vlaneseq
        %v5992 = vshrl.u32 %v5991, 7
        %v5993 = vsub.s32 %v5990, %v5992
        %v5994 = vrot.slane %v5987, %v5993
        %v5995 = vcombine.low %v5970, %v5978
        %v5997 = vunpack.c.l.s4 1934713408
        %v5998 = vunpack.c.0.s8 %v5997
        %v5999 = vlaneseq
        %v6000 = vshrl.u32 %v5999, 7
        %v6001 = vsub.s32 %v5998, %v6000
        %v6002 = vrot.slane %v5995, %v6001
        %v6003 = vcombine.low %v5986, %v5994
        %v6005 = vunpack.c.l.s4 1934713408
        %v6006 = vunpack.c.0.s8 %v6005
        %v6007 = vlaneseq
        %v6008 = vshrl.u32 %v6007, 7
        %v6009 = vsub.s32 %v6006, %v6008
        %v6010 = vrot.slane %v6003, %v6009
        %v6011 = vcombine.low %v6002, %v6010
        %v6012 = vcombine.low %v5250, %v5257
        %v6014 = vunpack.c.l.s4 1983009808
        %v6015 = vunpack.c.0.s8 %v6014
        %v6016 = vlaneseq
        %v6017 = vshrl.u32 %v6016, 7
        %v6018 = vsub.s32 %v6015, %v6017
        %v6019 = vrot.slane %v6012, %v6018
        %v6020 = vcombine.low %v5273, %v5274
        %v6022 = vunpack.c.l.s4 1983009808
        %v6023 = vunpack.c.0.s8 %v6022
        %v6024 = vlaneseq
        %v6025 = vshrl.u32 %v6024, 7
        %v6026 = vsub.s32 %v6023, %v6025
        %v6027 = vrot.slane %v6020, %v6026
        %v6028 = vcombine.low %v5265, %v5272
        %v6030 = vunpack.c.l.s4 1983009808
        %v6031 = vunpack.c.0.s8 %v6030
        %v6032 = vlaneseq
        %v6033 = vshrl.u32 %v6032, 7
        %v6034 = vsub.s32 %v6031, %v6033
        %v6035 = vrot.slane %v6028, %v6034
        %v6036 = vcombine.low %v5275, %v5276
        %v6038 = vunpack.c.l.s4 1983009808
        %v6039 = vunpack.c.0.s8 %v6038
        %v6040 = vlaneseq
        %v6041 = vshrl.u32 %v6040, 7
        %v6042 = vsub.s32 %v6039, %v6041
        %v6043 = vrot.slane %v6036, %v6042
        %v6044 = vcombine.low %v6019, %v6027
        %v6046 = vunpack.c.l.s4 1934713408
        %v6047 = vunpack.c.0.s8 %v6046
        %v6048 = vlaneseq
        %v6049 = vshrl.u32 %v6048, 7
        %v6050 = vsub.s32 %v6047, %v6049
        %v6051 = vrot.slane %v6044, %v6050
        %v6052 = vcombine.low %v6035, %v6043
        %v6054 = vunpack.c.l.s4 1934713408
        %v6055 = vunpack.c.0.s8 %v6054
        %v6056 = vlaneseq
        %v6057 = vshrl.u32 %v6056, 7
        %v6058 = vsub.s32 %v6055, %v6057
        %v6059 = vrot.slane %v6052, %v6058
        %v6060 = vcombine.low %v6051, %v6059
        %v6061 = vcombine.low %v5299, %v5306
        %v6063 = vunpack.c.l.s4 1983009808
        %v6064 = vunpack.c.0.s8 %v6063
        %v6065 = vlaneseq
        %v6066 = vshrl.u32 %v6065, 7
        %v6067 = vsub.s32 %v6064, %v6066
        %v6068 = vrot.slane %v6061, %v6067
        %v6069 = vcombine.low %v5322, %v5323
        %v6071 = vunpack.c.l.s4 1983009808
        %v6072 = vunpack.c.0.s8 %v6071
        %v6073 = vlaneseq
        %v6074 = vshrl.u32 %v6073, 7
        %v6075 = vsub.s32 %v6072, %v6074
        %v6076 = vrot.slane %v6069, %v6075
        %v6077 = vcombine.low %v5314, %v5321
        %v6079 = vunpack.c.l.s4 1983009808
        %v6080 = vunpack.c.0.s8 %v6079
        %v6081 = vlaneseq
        %v6082 = vshrl.u32 %v6081, 7
        %v6083 = vsub.s32 %v6080, %v6082
        %v6084 = vrot.slane %v6077, %v6083
        %v6085 = vcombine.low %v5324, %v5325
        %v6087 = vunpack.c.l.s4 1983009808
        %v6088 = vunpack.c.0.s8 %v6087
        %v6089 = vlaneseq
        %v6090 = vshrl.u32 %v6089, 7
        %v6091 = vsub.s32 %v6088, %v6090
        %v6092 = vrot.slane %v6085, %v6091
        %v6093 = vcombine.low %v6068, %v6076
        %v6095 = vunpack.c.l.s4 1934713408
        %v6096 = vunpack.c.0.s8 %v6095
        %v6097 = vlaneseq
        %v6098 = vshrl.u32 %v6097, 7
        %v6099 = vsub.s32 %v6096, %v6098
        %v6100 = vrot.slane %v6093, %v6099
        %v6101 = vcombine.low %v6084, %v6092
        %v6103 = vunpack.c.l.s4 1934713408
        %v6104 = vunpack.c.0.s8 %v6103
        %v6105 = vlaneseq
        %v6106 = vshrl.u32 %v6105, 7
        %v6107 = vsub.s32 %v6104, %v6106
        %v6108 = vrot.slane %v6101, %v6107
        %v6109 = vcombine.low %v6100, %v6108
        %v6110 = vcombine.low %v5348, %v5355
        %v6112 = vunpack.c.l.s4 1983009808
        %v6113 = vunpack.c.0.s8 %v6112
        %v6114 = vlaneseq
        %v6115 = vshrl.u32 %v6114, 7
        %v6116 = vsub.s32 %v6113, %v6115
        %v6117 = vrot.slane %v6110, %v6116
        %v6118 = vcombine.low %v5371, %v5372
        %v6120 = vunpack.c.l.s4 1983009808
        %v6121 = vunpack.c.0.s8 %v6120
        %v6122 = vlaneseq
        %v6123 = vshrl.u32 %v6122, 7
        %v6124 = vsub.s32 %v6121, %v6123
        %v6125 = vrot.slane %v6118, %v6124
        %v6126 = vcombine.low %v5363, %v5370
        %v6128 = vunpack.c.l.s4 1983009808
        %v6129 = vunpack.c.0.s8 %v6128
        %v6130 = vlaneseq
        %v6131 = vshrl.u32 %v6130, 7
        %v6132 = vsub.s32 %v6129, %v6131
        %v6133 = vrot.slane %v6126, %v6132
        %v6134 = vcombine.low %v5373, %v5374
        %v6136 = vunpack.c.l.s4 1983009808
        %v6137 = vunpack.c.0.s8 %v6136
        %v6138 = vlaneseq
        %v6139 = vshrl.u32 %v6138, 7
        %v6140 = vsub.s32 %v6137, %v6139
        %v6141 = vrot.slane %v6134, %v6140
        %v6142 = vcombine.low %v6117, %v6125
        %v6144 = vunpack.c.l.s4 1934713408
        %v6145 = vunpack.c.0.s8 %v6144
        %v6146 = vlaneseq
        %v6147 = vshrl.u32 %v6146, 7
        %v6148 = vsub.s32 %v6145, %v6147
        %v6149 = vrot.slane %v6142, %v6148
        %v6150 = vcombine.low %v6133, %v6141
        %v6152 = vunpack.c.l.s4 1934713408
        %v6153 = vunpack.c.0.s8 %v6152
        %v6154 = vlaneseq
        %v6155 = vshrl.u32 %v6154, 7
        %v6156 = vsub.s32 %v6153, %v6155
        %v6157 = vrot.slane %v6150, %v6156
        %v6158 = vcombine.low %v6149, %v6157
        %v6159 = vcombine.low %v5397, %v5404
        %v6161 = vunpack.c.l.s4 1983009808
        %v6162 = vunpack.c.0.s8 %v6161
        %v6163 = vlaneseq
        %v6164 = vshrl.u32 %v6163, 7
        %v6165 = vsub.s32 %v6162, %v6164
        %v6166 = vrot.slane %v6159, %v6165
        %v6167 = vcombine.low %v5420, %v5421
        %v6169 = vunpack.c.l.s4 1983009808
        %v6170 = vunpack.c.0.s8 %v6169
        %v6171 = vlaneseq
        %v6172 = vshrl.u32 %v6171, 7
        %v6173 = vsub.s32 %v6170, %v6172
        %v6174 = vrot.slane %v6167, %v6173
        %v6175 = vcombine.low %v5412, %v5419
        %v6177 = vunpack.c.l.s4 1983009808
        %v6178 = vunpack.c.0.s8 %v6177
        %v6179 = vlaneseq
        %v6180 = vshrl.u32 %v6179, 7
        %v6181 = vsub.s32 %v6178, %v6180
        %v6182 = vrot.slane %v6175, %v6181
        %v6183 = vcombine.low %v5422, %v5423
        %v6185 = vunpack.c.l.s4 1983009808
        %v6186 = vunpack.c.0.s8 %v6185
        %v6187 = vlaneseq
        %v6188 = vshrl.u32 %v6187, 7
        %v6189 = vsub.s32 %v6186, %v6188
        %v6190 = vrot.slane %v6183, %v6189
        %v6191 = vcombine.low %v6166, %v6174
        %v6193 = vunpack.c.l.s4 1934713408
        %v6194 = vunpack.c.0.s8 %v6193
        %v6195 = vlaneseq
        %v6196 = vshrl.u32 %v6195, 7
        %v6197 = vsub.s32 %v6194, %v6196
        %v6198 = vrot.slane %v6191, %v6197
        %v6199 = vcombine.low %v6182, %v6190
        %v6201 = vunpack.c.l.s4 1934713408
        %v6202 = vunpack.c.0.s8 %v6201
        %v6203 = vlaneseq
        %v6204 = vshrl.u32 %v6203, 7
        %v6205 = vsub.s32 %v6202, %v6204
        %v6206 = vrot.slane %v6199, %v6205
        %v6207 = vcombine.low %v6198, %v6206
        %v6208 = vcombine.low %v5446, %v5453
        %v6210 = vunpack.c.l.s4 1983009808
        %v6211 = vunpack.c.0.s8 %v6210
        %v6212 = vlaneseq
        %v6213 = vshrl.u32 %v6212, 7
        %v6214 = vsub.s32 %v6211, %v6213
        %v6215 = vrot.slane %v6208, %v6214
        %v6216 = vcombine.low %v5469, %v5470
        %v6218 = vunpack.c.l.s4 1983009808
        %v6219 = vunpack.c.0.s8 %v6218
        %v6220 = vlaneseq
        %v6221 = vshrl.u32 %v6220, 7
        %v6222 = vsub.s32 %v6219, %v6221
        %v6223 = vrot.slane %v6216, %v6222
        %v6224 = vcombine.low %v5461, %v5468
        %v6226 = vunpack.c.l.s4 1983009808
        %v6227 = vunpack.c.0.s8 %v6226
        %v6228 = vlaneseq
        %v6229 = vshrl.u32 %v6228, 7
        %v6230 = vsub.s32 %v6227, %v6229
        %v6231 = vrot.slane %v6224, %v6230
        %v6232 = vcombine.low %v5471, %v5472
        %v6234 = vunpack.c.l.s4 1983009808
        %v6235 = vunpack.c.0.s8 %v6234
        %v6236 = vlaneseq
        %v6237 = vshrl.u32 %v6236, 7
        %v6238 = vsub.s32 %v6235, %v6237
        %v6239 = vrot.slane %v6232, %v6238
        %v6240 = vcombine.low %v6215, %v6223
        %v6242 = vunpack.c.l.s4 1934713408
        %v6243 = vunpack.c.0.s8 %v6242
        %v6244 = vlaneseq
        %v6245 = vshrl.u32 %v6244, 7
        %v6246 = vsub.s32 %v6243, %v6245
        %v6247 = vrot.slane %v6240, %v6246
        %v6248 = vcombine.low %v6231, %v6239
        %v6250 = vunpack.c.l.s4 1934713408
        %v6251 = vunpack.c.0.s8 %v6250
        %v6252 = vlaneseq
        %v6253 = vshrl.u32 %v6252, 7
        %v6254 = vsub.s32 %v6251, %v6253
        %v6255 = vrot.slane %v6248, %v6254
        %v6256 = vcombine.low %v6247, %v6255
        %v6257 = vcombine.low %v5495, %v5502
        %v6259 = vunpack.c.l.s4 1983009808
        %v6260 = vunpack.c.0.s8 %v6259
        %v6261 = vlaneseq
        %v6262 = vshrl.u32 %v6261, 7
        %v6263 = vsub.s32 %v6260, %v6262
        %v6264 = vrot.slane %v6257, %v6263
        %v6265 = vcombine.low %v5518, %v5519
        %v6267 = vunpack.c.l.s4 1983009808
        %v6268 = vunpack.c.0.s8 %v6267
        %v6269 = vlaneseq
        %v6270 = vshrl.u32 %v6269, 7
        %v6271 = vsub.s32 %v6268, %v6270
        %v6272 = vrot.slane %v6265, %v6271
        %v6273 = vcombine.low %v5510, %v5517
        %v6275 = vunpack.c.l.s4 1983009808
        %v6276 = vunpack.c.0.s8 %v6275
        %v6277 = vlaneseq
        %v6278 = vshrl.u32 %v6277, 7
        %v6279 = vsub.s32 %v6276, %v6278
        %v6280 = vrot.slane %v6273, %v6279
        %v6281 = vcombine.low %v5520, %v5521
        %v6283 = vunpack.c.l.s4 1983009808
        %v6284 = vunpack.c.0.s8 %v6283
        %v6285 = vlaneseq
        %v6286 = vshrl.u32 %v6285, 7
        %v6287 = vsub.s32 %v6284, %v6286
        %v6288 = vrot.slane %v6281, %v6287
        %v6289 = vcombine.low %v6264, %v6272
        %v6291 = vunpack.c.l.s4 1934713408
        %v6292 = vunpack.c.0.s8 %v6291
        %v6293 = vlaneseq
        %v6294 = vshrl.u32 %v6293, 7
        %v6295 = vsub.s32 %v6292, %v6294
        %v6296 = vrot.slane %v6289, %v6295
        %v6297 = vcombine.low %v6280, %v6288
        %v6299 = vunpack.c.l.s4 1934713408
        %v6300 = vunpack.c.0.s8 %v6299
        %v6301 = vlaneseq
        %v6302 = vshrl.u32 %v6301, 7
        %v6303 = vsub.s32 %v6300, %v6302
        %v6304 = vrot.slane %v6297, %v6303
        %v6305 = vcombine.low %v6296, %v6304
        %v6306 = vcombine.low %v5544, %v5551
        %v6308 = vunpack.c.l.s4 1983009808
        %v6309 = vunpack.c.0.s8 %v6308
        %v6310 = vlaneseq
        %v6311 = vshrl.u32 %v6310, 7
        %v6312 = vsub.s32 %v6309, %v6311
        %v6313 = vrot.slane %v6306, %v6312
        %v6314 = vcombine.low %v5567, %v5568
        %v6316 = vunpack.c.l.s4 1983009808
        %v6317 = vunpack.c.0.s8 %v6316
        %v6318 = vlaneseq
        %v6319 = vshrl.u32 %v6318, 7
        %v6320 = vsub.s32 %v6317, %v6319
        %v6321 = vrot.slane %v6314, %v6320
        %v6322 = vcombine.low %v5559, %v5566
        %v6324 = vunpack.c.l.s4 1983009808
        %v6325 = vunpack.c.0.s8 %v6324
        %v6326 = vlaneseq
        %v6327 = vshrl.u32 %v6326, 7
        %v6328 = vsub.s32 %v6325, %v6327
        %v6329 = vrot.slane %v6322, %v6328
        %v6330 = vcombine.low %v5569, %v5570
        %v6332 = vunpack.c.l.s4 1983009808
        %v6333 = vunpack.c.0.s8 %v6332
        %v6334 = vlaneseq
        %v6335 = vshrl.u32 %v6334, 7
        %v6336 = vsub.s32 %v6333, %v6335
        %v6337 = vrot.slane %v6330, %v6336
        %v6338 = vcombine.low %v6313, %v6321
        %v6340 = vunpack.c.l.s4 1934713408
        %v6341 = vunpack.c.0.s8 %v6340
        %v6342 = vlaneseq
        %v6343 = vshrl.u32 %v6342, 7
        %v6344 = vsub.s32 %v6341, %v6343
        %v6345 = vrot.slane %v6338, %v6344
        %v6346 = vcombine.low %v6329, %v6337
        %v6348 = vunpack.c.l.s4 1934713408
        %v6349 = vunpack.c.0.s8 %v6348
        %v6350 = vlaneseq
        %v6351 = vshrl.u32 %v6350, 7
        %v6352 = vsub.s32 %v6349, %v6351
        %v6353 = vrot.slane %v6346, %v6352
        %v6354 = vcombine.low %v6345, %v6353
        %v6355 = vcombine.low %v5593, %v5600
        %v6357 = vunpack.c.l.s4 1983009808
        %v6358 = vunpack.c.0.s8 %v6357
        %v6359 = vlaneseq
        %v6360 = vshrl.u32 %v6359, 7
        %v6361 = vsub.s32 %v6358, %v6360
        %v6362 = vrot.slane %v6355, %v6361
        %v6363 = vcombine.low %v5616, %v5617
        %v6365 = vunpack.c.l.s4 1983009808
        %v6366 = vunpack.c.0.s8 %v6365
        %v6367 = vlaneseq
        %v6368 = vshrl.u32 %v6367, 7
        %v6369 = vsub.s32 %v6366, %v6368
        %v6370 = vrot.slane %v6363, %v6369
        %v6371 = vcombine.low %v5608, %v5615
        %v6373 = vunpack.c.l.s4 1983009808
        %v6374 = vunpack.c.0.s8 %v6373
        %v6375 = vlaneseq
        %v6376 = vshrl.u32 %v6375, 7
        %v6377 = vsub.s32 %v6374, %v6376
        %v6378 = vrot.slane %v6371, %v6377
        %v6379 = vcombine.low %v5618, %v5619
        %v6381 = vunpack.c.l.s4 1983009808
        %v6382 = vunpack.c.0.s8 %v6381
        %v6383 = vlaneseq
        %v6384 = vshrl.u32 %v6383, 7
        %v6385 = vsub.s32 %v6382, %v6384
        %v6386 = vrot.slane %v6379, %v6385
        %v6387 = vcombine.low %v6362, %v6370
        %v6389 = vunpack.c.l.s4 1934713408
        %v6390 = vunpack.c.0.s8 %v6389
        %v6391 = vlaneseq
        %v6392 = vshrl.u32 %v6391, 7
        %v6393 = vsub.s32 %v6390, %v6392
        %v6394 = vrot.slane %v6387, %v6393
        %v6395 = vcombine.low %v6378, %v6386
        %v6397 = vunpack.c.l.s4 1934713408
        %v6398 = vunpack.c.0.s8 %v6397
        %v6399 = vlaneseq
        %v6400 = vshrl.u32 %v6399, 7
        %v6401 = vsub.s32 %v6398, %v6400
        %v6402 = vrot.slane %v6395, %v6401
        %v6403 = vcombine.low %v6394, %v6402
        %v6404 = vcombine.low %v5642, %v5649
        %v6406 = vunpack.c.l.s4 1983009808
        %v6407 = vunpack.c.0.s8 %v6406
        %v6408 = vlaneseq
        %v6409 = vshrl.u32 %v6408, 7
        %v6410 = vsub.s32 %v6407, %v6409
        %v6411 = vrot.slane %v6404, %v6410
        %v6412 = vcombine.low %v5665, %v5666
        %v6414 = vunpack.c.l.s4 1983009808
        %v6415 = vunpack.c.0.s8 %v6414
        %v6416 = vlaneseq
        %v6417 = vshrl.u32 %v6416, 7
        %v6418 = vsub.s32 %v6415, %v6417
        %v6419 = vrot.slane %v6412, %v6418
        %v6420 = vcombine.low %v5657, %v5664
        %v6422 = vunpack.c.l.s4 1983009808
        %v6423 = vunpack.c.0.s8 %v6422
        %v6424 = vlaneseq
        %v6425 = vshrl.u32 %v6424, 7
        %v6426 = vsub.s32 %v6423, %v6425
        %v6427 = vrot.slane %v6420, %v6426
        %v6428 = vcombine.low %v5667, %v5668
        %v6430 = vunpack.c.l.s4 1983009808
        %v6431 = vunpack.c.0.s8 %v6430
        %v6432 = vlaneseq
        %v6433 = vshrl.u32 %v6432, 7
        %v6434 = vsub.s32 %v6431, %v6433
        %v6435 = vrot.slane %v6428, %v6434
        %v6436 = vcombine.low %v6411, %v6419
        %v6438 = vunpack.c.l.s4 1934713408
        %v6439 = vunpack.c.0.s8 %v6438
        %v6440 = vlaneseq
        %v6441 = vshrl.u32 %v6440, 7
        %v6442 = vsub.s32 %v6439, %v6441
        %v6443 = vrot.slane %v6436, %v6442
        %v6444 = vcombine.low %v6427, %v6435
        %v6446 = vunpack.c.l.s4 1934713408
        %v6447 = vunpack.c.0.s8 %v6446
        %v6448 = vlaneseq
        %v6449 = vshrl.u32 %v6448, 7
        %v6450 = vsub.s32 %v6447, %v6449
        %v6451 = vrot.slane %v6444, %v6450
        %v6452 = vcombine.low %v6443, %v6451
        %v6453 = vcombine.low %v5691, %v5698
        %v6455 = vunpack.c.l.s4 1983009808
        %v6456 = vunpack.c.0.s8 %v6455
        %v6457 = vlaneseq
        %v6458 = vshrl.u32 %v6457, 7
        %v6459 = vsub.s32 %v6456, %v6458
        %v6460 = vrot.slane %v6453, %v6459
        %v6461 = vcombine.low %v5714, %v5715
        %v6463 = vunpack.c.l.s4 1983009808
        %v6464 = vunpack.c.0.s8 %v6463
        %v6465 = vlaneseq
        %v6466 = vshrl.u32 %v6465, 7
        %v6467 = vsub.s32 %v6464, %v6466
        %v6468 = vrot.slane %v6461, %v6467
        %v6469 = vcombine.low %v5706, %v5713
        %v6471 = vunpack.c.l.s4 1983009808
        %v6472 = vunpack.c.0.s8 %v6471
        %v6473 = vlaneseq
        %v6474 = vshrl.u32 %v6473, 7
        %v6475 = vsub.s32 %v6472, %v6474
        %v6476 = vrot.slane %v6469, %v6475
        %v6477 = vcombine.low %v5716, %v5717
        %v6479 = vunpack.c.l.s4 1983009808
        %v6480 = vunpack.c.0.s8 %v6479
        %v6481 = vlaneseq
        %v6482 = vshrl.u32 %v6481, 7
        %v6483 = vsub.s32 %v6480, %v6482
        %v6484 = vrot.slane %v6477, %v6483
        %v6485 = vcombine.low %v6460, %v6468
        %v6487 = vunpack.c.l.s4 1934713408
        %v6488 = vunpack.c.0.s8 %v6487
        %v6489 = vlaneseq
        %v6490 = vshrl.u32 %v6489, 7
        %v6491 = vsub.s32 %v6488, %v6490
        %v6492 = vrot.slane %v6485, %v6491
        %v6493 = vcombine.low %v6476, %v6484
        %v6495 = vunpack.c.l.s4 1934713408
        %v6496 = vunpack.c.0.s8 %v6495
        %v6497 = vlaneseq
        %v6498 = vshrl.u32 %v6497, 7
        %v6499 = vsub.s32 %v6496, %v6498
        %v6500 = vrot.slane %v6493, %v6499
        %v6501 = vcombine.low %v6492, %v6500
        %v6502 = vcombine.low %v5740, %v5747
        %v6504 = vunpack.c.l.s4 1983009808
        %v6505 = vunpack.c.0.s8 %v6504
        %v6506 = vlaneseq
        %v6507 = vshrl.u32 %v6506, 7
        %v6508 = vsub.s32 %v6505, %v6507
        %v6509 = vrot.slane %v6502, %v6508
        %v6510 = vcombine.low %v5763, %v5764
        %v6512 = vunpack.c.l.s4 1983009808
        %v6513 = vunpack.c.0.s8 %v6512
        %v6514 = vlaneseq
        %v6515 = vshrl.u32 %v6514, 7
        %v6516 = vsub.s32 %v6513, %v6515
        %v6517 = vrot.slane %v6510, %v6516
        %v6518 = vcombine.low %v5755, %v5762
        %v6520 = vunpack.c.l.s4 1983009808
        %v6521 = vunpack.c.0.s8 %v6520
        %v6522 = vlaneseq
        %v6523 = vshrl.u32 %v6522, 7
        %v6524 = vsub.s32 %v6521, %v6523
        %v6525 = vrot.slane %v6518, %v6524
        %v6526 = vcombine.low %v5765, %v5766
        %v6528 = vunpack.c.l.s4 1983009808
        %v6529 = vunpack.c.0.s8 %v6528
        %v6530 = vlaneseq
        %v6531 = vshrl.u32 %v6530, 7
        %v6532 = vsub.s32 %v6529, %v6531
        %v6533 = vrot.slane %v6526, %v6532
        %v6534 = vcombine.low %v6509, %v6517
        %v6536 = vunpack.c.l.s4 1934713408
        %v6537 = vunpack.c.0.s8 %v6536
        %v6538 = vlaneseq
        %v6539 = vshrl.u32 %v6538, 7
        %v6540 = vsub.s32 %v6537, %v6539
        %v6541 = vrot.slane %v6534, %v6540
        %v6542 = vcombine.low %v6525, %v6533
        %v6544 = vunpack.c.l.s4 1934713408
        %v6545 = vunpack.c.0.s8 %v6544
        %v6546 = vlaneseq
        %v6547 = vshrl.u32 %v6546, 7
        %v6548 = vsub.s32 %v6545, %v6547
        %v6549 = vrot.slane %v6542, %v6548
        %v6550 = vcombine.low %v6541, %v6549
        %v6551 = vcombine.low %v5789, %v5796
        %v6553 = vunpack.c.l.s4 1983009808
        %v6554 = vunpack.c.0.s8 %v6553
        %v6555 = vlaneseq
        %v6556 = vshrl.u32 %v6555, 7
        %v6557 = vsub.s32 %v6554, %v6556
        %v6558 = vrot.slane %v6551, %v6557
        %v6559 = vcombine.low %v5812, %v5813
        %v6561 = vunpack.c.l.s4 1983009808
        %v6562 = vunpack.c.0.s8 %v6561
        %v6563 = vlaneseq
        %v6564 = vshrl.u32 %v6563, 7
        %v6565 = vsub.s32 %v6562, %v6564
        %v6566 = vrot.slane %v6559, %v6565
        %v6567 = vcombine.low %v5804, %v5811
        %v6569 = vunpack.c.l.s4 1983009808
        %v6570 = vunpack.c.0.s8 %v6569
        %v6571 = vlaneseq
        %v6572 = vshrl.u32 %v6571, 7
        %v6573 = vsub.s32 %v6570, %v6572
        %v6574 = vrot.slane %v6567, %v6573
        %v6575 = vcombine.low %v5814, %v5815
        %v6577 = vunpack.c.l.s4 1983009808
        %v6578 = vunpack.c.0.s8 %v6577
        %v6579 = vlaneseq
        %v6580 = vshrl.u32 %v6579, 7
        %v6581 = vsub.s32 %v6578, %v6580
        %v6582 = vrot.slane %v6575, %v6581
        %v6583 = vcombine.low %v6558, %v6566
        %v6585 = vunpack.c.l.s4 1934713408
        %v6586 = vunpack.c.0.s8 %v6585
        %v6587 = vlaneseq
        %v6588 = vshrl.u32 %v6587, 7
        %v6589 = vsub.s32 %v6586, %v6588
        %v6590 = vrot.slane %v6583, %v6589
        %v6591 = vcombine.low %v6574, %v6582
        %v6593 = vunpack.c.l.s4 1934713408
        %v6594 = vunpack.c.0.s8 %v6593
        %v6595 = vlaneseq
        %v6596 = vshrl.u32 %v6595, 7
        %v6597 = vsub.s32 %v6594, %v6596
        %v6598 = vrot.slane %v6591, %v6597
        %v6599 = vcombine.low %v6590, %v6598
        %v6600 = vcombine.low %v5838, %v5845
        %v6602 = vunpack.c.l.s4 1983009808
        %v6603 = vunpack.c.0.s8 %v6602
        %v6604 = vlaneseq
        %v6605 = vshrl.u32 %v6604, 7
        %v6606 = vsub.s32 %v6603, %v6605
        %v6607 = vrot.slane %v6600, %v6606
        %v6608 = vcombine.low %v5861, %v5862
        %v6610 = vunpack.c.l.s4 1983009808
        %v6611 = vunpack.c.0.s8 %v6610
        %v6612 = vlaneseq
        %v6613 = vshrl.u32 %v6612, 7
        %v6614 = vsub.s32 %v6611, %v6613
        %v6615 = vrot.slane %v6608, %v6614
        %v6616 = vcombine.low %v5853, %v5860
        %v6618 = vunpack.c.l.s4 1983009808
        %v6619 = vunpack.c.0.s8 %v6618
        %v6620 = vlaneseq
        %v6621 = vshrl.u32 %v6620, 7
        %v6622 = vsub.s32 %v6619, %v6621
        %v6623 = vrot.slane %v6616, %v6622
        %v6624 = vcombine.low %v5863, %v5864
        %v6626 = vunpack.c.l.s4 1983009808
        %v6627 = vunpack.c.0.s8 %v6626
        %v6628 = vlaneseq
        %v6629 = vshrl.u32 %v6628, 7
        %v6630 = vsub.s32 %v6627, %v6629
        %v6631 = vrot.slane %v6624, %v6630
        %v6632 = vcombine.low %v6607, %v6615
        %v6634 = vunpack.c.l.s4 1934713408
        %v6635 = vunpack.c.0.s8 %v6634
        %v6636 = vlaneseq
        %v6637 = vshrl.u32 %v6636, 7
        %v6638 = vsub.s32 %v6635, %v6637
        %v6639 = vrot.slane %v6632, %v6638
        %v6640 = vcombine.low %v6623, %v6631
        %v6642 = vunpack.c.l.s4 1934713408
        %v6643 = vunpack.c.0.s8 %v6642
        %v6644 = vlaneseq
        %v6645 = vshrl.u32 %v6644, 7
        %v6646 = vsub.s32 %v6643, %v6645
        %v6647 = vrot.slane %v6640, %v6646
        %v6648 = vcombine.low %v6639, %v6647
        %v6649 = vcombine.low %v5887, %v5894
        %v6651 = vunpack.c.l.s4 1983009808
        %v6652 = vunpack.c.0.s8 %v6651
        %v6653 = vlaneseq
        %v6654 = vshrl.u32 %v6653, 7
        %v6655 = vsub.s32 %v6652, %v6654
        %v6656 = vrot.slane %v6649, %v6655
        %v6657 = vcombine.low %v5910, %v5911
        %v6659 = vunpack.c.l.s4 1983009808
        %v6660 = vunpack.c.0.s8 %v6659
        %v6661 = vlaneseq
        %v6662 = vshrl.u32 %v6661, 7
        %v6663 = vsub.s32 %v6660, %v6662
        %v6664 = vrot.slane %v6657, %v6663
        %v6665 = vcombine.low %v5902, %v5909
        %v6667 = vunpack.c.l.s4 1983009808
        %v6668 = vunpack.c.0.s8 %v6667
        %v6669 = vlaneseq
        %v6670 = vshrl.u32 %v6669, 7
        %v6671 = vsub.s32 %v6668, %v6670
        %v6672 = vrot.slane %v6665, %v6671
        %v6673 = vcombine.low %v5912, %v5913
        %v6675 = vunpack.c.l.s4 1983009808
        %v6676 = vunpack.c.0.s8 %v6675
        %v6677 = vlaneseq
        %v6678 = vshrl.u32 %v6677, 7
        %v6679 = vsub.s32 %v6676, %v6678
        %v6680 = vrot.slane %v6673, %v6679
        %v6681 = vcombine.low %v6656, %v6664
        %v6683 = vunpack.c.l.s4 1934713408
        %v6684 = vunpack.c.0.s8 %v6683
        %v6685 = vlaneseq
        %v6686 = vshrl.u32 %v6685, 7
        %v6687 = vsub.s32 %v6684, %v6686
        %v6688 = vrot.slane %v6681, %v6687
        %v6689 = vcombine.low %v6672, %v6680
        %v6691 = vunpack.c.l.s4 1934713408
        %v6692 = vunpack.c.0.s8 %v6691
        %v6693 = vlaneseq
        %v6694 = vshrl.u32 %v6693, 7
        %v6695 = vsub.s32 %v6692, %v6694
        %v6696 = vrot.slane %v6689, %v6695
        %v6697 = vcombine.low %v6688, %v6696
        %v6700 = vpack.i.b16 %v6011, %v5962
        %v6702 = vshrl.u32 %v5962, 16
        %v6703 = vshrl.u32 %v6011, 16
        %v6704 = vpack.i.b16 %v6703, %v6702
        %v6708 = vpack.i.b16 %v6109, %v6060
        %v6710 = vshrl.u32 %v6060, 16
        %v6711 = vshrl.u32 %v6109, 16
        %v6712 = vpack.i.b16 %v6711, %v6710
        %v6716 = vpack.i.b16 %v6207, %v6158
        %v6718 = vshrl.u32 %v6158, 16
        %v6719 = vshrl.u32 %v6207, 16
        %v6720 = vpack.i.b16 %v6719, %v6718
        %v6724 = vpack.i.b16 %v6305, %v6256
        %v6726 = vshrl.u32 %v6256, 16
        %v6727 = vshrl.u32 %v6305, 16
        %v6728 = vpack.i.b16 %v6727, %v6726
        %v6732 = vpack.i.b16 %v6403, %v6354
        %v6734 = vshrl.u32 %v6354, 16
        %v6735 = vshrl.u32 %v6403, 16
        %v6736 = vpack.i.b16 %v6735, %v6734
        %v6740 = vpack.i.b16 %v6501, %v6452
        %v6742 = vshrl.u32 %v6452, 16
        %v6743 = vshrl.u32 %v6501, 16
        %v6744 = vpack.i.b16 %v6743, %v6742
        %v6748 = vpack.i.b16 %v6599, %v6550
        %v6750 = vshrl.u32 %v6550, 16
        %v6751 = vshrl.u32 %v6599, 16
        %v6752 = vpack.i.b16 %v6751, %v6750
        %v6756 = vpack.i.b16 %v6697, %v6648
        %v6758 = vshrl.u32 %v6648, 16
        %v6759 = vshrl.u32 %v6697, 16
        %v6760 = vpack.i.b16 %v6759, %v6758
        %vm6762 = vcmask 523264
        %v6764 = vsel %vm6762, %v3276, 0
        %v6767 = vsel %vm6762, %v3282, 0
        %v6770 = vsel %vm6762, %v3288, 0
        %v6773 = vsel %vm6762, %v3294, 0
        %v6776 = vsel %vm6762, %v3300, 0
        %v6779 = vsel %vm6762, %v3306, 0
        %v6782 = vsel %vm6762, %v3312, 0
        %v6785 = vsel %vm6762, %v3318, 0
        %v6788 = vsel %vm6762, %v4988, 0
        %v6791 = vsel %vm6762, %v4994, 0
        %v6794 = vsel %vm6762, %v5000, 0
        %v6797 = vsel %vm6762, %v5006, 0
        %v6800 = vsel %vm6762, %v5012, 0
        %v6803 = vsel %vm6762, %v5018, 0
        %v6806 = vsel %vm6762, %v5024, 0
        %v6809 = vsel %vm6762, %v5030, 0
        %6811 = vmatprep.subr.bf16.mxu0 0
        %6812 = vmatpush1.bf16.xpose.msra.mxu0 %v6788
        %6813 = vmatprep.subr.bf16.mxu0 0
        %6814 = vmatpush1.bf16.xpose.msra.mxu0 %v6791
        %6815 = vmatprep.subr.bf16.mxu0 0
        %6816 = vmatpush1.bf16.xpose.msra.mxu0 %v6794
        %6817 = vmatprep.subr.bf16.mxu0 0
        %6818 = vmatpush1.bf16.xpose.msra.mxu0 %v6797
        %6819 = vmatprep.subr.bf16.mxu0 0
        %6820 = vmatpush1.bf16.xpose.msra.mxu0 %v6800
        %6821 = vmatprep.subr.bf16.mxu0 0
        %6822 = vmatpush1.bf16.xpose.msra.mxu0 %v6803
        %6823 = vmatprep.subr.bf16.mxu0 0
        %6824 = vmatpush1.bf16.xpose.msra.mxu0 %v6806
        %6825 = vmatprep.subr.bf16.mxu0 0
        %6826 = vmatpush1.bf16.xpose.msra.mxu0 %v6809
        %6827 = vmatprep.subr.bf16.mxu0 0
        %6828 = vmatpush1.bf16.xpose.msra.mxu0 0
        %6829 = vmatprep.subr.bf16.mxu0 0
        %6830 = vmatpush1.bf16.xpose.msra.mxu0 0
        %6831 = vmatprep.subr.bf16.mxu0 0
        %6832 = vmatpush1.bf16.xpose.msra.mxu0 0
        %6833 = vmatprep.subr.bf16.mxu0 0
        %6834 = vmatpush1.bf16.xpose.msra.mxu0 0
        %6835 = vmatprep.subr.bf16.mxu0 0
        %6836 = vmatpush1.bf16.xpose.msra.mxu0 0
        %6837 = vmatprep.subr.bf16.mxu0 0
        %6838 = vmatpush1.bf16.xpose.msra.mxu0 0
        %6839 = vmatprep.subr.bf16.mxu0 0
        %6840 = vmatpush1.bf16.xpose.msra.mxu0 0
        %6841 = vmatprep.subr.bf16.mxu0 0
        %6842 = vmatpush1.bf16.xpose.msra.mxu0 0
        %6843 = vmatprep.mubr.bf16.mxu0 0
        %6844 = vmatmul.mubr.bf16.gmra.mrb[0].mxu0 %v6764
        %v6845 = vpop.f32.mrb[0].mxu0
        %v6846 = vadd.f32 %v954, %v6845
        %v6847 = vpop.f32.mrb[0].mxu0
        %v6848 = vpop.f32.mrb[0].mxu0
        %v6849 = vadd.f32 %v955, %v6848
        %v6850 = vpop.f32.mrb[0].mxu0
        %6851 = vmatprep.mubr.bf16.mxu0 0
        %6852 = vmatmul.mubr.bf16.gmra.mrb[0].mxu0 %v6767
        %v6853 = vpop.f32.mrb[0].mxu0
        %v6854 = vadd.f32 %v956, %v6853
        %v6855 = vpop.f32.mrb[0].mxu0
        %v6856 = vpop.f32.mrb[0].mxu0
        %v6857 = vadd.f32 %v957, %v6856
        %v6858 = vpop.f32.mrb[0].mxu0
        %6859 = vmatprep.mubr.bf16.mxu0 0
        %6860 = vmatmul.mubr.bf16.gmra.mrb[0].mxu0 %v6770
        %v6861 = vpop.f32.mrb[0].mxu0
        %v6862 = vadd.f32 %v958, %v6861
        %v6863 = vpop.f32.mrb[0].mxu0
        %v6864 = vpop.f32.mrb[0].mxu0
        %v6865 = vadd.f32 %v959, %v6864
        %v6866 = vpop.f32.mrb[0].mxu0
        %6867 = vmatprep.mubr.bf16.mxu0 0
        %6868 = vmatmul.mubr.bf16.gmra.mrb[0].mxu0 %v6773
        %v6869 = vpop.f32.mrb[0].mxu0
        %v6870 = vadd.f32 %v960, %v6869
        %v6871 = vpop.f32.mrb[0].mxu0
        %v6872 = vpop.f32.mrb[0].mxu0
        %v6873 = vadd.f32 %v961, %v6872
        %v6874 = vpop.f32.mrb[0].mxu0
        %6875 = vmatprep.mubr.bf16.mxu0 0
        %6876 = vmatmul.mubr.bf16.gmra.mrb[0].mxu0 %v6776
        %v6877 = vpop.f32.mrb[0].mxu0
        %v6878 = vadd.f32 %v962, %v6877
        %v6879 = vpop.f32.mrb[0].mxu0
        %v6880 = vpop.f32.mrb[0].mxu0
        %v6881 = vadd.f32 %v963, %v6880
        %v6882 = vpop.f32.mrb[0].mxu0
        %6883 = vmatprep.mubr.bf16.mxu0 0
        %6884 = vmatmul.mubr.bf16.gmra.mrb[0].mxu0 %v6779
        %v6885 = vpop.f32.mrb[0].mxu0
        %v6886 = vadd.f32 %v964, %v6885
        %v6887 = vpop.f32.mrb[0].mxu0
        %v6888 = vpop.f32.mrb[0].mxu0
        %v6889 = vadd.f32 %v965, %v6888
        %v6890 = vpop.f32.mrb[0].mxu0
        %6891 = vmatprep.mubr.bf16.mxu0 0
        %6892 = vmatmul.mubr.bf16.gmra.mrb[0].mxu0 %v6782
        %v6893 = vpop.f32.mrb[0].mxu0
        %v6894 = vadd.f32 %v966, %v6893
        %v6895 = vpop.f32.mrb[0].mxu0
        %v6896 = vpop.f32.mrb[0].mxu0
        %v6897 = vadd.f32 %v967, %v6896
        %v6898 = vpop.f32.mrb[0].mxu0
        %6899 = vmatprep.mubr.bf16.mxu0 0
        %6900 = vmatmul.mubr.bf16.gmra.mrb[0].mxu0 %v6785
        %v6901 = vpop.f32.mrb[0].mxu0
        %v6902 = vadd.f32 %v968, %v6901
        %v6903 = vpop.f32.mrb[0].mxu0
        %v6904 = vpop.f32.mrb[0].mxu0
        %v6905 = vadd.f32 %v969, %v6904
        %v6906 = vpop.f32.mrb[0].mxu0
        %6907 = vdwg.mxu0
        %v6909 = vsel %vm6762, %v3279, 0
        %v6912 = vsel %vm6762, %v3285, 0
        %v6915 = vsel %vm6762, %v3291, 0
        %v6918 = vsel %vm6762, %v3297, 0
        %v6921 = vsel %vm6762, %v3303, 0
        %v6924 = vsel %vm6762, %v3309, 0
        %v6927 = vsel %vm6762, %v3315, 0
        %v6930 = vsel %vm6762, %v3321, 0
        %v6933 = vsel %vm6762, %v4991, 0
        %v6936 = vsel %vm6762, %v4997, 0
        %v6939 = vsel %vm6762, %v5003, 0
        %v6942 = vsel %vm6762, %v5009, 0
        %v6945 = vsel %vm6762, %v5015, 0
        %v6948 = vsel %vm6762, %v5021, 0
        %v6951 = vsel %vm6762, %v5027, 0
        %v6954 = vsel %vm6762, %v5033, 0
        %6956 = vmatprep.subr.bf16.mxu0 0
        %6957 = vmatpush1.bf16.xpose.msra.mxu0 %v6933
        %6958 = vmatprep.subr.bf16.mxu0 0
        %6959 = vmatpush1.bf16.xpose.msra.mxu0 %v6936
        %6960 = vmatprep.subr.bf16.mxu0 0
        %6961 = vmatpush1.bf16.xpose.msra.mxu0 %v6939
        %6962 = vmatprep.subr.bf16.mxu0 0
        %6963 = vmatpush1.bf16.xpose.msra.mxu0 %v6942
        %6964 = vmatprep.subr.bf16.mxu0 0
        %6965 = vmatpush1.bf16.xpose.msra.mxu0 %v6945
        %6966 = vmatprep.subr.bf16.mxu0 0
        %6967 = vmatpush1.bf16.xpose.msra.mxu0 %v6948
        %6968 = vmatprep.subr.bf16.mxu0 0
        %6969 = vmatpush1.bf16.xpose.msra.mxu0 %v6951
        %6970 = vmatprep.subr.bf16.mxu0 0
        %6971 = vmatpush1.bf16.xpose.msra.mxu0 %v6954
        %6972 = vmatprep.subr.bf16.mxu0 0
        %6973 = vmatpush1.bf16.xpose.msra.mxu0 0
        %6974 = vmatprep.subr.bf16.mxu0 0
        %6975 = vmatpush1.bf16.xpose.msra.mxu0 0
        %6976 = vmatprep.subr.bf16.mxu0 0
        %6977 = vmatpush1.bf16.xpose.msra.mxu0 0
        %6978 = vmatprep.subr.bf16.mxu0 0
        %6979 = vmatpush1.bf16.xpose.msra.mxu0 0
        %6980 = vmatprep.subr.bf16.mxu0 0
        %6981 = vmatpush1.bf16.xpose.msra.mxu0 0
        %6982 = vmatprep.subr.bf16.mxu0 0
        %6983 = vmatpush1.bf16.xpose.msra.mxu0 0
        %6984 = vmatprep.subr.bf16.mxu0 0
        %6985 = vmatpush1.bf16.xpose.msra.mxu0 0
        %6986 = vmatprep.subr.bf16.mxu0 0
        %6987 = vmatpush1.bf16.xpose.msra.mxu0 0
        %6988 = vmatprep.mubr.bf16.mxu0 0
        %6989 = vmatmul.mubr.bf16.gmra.mrb[0].mxu0 %v6909
        %v6990 = vpop.f32.mrb[0].mxu0
        %v6991 = vadd.f32 %v954, %v6990
        %v6992 = vpop.f32.mrb[0].mxu0
        %v6993 = vpop.f32.mrb[0].mxu0
        %v6994 = vadd.f32 %v955, %v6993
        %v6995 = vpop.f32.mrb[0].mxu0
        %6996 = vmatprep.mubr.bf16.mxu0 0
        %6997 = vmatmul.mubr.bf16.gmra.mrb[0].mxu0 %v6912
        %v6998 = vpop.f32.mrb[0].mxu0
        %v6999 = vadd.f32 %v956, %v6998
        %v7000 = vpop.f32.mrb[0].mxu0
        %v7001 = vpop.f32.mrb[0].mxu0
        %v7002 = vadd.f32 %v957, %v7001
        %v7003 = vpop.f32.mrb[0].mxu0
        %7004 = vmatprep.mubr.bf16.mxu0 0
        %7005 = vmatmul.mubr.bf16.gmra.mrb[0].mxu0 %v6915
        %v7006 = vpop.f32.mrb[0].mxu0
        %v7007 = vadd.f32 %v958, %v7006
        %v7008 = vpop.f32.mrb[0].mxu0
        %v7009 = vpop.f32.mrb[0].mxu0
        %v7010 = vadd.f32 %v959, %v7009
        %v7011 = vpop.f32.mrb[0].mxu0
        %7012 = vmatprep.mubr.bf16.mxu0 0
        %7013 = vmatmul.mubr.bf16.gmra.mrb[0].mxu0 %v6918
        %v7014 = vpop.f32.mrb[0].mxu0
        %v7015 = vadd.f32 %v960, %v7014
        %v7016 = vpop.f32.mrb[0].mxu0
        %v7017 = vpop.f32.mrb[0].mxu0
        %v7018 = vadd.f32 %v961, %v7017
        %v7019 = vpop.f32.mrb[0].mxu0
        %7020 = vmatprep.mubr.bf16.mxu0 0
        %7021 = vmatmul.mubr.bf16.gmra.mrb[0].mxu0 %v6921
        %v7022 = vpop.f32.mrb[0].mxu0
        %v7023 = vadd.f32 %v962, %v7022
        %v7024 = vpop.f32.mrb[0].mxu0
        %v7025 = vpop.f32.mrb[0].mxu0
        %v7026 = vadd.f32 %v963, %v7025
        %v7027 = vpop.f32.mrb[0].mxu0
        %7028 = vmatprep.mubr.bf16.mxu0 0
        %7029 = vmatmul.mubr.bf16.gmra.mrb[0].mxu0 %v6924
        %v7030 = vpop.f32.mrb[0].mxu0
        %v7031 = vadd.f32 %v964, %v7030
        %v7032 = vpop.f32.mrb[0].mxu0
        %v7033 = vpop.f32.mrb[0].mxu0
        %v7034 = vadd.f32 %v965, %v7033
        %v7035 = vpop.f32.mrb[0].mxu0
        %7036 = vmatprep.mubr.bf16.mxu0 0
        %7037 = vmatmul.mubr.bf16.gmra.mrb[0].mxu0 %v6927
        %v7038 = vpop.f32.mrb[0].mxu0
        %v7039 = vadd.f32 %v966, %v7038
        %v7040 = vpop.f32.mrb[0].mxu0
        %v7041 = vpop.f32.mrb[0].mxu0
        %v7042 = vadd.f32 %v967, %v7041
        %v7043 = vpop.f32.mrb[0].mxu0
        %7044 = vmatprep.mubr.bf16.mxu0 0
        %7045 = vmatmul.mubr.bf16.gmra.mrb[0].mxu0 %v6930
        %v7046 = vpop.f32.mrb[0].mxu0
        %v7047 = vadd.f32 %v968, %v7046
        %v7048 = vpop.f32.mrb[0].mxu0
        %v7049 = vpop.f32.mrb[0].mxu0
        %v7050 = vadd.f32 %v969, %v7049
        %v7051 = vpop.f32.mrb[0].mxu0
        %7052 = vdwg.mxu0
        %7053 = vmax.xlane.f32.xlu0 %v6846
        %v7054 = vpop.xlane.xlu0 %7053
        %7055 = vmax.xlane.f32.xlu0 %v6849
        %v7056 = vpop.xlane.xlu0 %7055
        %7057 = vmax.xlane.f32.xlu0 %v6854
        %v7058 = vpop.xlane.xlu0 %7057
        %7059 = vmax.xlane.f32.xlu0 %v6857
        %v7060 = vpop.xlane.xlu0 %7059
        %7061 = vmax.xlane.f32.xlu0 %v6862
        %v7062 = vpop.xlane.xlu0 %7061
        %7063 = vmax.xlane.f32.xlu0 %v6865
        %v7064 = vpop.xlane.xlu0 %7063
        %7065 = vmax.xlane.f32.xlu0 %v6870
        %v7066 = vpop.xlane.xlu0 %7065
        %7067 = vmax.xlane.f32.xlu0 %v6873
        %v7068 = vpop.xlane.xlu0 %7067
        %7069 = vmax.xlane.f32.xlu0 %v6878
        %v7070 = vpop.xlane.xlu0 %7069
        %7071 = vmax.xlane.f32.xlu0 %v6881
        %v7072 = vpop.xlane.xlu0 %7071
        %7073 = vmax.xlane.f32.xlu0 %v6886
        %v7074 = vpop.xlane.xlu0 %7073
        %7075 = vmax.xlane.f32.xlu0 %v6889
        %v7076 = vpop.xlane.xlu0 %7075
        %7077 = vmax.xlane.f32.xlu0 %v6894
        %v7078 = vpop.xlane.xlu0 %7077
        %7079 = vmax.xlane.f32.xlu0 %v6897
        %v7080 = vpop.xlane.xlu0 %7079
        %7081 = vmax.xlane.f32.xlu0 %v6902
        %v7082 = vpop.xlane.xlu0 %7081
        %7083 = vmax.xlane.f32.xlu0 %v6905
        %v7084 = vpop.xlane.xlu0 %7083
        %7085 = vmax.xlane.f32.xlu0 %v6991
        %v7086 = vpop.xlane.xlu0 %7085
        %7087 = vmax.xlane.f32.xlu0 %v6994
        %v7088 = vpop.xlane.xlu0 %7087
        %7089 = vmax.xlane.f32.xlu0 %v6999
        %v7090 = vpop.xlane.xlu0 %7089
        %7091 = vmax.xlane.f32.xlu0 %v7002
        %v7092 = vpop.xlane.xlu0 %7091
        %7093 = vmax.xlane.f32.xlu0 %v7007
        %v7094 = vpop.xlane.xlu0 %7093
        %7095 = vmax.xlane.f32.xlu0 %v7010
        %v7096 = vpop.xlane.xlu0 %7095
        %7097 = vmax.xlane.f32.xlu0 %v7015
        %v7098 = vpop.xlane.xlu0 %7097
        %7099 = vmax.xlane.f32.xlu0 %v7018
        %v7100 = vpop.xlane.xlu0 %7099
        %7101 = vmax.xlane.f32.xlu0 %v7023
        %v7102 = vpop.xlane.xlu0 %7101
        %7103 = vmax.xlane.f32.xlu0 %v7026
        %v7104 = vpop.xlane.xlu0 %7103
        %7105 = vmax.xlane.f32.xlu0 %v7031
        %v7106 = vpop.xlane.xlu0 %7105
        %7107 = vmax.xlane.f32.xlu0 %v7034
        %v7108 = vpop.xlane.xlu0 %7107
        %7109 = vmax.xlane.f32.xlu0 %v7039
        %v7110 = vpop.xlane.xlu0 %7109
        %7111 = vmax.xlane.f32.xlu0 %v7042
        %v7112 = vpop.xlane.xlu0 %7111
        %7113 = vmax.xlane.f32.xlu0 %v7047
        %v7114 = vpop.xlane.xlu0 %7113
        %7115 = vmax.xlane.f32.xlu0 %v7050
        %v7116 = vpop.xlane.xlu0 %7115
        %v7117 = vsub.f32 %v6846, %v7054
        %v7118 = vsub.f32 %v6849, %v7056
        %v7119 = vsub.f32 %v6854, %v7058
        %v7120 = vsub.f32 %v6857, %v7060
        %v7121 = vsub.f32 %v6862, %v7062
        %v7122 = vsub.f32 %v6865, %v7064
        %v7123 = vsub.f32 %v6870, %v7066
        %v7124 = vsub.f32 %v6873, %v7068
        %v7125 = vsub.f32 %v6878, %v7070
        %v7126 = vsub.f32 %v6881, %v7072
        %v7127 = vsub.f32 %v6886, %v7074
        %v7128 = vsub.f32 %v6889, %v7076
        %v7129 = vsub.f32 %v6894, %v7078
        %v7130 = vsub.f32 %v6897, %v7080
        %v7131 = vsub.f32 %v6902, %v7082
        %v7132 = vsub.f32 %v6905, %v7084
        %v7133 = vsub.f32 %v6991, %v7086
        %v7134 = vsub.f32 %v6994, %v7088
        %v7135 = vsub.f32 %v6999, %v7090
        %v7136 = vsub.f32 %v7002, %v7092
        %v7137 = vsub.f32 %v7007, %v7094
        %v7138 = vsub.f32 %v7010, %v7096
        %v7139 = vsub.f32 %v7015, %v7098
        %v7140 = vsub.f32 %v7018, %v7100
        %v7141 = vsub.f32 %v7023, %v7102
        %v7142 = vsub.f32 %v7026, %v7104
        %v7143 = vsub.f32 %v7031, %v7106
        %v7144 = vsub.f32 %v7034, %v7108
        %v7145 = vsub.f32 %v7039, %v7110
        %v7146 = vsub.f32 %v7042, %v7112
        %v7147 = vsub.f32 %v7047, %v7114
        %v7148 = vsub.f32 %v7050, %v7116
        %v7149 = vmul.f32 %v7117, 1.442695
        %v7150 = vpow.pop %v7149
        %v7151 = vmul.f32 %v7118, 1.442695
        %v7152 = vpow.pop %v7151
        %v7153 = vmul.f32 %v7119, 1.442695
        %v7154 = vpow.pop %v7153
        %v7155 = vmul.f32 %v7120, 1.442695
        %v7156 = vpow.pop %v7155
        %v7157 = vmul.f32 %v7121, 1.442695
        %v7158 = vpow.pop %v7157
        %v7159 = vmul.f32 %v7122, 1.442695
        %v7160 = vpow.pop %v7159
        %v7161 = vmul.f32 %v7123, 1.442695
        %v7162 = vpow.pop %v7161
        %v7163 = vmul.f32 %v7124, 1.442695
        %v7164 = vpow.pop %v7163
        %v7165 = vmul.f32 %v7125, 1.442695
        %v7166 = vpow.pop %v7165
        %v7167 = vmul.f32 %v7126, 1.442695
        %v7168 = vpow.pop %v7167
        %v7169 = vmul.f32 %v7127, 1.442695
        %v7170 = vpow.pop %v7169
        %v7171 = vmul.f32 %v7128, 1.442695
        %v7172 = vpow.pop %v7171
        %v7173 = vmul.f32 %v7129, 1.442695
        %v7174 = vpow.pop %v7173
        %v7175 = vmul.f32 %v7130, 1.442695
        %v7176 = vpow.pop %v7175
        %v7177 = vmul.f32 %v7131, 1.442695
        %v7178 = vpow.pop %v7177
        %v7179 = vmul.f32 %v7132, 1.442695
        %v7180 = vpow.pop %v7179
        %v7181 = vmul.f32 %v7133, 1.442695
        %v7182 = vpow.pop %v7181
        %v7183 = vmul.f32 %v7134, 1.442695
        %v7184 = vpow.pop %v7183
        %v7185 = vmul.f32 %v7135, 1.442695
        %v7186 = vpow.pop %v7185
        %v7187 = vmul.f32 %v7136, 1.442695
        %v7188 = vpow.pop %v7187
        %v7189 = vmul.f32 %v7137, 1.442695
        %v7190 = vpow.pop %v7189
        %v7191 = vmul.f32 %v7138, 1.442695
        %v7192 = vpow.pop %v7191
        %v7193 = vmul.f32 %v7139, 1.442695
        %v7194 = vpow.pop %v7193
        %v7195 = vmul.f32 %v7140, 1.442695
        %v7196 = vpow.pop %v7195
        %v7197 = vmul.f32 %v7141, 1.442695
        %v7198 = vpow.pop %v7197
        %v7199 = vmul.f32 %v7142, 1.442695
        %v7200 = vpow.pop %v7199
        %v7201 = vmul.f32 %v7143, 1.442695
        %v7202 = vpow.pop %v7201
        %v7203 = vmul.f32 %v7144, 1.442695
        %v7204 = vpow.pop %v7203
        %v7205 = vmul.f32 %v7145, 1.442695
        %v7206 = vpow.pop %v7205
        %v7207 = vmul.f32 %v7146, 1.442695
        %v7208 = vpow.pop %v7207
        %v7209 = vmul.f32 %v7147, 1.442695
        %v7210 = vpow.pop %v7209
        %v7211 = vmul.f32 %v7148, 1.442695
        %v7212 = vpow.pop %v7211
        %7213 = vadd.xlane.f32.xlu0 %v7150
        %v7214 = vpop.xlane.xlu0 %7213
        %7215 = vadd.xlane.f32.xlu0 %v7152
        %v7216 = vpop.xlane.xlu0 %7215
        %7217 = vadd.xlane.f32.xlu0 %v7154
        %v7218 = vpop.xlane.xlu0 %7217
        %7219 = vadd.xlane.f32.xlu0 %v7156
        %v7220 = vpop.xlane.xlu0 %7219
        %7221 = vadd.xlane.f32.xlu0 %v7158
        %v7222 = vpop.xlane.xlu0 %7221
        %7223 = vadd.xlane.f32.xlu0 %v7160
        %v7224 = vpop.xlane.xlu0 %7223
        %7225 = vadd.xlane.f32.xlu0 %v7162
        %v7226 = vpop.xlane.xlu0 %7225
        %7227 = vadd.xlane.f32.xlu0 %v7164
        %v7228 = vpop.xlane.xlu0 %7227
        %7229 = vadd.xlane.f32.xlu0 %v7166
        %v7230 = vpop.xlane.xlu0 %7229
        %7231 = vadd.xlane.f32.xlu0 %v7168
        %v7232 = vpop.xlane.xlu0 %7231
        %7233 = vadd.xlane.f32.xlu0 %v7170
        %v7234 = vpop.xlane.xlu0 %7233
        %7235 = vadd.xlane.f32.xlu0 %v7172
        %v7236 = vpop.xlane.xlu0 %7235
        %7237 = vadd.xlane.f32.xlu0 %v7174
        %v7238 = vpop.xlane.xlu0 %7237
        %7239 = vadd.xlane.f32.xlu0 %v7176
        %v7240 = vpop.xlane.xlu0 %7239
        %7241 = vadd.xlane.f32.xlu0 %v7178
        %v7242 = vpop.xlane.xlu0 %7241
        %7243 = vadd.xlane.f32.xlu0 %v7180
        %v7244 = vpop.xlane.xlu0 %7243
        %7245 = vadd.xlane.f32.xlu0 %v7182
        %v7246 = vpop.xlane.xlu0 %7245
        %7247 = vadd.xlane.f32.xlu0 %v7184
        %v7248 = vpop.xlane.xlu0 %7247
        %7249 = vadd.xlane.f32.xlu0 %v7186
        %v7250 = vpop.xlane.xlu0 %7249
        %7251 = vadd.xlane.f32.xlu0 %v7188
        %v7252 = vpop.xlane.xlu0 %7251
        %7253 = vadd.xlane.f32.xlu0 %v7190
        %v7254 = vpop.xlane.xlu0 %7253
        %7255 = vadd.xlane.f32.xlu0 %v7192
        %v7256 = vpop.xlane.xlu0 %7255
        %7257 = vadd.xlane.f32.xlu0 %v7194
        %v7258 = vpop.xlane.xlu0 %7257
        %7259 = vadd.xlane.f32.xlu0 %v7196
        %v7260 = vpop.xlane.xlu0 %7259
        %7261 = vadd.xlane.f32.xlu0 %v7198
        %v7262 = vpop.xlane.xlu0 %7261
        %7263 = vadd.xlane.f32.xlu0 %v7200
        %v7264 = vpop.xlane.xlu0 %7263
        %7265 = vadd.xlane.f32.xlu0 %v7202
        %v7266 = vpop.xlane.xlu0 %7265
        %7267 = vadd.xlane.f32.xlu0 %v7204
        %v7268 = vpop.xlane.xlu0 %7267
        %7269 = vadd.xlane.f32.xlu0 %v7206
        %v7270 = vpop.xlane.xlu0 %7269
        %7271 = vadd.xlane.f32.xlu0 %v7208
        %v7272 = vpop.xlane.xlu0 %7271
        %7273 = vadd.xlane.f32.xlu0 %v7210
        %v7274 = vpop.xlane.xlu0 %7273
        %7275 = vadd.xlane.f32.xlu0 %v7212
        %v7276 = vpop.xlane.xlu0 %7275
        %v7277 = vrcp.pop %v7214
        %v7278 = vmul.f32 %v7150, %v7277
        %v7279 = vrcp.pop %v7216
        %v7280 = vmul.f32 %v7152, %v7279
        %v7281 = vrcp.pop %v7218
        %v7282 = vmul.f32 %v7154, %v7281
        %v7283 = vrcp.pop %v7220
        %v7284 = vmul.f32 %v7156, %v7283
        %v7285 = vrcp.pop %v7222
        %v7286 = vmul.f32 %v7158, %v7285
        %v7287 = vrcp.pop %v7224
        %v7288 = vmul.f32 %v7160, %v7287
        %v7289 = vrcp.pop %v7226
        %v7290 = vmul.f32 %v7162, %v7289
        %v7291 = vrcp.pop %v7228
        %v7292 = vmul.f32 %v7164, %v7291
        %v7293 = vrcp.pop %v7230
        %v7294 = vmul.f32 %v7166, %v7293
        %v7295 = vrcp.pop %v7232
        %v7296 = vmul.f32 %v7168, %v7295
        %v7297 = vrcp.pop %v7234
        %v7298 = vmul.f32 %v7170, %v7297
        %v7299 = vrcp.pop %v7236
        %v7300 = vmul.f32 %v7172, %v7299
        %v7301 = vrcp.pop %v7238
        %v7302 = vmul.f32 %v7174, %v7301
        %v7303 = vrcp.pop %v7240
        %v7304 = vmul.f32 %v7176, %v7303
        %v7305 = vrcp.pop %v7242
        %v7306 = vmul.f32 %v7178, %v7305
        %v7307 = vrcp.pop %v7244
        %v7308 = vmul.f32 %v7180, %v7307
        %v7309 = vrcp.pop %v7246
        %v7310 = vmul.f32 %v7182, %v7309
        %v7311 = vrcp.pop %v7248
        %v7312 = vmul.f32 %v7184, %v7311
        %v7313 = vrcp.pop %v7250
        %v7314 = vmul.f32 %v7186, %v7313
        %v7315 = vrcp.pop %v7252
        %v7316 = vmul.f32 %v7188, %v7315
        %v7317 = vrcp.pop %v7254
        %v7318 = vmul.f32 %v7190, %v7317
        %v7319 = vrcp.pop %v7256
        %v7320 = vmul.f32 %v7192, %v7319
        %v7321 = vrcp.pop %v7258
        %v7322 = vmul.f32 %v7194, %v7321
        %v7323 = vrcp.pop %v7260
        %v7324 = vmul.f32 %v7196, %v7323
        %v7325 = vrcp.pop %v7262
        %v7326 = vmul.f32 %v7198, %v7325
        %v7327 = vrcp.pop %v7264
        %v7328 = vmul.f32 %v7200, %v7327
        %v7329 = vrcp.pop %v7266
        %v7330 = vmul.f32 %v7202, %v7329
        %v7331 = vrcp.pop %v7268
        %v7332 = vmul.f32 %v7204, %v7331
        %v7333 = vrcp.pop %v7270
        %v7334 = vmul.f32 %v7206, %v7333
        %v7335 = vrcp.pop %v7272
        %v7336 = vmul.f32 %v7208, %v7335
        %v7337 = vrcp.pop %v7274
        %v7338 = vmul.f32 %v7210, %v7337
        %v7339 = vrcp.pop %v7276
        %v7340 = vmul.f32 %v7212, %v7339
        %v7341 = vpack.c.bf16 %v7280, %v7278
        %v7342 = vpack.c.bf16 %v7284, %v7282
        %v7343 = vpack.c.bf16 %v7288, %v7286
        %v7344 = vpack.c.bf16 %v7292, %v7290
        %v7345 = vpack.c.bf16 %v7296, %v7294
        %v7346 = vpack.c.bf16 %v7300, %v7298
        %v7347 = vpack.c.bf16 %v7304, %v7302
        %v7348 = vpack.c.bf16 %v7308, %v7306
        %v7349 = vpack.c.bf16 %v7312, %v7310
        %v7350 = vpack.c.bf16 %v7316, %v7314
        %v7351 = vpack.c.bf16 %v7320, %v7318
        %v7352 = vpack.c.bf16 %v7324, %v7322
        %v7353 = vpack.c.bf16 %v7328, %v7326
        %v7354 = vpack.c.bf16 %v7332, %v7330
        %v7355 = vpack.c.bf16 %v7336, %v7334
        %v7356 = vpack.c.bf16 %v7340, %v7338
        %7357 = vmatprep.subr.bf16.mxu0 0
        %7358 = vmatpush1.bf16.msra.mxu0 %v6700
        %7359 = vmatprep.subr.bf16.mxu0 0
        %7360 = vmatpush1.bf16.msra.mxu0 %v6708
        %7361 = vmatprep.subr.bf16.mxu0 0
        %7362 = vmatpush1.bf16.msra.mxu0 %v6716
        %7363 = vmatprep.subr.bf16.mxu0 0
        %7364 = vmatpush1.bf16.msra.mxu0 %v6724
        %7365 = vmatprep.subr.bf16.mxu0 0
        %7366 = vmatpush1.bf16.msra.mxu0 %v6732
        %7367 = vmatprep.subr.bf16.mxu0 0
        %7368 = vmatpush1.bf16.msra.mxu0 %v6740
        %7369 = vmatprep.subr.bf16.mxu0 0
        %7370 = vmatpush1.bf16.msra.mxu0 %v6748
        %7371 = vmatprep.subr.bf16.mxu0 0
        %7372 = vmatpush1.bf16.msra.mxu0 %v6756
        %7373 = vmatprep.subr.bf16.mxu0 0
        %7374 = vmatpush1.bf16.msra.mxu0 0
        %7375 = vmatprep.subr.bf16.mxu0 0
        %7376 = vmatpush1.bf16.msra.mxu0 0
        %7377 = vmatprep.subr.bf16.mxu0 0
        %7378 = vmatpush1.bf16.msra.mxu0 0
        %7379 = vmatprep.subr.bf16.mxu0 0
        %7380 = vmatpush1.bf16.msra.mxu0 0
        %7381 = vmatprep.subr.bf16.mxu0 0
        %7382 = vmatpush1.bf16.msra.mxu0 0
        %7383 = vmatprep.subr.bf16.mxu0 0
        %7384 = vmatpush1.bf16.msra.mxu0 0
        %7385 = vmatprep.subr.bf16.mxu0 0
        %7386 = vmatpush1.bf16.msra.mxu0 0
        %7387 = vmatprep.subr.bf16.mxu0 0
        %7388 = vmatpush1.bf16.msra.mxu0 0
        %7389 = vmatprep.mubr.bf16.mxu0 0
        %7390 = vmatmul.mubr.bf16.gmra.mrb[0].mxu0 %v7341
        %v7391 = vpop.f32.mrb[0].mxu0
        %v7392 = vadd.f32 0.0, %v7391
        %v7393 = vpop.f32.mrb[0].mxu0
        %v7394 = vpop.f32.mrb[0].mxu0
        %v7395 = vadd.f32 0.0, %v7394
        %v7396 = vpop.f32.mrb[0].mxu0
        %7397 = vmatprep.mubr.bf16.mxu0 0
        %7398 = vmatmul.mubr.bf16.gmra.mrb[0].mxu0 %v7342
        %v7399 = vpop.f32.mrb[0].mxu0
        %v7400 = vadd.f32 0.0, %v7399
        %v7401 = vpop.f32.mrb[0].mxu0
        %v7402 = vpop.f32.mrb[0].mxu0
        %v7403 = vadd.f32 0.0, %v7402
        %v7404 = vpop.f32.mrb[0].mxu0
        %7405 = vmatprep.mubr.bf16.mxu0 0
        %7406 = vmatmul.mubr.bf16.gmra.mrb[0].mxu0 %v7343
        %v7407 = vpop.f32.mrb[0].mxu0
        %v7408 = vadd.f32 0.0, %v7407
        %v7409 = vpop.f32.mrb[0].mxu0
        %v7410 = vpop.f32.mrb[0].mxu0
        %v7411 = vadd.f32 0.0, %v7410
        %v7412 = vpop.f32.mrb[0].mxu0
        %7413 = vmatprep.mubr.bf16.mxu0 0
        %7414 = vmatmul.mubr.bf16.gmra.mrb[0].mxu0 %v7344
        %v7415 = vpop.f32.mrb[0].mxu0
        %v7416 = vadd.f32 0.0, %v7415
        %v7417 = vpop.f32.mrb[0].mxu0
        %v7418 = vpop.f32.mrb[0].mxu0
        %v7419 = vadd.f32 0.0, %v7418
        %v7420 = vpop.f32.mrb[0].mxu0
        %7421 = vmatprep.mubr.bf16.mxu0 0
        %7422 = vmatmul.mubr.bf16.gmra.mrb[0].mxu0 %v7345
        %v7423 = vpop.f32.mrb[0].mxu0
        %v7424 = vadd.f32 0.0, %v7423
        %v7425 = vpop.f32.mrb[0].mxu0
        %v7426 = vpop.f32.mrb[0].mxu0
        %v7427 = vadd.f32 0.0, %v7426
        %v7428 = vpop.f32.mrb[0].mxu0
        %7429 = vmatprep.mubr.bf16.mxu0 0
        %7430 = vmatmul.mubr.bf16.gmra.mrb[0].mxu0 %v7346
        %v7431 = vpop.f32.mrb[0].mxu0
        %v7432 = vadd.f32 0.0, %v7431
        %v7433 = vpop.f32.mrb[0].mxu0
        %v7434 = vpop.f32.mrb[0].mxu0
        %v7435 = vadd.f32 0.0, %v7434
        %v7436 = vpop.f32.mrb[0].mxu0
        %7437 = vmatprep.mubr.bf16.mxu0 0
        %7438 = vmatmul.mubr.bf16.gmra.mrb[0].mxu0 %v7347
        %v7439 = vpop.f32.mrb[0].mxu0
        %v7440 = vadd.f32 0.0, %v7439
        %v7441 = vpop.f32.mrb[0].mxu0
        %v7442 = vpop.f32.mrb[0].mxu0
        %v7443 = vadd.f32 0.0, %v7442
        %v7444 = vpop.f32.mrb[0].mxu0
        %7445 = vmatprep.mubr.bf16.mxu0 0
        %7446 = vmatmul.mubr.bf16.gmra.mrb[0].mxu0 %v7348
        %v7447 = vpop.f32.mrb[0].mxu0
        %v7448 = vadd.f32 0.0, %v7447
        %v7449 = vpop.f32.mrb[0].mxu0
        %v7450 = vpop.f32.mrb[0].mxu0
        %v7451 = vadd.f32 0.0, %v7450
        %v7452 = vpop.f32.mrb[0].mxu0
        %7453 = vdwg.mxu0
        %7454 = vmatprep.subr.bf16.mxu0 0
        %7455 = vmatpush1.bf16.msra.mxu0 %v6704
        %7456 = vmatprep.subr.bf16.mxu0 0
        %7457 = vmatpush1.bf16.msra.mxu0 %v6712
        %7458 = vmatprep.subr.bf16.mxu0 0
        %7459 = vmatpush1.bf16.msra.mxu0 %v6720
        %7460 = vmatprep.subr.bf16.mxu0 0
        %7461 = vmatpush1.bf16.msra.mxu0 %v6728
        %7462 = vmatprep.subr.bf16.mxu0 0
        %7463 = vmatpush1.bf16.msra.mxu0 %v6736
        %7464 = vmatprep.subr.bf16.mxu0 0
        %7465 = vmatpush1.bf16.msra.mxu0 %v6744
        %7466 = vmatprep.subr.bf16.mxu0 0
        %7467 = vmatpush1.bf16.msra.mxu0 %v6752
        %7468 = vmatprep.subr.bf16.mxu0 0
        %7469 = vmatpush1.bf16.msra.mxu0 %v6760
        %7470 = vmatprep.subr.bf16.mxu0 0
        %7471 = vmatpush1.bf16.msra.mxu0 0
        %7472 = vmatprep.subr.bf16.mxu0 0
        %7473 = vmatpush1.bf16.msra.mxu0 0
        %7474 = vmatprep.subr.bf16.mxu0 0
        %7475 = vmatpush1.bf16.msra.mxu0 0
        %7476 = vmatprep.subr.bf16.mxu0 0
        %7477 = vmatpush1.bf16.msra.mxu0 0
        %7478 = vmatprep.subr.bf16.mxu0 0
        %7479 = vmatpush1.bf16.msra.mxu0 0
        %7480 = vmatprep.subr.bf16.mxu0 0
        %7481 = vmatpush1.bf16.msra.mxu0 0
        %7482 = vmatprep.subr.bf16.mxu0 0
        %7483 = vmatpush1.bf16.msra.mxu0 0
        %7484 = vmatprep.subr.bf16.mxu0 0
        %7485 = vmatpush1.bf16.msra.mxu0 0
        %7486 = vmatprep.mubr.bf16.mxu0 0
        %7487 = vmatmul.mubr.bf16.gmra.mrb[0].mxu0 %v7349
        %v7488 = vpop.f32.mrb[0].mxu0
        %v7489 = vadd.f32 0.0, %v7488
        %v7490 = vpop.f32.mrb[0].mxu0
        %v7491 = vpop.f32.mrb[0].mxu0
        %v7492 = vadd.f32 0.0, %v7491
        %v7493 = vpop.f32.mrb[0].mxu0
        %7494 = vmatprep.mubr.bf16.mxu0 0
        %7495 = vmatmul.mubr.bf16.gmra.mrb[0].mxu0 %v7350
        %v7496 = vpop.f32.mrb[0].mxu0
        %v7497 = vadd.f32 0.0, %v7496
        %v7498 = vpop.f32.mrb[0].mxu0
        %v7499 = vpop.f32.mrb[0].mxu0
        %v7500 = vadd.f32 0.0, %v7499
        %v7501 = vpop.f32.mrb[0].mxu0
        %7502 = vmatprep.mubr.bf16.mxu0 0
        %7503 = vmatmul.mubr.bf16.gmra.mrb[0].mxu0 %v7351
        %v7504 = vpop.f32.mrb[0].mxu0
        %v7505 = vadd.f32 0.0, %v7504
        %v7506 = vpop.f32.mrb[0].mxu0
        %v7507 = vpop.f32.mrb[0].mxu0
        %v7508 = vadd.f32 0.0, %v7507
        %v7509 = vpop.f32.mrb[0].mxu0
        %7510 = vmatprep.mubr.bf16.mxu0 0
        %7511 = vmatmul.mubr.bf16.gmra.mrb[0].mxu0 %v7352
        %v7512 = vpop.f32.mrb[0].mxu0
        %v7513 = vadd.f32 0.0, %v7512
        %v7514 = vpop.f32.mrb[0].mxu0
        %v7515 = vpop.f32.mrb[0].mxu0
        %v7516 = vadd.f32 0.0, %v7515
        %v7517 = vpop.f32.mrb[0].mxu0
        %7518 = vmatprep.mubr.bf16.mxu0 0
        %7519 = vmatmul.mubr.bf16.gmra.mrb[0].mxu0 %v7353
        %v7520 = vpop.f32.mrb[0].mxu0
        %v7521 = vadd.f32 0.0, %v7520
        %v7522 = vpop.f32.mrb[0].mxu0
        %v7523 = vpop.f32.mrb[0].mxu0
        %v7524 = vadd.f32 0.0, %v7523
        %v7525 = vpop.f32.mrb[0].mxu0
        %7526 = vmatprep.mubr.bf16.mxu0 0
        %7527 = vmatmul.mubr.bf16.gmra.mrb[0].mxu0 %v7354
        %v7528 = vpop.f32.mrb[0].mxu0
        %v7529 = vadd.f32 0.0, %v7528
        %v7530 = vpop.f32.mrb[0].mxu0
        %v7531 = vpop.f32.mrb[0].mxu0
        %v7532 = vadd.f32 0.0, %v7531
        %v7533 = vpop.f32.mrb[0].mxu0
        %7534 = vmatprep.mubr.bf16.mxu0 0
        %7535 = vmatmul.mubr.bf16.gmra.mrb[0].mxu0 %v7355
        %v7536 = vpop.f32.mrb[0].mxu0
        %v7537 = vadd.f32 0.0, %v7536
        %v7538 = vpop.f32.mrb[0].mxu0
        %v7539 = vpop.f32.mrb[0].mxu0
        %v7540 = vadd.f32 0.0, %v7539
        %v7541 = vpop.f32.mrb[0].mxu0
        %7542 = vmatprep.mubr.bf16.mxu0 0
        %7543 = vmatmul.mubr.bf16.gmra.mrb[0].mxu0 %v7356
        %v7544 = vpop.f32.mrb[0].mxu0
        %v7545 = vadd.f32 0.0, %v7544
        %v7546 = vpop.f32.mrb[0].mxu0
        %v7547 = vpop.f32.mrb[0].mxu0
        %v7548 = vadd.f32 0.0, %v7547
        %v7549 = vpop.f32.mrb[0].mxu0
        %7550 = vdwg.mxu0
        %v7551 = vcombine.high %v7392, 0.0
        %v7553 = vunpack.c.l.s4 1983009808
        %v7554 = vunpack.c.0.s8 %v7553
        %v7555 = vlaneseq
        %v7556 = vshrl.u32 %v7555, 7
        %v7557 = vsub.s32 %v7554, %v7556
        %v7558 = vrot.slane %v7392, %v7557
        %v7560 = vunpack.c.l.s4 1983009808
        %v7561 = vunpack.c.0.s8 %v7560
        %v7562 = vlaneseq
        %v7563 = vshrl.u32 %v7562, 7
        %v7564 = vsub.s32 %v7561, %v7563
        %v7565 = vrot.slane %v7551, %v7564
        %v7566 = vcombine.high %v7489, 0.0
        %v7568 = vunpack.c.l.s4 1983009808
        %v7569 = vunpack.c.0.s8 %v7568
        %v7570 = vlaneseq
        %v7571 = vshrl.u32 %v7570, 7
        %v7572 = vsub.s32 %v7569, %v7571
        %v7573 = vrot.slane %v7489, %v7572
        %v7575 = vunpack.c.l.s4 1983009808
        %v7576 = vunpack.c.0.s8 %v7575
        %v7577 = vlaneseq
        %v7578 = vshrl.u32 %v7577, 7
        %v7579 = vsub.s32 %v7576, %v7578
        %v7580 = vrot.slane %v7566, %v7579
        %v7581 = vcombine.low %v7558, %v7573
        %v7582 = vcombine.high %v7558, %v7573
        %v7584 = vunpack.c.l.s4 1934713408
        %v7585 = vunpack.c.0.s8 %v7584
        %v7586 = vlaneseq
        %v7587 = vshrl.u32 %v7586, 7
        %v7588 = vsub.s32 %v7585, %v7587
        %v7589 = vrot.slane %v7581, %v7588
        %v7591 = vunpack.c.l.s4 1934713408
        %v7592 = vunpack.c.0.s8 %v7591
        %v7593 = vlaneseq
        %v7594 = vshrl.u32 %v7593, 7
        %v7595 = vsub.s32 %v7592, %v7594
        %v7596 = vrot.slane %v7582, %v7595
        %v7597 = vcombine.low %v7565, %v7580
        %v7598 = vcombine.high %v7565, %v7580
        %v7600 = vunpack.c.l.s4 1934713408
        %v7601 = vunpack.c.0.s8 %v7600
        %v7602 = vlaneseq
        %v7603 = vshrl.u32 %v7602, 7
        %v7604 = vsub.s32 %v7601, %v7603
        %v7605 = vrot.slane %v7597, %v7604
        %v7607 = vunpack.c.l.s4 1934713408
        %v7608 = vunpack.c.0.s8 %v7607
        %v7609 = vlaneseq
        %v7610 = vshrl.u32 %v7609, 7
        %v7611 = vsub.s32 %v7608, %v7610
        %v7612 = vrot.slane %v7598, %v7611
        %v7613 = vcombine.high %v7589, 0.0
        %v7614 = vcombine.high %v7596, 0.0
        %v7615 = vcombine.high %v7605, 0.0
        %v7616 = vcombine.high %v7612, 0.0
        %v7617 = vcombine.high %v7395, 0.0
        %v7619 = vunpack.c.l.s4 1983009808
        %v7620 = vunpack.c.0.s8 %v7619
        %v7621 = vlaneseq
        %v7622 = vshrl.u32 %v7621, 7
        %v7623 = vsub.s32 %v7620, %v7622
        %v7624 = vrot.slane %v7395, %v7623
        %v7626 = vunpack.c.l.s4 1983009808
        %v7627 = vunpack.c.0.s8 %v7626
        %v7628 = vlaneseq
        %v7629 = vshrl.u32 %v7628, 7
        %v7630 = vsub.s32 %v7627, %v7629
        %v7631 = vrot.slane %v7617, %v7630
        %v7632 = vcombine.high %v7492, 0.0
        %v7634 = vunpack.c.l.s4 1983009808
        %v7635 = vunpack.c.0.s8 %v7634
        %v7636 = vlaneseq
        %v7637 = vshrl.u32 %v7636, 7
        %v7638 = vsub.s32 %v7635, %v7637
        %v7639 = vrot.slane %v7492, %v7638
        %v7641 = vunpack.c.l.s4 1983009808
        %v7642 = vunpack.c.0.s8 %v7641
        %v7643 = vlaneseq
        %v7644 = vshrl.u32 %v7643, 7
        %v7645 = vsub.s32 %v7642, %v7644
        %v7646 = vrot.slane %v7632, %v7645
        %v7647 = vcombine.low %v7624, %v7639
        %v7648 = vcombine.high %v7624, %v7639
        %v7650 = vunpack.c.l.s4 1934713408
        %v7651 = vunpack.c.0.s8 %v7650
        %v7652 = vlaneseq
        %v7653 = vshrl.u32 %v7652, 7
        %v7654 = vsub.s32 %v7651, %v7653
        %v7655 = vrot.slane %v7647, %v7654
        %v7657 = vunpack.c.l.s4 1934713408
        %v7658 = vunpack.c.0.s8 %v7657
        %v7659 = vlaneseq
        %v7660 = vshrl.u32 %v7659, 7
        %v7661 = vsub.s32 %v7658, %v7660
        %v7662 = vrot.slane %v7648, %v7661
        %v7663 = vcombine.low %v7631, %v7646
        %v7664 = vcombine.high %v7631, %v7646
        %v7666 = vunpack.c.l.s4 1934713408
        %v7667 = vunpack.c.0.s8 %v7666
        %v7668 = vlaneseq
        %v7669 = vshrl.u32 %v7668, 7
        %v7670 = vsub.s32 %v7667, %v7669
        %v7671 = vrot.slane %v7663, %v7670
        %v7673 = vunpack.c.l.s4 1934713408
        %v7674 = vunpack.c.0.s8 %v7673
        %v7675 = vlaneseq
        %v7676 = vshrl.u32 %v7675, 7
        %v7677 = vsub.s32 %v7674, %v7676
        %v7678 = vrot.slane %v7664, %v7677
        %v7679 = vcombine.high %v7655, 0.0
        %v7680 = vcombine.high %v7662, 0.0
        %v7681 = vcombine.high %v7671, 0.0
        %v7682 = vcombine.high %v7678, 0.0
        %v7683 = vcombine.high %v7400, 0.0
        %v7685 = vunpack.c.l.s4 1983009808
        %v7686 = vunpack.c.0.s8 %v7685
        %v7687 = vlaneseq
        %v7688 = vshrl.u32 %v7687, 7
        %v7689 = vsub.s32 %v7686, %v7688
        %v7690 = vrot.slane %v7400, %v7689
        %v7692 = vunpack.c.l.s4 1983009808
        %v7693 = vunpack.c.0.s8 %v7692
        %v7694 = vlaneseq
        %v7695 = vshrl.u32 %v7694, 7
        %v7696 = vsub.s32 %v7693, %v7695
        %v7697 = vrot.slane %v7683, %v7696
        %v7698 = vcombine.high %v7497, 0.0
        %v7700 = vunpack.c.l.s4 1983009808
        %v7701 = vunpack.c.0.s8 %v7700
        %v7702 = vlaneseq
        %v7703 = vshrl.u32 %v7702, 7
        %v7704 = vsub.s32 %v7701, %v7703
        %v7705 = vrot.slane %v7497, %v7704
        %v7707 = vunpack.c.l.s4 1983009808
        %v7708 = vunpack.c.0.s8 %v7707
        %v7709 = vlaneseq
        %v7710 = vshrl.u32 %v7709, 7
        %v7711 = vsub.s32 %v7708, %v7710
        %v7712 = vrot.slane %v7698, %v7711
        %v7713 = vcombine.low %v7690, %v7705
        %v7714 = vcombine.high %v7690, %v7705
        %v7716 = vunpack.c.l.s4 1934713408
        %v7717 = vunpack.c.0.s8 %v7716
        %v7718 = vlaneseq
        %v7719 = vshrl.u32 %v7718, 7
        %v7720 = vsub.s32 %v7717, %v7719
        %v7721 = vrot.slane %v7713, %v7720
        %v7723 = vunpack.c.l.s4 1934713408
        %v7724 = vunpack.c.0.s8 %v7723
        %v7725 = vlaneseq
        %v7726 = vshrl.u32 %v7725, 7
        %v7727 = vsub.s32 %v7724, %v7726
        %v7728 = vrot.slane %v7714, %v7727
        %v7729 = vcombine.low %v7697, %v7712
        %v7730 = vcombine.high %v7697, %v7712
        %v7732 = vunpack.c.l.s4 1934713408
        %v7733 = vunpack.c.0.s8 %v7732
        %v7734 = vlaneseq
        %v7735 = vshrl.u32 %v7734, 7
        %v7736 = vsub.s32 %v7733, %v7735
        %v7737 = vrot.slane %v7729, %v7736
        %v7739 = vunpack.c.l.s4 1934713408
        %v7740 = vunpack.c.0.s8 %v7739
        %v7741 = vlaneseq
        %v7742 = vshrl.u32 %v7741, 7
        %v7743 = vsub.s32 %v7740, %v7742
        %v7744 = vrot.slane %v7730, %v7743
        %v7745 = vcombine.high %v7721, 0.0
        %v7746 = vcombine.high %v7728, 0.0
        %v7747 = vcombine.high %v7737, 0.0
        %v7748 = vcombine.high %v7744, 0.0
        %v7749 = vcombine.high %v7403, 0.0
        %v7751 = vunpack.c.l.s4 1983009808
        %v7752 = vunpack.c.0.s8 %v7751
        %v7753 = vlaneseq
        %v7754 = vshrl.u32 %v7753, 7
        %v7755 = vsub.s32 %v7752, %v7754
        %v7756 = vrot.slane %v7403, %v7755
        %v7758 = vunpack.c.l.s4 1983009808
        %v7759 = vunpack.c.0.s8 %v7758
        %v7760 = vlaneseq
        %v7761 = vshrl.u32 %v7760, 7
        %v7762 = vsub.s32 %v7759, %v7761
        %v7763 = vrot.slane %v7749, %v7762
        %v7764 = vcombine.high %v7500, 0.0
        %v7766 = vunpack.c.l.s4 1983009808
        %v7767 = vunpack.c.0.s8 %v7766
        %v7768 = vlaneseq
        %v7769 = vshrl.u32 %v7768, 7
        %v7770 = vsub.s32 %v7767, %v7769
        %v7771 = vrot.slane %v7500, %v7770
        %v7773 = vunpack.c.l.s4 1983009808
        %v7774 = vunpack.c.0.s8 %v7773
        %v7775 = vlaneseq
        %v7776 = vshrl.u32 %v7775, 7
        %v7777 = vsub.s32 %v7774, %v7776
        %v7778 = vrot.slane %v7764, %v7777
        %v7779 = vcombine.low %v7756, %v7771
        %v7780 = vcombine.high %v7756, %v7771
        %v7782 = vunpack.c.l.s4 1934713408
        %v7783 = vunpack.c.0.s8 %v7782
        %v7784 = vlaneseq
        %v7785 = vshrl.u32 %v7784, 7
        %v7786 = vsub.s32 %v7783, %v7785
        %v7787 = vrot.slane %v7779, %v7786
        %v7789 = vunpack.c.l.s4 1934713408
        %v7790 = vunpack.c.0.s8 %v7789
        %v7791 = vlaneseq
        %v7792 = vshrl.u32 %v7791, 7
        %v7793 = vsub.s32 %v7790, %v7792
        %v7794 = vrot.slane %v7780, %v7793
        %v7795 = vcombine.low %v7763, %v7778
        %v7796 = vcombine.high %v7763, %v7778
        %v7798 = vunpack.c.l.s4 1934713408
        %v7799 = vunpack.c.0.s8 %v7798
        %v7800 = vlaneseq
        %v7801 = vshrl.u32 %v7800, 7
        %v7802 = vsub.s32 %v7799, %v7801
        %v7803 = vrot.slane %v7795, %v7802
        %v7805 = vunpack.c.l.s4 1934713408
        %v7806 = vunpack.c.0.s8 %v7805
        %v7807 = vlaneseq
        %v7808 = vshrl.u32 %v7807, 7
        %v7809 = vsub.s32 %v7806, %v7808
        %v7810 = vrot.slane %v7796, %v7809
        %v7811 = vcombine.high %v7787, 0.0
        %v7812 = vcombine.high %v7794, 0.0
        %v7813 = vcombine.high %v7803, 0.0
        %v7814 = vcombine.high %v7810, 0.0
        %v7815 = vcombine.high %v7408, 0.0
        %v7817 = vunpack.c.l.s4 1983009808
        %v7818 = vunpack.c.0.s8 %v7817
        %v7819 = vlaneseq
        %v7820 = vshrl.u32 %v7819, 7
        %v7821 = vsub.s32 %v7818, %v7820
        %v7822 = vrot.slane %v7408, %v7821
        %v7824 = vunpack.c.l.s4 1983009808
        %v7825 = vunpack.c.0.s8 %v7824
        %v7826 = vlaneseq
        %v7827 = vshrl.u32 %v7826, 7
        %v7828 = vsub.s32 %v7825, %v7827
        %v7829 = vrot.slane %v7815, %v7828
        %v7830 = vcombine.high %v7505, 0.0
        %v7832 = vunpack.c.l.s4 1983009808
        %v7833 = vunpack.c.0.s8 %v7832
        %v7834 = vlaneseq
        %v7835 = vshrl.u32 %v7834, 7
        %v7836 = vsub.s32 %v7833, %v7835
        %v7837 = vrot.slane %v7505, %v7836
        %v7839 = vunpack.c.l.s4 1983009808
        %v7840 = vunpack.c.0.s8 %v7839
        %v7841 = vlaneseq
        %v7842 = vshrl.u32 %v7841, 7
        %v7843 = vsub.s32 %v7840, %v7842
        %v7844 = vrot.slane %v7830, %v7843
        %v7845 = vcombine.low %v7822, %v7837
        %v7846 = vcombine.high %v7822, %v7837
        %v7848 = vunpack.c.l.s4 1934713408
        %v7849 = vunpack.c.0.s8 %v7848
        %v7850 = vlaneseq
        %v7851 = vshrl.u32 %v7850, 7
        %v7852 = vsub.s32 %v7849, %v7851
        %v7853 = vrot.slane %v7845, %v7852
        %v7855 = vunpack.c.l.s4 1934713408
        %v7856 = vunpack.c.0.s8 %v7855
        %v7857 = vlaneseq
        %v7858 = vshrl.u32 %v7857, 7
        %v7859 = vsub.s32 %v7856, %v7858
        %v7860 = vrot.slane %v7846, %v7859
        %v7861 = vcombine.low %v7829, %v7844
        %v7862 = vcombine.high %v7829, %v7844
        %v7864 = vunpack.c.l.s4 1934713408
        %v7865 = vunpack.c.0.s8 %v7864
        %v7866 = vlaneseq
        %v7867 = vshrl.u32 %v7866, 7
        %v7868 = vsub.s32 %v7865, %v7867
        %v7869 = vrot.slane %v7861, %v7868
        %v7871 = vunpack.c.l.s4 1934713408
        %v7872 = vunpack.c.0.s8 %v7871
        %v7873 = vlaneseq
        %v7874 = vshrl.u32 %v7873, 7
        %v7875 = vsub.s32 %v7872, %v7874
        %v7876 = vrot.slane %v7862, %v7875
        %v7877 = vcombine.high %v7853, 0.0
        %v7878 = vcombine.high %v7860, 0.0
        %v7879 = vcombine.high %v7869, 0.0
        %v7880 = vcombine.high %v7876, 0.0
        %v7881 = vcombine.high %v7411, 0.0
        %v7883 = vunpack.c.l.s4 1983009808
        %v7884 = vunpack.c.0.s8 %v7883
        %v7885 = vlaneseq
        %v7886 = vshrl.u32 %v7885, 7
        %v7887 = vsub.s32 %v7884, %v7886
        %v7888 = vrot.slane %v7411, %v7887
        %v7890 = vunpack.c.l.s4 1983009808
        %v7891 = vunpack.c.0.s8 %v7890
        %v7892 = vlaneseq
        %v7893 = vshrl.u32 %v7892, 7
        %v7894 = vsub.s32 %v7891, %v7893
        %v7895 = vrot.slane %v7881, %v7894
        %v7896 = vcombine.high %v7508, 0.0
        %v7898 = vunpack.c.l.s4 1983009808
        %v7899 = vunpack.c.0.s8 %v7898
        %v7900 = vlaneseq
        %v7901 = vshrl.u32 %v7900, 7
        %v7902 = vsub.s32 %v7899, %v7901
        %v7903 = vrot.slane %v7508, %v7902
        %v7905 = vunpack.c.l.s4 1983009808
        %v7906 = vunpack.c.0.s8 %v7905
        %v7907 = vlaneseq
        %v7908 = vshrl.u32 %v7907, 7
        %v7909 = vsub.s32 %v7906, %v7908
        %v7910 = vrot.slane %v7896, %v7909
        %v7911 = vcombine.low %v7888, %v7903
        %v7912 = vcombine.high %v7888, %v7903
        %v7914 = vunpack.c.l.s4 1934713408
        %v7915 = vunpack.c.0.s8 %v7914
        %v7916 = vlaneseq
        %v7917 = vshrl.u32 %v7916, 7
        %v7918 = vsub.s32 %v7915, %v7917
        %v7919 = vrot.slane %v7911, %v7918
        %v7921 = vunpack.c.l.s4 1934713408
        %v7922 = vunpack.c.0.s8 %v7921
        %v7923 = vlaneseq
        %v7924 = vshrl.u32 %v7923, 7
        %v7925 = vsub.s32 %v7922, %v7924
        %v7926 = vrot.slane %v7912, %v7925
        %v7927 = vcombine.low %v7895, %v7910
        %v7928 = vcombine.high %v7895, %v7910
        %v7930 = vunpack.c.l.s4 1934713408
        %v7931 = vunpack.c.0.s8 %v7930
        %v7932 = vlaneseq
        %v7933 = vshrl.u32 %v7932, 7
        %v7934 = vsub.s32 %v7931, %v7933
        %v7935 = vrot.slane %v7927, %v7934
        %v7937 = vunpack.c.l.s4 1934713408
        %v7938 = vunpack.c.0.s8 %v7937
        %v7939 = vlaneseq
        %v7940 = vshrl.u32 %v7939, 7
        %v7941 = vsub.s32 %v7938, %v7940
        %v7942 = vrot.slane %v7928, %v7941
        %v7943 = vcombine.high %v7919, 0.0
        %v7944 = vcombine.high %v7926, 0.0
        %v7945 = vcombine.high %v7935, 0.0
        %v7946 = vcombine.high %v7942, 0.0
        %v7947 = vcombine.high %v7416, 0.0
        %v7949 = vunpack.c.l.s4 1983009808
        %v7950 = vunpack.c.0.s8 %v7949
        %v7951 = vlaneseq
        %v7952 = vshrl.u32 %v7951, 7
        %v7953 = vsub.s32 %v7950, %v7952
        %v7954 = vrot.slane %v7416, %v7953
        %v7956 = vunpack.c.l.s4 1983009808
        %v7957 = vunpack.c.0.s8 %v7956
        %v7958 = vlaneseq
        %v7959 = vshrl.u32 %v7958, 7
        %v7960 = vsub.s32 %v7957, %v7959
        %v7961 = vrot.slane %v7947, %v7960
        %v7962 = vcombine.high %v7513, 0.0
        %v7964 = vunpack.c.l.s4 1983009808
        %v7965 = vunpack.c.0.s8 %v7964
        %v7966 = vlaneseq
        %v7967 = vshrl.u32 %v7966, 7
        %v7968 = vsub.s32 %v7965, %v7967
        %v7969 = vrot.slane %v7513, %v7968
        %v7971 = vunpack.c.l.s4 1983009808
        %v7972 = vunpack.c.0.s8 %v7971
        %v7973 = vlaneseq
        %v7974 = vshrl.u32 %v7973, 7
        %v7975 = vsub.s32 %v7972, %v7974
        %v7976 = vrot.slane %v7962, %v7975
        %v7977 = vcombine.low %v7954, %v7969
        %v7978 = vcombine.high %v7954, %v7969
        %v7980 = vunpack.c.l.s4 1934713408
        %v7981 = vunpack.c.0.s8 %v7980
        %v7982 = vlaneseq
        %v7983 = vshrl.u32 %v7982, 7
        %v7984 = vsub.s32 %v7981, %v7983
        %v7985 = vrot.slane %v7977, %v7984
        %v7987 = vunpack.c.l.s4 1934713408
        %v7988 = vunpack.c.0.s8 %v7987
        %v7989 = vlaneseq
        %v7990 = vshrl.u32 %v7989, 7
        %v7991 = vsub.s32 %v7988, %v7990
        %v7992 = vrot.slane %v7978, %v7991
        %v7993 = vcombine.low %v7961, %v7976
        %v7994 = vcombine.high %v7961, %v7976
        %v7996 = vunpack.c.l.s4 1934713408
        %v7997 = vunpack.c.0.s8 %v7996
        %v7998 = vlaneseq
        %v7999 = vshrl.u32 %v7998, 7
        %v8000 = vsub.s32 %v7997, %v7999
        %v8001 = vrot.slane %v7993, %v8000
        %v8003 = vunpack.c.l.s4 1934713408
        %v8004 = vunpack.c.0.s8 %v8003
        %v8005 = vlaneseq
        %v8006 = vshrl.u32 %v8005, 7
        %v8007 = vsub.s32 %v8004, %v8006
        %v8008 = vrot.slane %v7994, %v8007
        %v8009 = vcombine.high %v7985, 0.0
        %v8010 = vcombine.high %v7992, 0.0
        %v8011 = vcombine.high %v8001, 0.0
        %v8012 = vcombine.high %v8008, 0.0
        %v8013 = vcombine.high %v7419, 0.0
        %v8015 = vunpack.c.l.s4 1983009808
        %v8016 = vunpack.c.0.s8 %v8015
        %v8017 = vlaneseq
        %v8018 = vshrl.u32 %v8017, 7
        %v8019 = vsub.s32 %v8016, %v8018
        %v8020 = vrot.slane %v7419, %v8019
        %v8022 = vunpack.c.l.s4 1983009808
        %v8023 = vunpack.c.0.s8 %v8022
        %v8024 = vlaneseq
        %v8025 = vshrl.u32 %v8024, 7
        %v8026 = vsub.s32 %v8023, %v8025
        %v8027 = vrot.slane %v8013, %v8026
        %v8028 = vcombine.high %v7516, 0.0
        %v8030 = vunpack.c.l.s4 1983009808
        %v8031 = vunpack.c.0.s8 %v8030
        %v8032 = vlaneseq
        %v8033 = vshrl.u32 %v8032, 7
        %v8034 = vsub.s32 %v8031, %v8033
        %v8035 = vrot.slane %v7516, %v8034
        %v8037 = vunpack.c.l.s4 1983009808
        %v8038 = vunpack.c.0.s8 %v8037
        %v8039 = vlaneseq
        %v8040 = vshrl.u32 %v8039, 7
        %v8041 = vsub.s32 %v8038, %v8040
        %v8042 = vrot.slane %v8028, %v8041
        %v8043 = vcombine.low %v8020, %v8035
        %v8044 = vcombine.high %v8020, %v8035
        %v8046 = vunpack.c.l.s4 1934713408
        %v8047 = vunpack.c.0.s8 %v8046
        %v8048 = vlaneseq
        %v8049 = vshrl.u32 %v8048, 7
        %v8050 = vsub.s32 %v8047, %v8049
        %v8051 = vrot.slane %v8043, %v8050
        %v8053 = vunpack.c.l.s4 1934713408
        %v8054 = vunpack.c.0.s8 %v8053
        %v8055 = vlaneseq
        %v8056 = vshrl.u32 %v8055, 7
        %v8057 = vsub.s32 %v8054, %v8056
        %v8058 = vrot.slane %v8044, %v8057
        %v8059 = vcombine.low %v8027, %v8042
        %v8060 = vcombine.high %v8027, %v8042
        %v8062 = vunpack.c.l.s4 1934713408
        %v8063 = vunpack.c.0.s8 %v8062
        %v8064 = vlaneseq
        %v8065 = vshrl.u32 %v8064, 7
        %v8066 = vsub.s32 %v8063, %v8065
        %v8067 = vrot.slane %v8059, %v8066
        %v8069 = vunpack.c.l.s4 1934713408
        %v8070 = vunpack.c.0.s8 %v8069
        %v8071 = vlaneseq
        %v8072 = vshrl.u32 %v8071, 7
        %v8073 = vsub.s32 %v8070, %v8072
        %v8074 = vrot.slane %v8060, %v8073
        %v8075 = vcombine.high %v8051, 0.0
        %v8076 = vcombine.high %v8058, 0.0
        %v8077 = vcombine.high %v8067, 0.0
        %v8078 = vcombine.high %v8074, 0.0
        %v8079 = vcombine.high %v7424, 0.0
        %v8081 = vunpack.c.l.s4 1983009808
        %v8082 = vunpack.c.0.s8 %v8081
        %v8083 = vlaneseq
        %v8084 = vshrl.u32 %v8083, 7
        %v8085 = vsub.s32 %v8082, %v8084
        %v8086 = vrot.slane %v7424, %v8085
        %v8088 = vunpack.c.l.s4 1983009808
        %v8089 = vunpack.c.0.s8 %v8088
        %v8090 = vlaneseq
        %v8091 = vshrl.u32 %v8090, 7
        %v8092 = vsub.s32 %v8089, %v8091
        %v8093 = vrot.slane %v8079, %v8092
        %v8094 = vcombine.high %v7521, 0.0
        %v8096 = vunpack.c.l.s4 1983009808
        %v8097 = vunpack.c.0.s8 %v8096
        %v8098 = vlaneseq
        %v8099 = vshrl.u32 %v8098, 7
        %v8100 = vsub.s32 %v8097, %v8099
        %v8101 = vrot.slane %v7521, %v8100
        %v8103 = vunpack.c.l.s4 1983009808
        %v8104 = vunpack.c.0.s8 %v8103
        %v8105 = vlaneseq
        %v8106 = vshrl.u32 %v8105, 7
        %v8107 = vsub.s32 %v8104, %v8106
        %v8108 = vrot.slane %v8094, %v8107
        %v8109 = vcombine.low %v8086, %v8101
        %v8110 = vcombine.high %v8086, %v8101
        %v8112 = vunpack.c.l.s4 1934713408
        %v8113 = vunpack.c.0.s8 %v8112
        %v8114 = vlaneseq
        %v8115 = vshrl.u32 %v8114, 7
        %v8116 = vsub.s32 %v8113, %v8115
        %v8117 = vrot.slane %v8109, %v8116
        %v8119 = vunpack.c.l.s4 1934713408
        %v8120 = vunpack.c.0.s8 %v8119
        %v8121 = vlaneseq
        %v8122 = vshrl.u32 %v8121, 7
        %v8123 = vsub.s32 %v8120, %v8122
        %v8124 = vrot.slane %v8110, %v8123
        %v8125 = vcombine.low %v8093, %v8108
        %v8126 = vcombine.high %v8093, %v8108
        %v8128 = vunpack.c.l.s4 1934713408
        %v8129 = vunpack.c.0.s8 %v8128
        %v8130 = vlaneseq
        %v8131 = vshrl.u32 %v8130, 7
        %v8132 = vsub.s32 %v8129, %v8131
        %v8133 = vrot.slane %v8125, %v8132
        %v8135 = vunpack.c.l.s4 1934713408
        %v8136 = vunpack.c.0.s8 %v8135
        %v8137 = vlaneseq
        %v8138 = vshrl.u32 %v8137, 7
        %v8139 = vsub.s32 %v8136, %v8138
        %v8140 = vrot.slane %v8126, %v8139
        %v8141 = vcombine.high %v8117, 0.0
        %v8142 = vcombine.high %v8124, 0.0
        %v8143 = vcombine.high %v8133, 0.0
        %v8144 = vcombine.high %v8140, 0.0
        %v8145 = vcombine.high %v7427, 0.0
        %v8147 = vunpack.c.l.s4 1983009808
        %v8148 = vunpack.c.0.s8 %v8147
        %v8149 = vlaneseq
        %v8150 = vshrl.u32 %v8149, 7
        %v8151 = vsub.s32 %v8148, %v8150
        %v8152 = vrot.slane %v7427, %v8151
        %v8154 = vunpack.c.l.s4 1983009808
        %v8155 = vunpack.c.0.s8 %v8154
        %v8156 = vlaneseq
        %v8157 = vshrl.u32 %v8156, 7
        %v8158 = vsub.s32 %v8155, %v8157
        %v8159 = vrot.slane %v8145, %v8158
        %v8160 = vcombine.high %v7524, 0.0
        %v8162 = vunpack.c.l.s4 1983009808
        %v8163 = vunpack.c.0.s8 %v8162
        %v8164 = vlaneseq
        %v8165 = vshrl.u32 %v8164, 7
        %v8166 = vsub.s32 %v8163, %v8165
        %v8167 = vrot.slane %v7524, %v8166
        %v8169 = vunpack.c.l.s4 1983009808
        %v8170 = vunpack.c.0.s8 %v8169
        %v8171 = vlaneseq
        %v8172 = vshrl.u32 %v8171, 7
        %v8173 = vsub.s32 %v8170, %v8172
        %v8174 = vrot.slane %v8160, %v8173
        %v8175 = vcombine.low %v8152, %v8167
        %v8176 = vcombine.high %v8152, %v8167
        %v8178 = vunpack.c.l.s4 1934713408
        %v8179 = vunpack.c.0.s8 %v8178
        %v8180 = vlaneseq
        %v8181 = vshrl.u32 %v8180, 7
        %v8182 = vsub.s32 %v8179, %v8181
        %v8183 = vrot.slane %v8175, %v8182
        %v8185 = vunpack.c.l.s4 1934713408
        %v8186 = vunpack.c.0.s8 %v8185
        %v8187 = vlaneseq
        %v8188 = vshrl.u32 %v8187, 7
        %v8189 = vsub.s32 %v8186, %v8188
        %v8190 = vrot.slane %v8176, %v8189
        %v8191 = vcombine.low %v8159, %v8174
        %v8192 = vcombine.high %v8159, %v8174
        %v8194 = vunpack.c.l.s4 1934713408
        %v8195 = vunpack.c.0.s8 %v8194
        %v8196 = vlaneseq
        %v8197 = vshrl.u32 %v8196, 7
        %v8198 = vsub.s32 %v8195, %v8197
        %v8199 = vrot.slane %v8191, %v8198
        %v8201 = vunpack.c.l.s4 1934713408
        %v8202 = vunpack.c.0.s8 %v8201
        %v8203 = vlaneseq
        %v8204 = vshrl.u32 %v8203, 7
        %v8205 = vsub.s32 %v8202, %v8204
        %v8206 = vrot.slane %v8192, %v8205
        %v8207 = vcombine.high %v8183, 0.0
        %v8208 = vcombine.high %v8190, 0.0
        %v8209 = vcombine.high %v8199, 0.0
        %v8210 = vcombine.high %v8206, 0.0
        %v8211 = vcombine.high %v7432, 0.0
        %v8213 = vunpack.c.l.s4 1983009808
        %v8214 = vunpack.c.0.s8 %v8213
        %v8215 = vlaneseq
        %v8216 = vshrl.u32 %v8215, 7
        %v8217 = vsub.s32 %v8214, %v8216
        %v8218 = vrot.slane %v7432, %v8217
        %v8220 = vunpack.c.l.s4 1983009808
        %v8221 = vunpack.c.0.s8 %v8220
        %v8222 = vlaneseq
        %v8223 = vshrl.u32 %v8222, 7
        %v8224 = vsub.s32 %v8221, %v8223
        %v8225 = vrot.slane %v8211, %v8224
        %v8226 = vcombine.high %v7529, 0.0
        %v8228 = vunpack.c.l.s4 1983009808
        %v8229 = vunpack.c.0.s8 %v8228
        %v8230 = vlaneseq
        %v8231 = vshrl.u32 %v8230, 7
        %v8232 = vsub.s32 %v8229, %v8231
        %v8233 = vrot.slane %v7529, %v8232
        %v8235 = vunpack.c.l.s4 1983009808
        %v8236 = vunpack.c.0.s8 %v8235
        %v8237 = vlaneseq
        %v8238 = vshrl.u32 %v8237, 7
        %v8239 = vsub.s32 %v8236, %v8238
        %v8240 = vrot.slane %v8226, %v8239
        %v8241 = vcombine.low %v8218, %v8233
        %v8242 = vcombine.high %v8218, %v8233
        %v8244 = vunpack.c.l.s4 1934713408
        %v8245 = vunpack.c.0.s8 %v8244
        %v8246 = vlaneseq
        %v8247 = vshrl.u32 %v8246, 7
        %v8248 = vsub.s32 %v8245, %v8247
        %v8249 = vrot.slane %v8241, %v8248
        %v8251 = vunpack.c.l.s4 1934713408
        %v8252 = vunpack.c.0.s8 %v8251
        %v8253 = vlaneseq
        %v8254 = vshrl.u32 %v8253, 7
        %v8255 = vsub.s32 %v8252, %v8254
        %v8256 = vrot.slane %v8242, %v8255
        %v8257 = vcombine.low %v8225, %v8240
        %v8258 = vcombine.high %v8225, %v8240
        %v8260 = vunpack.c.l.s4 1934713408
        %v8261 = vunpack.c.0.s8 %v8260
        %v8262 = vlaneseq
        %v8263 = vshrl.u32 %v8262, 7
        %v8264 = vsub.s32 %v8261, %v8263
        %v8265 = vrot.slane %v8257, %v8264
        %v8267 = vunpack.c.l.s4 1934713408
        %v8268 = vunpack.c.0.s8 %v8267
        %v8269 = vlaneseq
        %v8270 = vshrl.u32 %v8269, 7
        %v8271 = vsub.s32 %v8268, %v8270
        %v8272 = vrot.slane %v8258, %v8271
        %v8273 = vcombine.high %v8249, 0.0
        %v8274 = vcombine.high %v8256, 0.0
        %v8275 = vcombine.high %v8265, 0.0
        %v8276 = vcombine.high %v8272, 0.0
        %v8277 = vcombine.high %v7435, 0.0
        %v8279 = vunpack.c.l.s4 1983009808
        %v8280 = vunpack.c.0.s8 %v8279
        %v8281 = vlaneseq
        %v8282 = vshrl.u32 %v8281, 7
        %v8283 = vsub.s32 %v8280, %v8282
        %v8284 = vrot.slane %v7435, %v8283
        %v8286 = vunpack.c.l.s4 1983009808
        %v8287 = vunpack.c.0.s8 %v8286
        %v8288 = vlaneseq
        %v8289 = vshrl.u32 %v8288, 7
        %v8290 = vsub.s32 %v8287, %v8289
        %v8291 = vrot.slane %v8277, %v8290
        %v8292 = vcombine.high %v7532, 0.0
        %v8294 = vunpack.c.l.s4 1983009808
        %v8295 = vunpack.c.0.s8 %v8294
        %v8296 = vlaneseq
        %v8297 = vshrl.u32 %v8296, 7
        %v8298 = vsub.s32 %v8295, %v8297
        %v8299 = vrot.slane %v7532, %v8298
        %v8301 = vunpack.c.l.s4 1983009808
        %v8302 = vunpack.c.0.s8 %v8301
        %v8303 = vlaneseq
        %v8304 = vshrl.u32 %v8303, 7
        %v8305 = vsub.s32 %v8302, %v8304
        %v8306 = vrot.slane %v8292, %v8305
        %v8307 = vcombine.low %v8284, %v8299
        %v8308 = vcombine.high %v8284, %v8299
        %v8310 = vunpack.c.l.s4 1934713408
        %v8311 = vunpack.c.0.s8 %v8310
        %v8312 = vlaneseq
        %v8313 = vshrl.u32 %v8312, 7
        %v8314 = vsub.s32 %v8311, %v8313
        %v8315 = vrot.slane %v8307, %v8314
        %v8317 = vunpack.c.l.s4 1934713408
        %v8318 = vunpack.c.0.s8 %v8317
        %v8319 = vlaneseq
        %v8320 = vshrl.u32 %v8319, 7
        %v8321 = vsub.s32 %v8318, %v8320
        %v8322 = vrot.slane %v8308, %v8321
        %v8323 = vcombine.low %v8291, %v8306
        %v8324 = vcombine.high %v8291, %v8306
        %v8326 = vunpack.c.l.s4 1934713408
        %v8327 = vunpack.c.0.s8 %v8326
        %v8328 = vlaneseq
        %v8329 = vshrl.u32 %v8328, 7
        %v8330 = vsub.s32 %v8327, %v8329
        %v8331 = vrot.slane %v8323, %v8330
        %v8333 = vunpack.c.l.s4 1934713408
        %v8334 = vunpack.c.0.s8 %v8333
        %v8335 = vlaneseq
        %v8336 = vshrl.u32 %v8335, 7
        %v8337 = vsub.s32 %v8334, %v8336
        %v8338 = vrot.slane %v8324, %v8337
        %v8339 = vcombine.high %v8315, 0.0
        %v8340 = vcombine.high %v8322, 0.0
        %v8341 = vcombine.high %v8331, 0.0
        %v8342 = vcombine.high %v8338, 0.0
        %v8343 = vcombine.high %v7440, 0.0
        %v8345 = vunpack.c.l.s4 1983009808
        %v8346 = vunpack.c.0.s8 %v8345
        %v8347 = vlaneseq
        %v8348 = vshrl.u32 %v8347, 7
        %v8349 = vsub.s32 %v8346, %v8348
        %v8350 = vrot.slane %v7440, %v8349
        %v8352 = vunpack.c.l.s4 1983009808
        %v8353 = vunpack.c.0.s8 %v8352
        %v8354 = vlaneseq
        %v8355 = vshrl.u32 %v8354, 7
        %v8356 = vsub.s32 %v8353, %v8355
        %v8357 = vrot.slane %v8343, %v8356
        %v8358 = vcombine.high %v7537, 0.0
        %v8360 = vunpack.c.l.s4 1983009808
        %v8361 = vunpack.c.0.s8 %v8360
        %v8362 = vlaneseq
        %v8363 = vshrl.u32 %v8362, 7
        %v8364 = vsub.s32 %v8361, %v8363
        %v8365 = vrot.slane %v7537, %v8364
        %v8367 = vunpack.c.l.s4 1983009808
        %v8368 = vunpack.c.0.s8 %v8367
        %v8369 = vlaneseq
        %v8370 = vshrl.u32 %v8369, 7
        %v8371 = vsub.s32 %v8368, %v8370
        %v8372 = vrot.slane %v8358, %v8371
        %v8373 = vcombine.low %v8350, %v8365
        %v8374 = vcombine.high %v8350, %v8365
        %v8376 = vunpack.c.l.s4 1934713408
        %v8377 = vunpack.c.0.s8 %v8376
        %v8378 = vlaneseq
        %v8379 = vshrl.u32 %v8378, 7
        %v8380 = vsub.s32 %v8377, %v8379
        %v8381 = vrot.slane %v8373, %v8380
        %v8383 = vunpack.c.l.s4 1934713408
        %v8384 = vunpack.c.0.s8 %v8383
        %v8385 = vlaneseq
        %v8386 = vshrl.u32 %v8385, 7
        %v8387 = vsub.s32 %v8384, %v8386
        %v8388 = vrot.slane %v8374, %v8387
        %v8389 = vcombine.low %v8357, %v8372
        %v8390 = vcombine.high %v8357, %v8372
        %v8392 = vunpack.c.l.s4 1934713408
        %v8393 = vunpack.c.0.s8 %v8392
        %v8394 = vlaneseq
        %v8395 = vshrl.u32 %v8394, 7
        %v8396 = vsub.s32 %v8393, %v8395
        %v8397 = vrot.slane %v8389, %v8396
        %v8399 = vunpack.c.l.s4 1934713408
        %v8400 = vunpack.c.0.s8 %v8399
        %v8401 = vlaneseq
        %v8402 = vshrl.u32 %v8401, 7
        %v8403 = vsub.s32 %v8400, %v8402
        %v8404 = vrot.slane %v8390, %v8403
        %v8405 = vcombine.high %v8381, 0.0
        %v8406 = vcombine.high %v8388, 0.0
        %v8407 = vcombine.high %v8397, 0.0
        %v8408 = vcombine.high %v8404, 0.0
        %v8409 = vcombine.high %v7443, 0.0
        %v8411 = vunpack.c.l.s4 1983009808
        %v8412 = vunpack.c.0.s8 %v8411
        %v8413 = vlaneseq
        %v8414 = vshrl.u32 %v8413, 7
        %v8415 = vsub.s32 %v8412, %v8414
        %v8416 = vrot.slane %v7443, %v8415
        %v8418 = vunpack.c.l.s4 1983009808
        %v8419 = vunpack.c.0.s8 %v8418
        %v8420 = vlaneseq
        %v8421 = vshrl.u32 %v8420, 7
        %v8422 = vsub.s32 %v8419, %v8421
        %v8423 = vrot.slane %v8409, %v8422
        %v8424 = vcombine.high %v7540, 0.0
        %v8426 = vunpack.c.l.s4 1983009808
        %v8427 = vunpack.c.0.s8 %v8426
        %v8428 = vlaneseq
        %v8429 = vshrl.u32 %v8428, 7
        %v8430 = vsub.s32 %v8427, %v8429
        %v8431 = vrot.slane %v7540, %v8430
        %v8433 = vunpack.c.l.s4 1983009808
        %v8434 = vunpack.c.0.s8 %v8433
        %v8435 = vlaneseq
        %v8436 = vshrl.u32 %v8435, 7
        %v8437 = vsub.s32 %v8434, %v8436
        %v8438 = vrot.slane %v8424, %v8437
        %v8439 = vcombine.low %v8416, %v8431
        %v8440 = vcombine.high %v8416, %v8431
        %v8442 = vunpack.c.l.s4 1934713408
        %v8443 = vunpack.c.0.s8 %v8442
        %v8444 = vlaneseq
        %v8445 = vshrl.u32 %v8444, 7
        %v8446 = vsub.s32 %v8443, %v8445
        %v8447 = vrot.slane %v8439, %v8446
        %v8449 = vunpack.c.l.s4 1934713408
        %v8450 = vunpack.c.0.s8 %v8449
        %v8451 = vlaneseq
        %v8452 = vshrl.u32 %v8451, 7
        %v8453 = vsub.s32 %v8450, %v8452
        %v8454 = vrot.slane %v8440, %v8453
        %v8455 = vcombine.low %v8423, %v8438
        %v8456 = vcombine.high %v8423, %v8438
        %v8458 = vunpack.c.l.s4 1934713408
        %v8459 = vunpack.c.0.s8 %v8458
        %v8460 = vlaneseq
        %v8461 = vshrl.u32 %v8460, 7
        %v8462 = vsub.s32 %v8459, %v8461
        %v8463 = vrot.slane %v8455, %v8462
        %v8465 = vunpack.c.l.s4 1934713408
        %v8466 = vunpack.c.0.s8 %v8465
        %v8467 = vlaneseq
        %v8468 = vshrl.u32 %v8467, 7
        %v8469 = vsub.s32 %v8466, %v8468
        %v8470 = vrot.slane %v8456, %v8469
        %v8471 = vcombine.high %v8447, 0.0
        %v8472 = vcombine.high %v8454, 0.0
        %v8473 = vcombine.high %v8463, 0.0
        %v8474 = vcombine.high %v8470, 0.0
        %v8475 = vcombine.high %v7448, 0.0
        %v8477 = vunpack.c.l.s4 1983009808
        %v8478 = vunpack.c.0.s8 %v8477
        %v8479 = vlaneseq
        %v8480 = vshrl.u32 %v8479, 7
        %v8481 = vsub.s32 %v8478, %v8480
        %v8482 = vrot.slane %v7448, %v8481
        %v8484 = vunpack.c.l.s4 1983009808
        %v8485 = vunpack.c.0.s8 %v8484
        %v8486 = vlaneseq
        %v8487 = vshrl.u32 %v8486, 7
        %v8488 = vsub.s32 %v8485, %v8487
        %v8489 = vrot.slane %v8475, %v8488
        %v8490 = vcombine.high %v7545, 0.0
        %v8492 = vunpack.c.l.s4 1983009808
        %v8493 = vunpack.c.0.s8 %v8492
        %v8494 = vlaneseq
        %v8495 = vshrl.u32 %v8494, 7
        %v8496 = vsub.s32 %v8493, %v8495
        %v8497 = vrot.slane %v7545, %v8496
        %v8499 = vunpack.c.l.s4 1983009808
        %v8500 = vunpack.c.0.s8 %v8499
        %v8501 = vlaneseq
        %v8502 = vshrl.u32 %v8501, 7
        %v8503 = vsub.s32 %v8500, %v8502
        %v8504 = vrot.slane %v8490, %v8503
        %v8505 = vcombine.low %v8482, %v8497
        %v8506 = vcombine.high %v8482, %v8497
        %v8508 = vunpack.c.l.s4 1934713408
        %v8509 = vunpack.c.0.s8 %v8508
        %v8510 = vlaneseq
        %v8511 = vshrl.u32 %v8510, 7
        %v8512 = vsub.s32 %v8509, %v8511
        %v8513 = vrot.slane %v8505, %v8512
        %v8515 = vunpack.c.l.s4 1934713408
        %v8516 = vunpack.c.0.s8 %v8515
        %v8517 = vlaneseq
        %v8518 = vshrl.u32 %v8517, 7
        %v8519 = vsub.s32 %v8516, %v8518
        %v8520 = vrot.slane %v8506, %v8519
        %v8521 = vcombine.low %v8489, %v8504
        %v8522 = vcombine.high %v8489, %v8504
        %v8524 = vunpack.c.l.s4 1934713408
        %v8525 = vunpack.c.0.s8 %v8524
        %v8526 = vlaneseq
        %v8527 = vshrl.u32 %v8526, 7
        %v8528 = vsub.s32 %v8525, %v8527
        %v8529 = vrot.slane %v8521, %v8528
        %v8531 = vunpack.c.l.s4 1934713408
        %v8532 = vunpack.c.0.s8 %v8531
        %v8533 = vlaneseq
        %v8534 = vshrl.u32 %v8533, 7
        %v8535 = vsub.s32 %v8532, %v8534
        %v8536 = vrot.slane %v8522, %v8535
        %v8537 = vcombine.high %v8513, 0.0
        %v8538 = vcombine.high %v8520, 0.0
        %v8539 = vcombine.high %v8529, 0.0
        %v8540 = vcombine.high %v8536, 0.0
        %v8541 = vcombine.high %v7451, 0.0
        %v8543 = vunpack.c.l.s4 1983009808
        %v8544 = vunpack.c.0.s8 %v8543
        %v8545 = vlaneseq
        %v8546 = vshrl.u32 %v8545, 7
        %v8547 = vsub.s32 %v8544, %v8546
        %v8548 = vrot.slane %v7451, %v8547
        %v8550 = vunpack.c.l.s4 1983009808
        %v8551 = vunpack.c.0.s8 %v8550
        %v8552 = vlaneseq
        %v8553 = vshrl.u32 %v8552, 7
        %v8554 = vsub.s32 %v8551, %v8553
        %v8555 = vrot.slane %v8541, %v8554
        %v8556 = vcombine.high %v7548, 0.0
        %v8558 = vunpack.c.l.s4 1983009808
        %v8559 = vunpack.c.0.s8 %v8558
        %v8560 = vlaneseq
        %v8561 = vshrl.u32 %v8560, 7
        %v8562 = vsub.s32 %v8559, %v8561
        %v8563 = vrot.slane %v7548, %v8562
        %v8565 = vunpack.c.l.s4 1983009808
        %v8566 = vunpack.c.0.s8 %v8565
        %v8567 = vlaneseq
        %v8568 = vshrl.u32 %v8567, 7
        %v8569 = vsub.s32 %v8566, %v8568
        %v8570 = vrot.slane %v8556, %v8569
        %v8571 = vcombine.low %v8548, %v8563
        %v8572 = vcombine.high %v8548, %v8563
        %v8574 = vunpack.c.l.s4 1934713408
        %v8575 = vunpack.c.0.s8 %v8574
        %v8576 = vlaneseq
        %v8577 = vshrl.u32 %v8576, 7
        %v8578 = vsub.s32 %v8575, %v8577
        %v8579 = vrot.slane %v8571, %v8578
        %v8581 = vunpack.c.l.s4 1934713408
        %v8582 = vunpack.c.0.s8 %v8581
        %v8583 = vlaneseq
        %v8584 = vshrl.u32 %v8583, 7
        %v8585 = vsub.s32 %v8582, %v8584
        %v8586 = vrot.slane %v8572, %v8585
        %v8587 = vcombine.low %v8555, %v8570
        %v8588 = vcombine.high %v8555, %v8570
        %v8590 = vunpack.c.l.s4 1934713408
        %v8591 = vunpack.c.0.s8 %v8590
        %v8592 = vlaneseq
        %v8593 = vshrl.u32 %v8592, 7
        %v8594 = vsub.s32 %v8591, %v8593
        %v8595 = vrot.slane %v8587, %v8594
        %v8597 = vunpack.c.l.s4 1934713408
        %v8598 = vunpack.c.0.s8 %v8597
        %v8599 = vlaneseq
        %v8600 = vshrl.u32 %v8599, 7
        %v8601 = vsub.s32 %v8598, %v8600
        %v8602 = vrot.slane %v8588, %v8601
        %v8603 = vcombine.high %v8579, 0.0
        %v8604 = vcombine.high %v8586, 0.0
        %v8605 = vcombine.high %v8595, 0.0
        %v8606 = vcombine.high %v8602, 0.0
        %v8607 = vcombine.low %v7589, %v7596
        %v8609 = vunpack.c.l.s4 1983009808
        %v8610 = vunpack.c.0.s8 %v8609
        %v8611 = vlaneseq
        %v8612 = vshrl.u32 %v8611, 7
        %v8613 = vsub.s32 %v8610, %v8612
        %v8614 = vrot.slane %v8607, %v8613
        %v8615 = vcombine.low %v7613, %v7614
        %v8617 = vunpack.c.l.s4 1983009808
        %v8618 = vunpack.c.0.s8 %v8617
        %v8619 = vlaneseq
        %v8620 = vshrl.u32 %v8619, 7
        %v8621 = vsub.s32 %v8618, %v8620
        %v8622 = vrot.slane %v8615, %v8621
        %v8623 = vcombine.low %v7605, %v7612
        %v8625 = vunpack.c.l.s4 1983009808
        %v8626 = vunpack.c.0.s8 %v8625
        %v8627 = vlaneseq
        %v8628 = vshrl.u32 %v8627, 7
        %v8629 = vsub.s32 %v8626, %v8628
        %v8630 = vrot.slane %v8623, %v8629
        %v8631 = vcombine.low %v7615, %v7616
        %v8633 = vunpack.c.l.s4 1983009808
        %v8634 = vunpack.c.0.s8 %v8633
        %v8635 = vlaneseq
        %v8636 = vshrl.u32 %v8635, 7
        %v8637 = vsub.s32 %v8634, %v8636
        %v8638 = vrot.slane %v8631, %v8637
        %v8639 = vcombine.low %v8614, %v8622
        %v8641 = vunpack.c.l.s4 1934713408
        %v8642 = vunpack.c.0.s8 %v8641
        %v8643 = vlaneseq
        %v8644 = vshrl.u32 %v8643, 7
        %v8645 = vsub.s32 %v8642, %v8644
        %v8646 = vrot.slane %v8639, %v8645
        %v8647 = vcombine.low %v8630, %v8638
        %v8649 = vunpack.c.l.s4 1934713408
        %v8650 = vunpack.c.0.s8 %v8649
        %v8651 = vlaneseq
        %v8652 = vshrl.u32 %v8651, 7
        %v8653 = vsub.s32 %v8650, %v8652
        %v8654 = vrot.slane %v8647, %v8653
        %v8655 = vcombine.low %v8646, %v8654
        %v8656 = vcombine.high %v8646, %v8654
        %v8657 = vcombine.low %v7655, %v7662
        %v8659 = vunpack.c.l.s4 1983009808
        %v8660 = vunpack.c.0.s8 %v8659
        %v8661 = vlaneseq
        %v8662 = vshrl.u32 %v8661, 7
        %v8663 = vsub.s32 %v8660, %v8662
        %v8664 = vrot.slane %v8657, %v8663
        %v8665 = vcombine.low %v7679, %v7680
        %v8667 = vunpack.c.l.s4 1983009808
        %v8668 = vunpack.c.0.s8 %v8667
        %v8669 = vlaneseq
        %v8670 = vshrl.u32 %v8669, 7
        %v8671 = vsub.s32 %v8668, %v8670
        %v8672 = vrot.slane %v8665, %v8671
        %v8673 = vcombine.low %v7671, %v7678
        %v8675 = vunpack.c.l.s4 1983009808
        %v8676 = vunpack.c.0.s8 %v8675
        %v8677 = vlaneseq
        %v8678 = vshrl.u32 %v8677, 7
        %v8679 = vsub.s32 %v8676, %v8678
        %v8680 = vrot.slane %v8673, %v8679
        %v8681 = vcombine.low %v7681, %v7682
        %v8683 = vunpack.c.l.s4 1983009808
        %v8684 = vunpack.c.0.s8 %v8683
        %v8685 = vlaneseq
        %v8686 = vshrl.u32 %v8685, 7
        %v8687 = vsub.s32 %v8684, %v8686
        %v8688 = vrot.slane %v8681, %v8687
        %v8689 = vcombine.low %v8664, %v8672
        %v8691 = vunpack.c.l.s4 1934713408
        %v8692 = vunpack.c.0.s8 %v8691
        %v8693 = vlaneseq
        %v8694 = vshrl.u32 %v8693, 7
        %v8695 = vsub.s32 %v8692, %v8694
        %v8696 = vrot.slane %v8689, %v8695
        %v8697 = vcombine.low %v8680, %v8688
        %v8699 = vunpack.c.l.s4 1934713408
        %v8700 = vunpack.c.0.s8 %v8699
        %v8701 = vlaneseq
        %v8702 = vshrl.u32 %v8701, 7
        %v8703 = vsub.s32 %v8700, %v8702
        %v8704 = vrot.slane %v8697, %v8703
        %v8705 = vcombine.low %v8696, %v8704
        %v8706 = vcombine.high %v8696, %v8704
        %v8707 = vcombine.low %v7721, %v7728
        %v8709 = vunpack.c.l.s4 1983009808
        %v8710 = vunpack.c.0.s8 %v8709
        %v8711 = vlaneseq
        %v8712 = vshrl.u32 %v8711, 7
        %v8713 = vsub.s32 %v8710, %v8712
        %v8714 = vrot.slane %v8707, %v8713
        %v8715 = vcombine.low %v7745, %v7746
        %v8717 = vunpack.c.l.s4 1983009808
        %v8718 = vunpack.c.0.s8 %v8717
        %v8719 = vlaneseq
        %v8720 = vshrl.u32 %v8719, 7
        %v8721 = vsub.s32 %v8718, %v8720
        %v8722 = vrot.slane %v8715, %v8721
        %v8723 = vcombine.low %v7737, %v7744
        %v8725 = vunpack.c.l.s4 1983009808
        %v8726 = vunpack.c.0.s8 %v8725
        %v8727 = vlaneseq
        %v8728 = vshrl.u32 %v8727, 7
        %v8729 = vsub.s32 %v8726, %v8728
        %v8730 = vrot.slane %v8723, %v8729
        %v8731 = vcombine.low %v7747, %v7748
        %v8733 = vunpack.c.l.s4 1983009808
        %v8734 = vunpack.c.0.s8 %v8733
        %v8735 = vlaneseq
        %v8736 = vshrl.u32 %v8735, 7
        %v8737 = vsub.s32 %v8734, %v8736
        %v8738 = vrot.slane %v8731, %v8737
        %v8739 = vcombine.low %v8714, %v8722
        %v8741 = vunpack.c.l.s4 1934713408
        %v8742 = vunpack.c.0.s8 %v8741
        %v8743 = vlaneseq
        %v8744 = vshrl.u32 %v8743, 7
        %v8745 = vsub.s32 %v8742, %v8744
        %v8746 = vrot.slane %v8739, %v8745
        %v8747 = vcombine.low %v8730, %v8738
        %v8749 = vunpack.c.l.s4 1934713408
        %v8750 = vunpack.c.0.s8 %v8749
        %v8751 = vlaneseq
        %v8752 = vshrl.u32 %v8751, 7
        %v8753 = vsub.s32 %v8750, %v8752
        %v8754 = vrot.slane %v8747, %v8753
        %v8755 = vcombine.low %v8746, %v8754
        %v8756 = vcombine.high %v8746, %v8754
        %v8757 = vcombine.low %v7787, %v7794
        %v8759 = vunpack.c.l.s4 1983009808
        %v8760 = vunpack.c.0.s8 %v8759
        %v8761 = vlaneseq
        %v8762 = vshrl.u32 %v8761, 7
        %v8763 = vsub.s32 %v8760, %v8762
        %v8764 = vrot.slane %v8757, %v8763
        %v8765 = vcombine.low %v7811, %v7812
        %v8767 = vunpack.c.l.s4 1983009808
        %v8768 = vunpack.c.0.s8 %v8767
        %v8769 = vlaneseq
        %v8770 = vshrl.u32 %v8769, 7
        %v8771 = vsub.s32 %v8768, %v8770
        %v8772 = vrot.slane %v8765, %v8771
        %v8773 = vcombine.low %v7803, %v7810
        %v8775 = vunpack.c.l.s4 1983009808
        %v8776 = vunpack.c.0.s8 %v8775
        %v8777 = vlaneseq
        %v8778 = vshrl.u32 %v8777, 7
        %v8779 = vsub.s32 %v8776, %v8778
        %v8780 = vrot.slane %v8773, %v8779
        %v8781 = vcombine.low %v7813, %v7814
        %v8783 = vunpack.c.l.s4 1983009808
        %v8784 = vunpack.c.0.s8 %v8783
        %v8785 = vlaneseq
        %v8786 = vshrl.u32 %v8785, 7
        %v8787 = vsub.s32 %v8784, %v8786
        %v8788 = vrot.slane %v8781, %v8787
        %v8789 = vcombine.low %v8764, %v8772
        %v8791 = vunpack.c.l.s4 1934713408
        %v8792 = vunpack.c.0.s8 %v8791
        %v8793 = vlaneseq
        %v8794 = vshrl.u32 %v8793, 7
        %v8795 = vsub.s32 %v8792, %v8794
        %v8796 = vrot.slane %v8789, %v8795
        %v8797 = vcombine.low %v8780, %v8788
        %v8799 = vunpack.c.l.s4 1934713408
        %v8800 = vunpack.c.0.s8 %v8799
        %v8801 = vlaneseq
        %v8802 = vshrl.u32 %v8801, 7
        %v8803 = vsub.s32 %v8800, %v8802
        %v8804 = vrot.slane %v8797, %v8803
        %v8805 = vcombine.low %v8796, %v8804
        %v8806 = vcombine.high %v8796, %v8804
        %v8807 = vcombine.low %v7853, %v7860
        %v8809 = vunpack.c.l.s4 1983009808
        %v8810 = vunpack.c.0.s8 %v8809
        %v8811 = vlaneseq
        %v8812 = vshrl.u32 %v8811, 7
        %v8813 = vsub.s32 %v8810, %v8812
        %v8814 = vrot.slane %v8807, %v8813
        %v8815 = vcombine.low %v7877, %v7878
        %v8817 = vunpack.c.l.s4 1983009808
        %v8818 = vunpack.c.0.s8 %v8817
        %v8819 = vlaneseq
        %v8820 = vshrl.u32 %v8819, 7
        %v8821 = vsub.s32 %v8818, %v8820
        %v8822 = vrot.slane %v8815, %v8821
        %v8823 = vcombine.low %v7869, %v7876
        %v8825 = vunpack.c.l.s4 1983009808
        %v8826 = vunpack.c.0.s8 %v8825
        %v8827 = vlaneseq
        %v8828 = vshrl.u32 %v8827, 7
        %v8829 = vsub.s32 %v8826, %v8828
        %v8830 = vrot.slane %v8823, %v8829
        %v8831 = vcombine.low %v7879, %v7880
        %v8833 = vunpack.c.l.s4 1983009808
        %v8834 = vunpack.c.0.s8 %v8833
        %v8835 = vlaneseq
        %v8836 = vshrl.u32 %v8835, 7
        %v8837 = vsub.s32 %v8834, %v8836
        %v8838 = vrot.slane %v8831, %v8837
        %v8839 = vcombine.low %v8814, %v8822
        %v8841 = vunpack.c.l.s4 1934713408
        %v8842 = vunpack.c.0.s8 %v8841
        %v8843 = vlaneseq
        %v8844 = vshrl.u32 %v8843, 7
        %v8845 = vsub.s32 %v8842, %v8844
        %v8846 = vrot.slane %v8839, %v8845
        %v8847 = vcombine.low %v8830, %v8838
        %v8849 = vunpack.c.l.s4 1934713408
        %v8850 = vunpack.c.0.s8 %v8849
        %v8851 = vlaneseq
        %v8852 = vshrl.u32 %v8851, 7
        %v8853 = vsub.s32 %v8850, %v8852
        %v8854 = vrot.slane %v8847, %v8853
        %v8855 = vcombine.low %v8846, %v8854
        %v8856 = vcombine.high %v8846, %v8854
        %v8857 = vcombine.low %v7919, %v7926
        %v8859 = vunpack.c.l.s4 1983009808
        %v8860 = vunpack.c.0.s8 %v8859
        %v8861 = vlaneseq
        %v8862 = vshrl.u32 %v8861, 7
        %v8863 = vsub.s32 %v8860, %v8862
        %v8864 = vrot.slane %v8857, %v8863
        %v8865 = vcombine.low %v7943, %v7944
        %v8867 = vunpack.c.l.s4 1983009808
        %v8868 = vunpack.c.0.s8 %v8867
        %v8869 = vlaneseq
        %v8870 = vshrl.u32 %v8869, 7
        %v8871 = vsub.s32 %v8868, %v8870
        %v8872 = vrot.slane %v8865, %v8871
        %v8873 = vcombine.low %v7935, %v7942
        %v8875 = vunpack.c.l.s4 1983009808
        %v8876 = vunpack.c.0.s8 %v8875
        %v8877 = vlaneseq
        %v8878 = vshrl.u32 %v8877, 7
        %v8879 = vsub.s32 %v8876, %v8878
        %v8880 = vrot.slane %v8873, %v8879
        %v8881 = vcombine.low %v7945, %v7946
        %v8883 = vunpack.c.l.s4 1983009808
        %v8884 = vunpack.c.0.s8 %v8883
        %v8885 = vlaneseq
        %v8886 = vshrl.u32 %v8885, 7
        %v8887 = vsub.s32 %v8884, %v8886
        %v8888 = vrot.slane %v8881, %v8887
        %v8889 = vcombine.low %v8864, %v8872
        %v8891 = vunpack.c.l.s4 1934713408
        %v8892 = vunpack.c.0.s8 %v8891
        %v8893 = vlaneseq
        %v8894 = vshrl.u32 %v8893, 7
        %v8895 = vsub.s32 %v8892, %v8894
        %v8896 = vrot.slane %v8889, %v8895
        %v8897 = vcombine.low %v8880, %v8888
        %v8899 = vunpack.c.l.s4 1934713408
        %v8900 = vunpack.c.0.s8 %v8899
        %v8901 = vlaneseq
        %v8902 = vshrl.u32 %v8901, 7
        %v8903 = vsub.s32 %v8900, %v8902
        %v8904 = vrot.slane %v8897, %v8903
        %v8905 = vcombine.low %v8896, %v8904
        %v8906 = vcombine.high %v8896, %v8904
        %v8907 = vcombine.low %v7985, %v7992
        %v8909 = vunpack.c.l.s4 1983009808
        %v8910 = vunpack.c.0.s8 %v8909
        %v8911 = vlaneseq
        %v8912 = vshrl.u32 %v8911, 7
        %v8913 = vsub.s32 %v8910, %v8912
        %v8914 = vrot.slane %v8907, %v8913
        %v8915 = vcombine.low %v8009, %v8010
        %v8917 = vunpack.c.l.s4 1983009808
        %v8918 = vunpack.c.0.s8 %v8917
        %v8919 = vlaneseq
        %v8920 = vshrl.u32 %v8919, 7
        %v8921 = vsub.s32 %v8918, %v8920
        %v8922 = vrot.slane %v8915, %v8921
        %v8923 = vcombine.low %v8001, %v8008
        %v8925 = vunpack.c.l.s4 1983009808
        %v8926 = vunpack.c.0.s8 %v8925
        %v8927 = vlaneseq
        %v8928 = vshrl.u32 %v8927, 7
        %v8929 = vsub.s32 %v8926, %v8928
        %v8930 = vrot.slane %v8923, %v8929
        %v8931 = vcombine.low %v8011, %v8012
        %v8933 = vunpack.c.l.s4 1983009808
        %v8934 = vunpack.c.0.s8 %v8933
        %v8935 = vlaneseq
        %v8936 = vshrl.u32 %v8935, 7
        %v8937 = vsub.s32 %v8934, %v8936
        %v8938 = vrot.slane %v8931, %v8937
        %v8939 = vcombine.low %v8914, %v8922
        %v8941 = vunpack.c.l.s4 1934713408
        %v8942 = vunpack.c.0.s8 %v8941
        %v8943 = vlaneseq
        %v8944 = vshrl.u32 %v8943, 7
        %v8945 = vsub.s32 %v8942, %v8944
        %v8946 = vrot.slane %v8939, %v8945
        %v8947 = vcombine.low %v8930, %v8938
        %v8949 = vunpack.c.l.s4 1934713408
        %v8950 = vunpack.c.0.s8 %v8949
        %v8951 = vlaneseq
        %v8952 = vshrl.u32 %v8951, 7
        %v8953 = vsub.s32 %v8950, %v8952
        %v8954 = vrot.slane %v8947, %v8953
        %v8955 = vcombine.low %v8946, %v8954
        %v8956 = vcombine.high %v8946, %v8954
        %v8957 = vcombine.low %v8051, %v8058
        %v8959 = vunpack.c.l.s4 1983009808
        %v8960 = vunpack.c.0.s8 %v8959
        %v8961 = vlaneseq
        %v8962 = vshrl.u32 %v8961, 7
        %v8963 = vsub.s32 %v8960, %v8962
        %v8964 = vrot.slane %v8957, %v8963
        %v8965 = vcombine.low %v8075, %v8076
        %v8967 = vunpack.c.l.s4 1983009808
        %v8968 = vunpack.c.0.s8 %v8967
        %v8969 = vlaneseq
        %v8970 = vshrl.u32 %v8969, 7
        %v8971 = vsub.s32 %v8968, %v8970
        %v8972 = vrot.slane %v8965, %v8971
        %v8973 = vcombine.low %v8067, %v8074
        %v8975 = vunpack.c.l.s4 1983009808
        %v8976 = vunpack.c.0.s8 %v8975
        %v8977 = vlaneseq
        %v8978 = vshrl.u32 %v8977, 7
        %v8979 = vsub.s32 %v8976, %v8978
        %v8980 = vrot.slane %v8973, %v8979
        %v8981 = vcombine.low %v8077, %v8078
        %v8983 = vunpack.c.l.s4 1983009808
        %v8984 = vunpack.c.0.s8 %v8983
        %v8985 = vlaneseq
        %v8986 = vshrl.u32 %v8985, 7
        %v8987 = vsub.s32 %v8984, %v8986
        %v8988 = vrot.slane %v8981, %v8987
        %v8989 = vcombine.low %v8964, %v8972
        %v8991 = vunpack.c.l.s4 1934713408
        %v8992 = vunpack.c.0.s8 %v8991
        %v8993 = vlaneseq
        %v8994 = vshrl.u32 %v8993, 7
        %v8995 = vsub.s32 %v8992, %v8994
        %v8996 = vrot.slane %v8989, %v8995
        %v8997 = vcombine.low %v8980, %v8988
        %v8999 = vunpack.c.l.s4 1934713408
        %v9000 = vunpack.c.0.s8 %v8999
        %v9001 = vlaneseq
        %v9002 = vshrl.u32 %v9001, 7
        %v9003 = vsub.s32 %v9000, %v9002
        %v9004 = vrot.slane %v8997, %v9003
        %v9005 = vcombine.low %v8996, %v9004
        %v9006 = vcombine.high %v8996, %v9004
        %v9007 = vcombine.low %v8117, %v8124
        %v9009 = vunpack.c.l.s4 1983009808
        %v9010 = vunpack.c.0.s8 %v9009
        %v9011 = vlaneseq
        %v9012 = vshrl.u32 %v9011, 7
        %v9013 = vsub.s32 %v9010, %v9012
        %v9014 = vrot.slane %v9007, %v9013
        %v9015 = vcombine.low %v8141, %v8142
        %v9017 = vunpack.c.l.s4 1983009808
        %v9018 = vunpack.c.0.s8 %v9017
        %v9019 = vlaneseq
        %v9020 = vshrl.u32 %v9019, 7
        %v9021 = vsub.s32 %v9018, %v9020
        %v9022 = vrot.slane %v9015, %v9021
        %v9023 = vcombine.low %v8133, %v8140
        %v9025 = vunpack.c.l.s4 1983009808
        %v9026 = vunpack.c.0.s8 %v9025
        %v9027 = vlaneseq
        %v9028 = vshrl.u32 %v9027, 7
        %v9029 = vsub.s32 %v9026, %v9028
        %v9030 = vrot.slane %v9023, %v9029
        %v9031 = vcombine.low %v8143, %v8144
        %v9033 = vunpack.c.l.s4 1983009808
        %v9034 = vunpack.c.0.s8 %v9033
        %v9035 = vlaneseq
        %v9036 = vshrl.u32 %v9035, 7
        %v9037 = vsub.s32 %v9034, %v9036
        %v9038 = vrot.slane %v9031, %v9037
        %v9039 = vcombine.low %v9014, %v9022
        %v9041 = vunpack.c.l.s4 1934713408
        %v9042 = vunpack.c.0.s8 %v9041
        %v9043 = vlaneseq
        %v9044 = vshrl.u32 %v9043, 7
        %v9045 = vsub.s32 %v9042, %v9044
        %v9046 = vrot.slane %v9039, %v9045
        %v9047 = vcombine.low %v9030, %v9038
        %v9049 = vunpack.c.l.s4 1934713408
        %v9050 = vunpack.c.0.s8 %v9049
        %v9051 = vlaneseq
        %v9052 = vshrl.u32 %v9051, 7
        %v9053 = vsub.s32 %v9050, %v9052
        %v9054 = vrot.slane %v9047, %v9053
        %v9055 = vcombine.low %v9046, %v9054
        %v9056 = vcombine.high %v9046, %v9054
        %v9057 = vcombine.low %v8183, %v8190
        %v9059 = vunpack.c.l.s4 1983009808
        %v9060 = vunpack.c.0.s8 %v9059
        %v9061 = vlaneseq
        %v9062 = vshrl.u32 %v9061, 7
        %v9063 = vsub.s32 %v9060, %v9062
        %v9064 = vrot.slane %v9057, %v9063
        %v9065 = vcombine.low %v8207, %v8208
        %v9067 = vunpack.c.l.s4 1983009808
        %v9068 = vunpack.c.0.s8 %v9067
        %v9069 = vlaneseq
        %v9070 = vshrl.u32 %v9069, 7
        %v9071 = vsub.s32 %v9068, %v9070
        %v9072 = vrot.slane %v9065, %v9071
        %v9073 = vcombine.low %v8199, %v8206
        %v9075 = vunpack.c.l.s4 1983009808
        %v9076 = vunpack.c.0.s8 %v9075
        %v9077 = vlaneseq
        %v9078 = vshrl.u32 %v9077, 7
        %v9079 = vsub.s32 %v9076, %v9078
        %v9080 = vrot.slane %v9073, %v9079
        %v9081 = vcombine.low %v8209, %v8210
        %v9083 = vunpack.c.l.s4 1983009808
        %v9084 = vunpack.c.0.s8 %v9083
        %v9085 = vlaneseq
        %v9086 = vshrl.u32 %v9085, 7
        %v9087 = vsub.s32 %v9084, %v9086
        %v9088 = vrot.slane %v9081, %v9087
        %v9089 = vcombine.low %v9064, %v9072
        %v9091 = vunpack.c.l.s4 1934713408
        %v9092 = vunpack.c.0.s8 %v9091
        %v9093 = vlaneseq
        %v9094 = vshrl.u32 %v9093, 7
        %v9095 = vsub.s32 %v9092, %v9094
        %v9096 = vrot.slane %v9089, %v9095
        %v9097 = vcombine.low %v9080, %v9088
        %v9099 = vunpack.c.l.s4 1934713408
        %v9100 = vunpack.c.0.s8 %v9099
        %v9101 = vlaneseq
        %v9102 = vshrl.u32 %v9101, 7
        %v9103 = vsub.s32 %v9100, %v9102
        %v9104 = vrot.slane %v9097, %v9103
        %v9105 = vcombine.low %v9096, %v9104
        %v9106 = vcombine.high %v9096, %v9104
        %v9107 = vcombine.low %v8249, %v8256
        %v9109 = vunpack.c.l.s4 1983009808
        %v9110 = vunpack.c.0.s8 %v9109
        %v9111 = vlaneseq
        %v9112 = vshrl.u32 %v9111, 7
        %v9113 = vsub.s32 %v9110, %v9112
        %v9114 = vrot.slane %v9107, %v9113
        %v9115 = vcombine.low %v8273, %v8274
        %v9117 = vunpack.c.l.s4 1983009808
        %v9118 = vunpack.c.0.s8 %v9117
        %v9119 = vlaneseq
        %v9120 = vshrl.u32 %v9119, 7
        %v9121 = vsub.s32 %v9118, %v9120
        %v9122 = vrot.slane %v9115, %v9121
        %v9123 = vcombine.low %v8265, %v8272
        %v9125 = vunpack.c.l.s4 1983009808
        %v9126 = vunpack.c.0.s8 %v9125
        %v9127 = vlaneseq
        %v9128 = vshrl.u32 %v9127, 7
        %v9129 = vsub.s32 %v9126, %v9128
        %v9130 = vrot.slane %v9123, %v9129
        %v9131 = vcombine.low %v8275, %v8276
        %v9133 = vunpack.c.l.s4 1983009808
        %v9134 = vunpack.c.0.s8 %v9133
        %v9135 = vlaneseq
        %v9136 = vshrl.u32 %v9135, 7
        %v9137 = vsub.s32 %v9134, %v9136
        %v9138 = vrot.slane %v9131, %v9137
        %v9139 = vcombine.low %v9114, %v9122
        %v9141 = vunpack.c.l.s4 1934713408
        %v9142 = vunpack.c.0.s8 %v9141
        %v9143 = vlaneseq
        %v9144 = vshrl.u32 %v9143, 7
        %v9145 = vsub.s32 %v9142, %v9144
        %v9146 = vrot.slane %v9139, %v9145
        %v9147 = vcombine.low %v9130, %v9138
        %v9149 = vunpack.c.l.s4 1934713408
        %v9150 = vunpack.c.0.s8 %v9149
        %v9151 = vlaneseq
        %v9152 = vshrl.u32 %v9151, 7
        %v9153 = vsub.s32 %v9150, %v9152
        %v9154 = vrot.slane %v9147, %v9153
        %v9155 = vcombine.low %v9146, %v9154
        %v9156 = vcombine.high %v9146, %v9154
        %v9157 = vcombine.low %v8315, %v8322
        %v9159 = vunpack.c.l.s4 1983009808
        %v9160 = vunpack.c.0.s8 %v9159
        %v9161 = vlaneseq
        %v9162 = vshrl.u32 %v9161, 7
        %v9163 = vsub.s32 %v9160, %v9162
        %v9164 = vrot.slane %v9157, %v9163
        %v9165 = vcombine.low %v8339, %v8340
        %v9167 = vunpack.c.l.s4 1983009808
        %v9168 = vunpack.c.0.s8 %v9167
        %v9169 = vlaneseq
        %v9170 = vshrl.u32 %v9169, 7
        %v9171 = vsub.s32 %v9168, %v9170
        %v9172 = vrot.slane %v9165, %v9171
        %v9173 = vcombine.low %v8331, %v8338
        %v9175 = vunpack.c.l.s4 1983009808
        %v9176 = vunpack.c.0.s8 %v9175
        %v9177 = vlaneseq
        %v9178 = vshrl.u32 %v9177, 7
        %v9179 = vsub.s32 %v9176, %v9178
        %v9180 = vrot.slane %v9173, %v9179
        %v9181 = vcombine.low %v8341, %v8342
        %v9183 = vunpack.c.l.s4 1983009808
        %v9184 = vunpack.c.0.s8 %v9183
        %v9185 = vlaneseq
        %v9186 = vshrl.u32 %v9185, 7
        %v9187 = vsub.s32 %v9184, %v9186
        %v9188 = vrot.slane %v9181, %v9187
        %v9189 = vcombine.low %v9164, %v9172
        %v9191 = vunpack.c.l.s4 1934713408
        %v9192 = vunpack.c.0.s8 %v9191
        %v9193 = vlaneseq
        %v9194 = vshrl.u32 %v9193, 7
        %v9195 = vsub.s32 %v9192, %v9194
        %v9196 = vrot.slane %v9189, %v9195
        %v9197 = vcombine.low %v9180, %v9188
        %v9199 = vunpack.c.l.s4 1934713408
        %v9200 = vunpack.c.0.s8 %v9199
        %v9201 = vlaneseq
        %v9202 = vshrl.u32 %v9201, 7
        %v9203 = vsub.s32 %v9200, %v9202
        %v9204 = vrot.slane %v9197, %v9203
        %v9205 = vcombine.low %v9196, %v9204
        %v9206 = vcombine.high %v9196, %v9204
        %v9207 = vcombine.low %v8381, %v8388
        %v9209 = vunpack.c.l.s4 1983009808
        %v9210 = vunpack.c.0.s8 %v9209
        %v9211 = vlaneseq
        %v9212 = vshrl.u32 %v9211, 7
        %v9213 = vsub.s32 %v9210, %v9212
        %v9214 = vrot.slane %v9207, %v9213
        %v9215 = vcombine.low %v8405, %v8406
        %v9217 = vunpack.c.l.s4 1983009808
        %v9218 = vunpack.c.0.s8 %v9217
        %v9219 = vlaneseq
        %v9220 = vshrl.u32 %v9219, 7
        %v9221 = vsub.s32 %v9218, %v9220
        %v9222 = vrot.slane %v9215, %v9221
        %v9223 = vcombine.low %v8397, %v8404
        %v9225 = vunpack.c.l.s4 1983009808
        %v9226 = vunpack.c.0.s8 %v9225
        %v9227 = vlaneseq
        %v9228 = vshrl.u32 %v9227, 7
        %v9229 = vsub.s32 %v9226, %v9228
        %v9230 = vrot.slane %v9223, %v9229
        %v9231 = vcombine.low %v8407, %v8408
        %v9233 = vunpack.c.l.s4 1983009808
        %v9234 = vunpack.c.0.s8 %v9233
        %v9235 = vlaneseq
        %v9236 = vshrl.u32 %v9235, 7
        %v9237 = vsub.s32 %v9234, %v9236
        %v9238 = vrot.slane %v9231, %v9237
        %v9239 = vcombine.low %v9214, %v9222
        %v9241 = vunpack.c.l.s4 1934713408
        %v9242 = vunpack.c.0.s8 %v9241
        %v9243 = vlaneseq
        %v9244 = vshrl.u32 %v9243, 7
        %v9245 = vsub.s32 %v9242, %v9244
        %v9246 = vrot.slane %v9239, %v9245
        %v9247 = vcombine.low %v9230, %v9238
        %v9249 = vunpack.c.l.s4 1934713408
        %v9250 = vunpack.c.0.s8 %v9249
        %v9251 = vlaneseq
        %v9252 = vshrl.u32 %v9251, 7
        %v9253 = vsub.s32 %v9250, %v9252
        %v9254 = vrot.slane %v9247, %v9253
        %v9255 = vcombine.low %v9246, %v9254
        %v9256 = vcombine.high %v9246, %v9254
        %v9257 = vcombine.low %v8447, %v8454
        %v9259 = vunpack.c.l.s4 1983009808
        %v9260 = vunpack.c.0.s8 %v9259
        %v9261 = vlaneseq
        %v9262 = vshrl.u32 %v9261, 7
        %v9263 = vsub.s32 %v9260, %v9262
        %v9264 = vrot.slane %v9257, %v9263
        %v9265 = vcombine.low %v8471, %v8472
        %v9267 = vunpack.c.l.s4 1983009808
        %v9268 = vunpack.c.0.s8 %v9267
        %v9269 = vlaneseq
        %v9270 = vshrl.u32 %v9269, 7
        %v9271 = vsub.s32 %v9268, %v9270
        %v9272 = vrot.slane %v9265, %v9271
        %v9273 = vcombine.low %v8463, %v8470
        %v9275 = vunpack.c.l.s4 1983009808
        %v9276 = vunpack.c.0.s8 %v9275
        %v9277 = vlaneseq
        %v9278 = vshrl.u32 %v9277, 7
        %v9279 = vsub.s32 %v9276, %v9278
        %v9280 = vrot.slane %v9273, %v9279
        %v9281 = vcombine.low %v8473, %v8474
        %v9283 = vunpack.c.l.s4 1983009808
        %v9284 = vunpack.c.0.s8 %v9283
        %v9285 = vlaneseq
        %v9286 = vshrl.u32 %v9285, 7
        %v9287 = vsub.s32 %v9284, %v9286
        %v9288 = vrot.slane %v9281, %v9287
        %v9289 = vcombine.low %v9264, %v9272
        %v9291 = vunpack.c.l.s4 1934713408
        %v9292 = vunpack.c.0.s8 %v9291
        %v9293 = vlaneseq
        %v9294 = vshrl.u32 %v9293, 7
        %v9295 = vsub.s32 %v9292, %v9294
        %v9296 = vrot.slane %v9289, %v9295
        %v9297 = vcombine.low %v9280, %v9288
        %v9299 = vunpack.c.l.s4 1934713408
        %v9300 = vunpack.c.0.s8 %v9299
        %v9301 = vlaneseq
        %v9302 = vshrl.u32 %v9301, 7
        %v9303 = vsub.s32 %v9300, %v9302
        %v9304 = vrot.slane %v9297, %v9303
        %v9305 = vcombine.low %v9296, %v9304
        %v9306 = vcombine.high %v9296, %v9304
        %v9307 = vcombine.low %v8513, %v8520
        %v9309 = vunpack.c.l.s4 1983009808
        %v9310 = vunpack.c.0.s8 %v9309
        %v9311 = vlaneseq
        %v9312 = vshrl.u32 %v9311, 7
        %v9313 = vsub.s32 %v9310, %v9312
        %v9314 = vrot.slane %v9307, %v9313
        %v9315 = vcombine.low %v8537, %v8538
        %v9317 = vunpack.c.l.s4 1983009808
        %v9318 = vunpack.c.0.s8 %v9317
        %v9319 = vlaneseq
        %v9320 = vshrl.u32 %v9319, 7
        %v9321 = vsub.s32 %v9318, %v9320
        %v9322 = vrot.slane %v9315, %v9321
        %v9323 = vcombine.low %v8529, %v8536
        %v9325 = vunpack.c.l.s4 1983009808
        %v9326 = vunpack.c.0.s8 %v9325
        %v9327 = vlaneseq
        %v9328 = vshrl.u32 %v9327, 7
        %v9329 = vsub.s32 %v9326, %v9328
        %v9330 = vrot.slane %v9323, %v9329
        %v9331 = vcombine.low %v8539, %v8540
        %v9333 = vunpack.c.l.s4 1983009808
        %v9334 = vunpack.c.0.s8 %v9333
        %v9335 = vlaneseq
        %v9336 = vshrl.u32 %v9335, 7
        %v9337 = vsub.s32 %v9334, %v9336
        %v9338 = vrot.slane %v9331, %v9337
        %v9339 = vcombine.low %v9314, %v9322
        %v9341 = vunpack.c.l.s4 1934713408
        %v9342 = vunpack.c.0.s8 %v9341
        %v9343 = vlaneseq
        %v9344 = vshrl.u32 %v9343, 7
        %v9345 = vsub.s32 %v9342, %v9344
        %v9346 = vrot.slane %v9339, %v9345
        %v9347 = vcombine.low %v9330, %v9338
        %v9349 = vunpack.c.l.s4 1934713408
        %v9350 = vunpack.c.0.s8 %v9349
        %v9351 = vlaneseq
        %v9352 = vshrl.u32 %v9351, 7
        %v9353 = vsub.s32 %v9350, %v9352
        %v9354 = vrot.slane %v9347, %v9353
        %v9355 = vcombine.low %v9346, %v9354
        %v9356 = vcombine.high %v9346, %v9354
        %v9357 = vcombine.low %v8579, %v8586
        %v9359 = vunpack.c.l.s4 1983009808
        %v9360 = vunpack.c.0.s8 %v9359
        %v9361 = vlaneseq
        %v9362 = vshrl.u32 %v9361, 7
        %v9363 = vsub.s32 %v9360, %v9362
        %v9364 = vrot.slane %v9357, %v9363
        %v9365 = vcombine.low %v8603, %v8604
        %v9367 = vunpack.c.l.s4 1983009808
        %v9368 = vunpack.c.0.s8 %v9367
        %v9369 = vlaneseq
        %v9370 = vshrl.u32 %v9369, 7
        %v9371 = vsub.s32 %v9368, %v9370
        %v9372 = vrot.slane %v9365, %v9371
        %v9373 = vcombine.low %v8595, %v8602
        %v9375 = vunpack.c.l.s4 1983009808
        %v9376 = vunpack.c.0.s8 %v9375
        %v9377 = vlaneseq
        %v9378 = vshrl.u32 %v9377, 7
        %v9379 = vsub.s32 %v9376, %v9378
        %v9380 = vrot.slane %v9373, %v9379
        %v9381 = vcombine.low %v8605, %v8606
        %v9383 = vunpack.c.l.s4 1983009808
        %v9384 = vunpack.c.0.s8 %v9383
        %v9385 = vlaneseq
        %v9386 = vshrl.u32 %v9385, 7
        %v9387 = vsub.s32 %v9384, %v9386
        %v9388 = vrot.slane %v9381, %v9387
        %v9389 = vcombine.low %v9364, %v9372
        %v9391 = vunpack.c.l.s4 1934713408
        %v9392 = vunpack.c.0.s8 %v9391
        %v9393 = vlaneseq
        %v9394 = vshrl.u32 %v9393, 7
        %v9395 = vsub.s32 %v9392, %v9394
        %v9396 = vrot.slane %v9389, %v9395
        %v9397 = vcombine.low %v9380, %v9388
        %v9399 = vunpack.c.l.s4 1934713408
        %v9400 = vunpack.c.0.s8 %v9399
        %v9401 = vlaneseq
        %v9402 = vshrl.u32 %v9401, 7
        %v9403 = vsub.s32 %v9400, %v9402
        %v9404 = vrot.slane %v9397, %v9403
        %v9405 = vcombine.low %v9396, %v9404
        %v9406 = vcombine.high %v9396, %v9404
        %9423 = vrot.lane.b32.xlu0 %v8656, 64
        %v9424 = vpop.permute.xlu0 %9423
        %9425 = vrot.lane.b32.xlu0 %v8706, 64
        %v9426 = vpop.permute.xlu0 %9425
        %9427 = vrot.lane.b32.xlu0 %v8756, 64
        %v9428 = vpop.permute.xlu0 %9427
        %9429 = vrot.lane.b32.xlu0 %v8806, 64
        %v9430 = vpop.permute.xlu0 %9429
        %9431 = vrot.lane.b32.xlu0 %v8856, 64
        %v9432 = vpop.permute.xlu0 %9431
        %9433 = vrot.lane.b32.xlu0 %v8906, 64
        %v9434 = vpop.permute.xlu0 %9433
        %9435 = vrot.lane.b32.xlu0 %v8956, 64
        %v9436 = vpop.permute.xlu0 %9435
        %9437 = vrot.lane.b32.xlu0 %v9006, 64
        %v9438 = vpop.permute.xlu0 %9437
        %9439 = vrot.lane.b32.xlu0 %v9056, 64
        %v9440 = vpop.permute.xlu0 %9439
        %9441 = vrot.lane.b32.xlu0 %v9106, 64
        %v9442 = vpop.permute.xlu0 %9441
        %9443 = vrot.lane.b32.xlu0 %v9156, 64
        %v9444 = vpop.permute.xlu0 %9443
        %9445 = vrot.lane.b32.xlu0 %v9206, 64
        %v9446 = vpop.permute.xlu0 %9445
        %9447 = vrot.lane.b32.xlu0 %v9256, 64
        %v9448 = vpop.permute.xlu0 %9447
        %9449 = vrot.lane.b32.xlu0 %v9306, 64
        %v9450 = vpop.permute.xlu0 %9449
        %9451 = vrot.lane.b32.xlu0 %v9356, 64
        %v9452 = vpop.permute.xlu0 %9451
        %9453 = vrot.lane.b32.xlu0 %v9406, 64
        %v9454 = vpop.permute.xlu0 %9453
        %v9471 = vsel %vm6762, %v8655, %v9424
        %v9472 = vsel %vm6762, %v8705, %v9426
        %v9473 = vsel %vm6762, %v8755, %v9428
        %v9474 = vsel %vm6762, %v8805, %v9430
        %v9475 = vsel %vm6762, %v8855, %v9432
        %v9476 = vsel %vm6762, %v8905, %v9434
        %v9477 = vsel %vm6762, %v8955, %v9436
        %v9478 = vsel %vm6762, %v9005, %v9438
        %v9479 = vsel %vm6762, %v9055, %v9440
        %v9480 = vsel %vm6762, %v9105, %v9442
        %v9481 = vsel %vm6762, %v9155, %v9444
        %v9482 = vsel %vm6762, %v9205, %v9446
        %v9483 = vsel %vm6762, %v9255, %v9448
        %v9484 = vsel %vm6762, %v9305, %v9450
        %v9485 = vsel %vm6762, %v9355, %v9452
        %v9486 = vsel %vm6762, %v9405, %v9454
        %v9487 = vpack.c.bf16 %v9472, %v9471
        %v9488 = vpack.c.bf16 %v9474, %v9473
        %v9489 = vpack.c.bf16 %v9476, %v9475
        %v9490 = vpack.c.bf16 %v9478, %v9477
        %v9491 = vpack.c.bf16 %v9480, %v9479
        %v9492 = vpack.c.bf16 %v9482, %v9481
        %v9493 = vpack.c.bf16 %v9484, %v9483
        %v9494 = vpack.c.bf16 %v9486, %v9485
        %v9495 = vld [vmem:[%s761] sm:$0xf]
        %v9496 = vld [vmem:[%s761 + $0x4] sm:$0xf]
        %v9497 = vld [vmem:[%s761 + $0x8] sm:$0xf]
        %v9498 = vld [vmem:[%s761 + $0xc] sm:$0xf]
        %v9499 = vld [vmem:[%s761 + $0x10] sm:$0xf]
        %v9500 = vld [vmem:[%s761 + $0x14] sm:$0xf]
        %v9501 = vld [vmem:[%s761 + $0x18] sm:$0xf]
        %v9502 = vld [vmem:[%s761 + $0x1c] sm:$0xf]
        %v9503 = vld [vmem:[%s761 + $0x20] sm:$0xf]
        %v9504 = vld [vmem:[%s761 + $0x24] sm:$0xf]
        %v9505 = vld [vmem:[%s761 + $0x28] sm:$0xf]
        %v9506 = vld [vmem:[%s761 + $0x2c] sm:$0xf]
        %v9507 = vld [vmem:[%s761 + $0x30] sm:$0xf]
        %v9508 = vld [vmem:[%s761 + $0x34] sm:$0xf]
        %v9509 = vld [vmem:[%s761 + $0x38] sm:$0xf]
        %v9510 = vld [vmem:[%s761 + $0x3c] sm:$0xf]
        %v9511 = vld [vmem:[%s887] sm:$0x1]
        %v9513 = vlaneseq
        %v9514 = vshrl.u32 %v9513, 7
        %v9515 = vsub.s32 0, %v9514
        %v9516 = vrot.slane %v9511, %v9515
        %v9534 = vunpack.c.l.b16 %v9495
        %v9535 = vunpack.c.l.b16 %v9496
        %v9536 = vunpack.c.l.b16 %v9497
        %v9537 = vunpack.c.l.b16 %v9498
        %v9538 = vunpack.c.l.b16 %v9499
        %v9539 = vunpack.c.l.b16 %v9500
        %v9540 = vunpack.c.l.b16 %v9501
        %v9541 = vunpack.c.l.b16 %v9502
        %v9542 = vunpack.c.l.b16 %v9503
        %v9543 = vunpack.c.l.b16 %v9504
        %v9544 = vunpack.c.l.b16 %v9505
        %v9545 = vunpack.c.l.b16 %v9506
        %v9546 = vunpack.c.l.b16 %v9507
        %v9547 = vunpack.c.l.b16 %v9508
        %v9548 = vunpack.c.l.b16 %v9509
        %v9549 = vunpack.c.l.b16 %v9510
        %v9550 = vpack.c.b16 %v9535, %v9534
        %v9551 = vpack.c.b16 %v9537, %v9536
        %v9552 = vpack.c.b16 %v9539, %v9538
        %v9553 = vpack.c.b16 %v9541, %v9540
        %v9554 = vpack.c.b16 %v9543, %v9542
        %v9555 = vpack.c.b16 %v9545, %v9544
        %v9556 = vpack.c.b16 %v9547, %v9546
        %v9557 = vpack.c.b16 %v9549, %v9548
        %9566 = vmatprep.subr.bf16.mxu0 0
        %9567 = vmatpush1.bf16.msra.mxu0 %v9550
        %9568 = vmatprep.subr.bf16.mxu0 0
        %9569 = vmatpush1.bf16.msra.mxu0 %v9551
        %9570 = vmatprep.subr.bf16.mxu0 0
        %9571 = vmatpush1.bf16.msra.mxu0 %v9552
        %9572 = vmatprep.subr.bf16.mxu0 0
        %9573 = vmatpush1.bf16.msra.mxu0 %v9553
        %9574 = vmatprep.subr.bf16.mxu0 0
        %9575 = vmatpush1.bf16.msra.mxu0 %v9554
        %9576 = vmatprep.subr.bf16.mxu0 0
        %9577 = vmatpush1.bf16.msra.mxu0 %v9555
        %9578 = vmatprep.subr.bf16.mxu0 0
        %9579 = vmatpush1.bf16.msra.mxu0 %v9556
        %9580 = vmatprep.subr.bf16.mxu0 0
        %9581 = vmatpush1.bf16.msra.mxu0 %v9557
        %9582 = vmatprep.subr.bf16.mxu0 0
        %9583 = vmatpush1.bf16.msra.mxu0 0
        %9584 = vmatprep.subr.bf16.mxu0 0
        %9585 = vmatpush1.bf16.msra.mxu0 0
        %9586 = vmatprep.subr.bf16.mxu0 0
        %9587 = vmatpush1.bf16.msra.mxu0 0
        %9588 = vmatprep.subr.bf16.mxu0 0
        %9589 = vmatpush1.bf16.msra.mxu0 0
        %9590 = vmatprep.subr.bf16.mxu0 0
        %9591 = vmatpush1.bf16.msra.mxu0 0
        %9592 = vmatprep.subr.bf16.mxu0 0
        %9593 = vmatpush1.bf16.msra.mxu0 0
        %9594 = vmatprep.subr.bf16.mxu0 0
        %9595 = vmatpush1.bf16.msra.mxu0 0
        %9596 = vmatprep.subr.bf16.mxu0 0
        %9597 = vmatpush1.bf16.msra.mxu0 0
        %9598 = vmatprep.mubr.bf16.mxu0 0
        %9599 = vmatmul.mubr.bf16.gmra.mrb[0].mxu0 %v9487
        %v9600 = vpop.f32.mrb[0].mxu0
        %v9601 = vadd.f32 %v9516, %v9600
        %v9602 = vpop.f32.mrb[0].mxu0
        %v9603 = vpop.f32.mrb[0].mxu0
        %v9604 = vadd.f32 %v9516, %v9603
        %v9605 = vpop.f32.mrb[0].mxu0
        %9606 = vmatprep.mubr.bf16.mxu0 0
        %9607 = vmatmul.mubr.bf16.gmra.mrb[0].mxu0 %v9488
        %v9608 = vpop.f32.mrb[0].mxu0
        %v9609 = vadd.f32 %v9516, %v9608
        %v9610 = vpop.f32.mrb[0].mxu0
        %v9611 = vpop.f32.mrb[0].mxu0
        %v9612 = vadd.f32 %v9516, %v9611
        %v9613 = vpop.f32.mrb[0].mxu0
        %9614 = vmatprep.mubr.bf16.mxu0 0
        %9615 = vmatmul.mubr.bf16.gmra.mrb[0].mxu0 %v9489
        %v9616 = vpop.f32.mrb[0].mxu0
        %v9617 = vadd.f32 %v9516, %v9616
        %v9618 = vpop.f32.mrb[0].mxu0
        %v9619 = vpop.f32.mrb[0].mxu0
        %v9620 = vadd.f32 %v9516, %v9619
        %v9621 = vpop.f32.mrb[0].mxu0
        %9622 = vmatprep.mubr.bf16.mxu0 0
        %9623 = vmatmul.mubr.bf16.gmra.mrb[0].mxu0 %v9490
        %v9624 = vpop.f32.mrb[0].mxu0
        %v9625 = vadd.f32 %v9516, %v9624
        %v9626 = vpop.f32.mrb[0].mxu0
        %v9627 = vpop.f32.mrb[0].mxu0
        %v9628 = vadd.f32 %v9516, %v9627
        %v9629 = vpop.f32.mrb[0].mxu0
        %9630 = vmatprep.mubr.bf16.mxu0 0
        %9631 = vmatmul.mubr.bf16.gmra.mrb[0].mxu0 %v9491
        %v9632 = vpop.f32.mrb[0].mxu0
        %v9633 = vadd.f32 %v9516, %v9632
        %v9634 = vpop.f32.mrb[0].mxu0
        %v9635 = vpop.f32.mrb[0].mxu0
        %v9636 = vadd.f32 %v9516, %v9635
        %v9637 = vpop.f32.mrb[0].mxu0
        %9638 = vmatprep.mubr.bf16.mxu0 0
        %9639 = vmatmul.mubr.bf16.gmra.mrb[0].mxu0 %v9492
        %v9640 = vpop.f32.mrb[0].mxu0
        %v9641 = vadd.f32 %v9516, %v9640
        %v9642 = vpop.f32.mrb[0].mxu0
        %v9643 = vpop.f32.mrb[0].mxu0
        %v9644 = vadd.f32 %v9516, %v9643
        %v9645 = vpop.f32.mrb[0].mxu0
        %9646 = vmatprep.mubr.bf16.mxu0 0
        %9647 = vmatmul.mubr.bf16.gmra.mrb[0].mxu0 %v9493
        %v9648 = vpop.f32.mrb[0].mxu0
        %v9649 = vadd.f32 %v9516, %v9648
        %v9650 = vpop.f32.mrb[0].mxu0
        %v9651 = vpop.f32.mrb[0].mxu0
        %v9652 = vadd.f32 %v9516, %v9651
        %v9653 = vpop.f32.mrb[0].mxu0
        %9654 = vmatprep.mubr.bf16.mxu0 0
        %9655 = vmatmul.mubr.bf16.gmra.mrb[0].mxu0 %v9494
        %v9656 = vpop.f32.mrb[0].mxu0
        %v9657 = vadd.f32 %v9516, %v9656
        %v9658 = vpop.f32.mrb[0].mxu0
        %v9659 = vpop.f32.mrb[0].mxu0
        %v9660 = vadd.f32 %v9516, %v9659
        %v9661 = vpop.f32.mrb[0].mxu0
        %9662 = vdwg.mxu0
        %v9663 = vadd.f32 %v938, %v9601
        %v9664 = vadd.f32 %v939, %v9604
        %v9665 = vadd.f32 %v940, %v9609
        %v9666 = vadd.f32 %v941, %v9612
        %v9667 = vadd.f32 %v942, %v9617
        %v9668 = vadd.f32 %v943, %v9620
        %v9669 = vadd.f32 %v944, %v9625
        %v9670 = vadd.f32 %v945, %v9628
        %v9671 = vadd.f32 %v946, %v9633
        %v9672 = vadd.f32 %v947, %v9636
        %v9673 = vadd.f32 %v948, %v9641
        %v9674 = vadd.f32 %v949, %v9644
        %v9675 = vadd.f32 %v950, %v9649
        %v9676 = vadd.f32 %v951, %v9652
        %v9677 = vadd.f32 %v952, %v9657
        %v9678 = vadd.f32 %v953, %v9660
        %v9679 = vld [vmem:[%s890] sm:$0x1]
        %v9680 = vld [vmem:[%s893] sm:$0x1]
        %9681 = vadd.xlane.f32.xlu0 %v9663
        %v9682 = vpop.xlane.xlu0 %9681
        %9683 = vadd.xlane.f32.xlu0 %v9664
        %v9684 = vpop.xlane.xlu0 %9683
        %9685 = vadd.xlane.f32.xlu0 %v9665
        %v9686 = vpop.xlane.xlu0 %9685
        %9687 = vadd.xlane.f32.xlu0 %v9666
        %v9688 = vpop.xlane.xlu0 %9687
        %9689 = vadd.xlane.f32.xlu0 %v9667
        %v9690 = vpop.xlane.xlu0 %9689
        %9691 = vadd.xlane.f32.xlu0 %v9668
        %v9692 = vpop.xlane.xlu0 %9691
        %9693 = vadd.xlane.f32.xlu0 %v9669
        %v9694 = vpop.xlane.xlu0 %9693
        %9695 = vadd.xlane.f32.xlu0 %v9670
        %v9696 = vpop.xlane.xlu0 %9695
        %9697 = vadd.xlane.f32.xlu0 %v9671
        %v9698 = vpop.xlane.xlu0 %9697
        %9699 = vadd.xlane.f32.xlu0 %v9672
        %v9700 = vpop.xlane.xlu0 %9699
        %9701 = vadd.xlane.f32.xlu0 %v9673
        %v9702 = vpop.xlane.xlu0 %9701
        %9703 = vadd.xlane.f32.xlu0 %v9674
        %v9704 = vpop.xlane.xlu0 %9703
        %9705 = vadd.xlane.f32.xlu0 %v9675
        %v9706 = vpop.xlane.xlu0 %9705
        %9707 = vadd.xlane.f32.xlu0 %v9676
        %v9708 = vpop.xlane.xlu0 %9707
        %9709 = vadd.xlane.f32.xlu0 %v9677
        %v9710 = vpop.xlane.xlu0 %9709
        %9711 = vadd.xlane.f32.xlu0 %v9678
        %v9712 = vpop.xlane.xlu0 %9711
        %v9713 = vmul.f32 %v9682, %v1004
        %v9714 = vmul.f32 %v9684, %v1004
        %v9715 = vmul.f32 %v9686, %v1004
        %v9716 = vmul.f32 %v9688, %v1004
        %v9717 = vmul.f32 %v9690, %v1004
        %v9718 = vmul.f32 %v9692, %v1004
        %v9719 = vmul.f32 %v9694, %v1004
        %v9720 = vmul.f32 %v9696, %v1004
        %v9721 = vmul.f32 %v9698, %v1004
        %v9722 = vmul.f32 %v9700, %v1004
        %v9723 = vmul.f32 %v9702, %v1004
        %v9724 = vmul.f32 %v9704, %v1004
        %v9725 = vmul.f32 %v9706, %v1004
        %v9726 = vmul.f32 %v9708, %v1004
        %v9727 = vmul.f32 %v9710, %v1004
        %v9728 = vmul.f32 %v9712, %v1004
        %v9729 = vsub.f32 %v9663, %v9713
        %v9730 = vsub.f32 %v9664, %v9714
        %v9731 = vsub.f32 %v9665, %v9715
        %v9732 = vsub.f32 %v9666, %v9716
        %v9733 = vsub.f32 %v9667, %v9717
        %v9734 = vsub.f32 %v9668, %v9718
        %v9735 = vsub.f32 %v9669, %v9719
        %v9736 = vsub.f32 %v9670, %v9720
        %v9737 = vsub.f32 %v9671, %v9721
        %v9738 = vsub.f32 %v9672, %v9722
        %v9739 = vsub.f32 %v9673, %v9723
        %v9740 = vsub.f32 %v9674, %v9724
        %v9741 = vsub.f32 %v9675, %v9725
        %v9742 = vsub.f32 %v9676, %v9726
        %v9743 = vsub.f32 %v9677, %v9727
        %v9744 = vsub.f32 %v9678, %v9728
        %v9745 = vmul.f32 %v9729, %v9729
        %v9746 = vmul.f32 %v9730, %v9730
        %v9747 = vmul.f32 %v9731, %v9731
        %v9748 = vmul.f32 %v9732, %v9732
        %v9749 = vmul.f32 %v9733, %v9733
        %v9750 = vmul.f32 %v9734, %v9734
        %v9751 = vmul.f32 %v9735, %v9735
        %v9752 = vmul.f32 %v9736, %v9736
        %v9753 = vmul.f32 %v9737, %v9737
        %v9754 = vmul.f32 %v9738, %v9738
        %v9755 = vmul.f32 %v9739, %v9739
        %v9756 = vmul.f32 %v9740, %v9740
        %v9757 = vmul.f32 %v9741, %v9741
        %v9758 = vmul.f32 %v9742, %v9742
        %v9759 = vmul.f32 %v9743, %v9743
        %v9760 = vmul.f32 %v9744, %v9744
        %9761 = vadd.xlane.f32.xlu0 %v9745
        %v9762 = vpop.xlane.xlu0 %9761
        %9763 = vadd.xlane.f32.xlu0 %v9746
        %v9764 = vpop.xlane.xlu0 %9763
        %9765 = vadd.xlane.f32.xlu0 %v9747
        %v9766 = vpop.xlane.xlu0 %9765
        %9767 = vadd.xlane.f32.xlu0 %v9748
        %v9768 = vpop.xlane.xlu0 %9767
        %9769 = vadd.xlane.f32.xlu0 %v9749
        %v9770 = vpop.xlane.xlu0 %9769
        %9771 = vadd.xlane.f32.xlu0 %v9750
        %v9772 = vpop.xlane.xlu0 %9771
        %9773 = vadd.xlane.f32.xlu0 %v9751
        %v9774 = vpop.xlane.xlu0 %9773
        %9775 = vadd.xlane.f32.xlu0 %v9752
        %v9776 = vpop.xlane.xlu0 %9775
        %9777 = vadd.xlane.f32.xlu0 %v9753
        %v9778 = vpop.xlane.xlu0 %9777
        %9779 = vadd.xlane.f32.xlu0 %v9754
        %v9780 = vpop.xlane.xlu0 %9779
        %9781 = vadd.xlane.f32.xlu0 %v9755
        %v9782 = vpop.xlane.xlu0 %9781
        %9783 = vadd.xlane.f32.xlu0 %v9756
        %v9784 = vpop.xlane.xlu0 %9783
        %9785 = vadd.xlane.f32.xlu0 %v9757
        %v9786 = vpop.xlane.xlu0 %9785
        %9787 = vadd.xlane.f32.xlu0 %v9758
        %v9788 = vpop.xlane.xlu0 %9787
        %9789 = vadd.xlane.f32.xlu0 %v9759
        %v9790 = vpop.xlane.xlu0 %9789
        %9791 = vadd.xlane.f32.xlu0 %v9760
        %v9792 = vpop.xlane.xlu0 %9791
        %v9793 = vmul.f32 %v9762, %v1004
        %v9794 = vmul.f32 %v9764, %v1004
        %v9795 = vmul.f32 %v9766, %v1004
        %v9796 = vmul.f32 %v9768, %v1004
        %v9797 = vmul.f32 %v9770, %v1004
        %v9798 = vmul.f32 %v9772, %v1004
        %v9799 = vmul.f32 %v9774, %v1004
        %v9800 = vmul.f32 %v9776, %v1004
        %v9801 = vmul.f32 %v9778, %v1004
        %v9802 = vmul.f32 %v9780, %v1004
        %v9803 = vmul.f32 %v9782, %v1004
        %v9804 = vmul.f32 %v9784, %v1004
        %v9805 = vmul.f32 %v9786, %v1004
        %v9806 = vmul.f32 %v9788, %v1004
        %v9807 = vmul.f32 %v9790, %v1004
        %v9808 = vmul.f32 %v9792, %v1004
        %v9809 = vadd.f32 %v9793, 1e-05
        %v9810 = vadd.f32 %v9794, 1e-05
        %v9811 = vadd.f32 %v9795, 1e-05
        %v9812 = vadd.f32 %v9796, 1e-05
        %v9813 = vadd.f32 %v9797, 1e-05
        %v9814 = vadd.f32 %v9798, 1e-05
        %v9815 = vadd.f32 %v9799, 1e-05
        %v9816 = vadd.f32 %v9800, 1e-05
        %v9817 = vadd.f32 %v9801, 1e-05
        %v9818 = vadd.f32 %v9802, 1e-05
        %v9819 = vadd.f32 %v9803, 1e-05
        %v9820 = vadd.f32 %v9804, 1e-05
        %v9821 = vadd.f32 %v9805, 1e-05
        %v9822 = vadd.f32 %v9806, 1e-05
        %v9823 = vadd.f32 %v9807, 1e-05
        %v9824 = vadd.f32 %v9808, 1e-05
        %v9825 = vrsqrt.pop %v9809
        %v9826 = vrsqrt.pop %v9810
        %v9827 = vrsqrt.pop %v9811
        %v9828 = vrsqrt.pop %v9812
        %v9829 = vrsqrt.pop %v9813
        %v9830 = vrsqrt.pop %v9814
        %v9831 = vrsqrt.pop %v9815
        %v9832 = vrsqrt.pop %v9816
        %v9833 = vrsqrt.pop %v9817
        %v9834 = vrsqrt.pop %v9818
        %v9835 = vrsqrt.pop %v9819
        %v9836 = vrsqrt.pop %v9820
        %v9837 = vrsqrt.pop %v9821
        %v9838 = vrsqrt.pop %v9822
        %v9839 = vrsqrt.pop %v9823
        %v9840 = vrsqrt.pop %v9824
        %v9841 = vmul.f32 %v9729, %v9825
        %v9842 = vmul.f32 %v9730, %v9826
        %v9843 = vmul.f32 %v9731, %v9827
        %v9844 = vmul.f32 %v9732, %v9828
        %v9845 = vmul.f32 %v9733, %v9829
        %v9846 = vmul.f32 %v9734, %v9830
        %v9847 = vmul.f32 %v9735, %v9831
        %v9848 = vmul.f32 %v9736, %v9832
        %v9849 = vmul.f32 %v9737, %v9833
        %v9850 = vmul.f32 %v9738, %v9834
        %v9851 = vmul.f32 %v9739, %v9835
        %v9852 = vmul.f32 %v9740, %v9836
        %v9853 = vmul.f32 %v9741, %v9837
        %v9854 = vmul.f32 %v9742, %v9838
        %v9855 = vmul.f32 %v9743, %v9839
        %v9856 = vmul.f32 %v9744, %v9840
        %v9858 = vlaneseq
        %v9859 = vshrl.u32 %v9858, 7
        %v9860 = vsub.s32 0, %v9859
        %v9861 = vrot.slane %v9679, %v9860
        %v9863 = vmul.f32 %v9841, %v9861
        %v9864 = vmul.f32 %v9842, %v9861
        %v9865 = vmul.f32 %v9843, %v9861
        %v9866 = vmul.f32 %v9844, %v9861
        %v9867 = vmul.f32 %v9845, %v9861
        %v9868 = vmul.f32 %v9846, %v9861
        %v9869 = vmul.f32 %v9847, %v9861
        %v9870 = vmul.f32 %v9848, %v9861
        %v9871 = vmul.f32 %v9849, %v9861
        %v9872 = vmul.f32 %v9850, %v9861
        %v9873 = vmul.f32 %v9851, %v9861
        %v9874 = vmul.f32 %v9852, %v9861
        %v9875 = vmul.f32 %v9853, %v9861
        %v9876 = vmul.f32 %v9854, %v9861
        %v9877 = vmul.f32 %v9855, %v9861
        %v9878 = vmul.f32 %v9856, %v9861
        %v9880 = vlaneseq
        %v9881 = vshrl.u32 %v9880, 7
        %v9882 = vsub.s32 0, %v9881
        %v9883 = vrot.slane %v9680, %v9882
        %v9885 = vadd.f32 %v9863, %v9883
        %v9886 = vadd.f32 %v9864, %v9883
        %v9887 = vadd.f32 %v9865, %v9883
        %v9888 = vadd.f32 %v9866, %v9883
        %v9889 = vadd.f32 %v9867, %v9883
        %v9890 = vadd.f32 %v9868, %v9883
        %v9891 = vadd.f32 %v9869, %v9883
        %v9892 = vadd.f32 %v9870, %v9883
        %v9893 = vadd.f32 %v9871, %v9883
        %v9894 = vadd.f32 %v9872, %v9883
        %v9895 = vadd.f32 %v9873, %v9883
        %v9896 = vadd.f32 %v9874, %v9883
        %v9897 = vadd.f32 %v9875, %v9883
        %v9898 = vadd.f32 %v9876, %v9883
        %v9899 = vadd.f32 %v9877, %v9883
        %v9900 = vadd.f32 %v9878, %v9883
        %v9901 = vpack.c.bf16 %v9886, %v9885
        %v9902 = vpack.c.bf16 %v9888, %v9887
        %v9903 = vpack.c.bf16 %v9890, %v9889
        %v9904 = vpack.c.bf16 %v9892, %v9891
        %v9905 = vpack.c.bf16 %v9894, %v9893
        %v9906 = vpack.c.bf16 %v9896, %v9895
        %v9907 = vpack.c.bf16 %v9898, %v9897
        %v9908 = vpack.c.bf16 %v9900, %v9899
        %v9909 = vld [vmem:[%s770] sm:$0xff]
        %v9910 = vld [vmem:[%s770 + $0x8] sm:$0xff]
        %v9911 = vld [vmem:[%s770 + $0x10] sm:$0xff]
        %v9912 = vld [vmem:[%s770 + $0x18] sm:$0xff]
        %v9913 = vld [vmem:[%s770 + $0x20] sm:$0xff]
        %v9914 = vld [vmem:[%s770 + $0x28] sm:$0xff]
        %v9915 = vld [vmem:[%s770 + $0x30] sm:$0xff]
        %v9916 = vld [vmem:[%s770 + $0x38] sm:$0xff]
        %v9917 = vld [vmem:[%s770 + $0x40] sm:$0xff]
        %v9918 = vld [vmem:[%s770 + $0x48] sm:$0xff]
        %v9919 = vld [vmem:[%s770 + $0x50] sm:$0xff]
        %v9920 = vld [vmem:[%s770 + $0x58] sm:$0xff]
        %v9921 = vld [vmem:[%s770 + $0x60] sm:$0xff]
        %v9922 = vld [vmem:[%s770 + $0x68] sm:$0xff]
        %v9923 = vld [vmem:[%s770 + $0x70] sm:$0xff]
        %v9924 = vld [vmem:[%s770 + $0x78] sm:$0xff]
        %v9925 = vld [vmem:[%s770 + $0x80] sm:$0xff]
        %v9926 = vld [vmem:[%s770 + $0x88] sm:$0xff]
        %v9927 = vld [vmem:[%s770 + $0x90] sm:$0xff]
        %v9928 = vld [vmem:[%s770 + $0x98] sm:$0xff]
        %v9929 = vld [vmem:[%s770 + $0xa0] sm:$0xff]
        %v9930 = vld [vmem:[%s770 + $0xa8] sm:$0xff]
        %v9931 = vld [vmem:[%s770 + $0xb0] sm:$0xff]
        %v9932 = vld [vmem:[%s770 + $0xb8] sm:$0xff]
        %v9933 = vld [vmem:[%s770 + $0xc0] sm:$0xff]
        %v9934 = vld [vmem:[%s770 + $0xc8] sm:$0xff]
        %v9935 = vld [vmem:[%s770 + $0xd0] sm:$0xff]
        %v9936 = vld [vmem:[%s770 + $0xd8] sm:$0xff]
        %v9937 = vld [vmem:[%s770 + $0xe0] sm:$0xff]
        %v9938 = vld [vmem:[%s770 + $0xe8] sm:$0xff]
        %v9939 = vld [vmem:[%s770 + $0xf0] sm:$0xff]
        %v9940 = vld [vmem:[%s770 + $0xf8] sm:$0xff]
        %v9941 = vld [vmem:[%s897] sm:$0xf]
        %v9943 = vlaneseq
        %v9944 = vshrl.u32 %v9943, 7
        %v9945 = vsub.s32 0, %v9944
        %v9946 = vrot.slane %v9941, %v9945
        %v9947 = vlaneseq
        %v9948 = vshrl.u32 %v9947, 7
        %v9949 = vsub.s32 1, %v9948
        %v9950 = vrot.slane %v9941, %v9949
        %v9951 = vlaneseq
        %v9952 = vshrl.u32 %v9951, 7
        %v9953 = vsub.s32 2, %v9952
        %v9954 = vrot.slane %v9941, %v9953
        %v9955 = vlaneseq
        %v9956 = vshrl.u32 %v9955, 7
        %v9957 = vsub.s32 3, %v9956
        %v9958 = vrot.slane %v9941, %v9957
        %v9995 = vunpack.c.l.b16 %v9909
        %v9996 = vunpack.c.h.b16 %v9909
        %v9997 = vunpack.c.l.b16 %v9910
        %v9998 = vunpack.c.h.b16 %v9910
        %v9999 = vunpack.c.l.b16 %v9911
        %v10000 = vunpack.c.h.b16 %v9911
        %v10001 = vunpack.c.l.b16 %v9912
        %v10002 = vunpack.c.h.b16 %v9912
        %v10003 = vunpack.c.l.b16 %v9913
        %v10004 = vunpack.c.h.b16 %v9913
        %v10005 = vunpack.c.l.b16 %v9914
        %v10006 = vunpack.c.h.b16 %v9914
        %v10007 = vunpack.c.l.b16 %v9915
        %v10008 = vunpack.c.h.b16 %v9915
        %v10009 = vunpack.c.l.b16 %v9916
        %v10010 = vunpack.c.h.b16 %v9916
        %v10011 = vunpack.c.l.b16 %v9917
        %v10012 = vunpack.c.h.b16 %v9917
        %v10013 = vunpack.c.l.b16 %v9918
        %v10014 = vunpack.c.h.b16 %v9918
        %v10015 = vunpack.c.l.b16 %v9919
        %v10016 = vunpack.c.h.b16 %v9919
        %v10017 = vunpack.c.l.b16 %v9920
        %v10018 = vunpack.c.h.b16 %v9920
        %v10019 = vunpack.c.l.b16 %v9921
        %v10020 = vunpack.c.h.b16 %v9921
        %v10021 = vunpack.c.l.b16 %v9922
        %v10022 = vunpack.c.h.b16 %v9922
        %v10023 = vunpack.c.l.b16 %v9923
        %v10024 = vunpack.c.h.b16 %v9923
        %v10025 = vunpack.c.l.b16 %v9924
        %v10026 = vunpack.c.h.b16 %v9924
        %v10027 = vunpack.c.l.b16 %v9925
        %v10028 = vunpack.c.h.b16 %v9925
        %v10029 = vunpack.c.l.b16 %v9926
        %v10030 = vunpack.c.h.b16 %v9926
        %v10031 = vunpack.c.l.b16 %v9927
        %v10032 = vunpack.c.h.b16 %v9927
        %v10033 = vunpack.c.l.b16 %v9928
        %v10034 = vunpack.c.h.b16 %v9928
        %v10035 = vunpack.c.l.b16 %v9929
        %v10036 = vunpack.c.h.b16 %v9929
        %v10037 = vunpack.c.l.b16 %v9930
        %v10038 = vunpack.c.h.b16 %v9930
        %v10039 = vunpack.c.l.b16 %v9931
        %v10040 = vunpack.c.h.b16 %v9931
        %v10041 = vunpack.c.l.b16 %v9932
        %v10042 = vunpack.c.h.b16 %v9932
        %v10043 = vunpack.c.l.b16 %v9933
        %v10044 = vunpack.c.h.b16 %v9933
        %v10045 = vunpack.c.l.b16 %v9934
        %v10046 = vunpack.c.h.b16 %v9934
        %v10047 = vunpack.c.l.b16 %v9935
        %v10048 = vunpack.c.h.b16 %v9935
        %v10049 = vunpack.c.l.b16 %v9936
        %v10050 = vunpack.c.h.b16 %v9936
        %v10051 = vunpack.c.l.b16 %v9937
        %v10052 = vunpack.c.h.b16 %v9937
        %v10053 = vunpack.c.l.b16 %v9938
        %v10054 = vunpack.c.h.b16 %v9938
        %v10055 = vunpack.c.l.b16 %v9939
        %v10056 = vunpack.c.h.b16 %v9939
        %v10057 = vunpack.c.l.b16 %v9940
        %v10058 = vunpack.c.h.b16 %v9940
        %v10059 = vpack.c.b16 %v9999, %v9995
        %v10060 = vpack.c.b16 %v10000, %v9996
        %v10061 = vpack.c.b16 %v10001, %v9997
        %v10062 = vpack.c.b16 %v10002, %v9998
        %v10063 = vpack.c.b16 %v10007, %v10003
        %v10064 = vpack.c.b16 %v10008, %v10004
        %v10065 = vpack.c.b16 %v10009, %v10005
        %v10066 = vpack.c.b16 %v10010, %v10006
        %v10067 = vpack.c.b16 %v10015, %v10011
        %v10068 = vpack.c.b16 %v10016, %v10012
        %v10069 = vpack.c.b16 %v10017, %v10013
        %v10070 = vpack.c.b16 %v10018, %v10014
        %v10071 = vpack.c.b16 %v10023, %v10019
        %v10072 = vpack.c.b16 %v10024, %v10020
        %v10073 = vpack.c.b16 %v10025, %v10021
        %v10074 = vpack.c.b16 %v10026, %v10022
        %v10075 = vpack.c.b16 %v10031, %v10027
        %v10076 = vpack.c.b16 %v10032, %v10028
        %v10077 = vpack.c.b16 %v10033, %v10029
        %v10078 = vpack.c.b16 %v10034, %v10030
        %v10079 = vpack.c.b16 %v10039, %v10035
        %v10080 = vpack.c.b16 %v10040, %v10036
        %v10081 = vpack.c.b16 %v10041, %v10037
        %v10082 = vpack.c.b16 %v10042, %v10038
        %v10083 = vpack.c.b16 %v10047, %v10043
        %v10084 = vpack.c.b16 %v10048, %v10044
        %v10085 = vpack.c.b16 %v10049, %v10045
        %v10086 = vpack.c.b16 %v10050, %v10046
        %v10087 = vpack.c.b16 %v10055, %v10051
        %v10088 = vpack.c.b16 %v10056, %v10052
        %v10089 = vpack.c.b16 %v10057, %v10053
        %v10090 = vpack.c.b16 %v10058, %v10054
        %10123 = vmatprep.subr.bf16.mxu0 %v10060
        %10124 = vmatpush1.bf16.msra.mxu0 %v10059
        %10125 = vmatprep.subr.bf16.mxu0 %v10064
        %10126 = vmatpush1.bf16.msra.mxu0 %v10063
        %10127 = vmatprep.subr.bf16.mxu0 %v10068
        %10128 = vmatpush1.bf16.msra.mxu0 %v10067
        %10129 = vmatprep.subr.bf16.mxu0 %v10072
        %10130 = vmatpush1.bf16.msra.mxu0 %v10071
        %10131 = vmatprep.subr.bf16.mxu0 %v10076
        %10132 = vmatpush1.bf16.msra.mxu0 %v10075
        %10133 = vmatprep.subr.bf16.mxu0 %v10080
        %10134 = vmatpush1.bf16.msra.mxu0 %v10079
        %10135 = vmatprep.subr.bf16.mxu0 %v10084
        %10136 = vmatpush1.bf16.msra.mxu0 %v10083
        %10137 = vmatprep.subr.bf16.mxu0 %v10088
        %10138 = vmatpush1.bf16.msra.mxu0 %v10087
        %10139 = vmatprep.subr.bf16.mxu0 0
        %10140 = vmatpush1.bf16.msra.mxu0 0
        %10141 = vmatprep.subr.bf16.mxu0 0
        %10142 = vmatpush1.bf16.msra.mxu0 0
        %10143 = vmatprep.subr.bf16.mxu0 0
        %10144 = vmatpush1.bf16.msra.mxu0 0
        %10145 = vmatprep.subr.bf16.mxu0 0
        %10146 = vmatpush1.bf16.msra.mxu0 0
        %10147 = vmatprep.subr.bf16.mxu0 0
        %10148 = vmatpush1.bf16.msra.mxu0 0
        %10149 = vmatprep.subr.bf16.mxu0 0
        %10150 = vmatpush1.bf16.msra.mxu0 0
        %10151 = vmatprep.subr.bf16.mxu0 0
        %10152 = vmatpush1.bf16.msra.mxu0 0
        %10153 = vmatprep.subr.bf16.mxu0 0
        %10154 = vmatpush1.bf16.msra.mxu0 0
        %10155 = vmatprep.mubr.bf16.mxu0 0
        %10156 = vmatmul.mubr.bf16.gmra.mrb[0].mxu0 %v9901
        %v10157 = vpop.f32.mrb[0].mxu0
        %v10158 = vadd.f32 %v9946, %v10157
        %v10159 = vpop.f32.mrb[0].mxu0
        %v10160 = vadd.f32 %v9950, %v10159
        %v10161 = vpop.f32.mrb[0].mxu0
        %v10162 = vadd.f32 %v9946, %v10161
        %v10163 = vpop.f32.mrb[0].mxu0
        %v10164 = vadd.f32 %v9950, %v10163
        %10165 = vmatprep.mubr.bf16.mxu0 0
        %10166 = vmatmul.mubr.bf16.gmra.mrb[0].mxu0 %v9902
        %v10167 = vpop.f32.mrb[0].mxu0
        %v10168 = vadd.f32 %v9946, %v10167
        %v10169 = vpop.f32.mrb[0].mxu0
        %v10170 = vadd.f32 %v9950, %v10169
        %v10171 = vpop.f32.mrb[0].mxu0
        %v10172 = vadd.f32 %v9946, %v10171
        %v10173 = vpop.f32.mrb[0].mxu0
        %v10174 = vadd.f32 %v9950, %v10173
        %10175 = vmatprep.mubr.bf16.mxu0 0
        %10176 = vmatmul.mubr.bf16.gmra.mrb[0].mxu0 %v9903
        %v10177 = vpop.f32.mrb[0].mxu0
        %v10178 = vadd.f32 %v9946, %v10177
        %v10179 = vpop.f32.mrb[0].mxu0
        %v10180 = vadd.f32 %v9950, %v10179
        %v10181 = vpop.f32.mrb[0].mxu0
        %v10182 = vadd.f32 %v9946, %v10181
        %v10183 = vpop.f32.mrb[0].mxu0
        %v10184 = vadd.f32 %v9950, %v10183
        %10185 = vmatprep.mubr.bf16.mxu0 0
        %10186 = vmatmul.mubr.bf16.gmra.mrb[0].mxu0 %v9904
        %v10187 = vpop.f32.mrb[0].mxu0
        %v10188 = vadd.f32 %v9946, %v10187
        %v10189 = vpop.f32.mrb[0].mxu0
        %v10190 = vadd.f32 %v9950, %v10189
        %v10191 = vpop.f32.mrb[0].mxu0
        %v10192 = vadd.f32 %v9946, %v10191
        %v10193 = vpop.f32.mrb[0].mxu0
        %v10194 = vadd.f32 %v9950, %v10193
        %10195 = vmatprep.mubr.bf16.mxu0 0
        %10196 = vmatmul.mubr.bf16.gmra.mrb[0].mxu0 %v9905
        %v10197 = vpop.f32.mrb[0].mxu0
        %v10198 = vadd.f32 %v9946, %v10197
        %v10199 = vpop.f32.mrb[0].mxu0
        %v10200 = vadd.f32 %v9950, %v10199
        %v10201 = vpop.f32.mrb[0].mxu0
        %v10202 = vadd.f32 %v9946, %v10201
        %v10203 = vpop.f32.mrb[0].mxu0
        %v10204 = vadd.f32 %v9950, %v10203
        %10205 = vmatprep.mubr.bf16.mxu0 0
        %10206 = vmatmul.mubr.bf16.gmra.mrb[0].mxu0 %v9906
        %v10207 = vpop.f32.mrb[0].mxu0
        %v10208 = vadd.f32 %v9946, %v10207
        %v10209 = vpop.f32.mrb[0].mxu0
        %v10210 = vadd.f32 %v9950, %v10209
        %v10211 = vpop.f32.mrb[0].mxu0
        %v10212 = vadd.f32 %v9946, %v10211
        %v10213 = vpop.f32.mrb[0].mxu0
        %v10214 = vadd.f32 %v9950, %v10213
        %10215 = vmatprep.mubr.bf16.mxu0 0
        %10216 = vmatmul.mubr.bf16.gmra.mrb[0].mxu0 %v9907
        %v10217 = vpop.f32.mrb[0].mxu0
        %v10218 = vadd.f32 %v9946, %v10217
        %v10219 = vpop.f32.mrb[0].mxu0
        %v10220 = vadd.f32 %v9950, %v10219
        %v10221 = vpop.f32.mrb[0].mxu0
        %v10222 = vadd.f32 %v9946, %v10221
        %v10223 = vpop.f32.mrb[0].mxu0
        %v10224 = vadd.f32 %v9950, %v10223
        %10225 = vmatprep.mubr.bf16.mxu0 0
        %10226 = vmatmul.mubr.bf16.gmra.mrb[0].mxu0 %v9908
        %v10227 = vpop.f32.mrb[0].mxu0
        %v10228 = vadd.f32 %v9946, %v10227
        %v10229 = vpop.f32.mrb[0].mxu0
        %v10230 = vadd.f32 %v9950, %v10229
        %v10231 = vpop.f32.mrb[0].mxu0
        %v10232 = vadd.f32 %v9946, %v10231
        %v10233 = vpop.f32.mrb[0].mxu0
        %v10234 = vadd.f32 %v9950, %v10233
        %10235 = vdwg.mxu0
        %10236 = vmatprep.subr.bf16.mxu0 %v10062
        %10237 = vmatpush1.bf16.msra.mxu0 %v10061
        %10238 = vmatprep.subr.bf16.mxu0 %v10066
        %10239 = vmatpush1.bf16.msra.mxu0 %v10065
        %10240 = vmatprep.subr.bf16.mxu0 %v10070
        %10241 = vmatpush1.bf16.msra.mxu0 %v10069
        %10242 = vmatprep.subr.bf16.mxu0 %v10074
        %10243 = vmatpush1.bf16.msra.mxu0 %v10073
        %10244 = vmatprep.subr.bf16.mxu0 %v10078
        %10245 = vmatpush1.bf16.msra.mxu0 %v10077
        %10246 = vmatprep.subr.bf16.mxu0 %v10082
        %10247 = vmatpush1.bf16.msra.mxu0 %v10081
        %10248 = vmatprep.subr.bf16.mxu0 %v10086
        %10249 = vmatpush1.bf16.msra.mxu0 %v10085
        %10250 = vmatprep.subr.bf16.mxu0 %v10090
        %10251 = vmatpush1.bf16.msra.mxu0 %v10089
        %10252 = vmatprep.subr.bf16.mxu0 0
        %10253 = vmatpush1.bf16.msra.mxu0 0
        %10254 = vmatprep.subr.bf16.mxu0 0
        %10255 = vmatpush1.bf16.msra.mxu0 0
        %10256 = vmatprep.subr.bf16.mxu0 0
        %10257 = vmatpush1.bf16.msra.mxu0 0
        %10258 = vmatprep.subr.bf16.mxu0 0
        %10259 = vmatpush1.bf16.msra.mxu0 0
        %10260 = vmatprep.subr.bf16.mxu0 0
        %10261 = vmatpush1.bf16.msra.mxu0 0
        %10262 = vmatprep.subr.bf16.mxu0 0
        %10263 = vmatpush1.bf16.msra.mxu0 0
        %10264 = vmatprep.subr.bf16.mxu0 0
        %10265 = vmatpush1.bf16.msra.mxu0 0
        %10266 = vmatprep.subr.bf16.mxu0 0
        %10267 = vmatpush1.bf16.msra.mxu0 0
        %10268 = vmatprep.mubr.bf16.mxu0 0
        %10269 = vmatmul.mubr.bf16.gmra.mrb[0].mxu0 %v9901
        %v10270 = vpop.f32.mrb[0].mxu0
        %v10271 = vadd.f32 %v9954, %v10270
        %v10272 = vpop.f32.mrb[0].mxu0
        %v10273 = vadd.f32 %v9958, %v10272
        %v10274 = vpop.f32.mrb[0].mxu0
        %v10275 = vadd.f32 %v9954, %v10274
        %v10276 = vpop.f32.mrb[0].mxu0
        %v10277 = vadd.f32 %v9958, %v10276
        %10278 = vmatprep.mubr.bf16.mxu0 0
        %10279 = vmatmul.mubr.bf16.gmra.mrb[0].mxu0 %v9902
        %v10280 = vpop.f32.mrb[0].mxu0
        %v10281 = vadd.f32 %v9954, %v10280
        %v10282 = vpop.f32.mrb[0].mxu0
        %v10283 = vadd.f32 %v9958, %v10282
        %v10284 = vpop.f32.mrb[0].mxu0
        %v10285 = vadd.f32 %v9954, %v10284
        %v10286 = vpop.f32.mrb[0].mxu0
        %v10287 = vadd.f32 %v9958, %v10286
        %10288 = vmatprep.mubr.bf16.mxu0 0
        %10289 = vmatmul.mubr.bf16.gmra.mrb[0].mxu0 %v9903
        %v10290 = vpop.f32.mrb[0].mxu0
        %v10291 = vadd.f32 %v9954, %v10290
        %v10292 = vpop.f32.mrb[0].mxu0
        %v10293 = vadd.f32 %v9958, %v10292
        %v10294 = vpop.f32.mrb[0].mxu0
        %v10295 = vadd.f32 %v9954, %v10294
        %v10296 = vpop.f32.mrb[0].mxu0
        %v10297 = vadd.f32 %v9958, %v10296
        %10298 = vmatprep.mubr.bf16.mxu0 0
        %10299 = vmatmul.mubr.bf16.gmra.mrb[0].mxu0 %v9904
        %v10300 = vpop.f32.mrb[0].mxu0
        %v10301 = vadd.f32 %v9954, %v10300
        %v10302 = vpop.f32.mrb[0].mxu0
        %v10303 = vadd.f32 %v9958, %v10302
        %v10304 = vpop.f32.mrb[0].mxu0
        %v10305 = vadd.f32 %v9954, %v10304
        %v10306 = vpop.f32.mrb[0].mxu0
        %v10307 = vadd.f32 %v9958, %v10306
        %10308 = vmatprep.mubr.bf16.mxu0 0
        %10309 = vmatmul.mubr.bf16.gmra.mrb[0].mxu0 %v9905
        %v10310 = vpop.f32.mrb[0].mxu0
        %v10311 = vadd.f32 %v9954, %v10310
        %v10312 = vpop.f32.mrb[0].mxu0
        %v10313 = vadd.f32 %v9958, %v10312
        %v10314 = vpop.f32.mrb[0].mxu0
        %v10315 = vadd.f32 %v9954, %v10314
        %v10316 = vpop.f32.mrb[0].mxu0
        %v10317 = vadd.f32 %v9958, %v10316
        %10318 = vmatprep.mubr.bf16.mxu0 0
        %10319 = vmatmul.mubr.bf16.gmra.mrb[0].mxu0 %v9906
        %v10320 = vpop.f32.mrb[0].mxu0
        %v10321 = vadd.f32 %v9954, %v10320
        %v10322 = vpop.f32.mrb[0].mxu0
        %v10323 = vadd.f32 %v9958, %v10322
        %v10324 = vpop.f32.mrb[0].mxu0
        %v10325 = vadd.f32 %v9954, %v10324
        %v10326 = vpop.f32.mrb[0].mxu0
        %v10327 = vadd.f32 %v9958, %v10326
        %10328 = vmatprep.mubr.bf16.mxu0 0
        %10329 = vmatmul.mubr.bf16.gmra.mrb[0].mxu0 %v9907
        %v10330 = vpop.f32.mrb[0].mxu0
        %v10331 = vadd.f32 %v9954, %v10330
        %v10332 = vpop.f32.mrb[0].mxu0
        %v10333 = vadd.f32 %v9958, %v10332
        %v10334 = vpop.f32.mrb[0].mxu0
        %v10335 = vadd.f32 %v9954, %v10334
        %v10336 = vpop.f32.mrb[0].mxu0
        %v10337 = vadd.f32 %v9958, %v10336
        %10338 = vmatprep.mubr.bf16.mxu0 0
        %10339 = vmatmul.mubr.bf16.gmra.mrb[0].mxu0 %v9908
        %v10340 = vpop.f32.mrb[0].mxu0
        %v10341 = vadd.f32 %v9954, %v10340
        %v10342 = vpop.f32.mrb[0].mxu0
        %v10343 = vadd.f32 %v9958, %v10342
        %v10344 = vpop.f32.mrb[0].mxu0
        %v10345 = vadd.f32 %v9954, %v10344
        %v10346 = vpop.f32.mrb[0].mxu0
        %v10347 = vadd.f32 %v9958, %v10346
        %10348 = vdwg.mxu0
        %v10349 = vmul.f32 %v10158, 1.702
        %v10350 = vmul.f32 %v10160, 1.702
        %v10351 = vmul.f32 %v10271, 1.702
        %v10352 = vmul.f32 %v10273, 1.702
        %v10353 = vmul.f32 %v10162, 1.702
        %v10354 = vmul.f32 %v10164, 1.702
        %v10355 = vmul.f32 %v10275, 1.702
        %v10356 = vmul.f32 %v10277, 1.702
        %v10357 = vmul.f32 %v10168, 1.702
        %v10358 = vmul.f32 %v10170, 1.702
        %v10359 = vmul.f32 %v10281, 1.702
        %v10360 = vmul.f32 %v10283, 1.702
        %v10361 = vmul.f32 %v10172, 1.702
        %v10362 = vmul.f32 %v10174, 1.702
        %v10363 = vmul.f32 %v10285, 1.702
        %v10364 = vmul.f32 %v10287, 1.702
        %v10365 = vmul.f32 %v10178, 1.702
        %v10366 = vmul.f32 %v10180, 1.702
        %v10367 = vmul.f32 %v10291, 1.702
        %v10368 = vmul.f32 %v10293, 1.702
        %v10369 = vmul.f32 %v10182, 1.702
        %v10370 = vmul.f32 %v10184, 1.702
        %v10371 = vmul.f32 %v10295, 1.702
        %v10372 = vmul.f32 %v10297, 1.702
        %v10373 = vmul.f32 %v10188, 1.702
        %v10374 = vmul.f32 %v10190, 1.702
        %v10375 = vmul.f32 %v10301, 1.702
        %v10376 = vmul.f32 %v10303, 1.702
        %v10377 = vmul.f32 %v10192, 1.702
        %v10378 = vmul.f32 %v10194, 1.702
        %v10379 = vmul.f32 %v10305, 1.702
        %v10380 = vmul.f32 %v10307, 1.702
        %v10381 = vmul.f32 %v10198, 1.702
        %v10382 = vmul.f32 %v10200, 1.702
        %v10383 = vmul.f32 %v10311, 1.702
        %v10384 = vmul.f32 %v10313, 1.702
        %v10385 = vmul.f32 %v10202, 1.702
        %v10386 = vmul.f32 %v10204, 1.702
        %v10387 = vmul.f32 %v10315, 1.702
        %v10388 = vmul.f32 %v10317, 1.702
        %v10389 = vmul.f32 %v10208, 1.702
        %v10390 = vmul.f32 %v10210, 1.702
        %v10391 = vmul.f32 %v10321, 1.702
        %v10392 = vmul.f32 %v10323, 1.702
        %v10393 = vmul.f32 %v10212, 1.702
        %v10394 = vmul.f32 %v10214, 1.702
        %v10395 = vmul.f32 %v10325, 1.702
        %v10396 = vmul.f32 %v10327, 1.702
        %v10397 = vmul.f32 %v10218, 1.702
        %v10398 = vmul.f32 %v10220, 1.702
        %v10399 = vmul.f32 %v10331, 1.702
        %v10400 = vmul.f32 %v10333, 1.702
        %v10401 = vmul.f32 %v10222, 1.702
        %v10402 = vmul.f32 %v10224, 1.702
        %v10403 = vmul.f32 %v10335, 1.702
        %v10404 = vmul.f32 %v10337, 1.702
        %v10405 = vmul.f32 %v10228, 1.702
        %v10406 = vmul.f32 %v10230, 1.702
        %v10407 = vmul.f32 %v10341, 1.702
        %v10408 = vmul.f32 %v10343, 1.702
        %v10409 = vmul.f32 %v10232, 1.702
        %v10410 = vmul.f32 %v10234, 1.702
        %v10411 = vmul.f32 %v10345, 1.702
        %v10412 = vmul.f32 %v10347, 1.702
        %v10413 = vxor.u32 %v10349, 2147483648
        %v10414 = vxor.u32 %v10350, 2147483648
        %v10415 = vxor.u32 %v10351, 2147483648
        %v10416 = vxor.u32 %v10352, 2147483648
        %v10417 = vxor.u32 %v10353, 2147483648
        %v10418 = vxor.u32 %v10354, 2147483648
        %v10419 = vxor.u32 %v10355, 2147483648
        %v10420 = vxor.u32 %v10356, 2147483648
        %v10421 = vxor.u32 %v10357, 2147483648
        %v10422 = vxor.u32 %v10358, 2147483648
        %v10423 = vxor.u32 %v10359, 2147483648
        %v10424 = vxor.u32 %v10360, 2147483648
        %v10425 = vxor.u32 %v10361, 2147483648
        %v10426 = vxor.u32 %v10362, 2147483648
        %v10427 = vxor.u32 %v10363, 2147483648
        %v10428 = vxor.u32 %v10364, 2147483648
        %v10429 = vxor.u32 %v10365, 2147483648
        %v10430 = vxor.u32 %v10366, 2147483648
        %v10431 = vxor.u32 %v10367, 2147483648
        %v10432 = vxor.u32 %v10368, 2147483648
        %v10433 = vxor.u32 %v10369, 2147483648
        %v10434 = vxor.u32 %v10370, 2147483648
        %v10435 = vxor.u32 %v10371, 2147483648
        %v10436 = vxor.u32 %v10372, 2147483648
        %v10437 = vxor.u32 %v10373, 2147483648
        %v10438 = vxor.u32 %v10374, 2147483648
        %v10439 = vxor.u32 %v10375, 2147483648
        %v10440 = vxor.u32 %v10376, 2147483648
        %v10441 = vxor.u32 %v10377, 2147483648
        %v10442 = vxor.u32 %v10378, 2147483648
        %v10443 = vxor.u32 %v10379, 2147483648
        %v10444 = vxor.u32 %v10380, 2147483648
        %v10445 = vxor.u32 %v10381, 2147483648
        %v10446 = vxor.u32 %v10382, 2147483648
        %v10447 = vxor.u32 %v10383, 2147483648
        %v10448 = vxor.u32 %v10384, 2147483648
        %v10449 = vxor.u32 %v10385, 2147483648
        %v10450 = vxor.u32 %v10386, 2147483648
        %v10451 = vxor.u32 %v10387, 2147483648
        %v10452 = vxor.u32 %v10388, 2147483648
        %v10453 = vxor.u32 %v10389, 2147483648
        %v10454 = vxor.u32 %v10390, 2147483648
        %v10455 = vxor.u32 %v10391, 2147483648
        %v10456 = vxor.u32 %v10392, 2147483648
        %v10457 = vxor.u32 %v10393, 2147483648
        %v10458 = vxor.u32 %v10394, 2147483648
        %v10459 = vxor.u32 %v10395, 2147483648
        %v10460 = vxor.u32 %v10396, 2147483648
        %v10461 = vxor.u32 %v10397, 2147483648
        %v10462 = vxor.u32 %v10398, 2147483648
        %v10463 = vxor.u32 %v10399, 2147483648
        %v10464 = vxor.u32 %v10400, 2147483648
        %v10465 = vxor.u32 %v10401, 2147483648
        %v10466 = vxor.u32 %v10402, 2147483648
        %v10467 = vxor.u32 %v10403, 2147483648
        %v10468 = vxor.u32 %v10404, 2147483648
        %v10469 = vxor.u32 %v10405, 2147483648
        %v10470 = vxor.u32 %v10406, 2147483648
        %v10471 = vxor.u32 %v10407, 2147483648
        %v10472 = vxor.u32 %v10408, 2147483648
        %v10473 = vxor.u32 %v10409, 2147483648
        %v10474 = vxor.u32 %v10410, 2147483648
        %v10475 = vxor.u32 %v10411, 2147483648
        %v10476 = vxor.u32 %v10412, 2147483648
        %v10477 = vmul.f32 %v10413, 1.442695
        %v10478 = vpow.pop %v10477
        %v10479 = vmul.f32 %v10414, 1.442695
        %v10480 = vpow.pop %v10479
        %v10481 = vmul.f32 %v10415, 1.442695
        %v10482 = vpow.pop %v10481
        %v10483 = vmul.f32 %v10416, 1.442695
        %v10484 = vpow.pop %v10483
        %v10485 = vmul.f32 %v10417, 1.442695
        %v10486 = vpow.pop %v10485
        %v10487 = vmul.f32 %v10418, 1.442695
        %v10488 = vpow.pop %v10487
        %v10489 = vmul.f32 %v10419, 1.442695
        %v10490 = vpow.pop %v10489
        %v10491 = vmul.f32 %v10420, 1.442695
        %v10492 = vpow.pop %v10491
        %v10493 = vmul.f32 %v10421, 1.442695
        %v10494 = vpow.pop %v10493
        %v10495 = vmul.f32 %v10422, 1.442695
        %v10496 = vpow.pop %v10495
        %v10497 = vmul.f32 %v10423, 1.442695
        %v10498 = vpow.pop %v10497
        %v10499 = vmul.f32 %v10424, 1.442695
        %v10500 = vpow.pop %v10499
        %v10501 = vmul.f32 %v10425, 1.442695
        %v10502 = vpow.pop %v10501
        %v10503 = vmul.f32 %v10426, 1.442695
        %v10504 = vpow.pop %v10503
        %v10505 = vmul.f32 %v10427, 1.442695
        %v10506 = vpow.pop %v10505
        %v10507 = vmul.f32 %v10428, 1.442695
        %v10508 = vpow.pop %v10507
        %v10509 = vmul.f32 %v10429, 1.442695
        %v10510 = vpow.pop %v10509
        %v10511 = vmul.f32 %v10430, 1.442695
        %v10512 = vpow.pop %v10511
        %v10513 = vmul.f32 %v10431, 1.442695
        %v10514 = vpow.pop %v10513
        %v10515 = vmul.f32 %v10432, 1.442695
        %v10516 = vpow.pop %v10515
        %v10517 = vmul.f32 %v10433, 1.442695
        %v10518 = vpow.pop %v10517
        %v10519 = vmul.f32 %v10434, 1.442695
        %v10520 = vpow.pop %v10519
        %v10521 = vmul.f32 %v10435, 1.442695
        %v10522 = vpow.pop %v10521
        %v10523 = vmul.f32 %v10436, 1.442695
        %v10524 = vpow.pop %v10523
        %v10525 = vmul.f32 %v10437, 1.442695
        %v10526 = vpow.pop %v10525
        %v10527 = vmul.f32 %v10438, 1.442695
        %v10528 = vpow.pop %v10527
        %v10529 = vmul.f32 %v10439, 1.442695
        %v10530 = vpow.pop %v10529
        %v10531 = vmul.f32 %v10440, 1.442695
        %v10532 = vpow.pop %v10531
        %v10533 = vmul.f32 %v10441, 1.442695
        %v10534 = vpow.pop %v10533
        %v10535 = vmul.f32 %v10442, 1.442695
        %v10536 = vpow.pop %v10535
        %v10537 = vmul.f32 %v10443, 1.442695
        %v10538 = vpow.pop %v10537
        %v10539 = vmul.f32 %v10444, 1.442695
        %v10540 = vpow.pop %v10539
        %v10541 = vmul.f32 %v10445, 1.442695
        %v10542 = vpow.pop %v10541
        %v10543 = vmul.f32 %v10446, 1.442695
        %v10544 = vpow.pop %v10543
        %v10545 = vmul.f32 %v10447, 1.442695
        %v10546 = vpow.pop %v10545
        %v10547 = vmul.f32 %v10448, 1.442695
        %v10548 = vpow.pop %v10547
        %v10549 = vmul.f32 %v10449, 1.442695
        %v10550 = vpow.pop %v10549
        %v10551 = vmul.f32 %v10450, 1.442695
        %v10552 = vpow.pop %v10551
        %v10553 = vmul.f32 %v10451, 1.442695
        %v10554 = vpow.pop %v10553
        %v10555 = vmul.f32 %v10452, 1.442695
        %v10556 = vpow.pop %v10555
        %v10557 = vmul.f32 %v10453, 1.442695
        %v10558 = vpow.pop %v10557
        %v10559 = vmul.f32 %v10454, 1.442695
        %v10560 = vpow.pop %v10559
        %v10561 = vmul.f32 %v10455, 1.442695
        %v10562 = vpow.pop %v10561
        %v10563 = vmul.f32 %v10456, 1.442695
        %v10564 = vpow.pop %v10563
        %v10565 = vmul.f32 %v10457, 1.442695
        %v10566 = vpow.pop %v10565
        %v10567 = vmul.f32 %v10458, 1.442695
        %v10568 = vpow.pop %v10567
        %v10569 = vmul.f32 %v10459, 1.442695
        %v10570 = vpow.pop %v10569
        %v10571 = vmul.f32 %v10460, 1.442695
        %v10572 = vpow.pop %v10571
        %v10573 = vmul.f32 %v10461, 1.442695
        %v10574 = vpow.pop %v10573
        %v10575 = vmul.f32 %v10462, 1.442695
        %v10576 = vpow.pop %v10575
        %v10577 = vmul.f32 %v10463, 1.442695
        %v10578 = vpow.pop %v10577
        %v10579 = vmul.f32 %v10464, 1.442695
        %v10580 = vpow.pop %v10579
        %v10581 = vmul.f32 %v10465, 1.442695
        %v10582 = vpow.pop %v10581
        %v10583 = vmul.f32 %v10466, 1.442695
        %v10584 = vpow.pop %v10583
        %v10585 = vmul.f32 %v10467, 1.442695
        %v10586 = vpow.pop %v10585
        %v10587 = vmul.f32 %v10468, 1.442695
        %v10588 = vpow.pop %v10587
        %v10589 = vmul.f32 %v10469, 1.442695
        %v10590 = vpow.pop %v10589
        %v10591 = vmul.f32 %v10470, 1.442695
        %v10592 = vpow.pop %v10591
        %v10593 = vmul.f32 %v10471, 1.442695
        %v10594 = vpow.pop %v10593
        %v10595 = vmul.f32 %v10472, 1.442695
        %v10596 = vpow.pop %v10595
        %v10597 = vmul.f32 %v10473, 1.442695
        %v10598 = vpow.pop %v10597
        %v10599 = vmul.f32 %v10474, 1.442695
        %v10600 = vpow.pop %v10599
        %v10601 = vmul.f32 %v10475, 1.442695
        %v10602 = vpow.pop %v10601
        %v10603 = vmul.f32 %v10476, 1.442695
        %v10604 = vpow.pop %v10603
        %v10605 = vadd.f32 %v10478, 1.0
        %v10606 = vadd.f32 %v10480, 1.0
        %v10607 = vadd.f32 %v10482, 1.0
        %v10608 = vadd.f32 %v10484, 1.0
        %v10609 = vadd.f32 %v10486, 1.0
        %v10610 = vadd.f32 %v10488, 1.0
        %v10611 = vadd.f32 %v10490, 1.0
        %v10612 = vadd.f32 %v10492, 1.0
        %v10613 = vadd.f32 %v10494, 1.0
        %v10614 = vadd.f32 %v10496, 1.0
        %v10615 = vadd.f32 %v10498, 1.0
        %v10616 = vadd.f32 %v10500, 1.0
        %v10617 = vadd.f32 %v10502, 1.0
        %v10618 = vadd.f32 %v10504, 1.0
        %v10619 = vadd.f32 %v10506, 1.0
        %v10620 = vadd.f32 %v10508, 1.0
        %v10621 = vadd.f32 %v10510, 1.0
        %v10622 = vadd.f32 %v10512, 1.0
        %v10623 = vadd.f32 %v10514, 1.0
        %v10624 = vadd.f32 %v10516, 1.0
        %v10625 = vadd.f32 %v10518, 1.0
        %v10626 = vadd.f32 %v10520, 1.0
        %v10627 = vadd.f32 %v10522, 1.0
        %v10628 = vadd.f32 %v10524, 1.0
        %v10629 = vadd.f32 %v10526, 1.0
        %v10630 = vadd.f32 %v10528, 1.0
        %v10631 = vadd.f32 %v10530, 1.0
        %v10632 = vadd.f32 %v10532, 1.0
        %v10633 = vadd.f32 %v10534, 1.0
        %v10634 = vadd.f32 %v10536, 1.0
        %v10635 = vadd.f32 %v10538, 1.0
        %v10636 = vadd.f32 %v10540, 1.0
        %v10637 = vadd.f32 %v10542, 1.0
        %v10638 = vadd.f32 %v10544, 1.0
        %v10639 = vadd.f32 %v10546, 1.0
        %v10640 = vadd.f32 %v10548, 1.0
        %v10641 = vadd.f32 %v10550, 1.0
        %v10642 = vadd.f32 %v10552, 1.0
        %v10643 = vadd.f32 %v10554, 1.0
        %v10644 = vadd.f32 %v10556, 1.0
        %v10645 = vadd.f32 %v10558, 1.0
        %v10646 = vadd.f32 %v10560, 1.0
        %v10647 = vadd.f32 %v10562, 1.0
        %v10648 = vadd.f32 %v10564, 1.0
        %v10649 = vadd.f32 %v10566, 1.0
        %v10650 = vadd.f32 %v10568, 1.0
        %v10651 = vadd.f32 %v10570, 1.0
        %v10652 = vadd.f32 %v10572, 1.0
        %v10653 = vadd.f32 %v10574, 1.0
        %v10654 = vadd.f32 %v10576, 1.0
        %v10655 = vadd.f32 %v10578, 1.0
        %v10656 = vadd.f32 %v10580, 1.0
        %v10657 = vadd.f32 %v10582, 1.0
        %v10658 = vadd.f32 %v10584, 1.0
        %v10659 = vadd.f32 %v10586, 1.0
        %v10660 = vadd.f32 %v10588, 1.0
        %v10661 = vadd.f32 %v10590, 1.0
        %v10662 = vadd.f32 %v10592, 1.0
        %v10663 = vadd.f32 %v10594, 1.0
        %v10664 = vadd.f32 %v10596, 1.0
        %v10665 = vadd.f32 %v10598, 1.0
        %v10666 = vadd.f32 %v10600, 1.0
        %v10667 = vadd.f32 %v10602, 1.0
        %v10668 = vadd.f32 %v10604, 1.0
        %v10669 = vrcp.pop %v10605
        %v10670 = vmul.f32 1.0, %v10669
        %v10671 = vrcp.pop %v10606
        %v10672 = vmul.f32 1.0, %v10671
        %v10673 = vrcp.pop %v10607
        %v10674 = vmul.f32 1.0, %v10673
        %v10675 = vrcp.pop %v10608
        %v10676 = vmul.f32 1.0, %v10675
        %v10677 = vrcp.pop %v10609
        %v10678 = vmul.f32 1.0, %v10677
        %v10679 = vrcp.pop %v10610
        %v10680 = vmul.f32 1.0, %v10679
        %v10681 = vrcp.pop %v10611
        %v10682 = vmul.f32 1.0, %v10681
        %v10683 = vrcp.pop %v10612
        %v10684 = vmul.f32 1.0, %v10683
        %v10685 = vrcp.pop %v10613
        %v10686 = vmul.f32 1.0, %v10685
        %v10687 = vrcp.pop %v10614
        %v10688 = vmul.f32 1.0, %v10687
        %v10689 = vrcp.pop %v10615
        %v10690 = vmul.f32 1.0, %v10689
        %v10691 = vrcp.pop %v10616
        %v10692 = vmul.f32 1.0, %v10691
        %v10693 = vrcp.pop %v10617
        %v10694 = vmul.f32 1.0, %v10693
        %v10695 = vrcp.pop %v10618
        %v10696 = vmul.f32 1.0, %v10695
        %v10697 = vrcp.pop %v10619
        %v10698 = vmul.f32 1.0, %v10697
        %v10699 = vrcp.pop %v10620
        %v10700 = vmul.f32 1.0, %v10699
        %v10701 = vrcp.pop %v10621
        %v10702 = vmul.f32 1.0, %v10701
        %v10703 = vrcp.pop %v10622
        %v10704 = vmul.f32 1.0, %v10703
        %v10705 = vrcp.pop %v10623
        %v10706 = vmul.f32 1.0, %v10705
        %v10707 = vrcp.pop %v10624
        %v10708 = vmul.f32 1.0, %v10707
        %v10709 = vrcp.pop %v10625
        %v10710 = vmul.f32 1.0, %v10709
        %v10711 = vrcp.pop %v10626
        %v10712 = vmul.f32 1.0, %v10711
        %v10713 = vrcp.pop %v10627
        %v10714 = vmul.f32 1.0, %v10713
        %v10715 = vrcp.pop %v10628
        %v10716 = vmul.f32 1.0, %v10715
        %v10717 = vrcp.pop %v10629
        %v10718 = vmul.f32 1.0, %v10717
        %v10719 = vrcp.pop %v10630
        %v10720 = vmul.f32 1.0, %v10719
        %v10721 = vrcp.pop %v10631
        %v10722 = vmul.f32 1.0, %v10721
        %v10723 = vrcp.pop %v10632
        %v10724 = vmul.f32 1.0, %v10723
        %v10725 = vrcp.pop %v10633
        %v10726 = vmul.f32 1.0, %v10725
        %v10727 = vrcp.pop %v10634
        %v10728 = vmul.f32 1.0, %v10727
        %v10729 = vrcp.pop %v10635
        %v10730 = vmul.f32 1.0, %v10729
        %v10731 = vrcp.pop %v10636
        %v10732 = vmul.f32 1.0, %v10731
        %v10733 = vrcp.pop %v10637
        %v10734 = vmul.f32 1.0, %v10733
        %v10735 = vrcp.pop %v10638
        %v10736 = vmul.f32 1.0, %v10735
        %v10737 = vrcp.pop %v10639
        %v10738 = vmul.f32 1.0, %v10737
        %v10739 = vrcp.pop %v10640
        %v10740 = vmul.f32 1.0, %v10739
        %v10741 = vrcp.pop %v10641
        %v10742 = vmul.f32 1.0, %v10741
        %v10743 = vrcp.pop %v10642
        %v10744 = vmul.f32 1.0, %v10743
        %v10745 = vrcp.pop %v10643
        %v10746 = vmul.f32 1.0, %v10745
        %v10747 = vrcp.pop %v10644
        %v10748 = vmul.f32 1.0, %v10747
        %v10749 = vrcp.pop %v10645
        %v10750 = vmul.f32 1.0, %v10749
        %v10751 = vrcp.pop %v10646
        %v10752 = vmul.f32 1.0, %v10751
        %v10753 = vrcp.pop %v10647
        %v10754 = vmul.f32 1.0, %v10753
        %v10755 = vrcp.pop %v10648
        %v10756 = vmul.f32 1.0, %v10755
        %v10757 = vrcp.pop %v10649
        %v10758 = vmul.f32 1.0, %v10757
        %v10759 = vrcp.pop %v10650
        %v10760 = vmul.f32 1.0, %v10759
        %v10761 = vrcp.pop %v10651
        %v10762 = vmul.f32 1.0, %v10761
        %v10763 = vrcp.pop %v10652
        %v10764 = vmul.f32 1.0, %v10763
        %v10765 = vrcp.pop %v10653
        %v10766 = vmul.f32 1.0, %v10765
        %v10767 = vrcp.pop %v10654
        %v10768 = vmul.f32 1.0, %v10767
        %v10769 = vrcp.pop %v10655
        %v10770 = vmul.f32 1.0, %v10769
        %v10771 = vrcp.pop %v10656
        %v10772 = vmul.f32 1.0, %v10771
        %v10773 = vrcp.pop %v10657
        %v10774 = vmul.f32 1.0, %v10773
        %v10775 = vrcp.pop %v10658
        %v10776 = vmul.f32 1.0, %v10775
        %v10777 = vrcp.pop %v10659
        %v10778 = vmul.f32 1.0, %v10777
        %v10779 = vrcp.pop %v10660
        %v10780 = vmul.f32 1.0, %v10779
        %v10781 = vrcp.pop %v10661
        %v10782 = vmul.f32 1.0, %v10781
        %v10783 = vrcp.pop %v10662
        %v10784 = vmul.f32 1.0, %v10783
        %v10785 = vrcp.pop %v10663
        %v10786 = vmul.f32 1.0, %v10785
        %v10787 = vrcp.pop %v10664
        %v10788 = vmul.f32 1.0, %v10787
        %v10789 = vrcp.pop %v10665
        %v10790 = vmul.f32 1.0, %v10789
        %v10791 = vrcp.pop %v10666
        %v10792 = vmul.f32 1.0, %v10791
        %v10793 = vrcp.pop %v10667
        %v10794 = vmul.f32 1.0, %v10793
        %v10795 = vrcp.pop %v10668
        %v10796 = vmul.f32 1.0, %v10795
        %v10797 = vmul.f32 %v10158, %v10670
        %v10798 = vmul.f32 %v10160, %v10672
        %v10799 = vmul.f32 %v10271, %v10674
        %v10800 = vmul.f32 %v10273, %v10676
        %v10801 = vmul.f32 %v10162, %v10678
        %v10802 = vmul.f32 %v10164, %v10680
        %v10803 = vmul.f32 %v10275, %v10682
        %v10804 = vmul.f32 %v10277, %v10684
        %v10805 = vmul.f32 %v10168, %v10686
        %v10806 = vmul.f32 %v10170, %v10688
        %v10807 = vmul.f32 %v10281, %v10690
        %v10808 = vmul.f32 %v10283, %v10692
        %v10809 = vmul.f32 %v10172, %v10694
        %v10810 = vmul.f32 %v10174, %v10696
        %v10811 = vmul.f32 %v10285, %v10698
        %v10812 = vmul.f32 %v10287, %v10700
        %v10813 = vmul.f32 %v10178, %v10702
        %v10814 = vmul.f32 %v10180, %v10704
        %v10815 = vmul.f32 %v10291, %v10706
        %v10816 = vmul.f32 %v10293, %v10708
        %v10817 = vmul.f32 %v10182, %v10710
        %v10818 = vmul.f32 %v10184, %v10712
        %v10819 = vmul.f32 %v10295, %v10714
        %v10820 = vmul.f32 %v10297, %v10716
        %v10821 = vmul.f32 %v10188, %v10718
        %v10822 = vmul.f32 %v10190, %v10720
        %v10823 = vmul.f32 %v10301, %v10722
        %v10824 = vmul.f32 %v10303, %v10724
        %v10825 = vmul.f32 %v10192, %v10726
        %v10826 = vmul.f32 %v10194, %v10728
        %v10827 = vmul.f32 %v10305, %v10730
        %v10828 = vmul.f32 %v10307, %v10732
        %v10829 = vmul.f32 %v10198, %v10734
        %v10830 = vmul.f32 %v10200, %v10736
        %v10831 = vmul.f32 %v10311, %v10738
        %v10832 = vmul.f32 %v10313, %v10740
        %v10833 = vmul.f32 %v10202, %v10742
        %v10834 = vmul.f32 %v10204, %v10744
        %v10835 = vmul.f32 %v10315, %v10746
        %v10836 = vmul.f32 %v10317, %v10748
        %v10837 = vmul.f32 %v10208, %v10750
        %v10838 = vmul.f32 %v10210, %v10752
        %v10839 = vmul.f32 %v10321, %v10754
        %v10840 = vmul.f32 %v10323, %v10756
        %v10841 = vmul.f32 %v10212, %v10758
        %v10842 = vmul.f32 %v10214, %v10760
        %v10843 = vmul.f32 %v10325, %v10762
        %v10844 = vmul.f32 %v10327, %v10764
        %v10845 = vmul.f32 %v10218, %v10766
        %v10846 = vmul.f32 %v10220, %v10768
        %v10847 = vmul.f32 %v10331, %v10770
        %v10848 = vmul.f32 %v10333, %v10772
        %v10849 = vmul.f32 %v10222, %v10774
        %v10850 = vmul.f32 %v10224, %v10776
        %v10851 = vmul.f32 %v10335, %v10778
        %v10852 = vmul.f32 %v10337, %v10780
        %v10853 = vmul.f32 %v10228, %v10782
        %v10854 = vmul.f32 %v10230, %v10784
        %v10855 = vmul.f32 %v10341, %v10786
        %v10856 = vmul.f32 %v10343, %v10788
        %v10857 = vmul.f32 %v10232, %v10790
        %v10858 = vmul.f32 %v10234, %v10792
        %v10859 = vmul.f32 %v10345, %v10794
        %v10860 = vmul.f32 %v10347, %v10796
        %v10861 = vpack.c.bf16 %v10801, %v10797
        %v10862 = vpack.c.bf16 %v10802, %v10798
        %v10863 = vpack.c.bf16 %v10803, %v10799
        %v10864 = vpack.c.bf16 %v10804, %v10800
        %v10865 = vpack.c.bf16 %v10809, %v10805
        %v10866 = vpack.c.bf16 %v10810, %v10806
        %v10867 = vpack.c.bf16 %v10811, %v10807
        %v10868 = vpack.c.bf16 %v10812, %v10808
        %v10869 = vpack.c.bf16 %v10817, %v10813
        %v10870 = vpack.c.bf16 %v10818, %v10814
        %v10871 = vpack.c.bf16 %v10819, %v10815
        %v10872 = vpack.c.bf16 %v10820, %v10816
        %v10873 = vpack.c.bf16 %v10825, %v10821
        %v10874 = vpack.c.bf16 %v10826, %v10822
        %v10875 = vpack.c.bf16 %v10827, %v10823
        %v10876 = vpack.c.bf16 %v10828, %v10824
        %v10877 = vpack.c.bf16 %v10833, %v10829
        %v10878 = vpack.c.bf16 %v10834, %v10830
        %v10879 = vpack.c.bf16 %v10835, %v10831
        %v10880 = vpack.c.bf16 %v10836, %v10832
        %v10881 = vpack.c.bf16 %v10841, %v10837
        %v10882 = vpack.c.bf16 %v10842, %v10838
        %v10883 = vpack.c.bf16 %v10843, %v10839
        %v10884 = vpack.c.bf16 %v10844, %v10840
        %v10885 = vpack.c.bf16 %v10849, %v10845
        %v10886 = vpack.c.bf16 %v10850, %v10846
        %v10887 = vpack.c.bf16 %v10851, %v10847
        %v10888 = vpack.c.bf16 %v10852, %v10848
        %v10889 = vpack.c.bf16 %v10857, %v10853
        %v10890 = vpack.c.bf16 %v10858, %v10854
        %v10891 = vpack.c.bf16 %v10859, %v10855
        %v10892 = vpack.c.bf16 %v10860, %v10856
        %v10893 = vld [vmem:[%s779] sm:$0xf]
        %v10894 = vld [vmem:[%s779 + $0x4] sm:$0xf]
        %v10895 = vld [vmem:[%s779 + $0x8] sm:$0xf]
        %v10896 = vld [vmem:[%s779 + $0xc] sm:$0xf]
        %v10897 = vld [vmem:[%s779 + $0x10] sm:$0xf]
        %v10898 = vld [vmem:[%s779 + $0x14] sm:$0xf]
        %v10899 = vld [vmem:[%s779 + $0x18] sm:$0xf]
        %v10900 = vld [vmem:[%s779 + $0x1c] sm:$0xf]
        %v10901 = vld [vmem:[%s779 + $0x20] sm:$0xf]
        %v10902 = vld [vmem:[%s779 + $0x24] sm:$0xf]
        %v10903 = vld [vmem:[%s779 + $0x28] sm:$0xf]
        %v10904 = vld [vmem:[%s779 + $0x2c] sm:$0xf]
        %v10905 = vld [vmem:[%s779 + $0x30] sm:$0xf]
        %v10906 = vld [vmem:[%s779 + $0x34] sm:$0xf]
        %v10907 = vld [vmem:[%s779 + $0x38] sm:$0xf]
        %v10908 = vld [vmem:[%s779 + $0x3c] sm:$0xf]
        %v10909 = vld [vmem:[%s779 + $0x40] sm:$0xf]
        %v10910 = vld [vmem:[%s779 + $0x44] sm:$0xf]
        %v10911 = vld [vmem:[%s779 + $0x48] sm:$0xf]
        %v10912 = vld [vmem:[%s779 + $0x4c] sm:$0xf]
        %v10913 = vld [vmem:[%s779 + $0x50] sm:$0xf]
        %v10914 = vld [vmem:[%s779 + $0x54] sm:$0xf]
        %v10915 = vld [vmem:[%s779 + $0x58] sm:$0xf]
        %v10916 = vld [vmem:[%s779 + $0x5c] sm:$0xf]
        %v10917 = vld [vmem:[%s779 + $0x60] sm:$0xf]
        %v10918 = vld [vmem:[%s779 + $0x64] sm:$0xf]
        %v10919 = vld [vmem:[%s779 + $0x68] sm:$0xf]
        %v10920 = vld [vmem:[%s779 + $0x6c] sm:$0xf]
        %v10921 = vld [vmem:[%s779 + $0x70] sm:$0xf]
        %v10922 = vld [vmem:[%s779 + $0x74] sm:$0xf]
        %v10923 = vld [vmem:[%s779 + $0x78] sm:$0xf]
        %v10924 = vld [vmem:[%s779 + $0x7c] sm:$0xf]
        %v10925 = vld [vmem:[%s779 + $0x80] sm:$0xf]
        %v10926 = vld [vmem:[%s779 + $0x84] sm:$0xf]
        %v10927 = vld [vmem:[%s779 + $0x88] sm:$0xf]
        %v10928 = vld [vmem:[%s779 + $0x8c] sm:$0xf]
        %v10929 = vld [vmem:[%s779 + $0x90] sm:$0xf]
        %v10930 = vld [vmem:[%s779 + $0x94] sm:$0xf]
        %v10931 = vld [vmem:[%s779 + $0x98] sm:$0xf]
        %v10932 = vld [vmem:[%s779 + $0x9c] sm:$0xf]
        %v10933 = vld [vmem:[%s779 + $0xa0] sm:$0xf]
        %v10934 = vld [vmem:[%s779 + $0xa4] sm:$0xf]
        %v10935 = vld [vmem:[%s779 + $0xa8] sm:$0xf]
        %v10936 = vld [vmem:[%s779 + $0xac] sm:$0xf]
        %v10937 = vld [vmem:[%s779 + $0xb0] sm:$0xf]
        %v10938 = vld [vmem:[%s779 + $0xb4] sm:$0xf]
        %v10939 = vld [vmem:[%s779 + $0xb8] sm:$0xf]
        %v10940 = vld [vmem:[%s779 + $0xbc] sm:$0xf]
        %v10941 = vld [vmem:[%s779 + $0xc0] sm:$0xf]
        %v10942 = vld [vmem:[%s779 + $0xc4] sm:$0xf]
        %v10943 = vld [vmem:[%s779 + $0xc8] sm:$0xf]
        %v10944 = vld [vmem:[%s779 + $0xcc] sm:$0xf]
        %v10945 = vld [vmem:[%s779 + $0xd0] sm:$0xf]
        %v10946 = vld [vmem:[%s779 + $0xd4] sm:$0xf]
        %v10947 = vld [vmem:[%s779 + $0xd8] sm:$0xf]
        %v10948 = vld [vmem:[%s779 + $0xdc] sm:$0xf]
        %v10949 = vld [vmem:[%s779 + $0xe0] sm:$0xf]
        %v10950 = vld [vmem:[%s779 + $0xe4] sm:$0xf]
        %v10951 = vld [vmem:[%s779 + $0xe8] sm:$0xf]
        %v10952 = vld [vmem:[%s779 + $0xec] sm:$0xf]
        %v10953 = vld [vmem:[%s779 + $0xf0] sm:$0xf]
        %v10954 = vld [vmem:[%s779 + $0xf4] sm:$0xf]
        %v10955 = vld [vmem:[%s779 + $0xf8] sm:$0xf]
        %v10956 = vld [vmem:[%s779 + $0xfc] sm:$0xf]
        %v10957 = vld [vmem:[%s900] sm:$0x1]
        %v10959 = vlaneseq
        %v10960 = vshrl.u32 %v10959, 7
        %v10961 = vsub.s32 0, %v10960
        %v10962 = vrot.slane %v10957, %v10961
        %v11028 = vunpack.c.l.b16 %v10893
        %v11029 = vunpack.c.l.b16 %v10894
        %v11030 = vunpack.c.l.b16 %v10895
        %v11031 = vunpack.c.l.b16 %v10896
        %v11032 = vunpack.c.l.b16 %v10897
        %v11033 = vunpack.c.l.b16 %v10898
        %v11034 = vunpack.c.l.b16 %v10899
        %v11035 = vunpack.c.l.b16 %v10900
        %v11036 = vunpack.c.l.b16 %v10901
        %v11037 = vunpack.c.l.b16 %v10902
        %v11038 = vunpack.c.l.b16 %v10903
        %v11039 = vunpack.c.l.b16 %v10904
        %v11040 = vunpack.c.l.b16 %v10905
        %v11041 = vunpack.c.l.b16 %v10906
        %v11042 = vunpack.c.l.b16 %v10907
        %v11043 = vunpack.c.l.b16 %v10908
        %v11044 = vunpack.c.l.b16 %v10909
        %v11045 = vunpack.c.l.b16 %v10910
        %v11046 = vunpack.c.l.b16 %v10911
        %v11047 = vunpack.c.l.b16 %v10912
        %v11048 = vunpack.c.l.b16 %v10913
        %v11049 = vunpack.c.l.b16 %v10914
        %v11050 = vunpack.c.l.b16 %v10915
        %v11051 = vunpack.c.l.b16 %v10916
        %v11052 = vunpack.c.l.b16 %v10917
        %v11053 = vunpack.c.l.b16 %v10918
        %v11054 = vunpack.c.l.b16 %v10919
        %v11055 = vunpack.c.l.b16 %v10920
        %v11056 = vunpack.c.l.b16 %v10921
        %v11057 = vunpack.c.l.b16 %v10922
        %v11058 = vunpack.c.l.b16 %v10923
        %v11059 = vunpack.c.l.b16 %v10924
        %v11060 = vunpack.c.l.b16 %v10925
        %v11061 = vunpack.c.l.b16 %v10926
        %v11062 = vunpack.c.l.b16 %v10927
        %v11063 = vunpack.c.l.b16 %v10928
        %v11064 = vunpack.c.l.b16 %v10929
        %v11065 = vunpack.c.l.b16 %v10930
        %v11066 = vunpack.c.l.b16 %v10931
        %v11067 = vunpack.c.l.b16 %v10932
        %v11068 = vunpack.c.l.b16 %v10933
        %v11069 = vunpack.c.l.b16 %v10934
        %v11070 = vunpack.c.l.b16 %v10935
        %v11071 = vunpack.c.l.b16 %v10936
        %v11072 = vunpack.c.l.b16 %v10937
        %v11073 = vunpack.c.l.b16 %v10938
        %v11074 = vunpack.c.l.b16 %v10939
        %v11075 = vunpack.c.l.b16 %v10940
        %v11076 = vunpack.c.l.b16 %v10941
        %v11077 = vunpack.c.l.b16 %v10942
        %v11078 = vunpack.c.l.b16 %v10943
        %v11079 = vunpack.c.l.b16 %v10944
        %v11080 = vunpack.c.l.b16 %v10945
        %v11081 = vunpack.c.l.b16 %v10946
        %v11082 = vunpack.c.l.b16 %v10947
        %v11083 = vunpack.c.l.b16 %v10948
        %v11084 = vunpack.c.l.b16 %v10949
        %v11085 = vunpack.c.l.b16 %v10950
        %v11086 = vunpack.c.l.b16 %v10951
        %v11087 = vunpack.c.l.b16 %v10952
        %v11088 = vunpack.c.l.b16 %v10953
        %v11089 = vunpack.c.l.b16 %v10954
        %v11090 = vunpack.c.l.b16 %v10955
        %v11091 = vunpack.c.l.b16 %v10956
        %v11092 = vpack.c.b16 %v11029, %v11028
        %v11093 = vpack.c.b16 %v11031, %v11030
        %v11094 = vpack.c.b16 %v11033, %v11032
        %v11095 = vpack.c.b16 %v11035, %v11034
        %v11096 = vpack.c.b16 %v11037, %v11036
        %v11097 = vpack.c.b16 %v11039, %v11038
        %v11098 = vpack.c.b16 %v11041, %v11040
        %v11099 = vpack.c.b16 %v11043, %v11042
        %v11100 = vpack.c.b16 %v11045, %v11044
        %v11101 = vpack.c.b16 %v11047, %v11046
        %v11102 = vpack.c.b16 %v11049, %v11048
        %v11103 = vpack.c.b16 %v11051, %v11050
        %v11104 = vpack.c.b16 %v11053, %v11052
        %v11105 = vpack.c.b16 %v11055, %v11054
        %v11106 = vpack.c.b16 %v11057, %v11056
        %v11107 = vpack.c.b16 %v11059, %v11058
        %v11108 = vpack.c.b16 %v11061, %v11060
        %v11109 = vpack.c.b16 %v11063, %v11062
        %v11110 = vpack.c.b16 %v11065, %v11064
        %v11111 = vpack.c.b16 %v11067, %v11066
        %v11112 = vpack.c.b16 %v11069, %v11068
        %v11113 = vpack.c.b16 %v11071, %v11070
        %v11114 = vpack.c.b16 %v11073, %v11072
        %v11115 = vpack.c.b16 %v11075, %v11074
        %v11116 = vpack.c.b16 %v11077, %v11076
        %v11117 = vpack.c.b16 %v11079, %v11078
        %v11118 = vpack.c.b16 %v11081, %v11080
        %v11119 = vpack.c.b16 %v11083, %v11082
        %v11120 = vpack.c.b16 %v11085, %v11084
        %v11121 = vpack.c.b16 %v11087, %v11086
        %v11122 = vpack.c.b16 %v11089, %v11088
        %v11123 = vpack.c.b16 %v11091, %v11090
        %11156 = vmatprep.subr.bf16.mxu0 0
        %11157 = vmatpush1.bf16.msra.mxu0 %v11092
        %11158 = vmatprep.subr.bf16.mxu0 0
        %11159 = vmatpush1.bf16.msra.mxu0 %v11093
        %11160 = vmatprep.subr.bf16.mxu0 0
        %11161 = vmatpush1.bf16.msra.mxu0 %v11094
        %11162 = vmatprep.subr.bf16.mxu0 0
        %11163 = vmatpush1.bf16.msra.mxu0 %v11095
        %11164 = vmatprep.subr.bf16.mxu0 0
        %11165 = vmatpush1.bf16.msra.mxu0 %v11096
        %11166 = vmatprep.subr.bf16.mxu0 0
        %11167 = vmatpush1.bf16.msra.mxu0 %v11097
        %11168 = vmatprep.subr.bf16.mxu0 0
        %11169 = vmatpush1.bf16.msra.mxu0 %v11098
        %11170 = vmatprep.subr.bf16.mxu0 0
        %11171 = vmatpush1.bf16.msra.mxu0 %v11099
        %11172 = vmatprep.subr.bf16.mxu0 0
        %11173 = vmatpush1.bf16.msra.mxu0 %v11100
        %11174 = vmatprep.subr.bf16.mxu0 0
        %11175 = vmatpush1.bf16.msra.mxu0 %v11101
        %11176 = vmatprep.subr.bf16.mxu0 0
        %11177 = vmatpush1.bf16.msra.mxu0 %v11102
        %11178 = vmatprep.subr.bf16.mxu0 0
        %11179 = vmatpush1.bf16.msra.mxu0 %v11103
        %11180 = vmatprep.subr.bf16.mxu0 0
        %11181 = vmatpush1.bf16.msra.mxu0 %v11104
        %11182 = vmatprep.subr.bf16.mxu0 0
        %11183 = vmatpush1.bf16.msra.mxu0 %v11105
        %11184 = vmatprep.subr.bf16.mxu0 0
        %11185 = vmatpush1.bf16.msra.mxu0 %v11106
        %11186 = vmatprep.subr.bf16.mxu0 0
        %11187 = vmatpush1.bf16.msra.mxu0 %v11107
        %11188 = vmatprep.mubr.bf16.mxu0 %v10862
        %11189 = vmatmul.mubr.bf16.gmra.mrb[0].mxu0 %v10861
        %v11190 = vpop.f32.mrb[0].mxu0
        %v11191 = vadd.f32 %v10962, %v11190
        %v11192 = vpop.f32.mrb[0].mxu0
        %v11193 = vpop.f32.mrb[0].mxu0
        %v11194 = vadd.f32 %v10962, %v11193
        %v11195 = vpop.f32.mrb[0].mxu0
        %11196 = vmatprep.mubr.bf16.mxu0 %v10866
        %11197 = vmatmul.mubr.bf16.gmra.mrb[0].mxu0 %v10865
        %v11198 = vpop.f32.mrb[0].mxu0
        %v11199 = vadd.f32 %v10962, %v11198
        %v11200 = vpop.f32.mrb[0].mxu0
        %v11201 = vpop.f32.mrb[0].mxu0
        %v11202 = vadd.f32 %v10962, %v11201
        %v11203 = vpop.f32.mrb[0].mxu0
        %11204 = vmatprep.mubr.bf16.mxu0 %v10870
        %11205 = vmatmul.mubr.bf16.gmra.mrb[0].mxu0 %v10869
        %v11206 = vpop.f32.mrb[0].mxu0
        %v11207 = vadd.f32 %v10962, %v11206
        %v11208 = vpop.f32.mrb[0].mxu0
        %v11209 = vpop.f32.mrb[0].mxu0
        %v11210 = vadd.f32 %v10962, %v11209
        %v11211 = vpop.f32.mrb[0].mxu0
        %11212 = vmatprep.mubr.bf16.mxu0 %v10874
        %11213 = vmatmul.mubr.bf16.gmra.mrb[0].mxu0 %v10873
        %v11214 = vpop.f32.mrb[0].mxu0
        %v11215 = vadd.f32 %v10962, %v11214
        %v11216 = vpop.f32.mrb[0].mxu0
        %v11217 = vpop.f32.mrb[0].mxu0
        %v11218 = vadd.f32 %v10962, %v11217
        %v11219 = vpop.f32.mrb[0].mxu0
        %11220 = vmatprep.mubr.bf16.mxu0 %v10878
        %11221 = vmatmul.mubr.bf16.gmra.mrb[0].mxu0 %v10877
        %v11222 = vpop.f32.mrb[0].mxu0
        %v11223 = vadd.f32 %v10962, %v11222
        %v11224 = vpop.f32.mrb[0].mxu0
        %v11225 = vpop.f32.mrb[0].mxu0
        %v11226 = vadd.f32 %v10962, %v11225
        %v11227 = vpop.f32.mrb[0].mxu0
        %11228 = vmatprep.mubr.bf16.mxu0 %v10882
        %11229 = vmatmul.mubr.bf16.gmra.mrb[0].mxu0 %v10881
        %v11230 = vpop.f32.mrb[0].mxu0
        %v11231 = vadd.f32 %v10962, %v11230
        %v11232 = vpop.f32.mrb[0].mxu0
        %v11233 = vpop.f32.mrb[0].mxu0
        %v11234 = vadd.f32 %v10962, %v11233
        %v11235 = vpop.f32.mrb[0].mxu0
        %11236 = vmatprep.mubr.bf16.mxu0 %v10886
        %11237 = vmatmul.mubr.bf16.gmra.mrb[0].mxu0 %v10885
        %v11238 = vpop.f32.mrb[0].mxu0
        %v11239 = vadd.f32 %v10962, %v11238
        %v11240 = vpop.f32.mrb[0].mxu0
        %v11241 = vpop.f32.mrb[0].mxu0
        %v11242 = vadd.f32 %v10962, %v11241
        %v11243 = vpop.f32.mrb[0].mxu0
        %11244 = vmatprep.mubr.bf16.mxu0 %v10890
        %11245 = vmatmul.mubr.bf16.gmra.mrb[0].mxu0 %v10889
        %v11246 = vpop.f32.mrb[0].mxu0
        %v11247 = vadd.f32 %v10962, %v11246
        %v11248 = vpop.f32.mrb[0].mxu0
        %v11249 = vpop.f32.mrb[0].mxu0
        %v11250 = vadd.f32 %v10962, %v11249
        %v11251 = vpop.f32.mrb[0].mxu0
        %11252 = vdwg.mxu0
        %11253 = vmatprep.subr.bf16.mxu0 0
        %11254 = vmatpush1.bf16.msra.mxu0 %v11108
        %11255 = vmatprep.subr.bf16.mxu0 0
        %11256 = vmatpush1.bf16.msra.mxu0 %v11109
        %11257 = vmatprep.subr.bf16.mxu0 0
        %11258 = vmatpush1.bf16.msra.mxu0 %v11110
        %11259 = vmatprep.subr.bf16.mxu0 0
        %11260 = vmatpush1.bf16.msra.mxu0 %v11111
        %11261 = vmatprep.subr.bf16.mxu0 0
        %11262 = vmatpush1.bf16.msra.mxu0 %v11112
        %11263 = vmatprep.subr.bf16.mxu0 0
        %11264 = vmatpush1.bf16.msra.mxu0 %v11113
        %11265 = vmatprep.subr.bf16.mxu0 0
        %11266 = vmatpush1.bf16.msra.mxu0 %v11114
        %11267 = vmatprep.subr.bf16.mxu0 0
        %11268 = vmatpush1.bf16.msra.mxu0 %v11115
        %11269 = vmatprep.subr.bf16.mxu0 0
        %11270 = vmatpush1.bf16.msra.mxu0 %v11116
        %11271 = vmatprep.subr.bf16.mxu0 0
        %11272 = vmatpush1.bf16.msra.mxu0 %v11117
        %11273 = vmatprep.subr.bf16.mxu0 0
        %11274 = vmatpush1.bf16.msra.mxu0 %v11118
        %11275 = vmatprep.subr.bf16.mxu0 0
        %11276 = vmatpush1.bf16.msra.mxu0 %v11119
        %11277 = vmatprep.subr.bf16.mxu0 0
        %11278 = vmatpush1.bf16.msra.mxu0 %v11120
        %11279 = vmatprep.subr.bf16.mxu0 0
        %11280 = vmatpush1.bf16.msra.mxu0 %v11121
        %11281 = vmatprep.subr.bf16.mxu0 0
        %11282 = vmatpush1.bf16.msra.mxu0 %v11122
        %11283 = vmatprep.subr.bf16.mxu0 0
        %11284 = vmatpush1.bf16.msra.mxu0 %v11123
        %11285 = vmatprep.mubr.bf16.mxu0 %v10864
        %11286 = vmatmul.mubr.bf16.gmra.mrb[0].mxu0 %v10863
        %v11287 = vpop.f32.mrb[0].mxu0
        %v11288 = vadd.f32 %v11191, %v11287
        %v11289 = vpop.f32.mrb[0].mxu0
        %v11290 = vpop.f32.mrb[0].mxu0
        %v11291 = vadd.f32 %v11194, %v11290
        %v11292 = vpop.f32.mrb[0].mxu0
        %11293 = vmatprep.mubr.bf16.mxu0 %v10868
        %11294 = vmatmul.mubr.bf16.gmra.mrb[0].mxu0 %v10867
        %v11295 = vpop.f32.mrb[0].mxu0
        %v11296 = vadd.f32 %v11199, %v11295
        %v11297 = vpop.f32.mrb[0].mxu0
        %v11298 = vpop.f32.mrb[0].mxu0
        %v11299 = vadd.f32 %v11202, %v11298
        %v11300 = vpop.f32.mrb[0].mxu0
        %11301 = vmatprep.mubr.bf16.mxu0 %v10872
        %11302 = vmatmul.mubr.bf16.gmra.mrb[0].mxu0 %v10871
        %v11303 = vpop.f32.mrb[0].mxu0
        %v11304 = vadd.f32 %v11207, %v11303
        %v11305 = vpop.f32.mrb[0].mxu0
        %v11306 = vpop.f32.mrb[0].mxu0
        %v11307 = vadd.f32 %v11210, %v11306
        %v11308 = vpop.f32.mrb[0].mxu0
        %11309 = vmatprep.mubr.bf16.mxu0 %v10876
        %11310 = vmatmul.mubr.bf16.gmra.mrb[0].mxu0 %v10875
        %v11311 = vpop.f32.mrb[0].mxu0
        %v11312 = vadd.f32 %v11215, %v11311
        %v11313 = vpop.f32.mrb[0].mxu0
        %v11314 = vpop.f32.mrb[0].mxu0
        %v11315 = vadd.f32 %v11218, %v11314
        %v11316 = vpop.f32.mrb[0].mxu0
        %11317 = vmatprep.mubr.bf16.mxu0 %v10880
        %11318 = vmatmul.mubr.bf16.gmra.mrb[0].mxu0 %v10879
        %v11319 = vpop.f32.mrb[0].mxu0
        %v11320 = vadd.f32 %v11223, %v11319
        %v11321 = vpop.f32.mrb[0].mxu0
        %v11322 = vpop.f32.mrb[0].mxu0
        %v11323 = vadd.f32 %v11226, %v11322
        %v11324 = vpop.f32.mrb[0].mxu0
        %11325 = vmatprep.mubr.bf16.mxu0 %v10884
        %11326 = vmatmul.mubr.bf16.gmra.mrb[0].mxu0 %v10883
        %v11327 = vpop.f32.mrb[0].mxu0
        %v11328 = vadd.f32 %v11231, %v11327
        %v11329 = vpop.f32.mrb[0].mxu0
        %v11330 = vpop.f32.mrb[0].mxu0
        %v11331 = vadd.f32 %v11234, %v11330
        %v11332 = vpop.f32.mrb[0].mxu0
        %11333 = vmatprep.mubr.bf16.mxu0 %v10888
        %11334 = vmatmul.mubr.bf16.gmra.mrb[0].mxu0 %v10887
        %v11335 = vpop.f32.mrb[0].mxu0
        %v11336 = vadd.f32 %v11239, %v11335
        %v11337 = vpop.f32.mrb[0].mxu0
        %v11338 = vpop.f32.mrb[0].mxu0
        %v11339 = vadd.f32 %v11242, %v11338
        %v11340 = vpop.f32.mrb[0].mxu0
        %11341 = vmatprep.mubr.bf16.mxu0 %v10892
        %11342 = vmatmul.mubr.bf16.gmra.mrb[0].mxu0 %v10891
        %v11343 = vpop.f32.mrb[0].mxu0
        %v11344 = vadd.f32 %v11247, %v11343
        %v11345 = vpop.f32.mrb[0].mxu0
        %v11346 = vpop.f32.mrb[0].mxu0
        %v11347 = vadd.f32 %v11250, %v11346
        %v11348 = vpop.f32.mrb[0].mxu0
        %11349 = vdwg.mxu0
        %v11350 = vadd.f32 %v9663, %v11288
        %v11351 = vadd.f32 %v9664, %v11291
        %v11352 = vadd.f32 %v9665, %v11296
        %v11353 = vadd.f32 %v9666, %v11299
        %v11354 = vadd.f32 %v9667, %v11304
        %v11355 = vadd.f32 %v9668, %v11307
        %v11356 = vadd.f32 %v9669, %v11312
        %v11357 = vadd.f32 %v9670, %v11315
        %v11358 = vadd.f32 %v9671, %v11320
        %v11359 = vadd.f32 %v9672, %v11323
        %v11360 = vadd.f32 %v9673, %v11328
        %v11361 = vadd.f32 %v9674, %v11331
        %v11362 = vadd.f32 %v9675, %v11336
        %v11363 = vadd.f32 %v9676, %v11339
        %v11364 = vadd.f32 %v9677, %v11344
        %v11365 = vadd.f32 %v9678, %v11347
        %p11366 = scmp.lt.s32.totalorder %s50, 1
        // Predicated region
        $region121: #{tpu_custom_call.1} parent=83 // pred_check
          %p11367 = pneg %p11366
        $region122: #{tpu_custom_call.1} parent=83 // pred_check_branch
          %11369 = sbr.rel (%p11367) target = $region124
        $region123: #{tpu_custom_call.1} parent=83 // pred_region
          %11370 = vst [vmem:[%s880] sm:$0xff] %v11350
          %11371 = vst [vmem:[%s880 + $0x8] sm:$0xff] %v11351
          %11372 = vst [vmem:[%s880 + $0x10] sm:$0xff] %v11352
          %11373 = vst [vmem:[%s880 + $0x18] sm:$0xff] %v11353
          %11374 = vst [vmem:[%s880 + $0x20] sm:$0xff] %v11354
          %11375 = vst [vmem:[%s880 + $0x28] sm:$0xff] %v11355
          %11376 = vst [vmem:[%s880 + $0x30] sm:$0xff] %v11356
          %11377 = vst [vmem:[%s880 + $0x38] sm:$0xff] %v11357
          %11378 = vst [vmem:[%s880 + $0x40] sm:$0xff] %v11358
          %11379 = vst [vmem:[%s880 + $0x48] sm:$0xff] %v11359
          %11380 = vst [vmem:[%s880 + $0x50] sm:$0xff] %v11360
          %11381 = vst [vmem:[%s880 + $0x58] sm:$0xff] %v11361
          %11382 = vst [vmem:[%s880 + $0x60] sm:$0xff] %v11362
          %11383 = vst [vmem:[%s880 + $0x68] sm:$0xff] %v11363
          %11384 = vst [vmem:[%s880 + $0x70] sm:$0xff] %v11364
          %11385 = vst [vmem:[%s880 + $0x78] sm:$0xff] %v11365
        $region124: #{tpu_custom_call.1} parent=83 // pred_fallthru
          _
        %p11386 = scmp.eq.s32.totalorder %s50, 1
        // Predicated region
        $region125: #{tpu_custom_call.1} parent=83 // pred_check
          %p11387 = pneg %p11386
        $region126: #{tpu_custom_call.1} parent=83 // pred_check_branch
          %11389 = sbr.rel (%p11387) target = $region128
        $region127: #{tpu_custom_call.1} parent=83 // pred_region
          %v11390 = vld [vmem:[%s14] sm:$0x1]
          %v11391 = vld [vmem:[%s15] sm:$0x1]
          %11392 = vadd.xlane.f32.xlu0 %v11350
          %v11393 = vpop.xlane.xlu0 %11392
          %11394 = vadd.xlane.f32.xlu0 %v11351
          %v11395 = vpop.xlane.xlu0 %11394
          %11396 = vadd.xlane.f32.xlu0 %v11352
          %v11397 = vpop.xlane.xlu0 %11396
          %11398 = vadd.xlane.f32.xlu0 %v11353
          %v11399 = vpop.xlane.xlu0 %11398
          %11400 = vadd.xlane.f32.xlu0 %v11354
          %v11401 = vpop.xlane.xlu0 %11400
          %11402 = vadd.xlane.f32.xlu0 %v11355
          %v11403 = vpop.xlane.xlu0 %11402
          %11404 = vadd.xlane.f32.xlu0 %v11356
          %v11405 = vpop.xlane.xlu0 %11404
          %11406 = vadd.xlane.f32.xlu0 %v11357
          %v11407 = vpop.xlane.xlu0 %11406
          %11408 = vadd.xlane.f32.xlu0 %v11358
          %v11409 = vpop.xlane.xlu0 %11408
          %11410 = vadd.xlane.f32.xlu0 %v11359
          %v11411 = vpop.xlane.xlu0 %11410
          %11412 = vadd.xlane.f32.xlu0 %v11360
          %v11413 = vpop.xlane.xlu0 %11412
          %11414 = vadd.xlane.f32.xlu0 %v11361
          %v11415 = vpop.xlane.xlu0 %11414
          %11416 = vadd.xlane.f32.xlu0 %v11362
          %v11417 = vpop.xlane.xlu0 %11416
          %11418 = vadd.xlane.f32.xlu0 %v11363
          %v11419 = vpop.xlane.xlu0 %11418
          %11420 = vadd.xlane.f32.xlu0 %v11364
          %v11421 = vpop.xlane.xlu0 %11420
          %11422 = vadd.xlane.f32.xlu0 %v11365
          %v11423 = vpop.xlane.xlu0 %11422
          %v11424 = vmul.f32 %v11393, %v1004
          %v11425 = vmul.f32 %v11395, %v1004
          %v11426 = vmul.f32 %v11397, %v1004
          %v11427 = vmul.f32 %v11399, %v1004
          %v11428 = vmul.f32 %v11401, %v1004
          %v11429 = vmul.f32 %v11403, %v1004
          %v11430 = vmul.f32 %v11405, %v1004
          %v11431 = vmul.f32 %v11407, %v1004
          %v11432 = vmul.f32 %v11409, %v1004
          %v11433 = vmul.f32 %v11411, %v1004
          %v11434 = vmul.f32 %v11413, %v1004
          %v11435 = vmul.f32 %v11415, %v1004
          %v11436 = vmul.f32 %v11417, %v1004
          %v11437 = vmul.f32 %v11419, %v1004
          %v11438 = vmul.f32 %v11421, %v1004
          %v11439 = vmul.f32 %v11423, %v1004
          %v11440 = vsub.f32 %v11350, %v11424
          %v11441 = vsub.f32 %v11351, %v11425
          %v11442 = vsub.f32 %v11352, %v11426
          %v11443 = vsub.f32 %v11353, %v11427
          %v11444 = vsub.f32 %v11354, %v11428
          %v11445 = vsub.f32 %v11355, %v11429
          %v11446 = vsub.f32 %v11356, %v11430
          %v11447 = vsub.f32 %v11357, %v11431
          %v11448 = vsub.f32 %v11358, %v11432
          %v11449 = vsub.f32 %v11359, %v11433
          %v11450 = vsub.f32 %v11360, %v11434
          %v11451 = vsub.f32 %v11361, %v11435
          %v11452 = vsub.f32 %v11362, %v11436
          %v11453 = vsub.f32 %v11363, %v11437
          %v11454 = vsub.f32 %v11364, %v11438
          %v11455 = vsub.f32 %v11365, %v11439
          %v11456 = vmul.f32 %v11440, %v11440
          %v11457 = vmul.f32 %v11441, %v11441
          %v11458 = vmul.f32 %v11442, %v11442
          %v11459 = vmul.f32 %v11443, %v11443
          %v11460 = vmul.f32 %v11444, %v11444
          %v11461 = vmul.f32 %v11445, %v11445
          %v11462 = vmul.f32 %v11446, %v11446
          %v11463 = vmul.f32 %v11447, %v11447
          %v11464 = vmul.f32 %v11448, %v11448
          %v11465 = vmul.f32 %v11449, %v11449
          %v11466 = vmul.f32 %v11450, %v11450
          %v11467 = vmul.f32 %v11451, %v11451
          %v11468 = vmul.f32 %v11452, %v11452
          %v11469 = vmul.f32 %v11453, %v11453
          %v11470 = vmul.f32 %v11454, %v11454
          %v11471 = vmul.f32 %v11455, %v11455
          %11472 = vadd.xlane.f32.xlu0 %v11456
          %v11473 = vpop.xlane.xlu0 %11472
          %11474 = vadd.xlane.f32.xlu0 %v11457
          %v11475 = vpop.xlane.xlu0 %11474
          %11476 = vadd.xlane.f32.xlu0 %v11458
          %v11477 = vpop.xlane.xlu0 %11476
          %11478 = vadd.xlane.f32.xlu0 %v11459
          %v11479 = vpop.xlane.xlu0 %11478
          %11480 = vadd.xlane.f32.xlu0 %v11460
          %v11481 = vpop.xlane.xlu0 %11480
          %11482 = vadd.xlane.f32.xlu0 %v11461
          %v11483 = vpop.xlane.xlu0 %11482
          %11484 = vadd.xlane.f32.xlu0 %v11462
          %v11485 = vpop.xlane.xlu0 %11484
          %11486 = vadd.xlane.f32.xlu0 %v11463
          %v11487 = vpop.xlane.xlu0 %11486
          %11488 = vadd.xlane.f32.xlu0 %v11464
          %v11489 = vpop.xlane.xlu0 %11488
          %11490 = vadd.xlane.f32.xlu0 %v11465
          %v11491 = vpop.xlane.xlu0 %11490
          %11492 = vadd.xlane.f32.xlu0 %v11466
          %v11493 = vpop.xlane.xlu0 %11492
          %11494 = vadd.xlane.f32.xlu0 %v11467
          %v11495 = vpop.xlane.xlu0 %11494
          %11496 = vadd.xlane.f32.xlu0 %v11468
          %v11497 = vpop.xlane.xlu0 %11496
          %11498 = vadd.xlane.f32.xlu0 %v11469
          %v11499 = vpop.xlane.xlu0 %11498
          %11500 = vadd.xlane.f32.xlu0 %v11470
          %v11501 = vpop.xlane.xlu0 %11500
          %11502 = vadd.xlane.f32.xlu0 %v11471
          %v11503 = vpop.xlane.xlu0 %11502
          %v11504 = vmul.f32 %v11473, %v1004
          %v11505 = vmul.f32 %v11475, %v1004
          %v11506 = vmul.f32 %v11477, %v1004
          %v11507 = vmul.f32 %v11479, %v1004
          %v11508 = vmul.f32 %v11481, %v1004
          %v11509 = vmul.f32 %v11483, %v1004
          %v11510 = vmul.f32 %v11485, %v1004
          %v11511 = vmul.f32 %v11487, %v1004
          %v11512 = vmul.f32 %v11489, %v1004
          %v11513 = vmul.f32 %v11491, %v1004
          %v11514 = vmul.f32 %v11493, %v1004
          %v11515 = vmul.f32 %v11495, %v1004
          %v11516 = vmul.f32 %v11497, %v1004
          %v11517 = vmul.f32 %v11499, %v1004
          %v11518 = vmul.f32 %v11501, %v1004
          %v11519 = vmul.f32 %v11503, %v1004
          %v11520 = vadd.f32 %v11504, 1e-05
          %v11521 = vadd.f32 %v11505, 1e-05
          %v11522 = vadd.f32 %v11506, 1e-05
          %v11523 = vadd.f32 %v11507, 1e-05
          %v11524 = vadd.f32 %v11508, 1e-05
          %v11525 = vadd.f32 %v11509, 1e-05
          %v11526 = vadd.f32 %v11510, 1e-05
          %v11527 = vadd.f32 %v11511, 1e-05
          %v11528 = vadd.f32 %v11512, 1e-05
          %v11529 = vadd.f32 %v11513, 1e-05
          %v11530 = vadd.f32 %v11514, 1e-05
          %v11531 = vadd.f32 %v11515, 1e-05
          %v11532 = vadd.f32 %v11516, 1e-05
          %v11533 = vadd.f32 %v11517, 1e-05
          %v11534 = vadd.f32 %v11518, 1e-05
          %v11535 = vadd.f32 %v11519, 1e-05
          %v11536 = vrsqrt.pop %v11520
          %v11537 = vrsqrt.pop %v11521
          %v11538 = vrsqrt.pop %v11522
          %v11539 = vrsqrt.pop %v11523
          %v11540 = vrsqrt.pop %v11524
          %v11541 = vrsqrt.pop %v11525
          %v11542 = vrsqrt.pop %v11526
          %v11543 = vrsqrt.pop %v11527
          %v11544 = vrsqrt.pop %v11528
          %v11545 = vrsqrt.pop %v11529
          %v11546 = vrsqrt.pop %v11530
          %v11547 = vrsqrt.pop %v11531
          %v11548 = vrsqrt.pop %v11532
          %v11549 = vrsqrt.pop %v11533
          %v11550 = vrsqrt.pop %v11534
          %v11551 = vrsqrt.pop %v11535
          %v11552 = vmul.f32 %v11440, %v11536
          %v11553 = vmul.f32 %v11441, %v11537
          %v11554 = vmul.f32 %v11442, %v11538
          %v11555 = vmul.f32 %v11443, %v11539
          %v11556 = vmul.f32 %v11444, %v11540
          %v11557 = vmul.f32 %v11445, %v11541
          %v11558 = vmul.f32 %v11446, %v11542
          %v11559 = vmul.f32 %v11447, %v11543
          %v11560 = vmul.f32 %v11448, %v11544
          %v11561 = vmul.f32 %v11449, %v11545
          %v11562 = vmul.f32 %v11450, %v11546
          %v11563 = vmul.f32 %v11451, %v11547
          %v11564 = vmul.f32 %v11452, %v11548
          %v11565 = vmul.f32 %v11453, %v11549
          %v11566 = vmul.f32 %v11454, %v11550
          %v11567 = vmul.f32 %v11455, %v11551
          %v11569 = vlaneseq
          %v11570 = vshrl.u32 %v11569, 7
          %v11571 = vsub.s32 0, %v11570
          %v11572 = vrot.slane %v11390, %v11571
          %v11574 = vmul.f32 %v11552, %v11572
          %v11575 = vmul.f32 %v11553, %v11572
          %v11576 = vmul.f32 %v11554, %v11572
          %v11577 = vmul.f32 %v11555, %v11572
          %v11578 = vmul.f32 %v11556, %v11572
          %v11579 = vmul.f32 %v11557, %v11572
          %v11580 = vmul.f32 %v11558, %v11572
          %v11581 = vmul.f32 %v11559, %v11572
          %v11582 = vmul.f32 %v11560, %v11572
          %v11583 = vmul.f32 %v11561, %v11572
          %v11584 = vmul.f32 %v11562, %v11572
          %v11585 = vmul.f32 %v11563, %v11572
          %v11586 = vmul.f32 %v11564, %v11572
          %v11587 = vmul.f32 %v11565, %v11572
          %v11588 = vmul.f32 %v11566, %v11572
          %v11589 = vmul.f32 %v11567, %v11572
          %v11591 = vlaneseq
          %v11592 = vshrl.u32 %v11591, 7
          %v11593 = vsub.s32 0, %v11592
          %v11594 = vrot.slane %v11391, %v11593
          %v11596 = vadd.f32 %v11574, %v11594
          %v11597 = vadd.f32 %v11575, %v11594
          %v11598 = vadd.f32 %v11576, %v11594
          %v11599 = vadd.f32 %v11577, %v11594
          %v11600 = vadd.f32 %v11578, %v11594
          %v11601 = vadd.f32 %v11579, %v11594
          %v11602 = vadd.f32 %v11580, %v11594
          %v11603 = vadd.f32 %v11581, %v11594
          %v11604 = vadd.f32 %v11582, %v11594
          %v11605 = vadd.f32 %v11583, %v11594
          %v11606 = vadd.f32 %v11584, %v11594
          %v11607 = vadd.f32 %v11585, %v11594
          %v11608 = vadd.f32 %v11586, %v11594
          %v11609 = vadd.f32 %v11587, %v11594
          %v11610 = vadd.f32 %v11588, %v11594
          %v11611 = vadd.f32 %v11589, %v11594
          %11612 = vst [vmem:[%s880] sm:$0xff] %v11596
          %11613 = vst [vmem:[%s880 + $0x8] sm:$0xff] %v11597
          %11614 = vst [vmem:[%s880 + $0x10] sm:$0xff] %v11598
          %11615 = vst [vmem:[%s880 + $0x18] sm:$0xff] %v11599
          %11616 = vst [vmem:[%s880 + $0x20] sm:$0xff] %v11600
          %11617 = vst [vmem:[%s880 + $0x28] sm:$0xff] %v11601
          %11618 = vst [vmem:[%s880 + $0x30] sm:$0xff] %v11602
          %11619 = vst [vmem:[%s880 + $0x38] sm:$0xff] %v11603
          %11620 = vst [vmem:[%s880 + $0x40] sm:$0xff] %v11604
          %11621 = vst [vmem:[%s880 + $0x48] sm:$0xff] %v11605
          %11622 = vst [vmem:[%s880 + $0x50] sm:$0xff] %v11606
          %11623 = vst [vmem:[%s880 + $0x58] sm:$0xff] %v11607
          %11624 = vst [vmem:[%s880 + $0x60] sm:$0xff] %v11608
          %11625 = vst [vmem:[%s880 + $0x68] sm:$0xff] %v11609
          %11626 = vst [vmem:[%s880 + $0x70] sm:$0xff] %v11610
          %11627 = vst [vmem:[%s880 + $0x78] sm:$0xff] %v11611
        $region128: #{tpu_custom_call.1} parent=83 // pred_fallthru
          _
        %s11628 = sand.u32 %s471, 1
        %s11629 = scalar_lea.sflag [#allocation4], %s11628
        %s11630 = sand.u32 %s471, 1
        %s11631 = smul.addr %s11630, 128
        %s11632 = scalar_lea.vmem [#allocation16], %s11631
        // Predicated region
        $region129: #{tpu_custom_call.1} parent=83 // pred_check
          %p11633 = pneg %p481
        $region130: #{tpu_custom_call.1} parent=83 // pred_check_branch
          %11635 = sbr.rel (%p11633) target = $region132
        $region131: #{tpu_custom_call.1} parent=83 // pred_region
          %s11637 = ssub.s32 2048, 2048
          %11638 = vsyncadd %s11629, %s11637
          %s11639 = smul.addr %s49, 16
          %s11640 = smul.addr %s11639, 128
          %s11641 = scalar_lea.hbm %s16, %s11640
          %s11642 = sshll.u32 %s11632, 4
          %s11643 = int_to_ptr.vmem [resolvable:$true] %s11642
          %11648 = dma.vmem_to_hbm [thread:$0]  %s11643, 2048, %s11641, %s11629, 128, 128, 8
        $region132: #{tpu_custom_call.1} parent=83 // pred_fallthru
          _
      $region84: #{tpu_custom_call.1} parent=5 // pred_fallthru
        _
      %p11649 = scmp.le.s32.totalorder 2, %s40
      // Predicated region
      $region133: #{tpu_custom_call.1} parent=5 // pred_check
        %p11650 = pneg %p11649
      $region134: #{tpu_custom_call.1} parent=5 // pred_check_branch
        %11652 = sbr.rel (%p11650) target = $region136
      $region135: #{tpu_custom_call.1} parent=5 // pred_region
        %s11653 = ssub.s32 %s40, 2
        // Predicated region
        $region137: #{tpu_custom_call.1} parent=135 // pred_check
          %p11654 = pneg %p487
        $region138: #{tpu_custom_call.1} parent=135 // pred_check_branch
          %11656 = sbr.rel (%p11654) target = $region140
        $region139: #{tpu_custom_call.1} parent=135 // pred_region
          %s11657 = sand.u32 %s472, 1
          %s11658 = scalar_lea.sflag [#allocation4], %s11657
          %s11659 = sand.u32 %s472, 1
          %s11660 = smul.addr %s11659, 128
          %s11661 = scalar_lea.vmem [#allocation16], %s11660
          %11662 = dma.done %s11658, 2048
        $region140: #{tpu_custom_call.1} parent=135 // pred_fallthru
          _
      $region136: #{tpu_custom_call.1} parent=5 // pred_fallthru
        _
    $region6: #{tpu_custom_call.1} parent=1 // loop_footer
      %s44 = sadd.s32 1, %s40
    $region7: #{tpu_custom_call.1} parent=1 // loop_footer_branch
      %39 = sbr.rel target = $region3
    $region8: #{tpu_custom_call.1} parent=1 // loop_exit
      _
    %11663 = vsyncpa [#allocation3], 1
    %s11664 = scalar_lea.sflag [#allocation3], 1
    %11665 = vsyncpa %s11664, 1
    %11666 = vsyncpa [#allocation6], 1
    %s11667 = scalar_lea.sflag [#allocation6], 1
    %11668 = vsyncpa %s11667, 1
    %11669 = vsyncpa [#allocation9], 1
    %s11670 = scalar_lea.sflag [#allocation9], 1
    %11671 = vsyncpa %s11670, 1
    %11672 = vsyncpa [#allocation12], 1
    %s11673 = scalar_lea.sflag [#allocation12], 1
    %11674 = vsyncpa %s11673, 1
    %11675 = vsyncpa [#allocation15], 1
    %s11676 = scalar_lea.sflag [#allocation15], 1
    %11677 = vsyncpa %s11676, 1
    %11678 = vsyncpa [#allocation4], 1
    %s11679 = scalar_lea.sflag [#allocation4], 1
    %11680 = vsyncpa %s11679, 1

</llo_original>
